<compile_context>
chip_gen: v6e
topology: v6e:2x2x1
jax: 0.10.0
libtpu: 0.0.40
codegen_flags: <defaults>
</compile_context>

<pallas_src>
import numpy as np
import jax
import jax.numpy as jnp
from jax.experimental import pallas as pl
from jax.experimental.pallas import tpu as pltpu


# ----------------------------------------------------------------------------
# Fused conv_block kernel: (Conv3d k3 s1 p1 -> BN(eval) -> ReLU) x 2
# ----------------------------------------------------------------------------
def _make_fused_conv_block_kernel(TD, D, Cout, L, Wp):
    def kernel(x2_ref, x1_ref, w1a_ref, w1b_ref, w2_ref,
               sc1_ref, sh1_ref, sc2_ref, sh2_ref, mask_ref,
               o_ref, h_ref):
        # x2_ref/x1_ref: (TD+4, C, Lxin) bf16 depth-slab of flattened padded planes
        # w1a/w1b:       (3,3,3,Cout,C2)/(3,3,3,Cout,C1) bf16 (concat fused via split)
        # w2:            (3,3,3,Cout,Cout) bf16
        # sc*/sh*:       (Cout,1) f32 folded BN scale/shift (conv bias folded in)
        # mask:          (1, L) f32 interior mask of the padded (Hp,Wp) grid
        # o_ref:         (TD, Cout, L) f32
        # h_ref:         (TD+2, Cout, Lxin) bf16 VMEM scratch (padded intermediate)
        d_base = pl.program_id(1) * TD
        sc1 = sc1_ref[...]
        sh1 = sh1_ref[...]
        sc2 = sc2_ref[...]
        sh2 = sh2_ref[...]
        mask = mask_ref[...]

        # Fresh zeros each step: provides the flat tail halo the 2nd conv reads.
        h_ref[...] = jnp.zeros_like(h_ref)

        def conv1_plane(j, carry):
            acc = jnp.zeros((Cout, L), jnp.float32)
            for kd in range(3):
                pa = x2_ref[j + kd]                      # (C2, Lxin) bf16
                pb = x1_ref[j + kd]                      # (C1, Lxin) bf16
                for kh in range(3):
                    for kw in range(3):
                        s0 = kh * Wp + kw                # static tap offset
                        acc = acc + jnp.dot(w1a_ref[kd, kh, kw], pa[:, s0:s0 + L],
                                            preferred_element_type=jnp.float32)
                        acc = acc + jnp.dot(w1b_ref[kd, kh, kw], pb[:, s0:s0 + L],
                                            preferred_element_type=jnp.float32)
            y = jnp.maximum(acc * sc1 + sh1, 0.0)        # BN-fold + ReLU (f32)
            # Intermediate plane j <-> absolute depth d_base + j - 1; planes outside
            # [0, D) and the (Hp,Wp) border are the 2nd conv's ZERO padding.
            e = d_base + j - 1
            valid = jnp.logical_and(e >= 0, e < D)
            y = jnp.where(valid, y * mask, 0.0)
            h_ref[j, :, 0:L] = y.astype(h_ref.dtype)     # bf16 intermediate in VMEM
            return carry

        jax.lax.fori_loop(0, TD + 2, conv1_plane, 0)

        def conv2_plane(d, carry):
            acc = jnp.zeros((Cout, L), jnp.float32)
            for kd in range(3):
                hp = h_ref[d + kd]                       # (Cout, Lxin) bf16
                for kh in range(3):
                    for kw in range(3):
                        s0 = kh * Wp + kw
                        acc = acc + jnp.dot(w2_ref[kd, kh, kw], hp[:, s0:s0 + L],
                                            preferred_element_type=jnp.float32)
            y = jnp.maximum(acc * sc2 + sh2, 0.0)
            o_ref[d] = y.astype(o_ref.dtype)
            return carry

        jax.lax.fori_loop(0, TD, conv2_plane, 0)

    return kernel


def _pick_depth_tile(D, Cin, Cout, Lxin, L, budget_bytes=20 * 1024 * 1024):
    """Largest divisor of D whose per-step VMEM footprint fits the budget."""
    def est(TD):
        inp = 2 * (TD + 4) * Cin * Lxin * 2      # two bf16 inputs, double-buffered
        out = 2 * TD * Cout * L * 4              # f32 output, double-buffered
        h = (TD + 2) * Cout * Lxin * 2           # bf16 intermediate scratch
        return inp + out + h
    best = 1
    for TD in range(1, D + 1):
        if D % TD == 0 and est(TD) <= budget_bytes:
            best = TD
    return best


def conv_block_fused(x2, x1, w1, scale1, shift1, w2, scale2, shift2):
    """Fused conv_block over the channel-concat [x2, x1] (concat fused in-kernel).

    x2: (B, C2, D, H, W), x1: (B, C1, D, H, W) already spatially aligned with x2.
    w1: (3,3,3,Cout,C2+C1), w2: (3,3,3,Cout,Cout), tap-major.
    Returns (B, Cout, D, H, W) f32.
    """
    B, C2, D, H, W = (int(s) for s in x2.shape)
    C1 = int(x1.shape[1])
    Cout = int(w1.shape[3])
    Hp, Wp = H + 2, W + 2
    L = Hp * Wp
    lead = tail = Wp + 1
    Lxin = L + lead + tail                       # flat padded plane + lead/tail halo

    def to_rows(x):
        # NCDHW -> (B, D+4, C, Lxin) bf16: conv halo pad (D:2, H/W:1), flatten plane,
        # then symmetric Wp+1 lead/tail zeros so every tap window is in-bounds.
        xb = x.astype(jnp.bfloat16)
        xp = jnp.pad(xb, ((0, 0), (0, 0), (2, 2), (1, 1), (1, 1)))
        xt = jnp.transpose(xp, (0, 2, 1, 3, 4))            # (B, D+4, C, Hp, Wp)
        rows = xt.reshape(B, D + 4, xt.shape[2], L)
        return jnp.pad(rows, ((0, 0), (0, 0), (0, 0), (lead, tail)))

    x2rows = to_rows(x2)
    x1rows = to_rows(x1)

    TD = _pick_depth_tile(D, C1 + C2, Cout, Lxin, L)
    nDT = D // TD
    if nDT == 1:
        x2t = x2rows[:, None]                              # (B, 1, D+4, C, Lxin)
        x1t = x1rows[:, None]
    else:                                                  # per-tile slabs with halo
        idx = jnp.arange(nDT)[:, None] * TD + jnp.arange(TD + 4)[None, :]
        x2t = jnp.take(x2rows, idx, axis=1)
        x1t = jnp.take(x1rows, idx, axis=1)

    w1b16 = w1.astype(jnp.bfloat16)
    w1a = w1b16[..., :C2]                                  # concat order is [x2, x1]
    w1b = w1b16[..., C2:]
    w2b = w2.astype(jnp.bfloat16)
    sc1 = scale1.reshape(Cout, 1).astype(jnp.float32)
    sh1 = shift1.reshape(Cout, 1).astype(jnp.float32)
    sc2 = scale2.reshape(Cout, 1).astype(jnp.float32)
    sh2 = shift2.reshape(Cout, 1).astype(jnp.float32)

    # Interior mask of the padded (Hp, Wp) grid (compile-time constant).
    ri, ci = np.meshgrid(np.arange(Hp), np.arange(Wp), indexing="ij")
    interior = (ri >= 1) & (ri <= H) & (ci >= 1) & (ci <= W)
    mask = jnp.asarray(interior.reshape(1, L).astype(np.float32))

    kernel = _make_fused_conv_block_kernel(TD, D, Cout, L, Wp)

    flops = 2 * 27 * L * (B * nDT * (TD + 2) * Cout * (C1 + C2) + B * D * Cout * Cout)
    bytes_accessed = ((x2t.size + x1t.size) * 2 + B * D * Cout * L * 4
                      + (w1a.size + w1b.size + w2b.size) * 2 + mask.size * 4)

    out_rows = pl.pallas_call(
        kernel,
        out_shape=jax.ShapeDtypeStruct((B, D, Cout, L), jnp.float32),
        grid_spec=pltpu.PrefetchScalarGridSpec(
            num_scalar_prefetch=0,
            grid=(B, nDT),
            in_specs=[
                pl.BlockSpec((None, None, TD + 4, C2, Lxin), lambda b, t: (b, t, 0, 0, 0)),
                pl.BlockSpec((None, None, TD + 4, C1, Lxin), lambda b, t: (b, t, 0, 0, 0)),
                pl.BlockSpec((3, 3, 3, Cout, C2), lambda b, t: (0, 0, 0, 0, 0)),
                pl.BlockSpec((3, 3, 3, Cout, C1), lambda b, t: (0, 0, 0, 0, 0)),
                pl.BlockSpec((3, 3, 3, Cout, Cout), lambda b, t: (0, 0, 0, 0, 0)),
                pl.BlockSpec((Cout, 1), lambda b, t: (0, 0)),
                pl.BlockSpec((Cout, 1), lambda b, t: (0, 0)),
                pl.BlockSpec((Cout, 1), lambda b, t: (0, 0)),
                pl.BlockSpec((Cout, 1), lambda b, t: (0, 0)),
                pl.BlockSpec((1, L), lambda b, t: (0, 0)),
            ],
            out_specs=pl.BlockSpec((None, TD, Cout, L), lambda b, t: (b, t, 0, 0)),
            scratch_shapes=[pltpu.VMEM((TD + 2, Cout, Lxin), jnp.bfloat16)],
        ),
        compiler_params=pltpu.CompilerParams(
            dimension_semantics=("parallel", "parallel"),
            vmem_limit_bytes=48 * 1024 * 1024,
        ),
        cost_estimate=pl.CostEstimate(flops=int(flops), transcendentals=0,
                                      bytes_accessed=int(bytes_accessed)),
    )(x2t, x1t, w1a, w1b, w2b, sc1, sh1, sc2, sh2, mask)

    # Drop the junk border rows/cols of the flat formulation, back to NCDHW.
    out = out_rows.reshape(B, D, Cout, Hp, Wp)[:, :, :, :H, :W]
    return jnp.transpose(out, (0, 2, 1, 3, 4))


# ----------------------------------------------------------------------------
# Plain-JAX glue: trilinear x2 upsample (align_corners=True) + diff pad
# ----------------------------------------------------------------------------
def _interp_matrix_x2(n):
    """(2n, n) interpolation matrix for x2 upsampling with align_corners=True."""
    m = 2 * n
    if n == 1:
        return jnp.ones((m, n), jnp.float32)
    pos = jnp.arange(m, dtype=jnp.float32) * ((n - 1) / (m - 1))
    lo = jnp.clip(jnp.floor(pos), 0.0, float(n - 2))
    frac = pos - lo
    src = jnp.arange(n, dtype=jnp.float32)[None, :]
    w_lo = (src == lo[:, None]).astype(jnp.float32) * (1.0 - frac)[:, None]
    w_hi = (src == (lo + 1.0)[:, None]).astype(jnp.float32) * frac[:, None]
    return w_lo + w_hi


def upsample_trilinear_x2(x):
    """scale_factor=2, mode='trilinear', align_corners=True.  x: (B, C, D, H, W)."""
    _, _, D, H, W = x.shape
    x = jnp.einsum('od,bcdhw->bcohw', _interp_matrix_x2(int(D)), x)
    x = jnp.einsum('oh,bcdhw->bcdow', _interp_matrix_x2(int(H)), x)
    x = jnp.einsum('ow,bcdhw->bcdho', _interp_matrix_x2(int(W)), x)
    return x


# ----------------------------------------------------------------------------
# UpSampleblock parameters + forward
# ----------------------------------------------------------------------------
def init_params(key, in_channels, out_channels, eps=1e-5):
    """Deterministic init matching the module's shapes (eval-mode BN folded)."""
    k1, k2, k3, k4 = jax.random.split(key, 4)

    def conv_init(kw_, kb_, cin, cout):
        bound = 1.0 / jnp.sqrt(cin * 27.0)
        w = jax.random.uniform(kw_, (3, 3, 3, cout, cin), jnp.float32, -bound, bound)
        b = jax.random.uniform(kb_, (cout,), jnp.float32, -bound, bound)
        return w, b

    w1, b1 = conv_init(k1, k2, in_channels, out_channels)
    w2, b2 = conv_init(k3, k4, out_channels, out_channels)

    def bn_fold(conv_bias, c):
        gamma = jnp.ones((c,), jnp.float32)
        beta = jnp.zeros((c,), jnp.float32)
        mean = jnp.zeros((c,), jnp.float32)
        var = jnp.ones((c,), jnp.float32)
        scale = gamma / jnp.sqrt(var + eps)
        shift = beta + (conv_bias - mean) * scale
        return scale, shift

    s1, sh1 = bn_fold(b1, out_channels)
    s2, sh2 = bn_fold(b2, out_channels)
    return dict(w1=w1, scale1=s1, shift1=sh1, w2=w2, scale2=s2, shift2=sh2)


def upsample_block_forward(params, x1, x2):
    """x1, x2 in PyTorch NCDHW layout.  Equivalent to UpSampleblock.forward
    (trilinear=True, eval-mode BatchNorm).  Returns NCDHW f32."""
    x1u = upsample_trilinear_x2(x1)

    diffZ = x2.shape[2] - x1u.shape[2]
    diffY = x2.shape[3] - x1u.shape[3]
    diffX = x2.shape[4] - x1u.shape[4]
    x1p = jnp.pad(
        x1u,
        ((0, 0), (0, 0),
         (diffZ // 2, diffZ - diffZ // 2),
         (diffY // 2, diffY - diffY // 2),
         (diffX // 2, diffX - diffX // 2)),
    )

    # torch.cat([x2, x1], dim=1) + conv_block, all fused in one Pallas kernel.
    return conv_block_fused(x2, x1p,
                            params["w1"], params["scale1"], params["shift1"],
                            params["w2"], params["scale2"], params["shift2"])


if __name__ == "__main__":
    key = jax.random.PRNGKey(0)
    k_x1, k_x2, k_p = jax.random.split(key, 3)

    # Small U-Net-style shapes (NCDHW).  in_channels = C(x2) + C(x1) = 8, out = 4.
    B = 2
    C1, C2 = 4, 4
    in_channels, out_channels = C1 + C2, 4

    x1 = jax.random.normal(k_x1, (B, C1, 4, 8, 8), jnp.float32)     # low-res feature map
    x2 = jax.random.normal(k_x2, (B, C2, 8, 16, 16), jnp.float32)   # skip connection

    params = init_params(k_p, in_channels, out_channels)

    fwd = jax.jit(upsample_block_forward)
    out = jax.block_until_ready(fwd(params, x1, x2))

    assert out.shape == (B, out_channels, 8, 16, 16)
    assert bool(jnp.all(jnp.isfinite(out)))
    print("KERNEL_OK")
</pallas_src>

<mosaic_0001>
module attributes {stable_mosaic.version = 11 : i64} {
  func.func @kernel(%arg0: i32, %arg1: i32, %arg2: memref<1x1x12x4x362xbf16, #tpu.memory_space<vmem>>, %arg3: memref<1x1x12x4x362xbf16, #tpu.memory_space<vmem>>, %arg4: memref<3x3x3x4x4xbf16, #tpu.memory_space<vmem>>, %arg5: memref<3x3x3x4x4xbf16, #tpu.memory_space<vmem>>, %arg6: memref<3x3x3x4x4xbf16, #tpu.memory_space<vmem>>, %arg7: memref<4x1xf32, #tpu.memory_space<vmem>>, %arg8: memref<4x1xf32, #tpu.memory_space<vmem>>, %arg9: memref<4x1xf32, #tpu.memory_space<vmem>>, %arg10: memref<4x1xf32, #tpu.memory_space<vmem>>, %arg11: memref<1x324xf32, #tpu.memory_space<vmem>>, %arg12: memref<1x8x4x324xf32, #tpu.memory_space<vmem>>, %arg13: memref<10x4x362xbf16, #tpu.memory_space<vmem>>) attributes {dimension_semantics = [#tpu.dimension_semantics<parallel>, #tpu.dimension_semantics<parallel>], iteration_bounds = array<i64: 2, 1>, scalar_prefetch = 0 : i64, scratch_operands = 1 : i64, tpu.core_type = #tpu.core_type<tc>, window_params = [{transform_indices = @transform_0, window_bounds = array<i64: 1, 1, 12, 4, 362>}, {transform_indices = @transform_1, window_bounds = array<i64: 1, 1, 12, 4, 362>}, {pipeline_mode = #tpu.pipeline_mode<synchronous>, transform_indices = @transform_2, window_bounds = array<i64: 3, 3, 3, 4, 4>}, {pipeline_mode = #tpu.pipeline_mode<synchronous>, transform_indices = @transform_3, window_bounds = array<i64: 3, 3, 3, 4, 4>}, {pipeline_mode = #tpu.pipeline_mode<synchronous>, transform_indices = @transform_4, window_bounds = array<i64: 3, 3, 3, 4, 4>}, {pipeline_mode = #tpu.pipeline_mode<synchronous>, transform_indices = @transform_5, window_bounds = array<i64: 4, 1>}, {pipeline_mode = #tpu.pipeline_mode<synchronous>, transform_indices = @transform_6, window_bounds = array<i64: 4, 1>}, {pipeline_mode = #tpu.pipeline_mode<synchronous>, transform_indices = @transform_7, window_bounds = array<i64: 4, 1>}, {pipeline_mode = #tpu.pipeline_mode<synchronous>, transform_indices = @transform_8, window_bounds = array<i64: 4, 1>}, {pipeline_mode = #tpu.pipeline_mode<synchronous>, transform_indices = @transform_9, window_bounds = array<i64: 1, 324>}, {transform_indices = @transform_10, window_bounds = array<i64: 1, 8, 4, 324>}]} {
    %c8_i32 = arith.constant 8 : i32
    %0 = arith.muli %arg1, %c8_i32 : i32
    %c0 = arith.constant 0 : index
    %c0_0 = arith.constant 0 : index
    %1 = vector.load %arg7[%c0, %c0_0] : memref<4x1xf32, #tpu.memory_space<vmem>>, vector<4x1xf32>
    %c0_1 = arith.constant 0 : index
    %c0_2 = arith.constant 0 : index
    %2 = vector.load %arg8[%c0_1, %c0_2] : memref<4x1xf32, #tpu.memory_space<vmem>>, vector<4x1xf32>
    %c0_3 = arith.constant 0 : index
    %c0_4 = arith.constant 0 : index
    %3 = vector.load %arg9[%c0_3, %c0_4] : memref<4x1xf32, #tpu.memory_space<vmem>>, vector<4x1xf32>
    %c0_5 = arith.constant 0 : index
    %c0_6 = arith.constant 0 : index
    %4 = vector.load %arg10[%c0_5, %c0_6] : memref<4x1xf32, #tpu.memory_space<vmem>>, vector<4x1xf32>
    %c0_7 = arith.constant 0 : index
    %c0_8 = arith.constant 0 : index
    %5 = vector.load %arg11[%c0_7, %c0_8] : memref<1x324xf32, #tpu.memory_space<vmem>>, vector<1x324xf32>
    %cst = arith.constant 0.000000e+00 : bf16
    %6 = vector.broadcast %cst : bf16 to vector<10x4x362xbf16>
    %c0_9 = arith.constant 0 : index
    %c0_10 = arith.constant 0 : index
    %c0_11 = arith.constant 0 : index
    %7 = vector.load %arg13[%c0_9, %c0_10, %c0_11] : memref<10x4x362xbf16, #tpu.memory_space<vmem>>, vector<10x4x362xbf16>
    tpu.vector_store %arg13[%c0_9, %c0_10, %c0_11], %6 {strides = array<i32>} : memref<10x4x362xbf16, #tpu.memory_space<vmem>>, vector<10x4x362xbf16>,
    %c0_i32 = arith.constant 0 : i32
    %c10_i32 = arith.constant 10 : i32
    %8 = arith.addi %c0_i32, %c10_i32 : i32
    %c1_i32 = arith.constant 1 : i32
    scf.for %arg14 = %c0_i32 to %8 step %c1_i32  : i32 {
      %cst_17 = arith.constant 0.000000e+00 : f32
      %10 = vector.broadcast %cst_17 : f32 to vector<4x324xf32>
      %c0_i32_18 = arith.constant 0 : i32
      %11 = arith.addi %arg14, %c0_i32_18 : i32
      %c0_19 = arith.constant 0 : index
      %c0_20 = arith.constant 0 : index
      %12 = arith.index_cast %11 : i32 to index
      %c0_21 = arith.constant 0 : index
      %c0_22 = arith.constant 0 : index
      %13 = vector.load %arg2[%c0_19, %c0_20, %12, %c0_21, %c0_22] : memref<1x1x12x4x362xbf16, #tpu.memory_space<vmem>>, vector<1x1x1x4x362xbf16>
      %14 = vector.shape_cast %13 : vector<1x1x1x4x362xbf16> to vector<4x362xbf16>
      %c0_i32_23 = arith.constant 0 : i32
      %15 = arith.addi %arg14, %c0_i32_23 : i32
      %c0_24 = arith.constant 0 : index
      %c0_25 = arith.constant 0 : index
      %16 = arith.index_cast %15 : i32 to index
      %c0_26 = arith.constant 0 : index
      %c0_27 = arith.constant 0 : index
      %17 = vector.load %arg3[%c0_24, %c0_25, %16, %c0_26, %c0_27] : memref<1x1x12x4x362xbf16, #tpu.memory_space<vmem>>, vector<1x1x1x4x362xbf16>
      %18 = vector.shape_cast %17 : vector<1x1x1x4x362xbf16> to vector<4x362xbf16>
      %c0_28 = arith.constant 0 : index
      %c0_29 = arith.constant 0 : index
      %c0_30 = arith.constant 0 : index
      %c0_31 = arith.constant 0 : index
      %c0_32 = arith.constant 0 : index
      %19 = vector.load %arg4[%c0_28, %c0_29, %c0_30, %c0_31, %c0_32] : memref<3x3x3x4x4xbf16, #tpu.memory_space<vmem>>, vector<1x1x1x4x4xbf16>
      %20 = vector.shape_cast %19 : vector<1x1x1x4x4xbf16> to vector<4x4xbf16>
      %21 = vector.extract_strided_slice %14 {offsets = [0, 0], sizes = [4, 324], strides = [1, 1]} : vector<4x362xbf16> to vector<4x324xbf16>
      %cst_33 = arith.constant dense<0.000000e+00> : vector<4x324xf32>
      %22 = tpu.matmul %20, %21, %cst_33 {dimension_numbers = #tpu.dot_dimension_numbers<[1], [0], [0], [1], [0, 0, 1, 1], [], []>} : vector<4x4xbf16>, vector<4x324xbf16>, vector<4x324xf32> -> vector<4x324xf32>
      %23 = arith.addf %10, %22 : vector<4x324xf32>
      %c0_34 = arith.constant 0 : index
      %c0_35 = arith.constant 0 : index
      %c0_36 = arith.constant 0 : index
      %c0_37 = arith.constant 0 : index
      %c0_38 = arith.constant 0 : index
      %24 = vector.load %arg5[%c0_34, %c0_35, %c0_36, %c0_37, %c0_38] : memref<3x3x3x4x4xbf16, #tpu.memory_space<vmem>>, vector<1x1x1x4x4xbf16>
      %25 = vector.shape_cast %24 : vector<1x1x1x4x4xbf16> to vector<4x4xbf16>
      %26 = vector.extract_strided_slice %18 {offsets = [0, 0], sizes = [4, 324], strides = [1, 1]} : vector<4x362xbf16> to vector<4x324xbf16>
      %cst_39 = arith.constant dense<0.000000e+00> : vector<4x324xf32>
      %27 = tpu.matmul %25, %26, %cst_39 {dimension_numbers = #tpu.dot_dimension_numbers<[1], [0], [0], [1], [0, 0, 1, 1], [], []>} : vector<4x4xbf16>, vector<4x324xbf16>, vector<4x324xf32> -> vector<4x324xf32>
      %28 = arith.addf %23, %27 : vector<4x324xf32>
      %c0_40 = arith.constant 0 : index
      %c0_41 = arith.constant 0 : index
      %c1 = arith.constant 1 : index
      %c0_42 = arith.constant 0 : index
      %c0_43 = arith.constant 0 : index
      %29 = vector.load %arg4[%c0_40, %c0_41, %c1, %c0_42, %c0_43] : memref<3x3x3x4x4xbf16, #tpu.memory_space<vmem>>, vector<1x1x1x4x4xbf16>
      %30 = vector.shape_cast %29 : vector<1x1x1x4x4xbf16> to vector<4x4xbf16>
      %31 = vector.extract_strided_slice %14 {offsets = [0, 1], sizes = [4, 324], strides = [1, 1]} : vector<4x362xbf16> to vector<4x324xbf16>
      %cst_44 = arith.constant dense<0.000000e+00> : vector<4x324xf32>
      %32 = tpu.matmul %30, %31, %cst_44 {dimension_numbers = #tpu.dot_dimension_numbers<[1], [0], [0], [1], [0, 0, 1, 1], [], []>} : vector<4x4xbf16>, vector<4x324xbf16>, vector<4x324xf32> -> vector<4x324xf32>
      %33 = arith.addf %28, %32 : vector<4x324xf32>
      %c0_45 = arith.constant 0 : index
      %c0_46 = arith.constant 0 : index
      %c1_47 = arith.constant 1 : index
      %c0_48 = arith.constant 0 : index
      %c0_49 = arith.constant 0 : index
      %34 = vector.load %arg5[%c0_45, %c0_46, %c1_47, %c0_48, %c0_49] : memref<3x3x3x4x4xbf16, #tpu.memory_space<vmem>>, vector<1x1x1x4x4xbf16>
      %35 = vector.shape_cast %34 : vector<1x1x1x4x4xbf16> to vector<4x4xbf16>
      %36 = vector.extract_strided_slice %18 {offsets = [0, 1], sizes = [4, 324], strides = [1, 1]} : vector<4x362xbf16> to vector<4x324xbf16>
      %cst_50 = arith.constant dense<0.000000e+00> : vector<4x324xf32>
      %37 = tpu.matmul %35, %36, %cst_50 {dimension_numbers = #tpu.dot_dimension_numbers<[1], [0], [0], [1], [0, 0, 1, 1], [], []>} : vector<4x4xbf16>, vector<4x324xbf16>, vector<4x324xf32> -> vector<4x324xf32>
      %38 = arith.addf %33, %37 : vector<4x324xf32>
      %c0_51 = arith.constant 0 : index
      %c0_52 = arith.constant 0 : index
      %c2 = arith.constant 2 : index
      %c0_53 = arith.constant 0 : index
      %c0_54 = arith.constant 0 : index
      %39 = vector.load %arg4[%c0_51, %c0_52, %c2, %c0_53, %c0_54] : memref<3x3x3x4x4xbf16, #tpu.memory_space<vmem>>, vector<1x1x1x4x4xbf16>
      %40 = vector.shape_cast %39 : vector<1x1x1x4x4xbf16> to vector<4x4xbf16>
      %41 = vector.extract_strided_slice %14 {offsets = [0, 2], sizes = [4, 324], strides = [1, 1]} : vector<4x362xbf16> to vector<4x324xbf16>
      %cst_55 = arith.constant dense<0.000000e+00> : vector<4x324xf32>
      %42 = tpu.matmul %40, %41, %cst_55 {dimension_numbers = #tpu.dot_dimension_numbers<[1], [0], [0], [1], [0, 0, 1, 1], [], []>} : vector<4x4xbf16>, vector<4x324xbf16>, vector<4x324xf32> -> vector<4x324xf32>
      %43 = arith.addf %38, %42 : vector<4x324xf32>
      %c0_56 = arith.constant 0 : index
      %c0_57 = arith.constant 0 : index
      %c2_58 = arith.constant 2 : index
      %c0_59 = arith.constant 0 : index
      %c0_60 = arith.constant 0 : index
      %44 = vector.load %arg5[%c0_56, %c0_57, %c2_58, %c0_59, %c0_60] : memref<3x3x3x4x4xbf16, #tpu.memory_space<vmem>>, vector<1x1x1x4x4xbf16>
      %45 = vector.shape_cast %44 : vector<1x1x1x4x4xbf16> to vector<4x4xbf16>
      %46 = vector.extract_strided_slice %18 {offsets = [0, 2], sizes = [4, 324], strides = [1, 1]} : vector<4x362xbf16> to vector<4x324xbf16>
      %cst_61 = arith.constant dense<0.000000e+00> : vector<4x324xf32>
      %47 = tpu.matmul %45, %46, %cst_61 {dimension_numbers = #tpu.dot_dimension_numbers<[1], [0], [0], [1], [0, 0, 1, 1], [], []>} : vector<4x4xbf16>, vector<4x324xbf16>, vector<4x324xf32> -> vector<4x324xf32>
      %48 = arith.addf %43, %47 : vector<4x324xf32>
      %c0_62 = arith.constant 0 : index
      %c1_63 = arith.constant 1 : index
      %c0_64 = arith.constant 0 : index
      %c0_65 = arith.constant 0 : index
      %c0_66 = arith.constant 0 : index
      %49 = vector.load %arg4[%c0_62, %c1_63, %c0_64, %c0_65, %c0_66] : memref<3x3x3x4x4xbf16, #tpu.memory_space<vmem>>, vector<1x1x1x4x4xbf16>
      %50 = vector.shape_cast %49 : vector<1x1x1x4x4xbf16> to vector<4x4xbf16>
      %51 = vector.extract_strided_slice %14 {offsets = [0, 18], sizes = [4, 324], strides = [1, 1]} : vector<4x362xbf16> to vector<4x324xbf16>
      %cst_67 = arith.constant dense<0.000000e+00> : vector<4x324xf32>
      %52 = tpu.matmul %50, %51, %cst_67 {dimension_numbers = #tpu.dot_dimension_numbers<[1], [0], [0], [1], [0, 0, 1, 1], [], []>} : vector<4x4xbf16>, vector<4x324xbf16>, vector<4x324xf32> -> vector<4x324xf32>
      %53 = arith.addf %48, %52 : vector<4x324xf32>
      %c0_68 = arith.constant 0 : index
      %c1_69 = arith.constant 1 : index
      %c0_70 = arith.constant 0 : index
      %c0_71 = arith.constant 0 : index
      %c0_72 = arith.constant 0 : index
      %54 = vector.load %arg5[%c0_68, %c1_69, %c0_70, %c0_71, %c0_72] : memref<3x3x3x4x4xbf16, #tpu.memory_space<vmem>>, vector<1x1x1x4x4xbf16>
      %55 = vector.shape_cast %54 : vector<1x1x1x4x4xbf16> to vector<4x4xbf16>
      %56 = vector.extract_strided_slice %18 {offsets = [0, 18], sizes = [4, 324], strides = [1, 1]} : vector<4x362xbf16> to vector<4x324xbf16>
      %cst_73 = arith.constant dense<0.000000e+00> : vector<4x324xf32>
      %57 = tpu.matmul %55, %56, %cst_73 {dimension_numbers = #tpu.dot_dimension_numbers<[1], [0], [0], [1], [0, 0, 1, 1], [], []>} : vector<4x4xbf16>, vector<4x324xbf16>, vector<4x324xf32> -> vector<4x324xf32>
      %58 = arith.addf %53, %57 : vector<4x324xf32>
      %c0_74 = arith.constant 0 : index
      %c1_75 = arith.constant 1 : index
      %c1_76 = arith.constant 1 : index
      %c0_77 = arith.constant 0 : index
      %c0_78 = arith.constant 0 : index
      %59 = vector.load %arg4[%c0_74, %c1_75, %c1_76, %c0_77, %c0_78] : memref<3x3x3x4x4xbf16, #tpu.memory_space<vmem>>, vector<1x1x1x4x4xbf16>
      %60 = vector.shape_cast %59 : vector<1x1x1x4x4xbf16> to vector<4x4xbf16>
      %61 = vector.extract_strided_slice %14 {offsets = [0, 19], sizes = [4, 324], strides = [1, 1]} : vector<4x362xbf16> to vector<4x324xbf16>
      %cst_79 = arith.constant dense<0.000000e+00> : vector<4x324xf32>
      %62 = tpu.matmul %60, %61, %cst_79 {dimension_numbers = #tpu.dot_dimension_numbers<[1], [0], [0], [1], [0, 0, 1, 1], [], []>} : vector<4x4xbf16>, vector<4x324xbf16>, vector<4x324xf32> -> vector<4x324xf32>
      %63 = arith.addf %58, %62 : vector<4x324xf32>
      %c0_80 = arith.constant 0 : index
      %c1_81 = arith.constant 1 : index
      %c1_82 = arith.constant 1 : index
      %c0_83 = arith.constant 0 : index
      %c0_84 = arith.constant 0 : index
      %64 = vector.load %arg5[%c0_80, %c1_81, %c1_82, %c0_83, %c0_84] : memref<3x3x3x4x4xbf16, #tpu.memory_space<vmem>>, vector<1x1x1x4x4xbf16>
      %65 = vector.shape_cast %64 : vector<1x1x1x4x4xbf16> to vector<4x4xbf16>
      %66 = vector.extract_strided_slice %18 {offsets = [0, 19], sizes = [4, 324], strides = [1, 1]} : vector<4x362xbf16> to vector<4x324xbf16>
      %cst_85 = arith.constant dense<0.000000e+00> : vector<4x324xf32>
      %67 = tpu.matmul %65, %66, %cst_85 {dimension_numbers = #tpu.dot_dimension_numbers<[1], [0], [0], [1], [0, 0, 1, 1], [], []>} : vector<4x4xbf16>, vector<4x324xbf16>, vector<4x324xf32> -> vector<4x324xf32>
      %68 = arith.addf %63, %67 : vector<4x324xf32>
      %c0_86 = arith.constant 0 : index
      %c1_87 = arith.constant 1 : index
      %c2_88 = arith.constant 2 : index
      %c0_89 = arith.constant 0 : index
      %c0_90 = arith.constant 0 : index
      %69 = vector.load %arg4[%c0_86, %c1_87, %c2_88, %c0_89, %c0_90] : memref<3x3x3x4x4xbf16, #tpu.memory_space<vmem>>, vector<1x1x1x4x4xbf16>
      %70 = vector.shape_cast %69 : vector<1x1x1x4x4xbf16> to vector<4x4xbf16>
      %71 = vector.extract_strided_slice %14 {offsets = [0, 20], sizes = [4, 324], strides = [1, 1]} : vector<4x362xbf16> to vector<4x324xbf16>
      %cst_91 = arith.constant dense<0.000000e+00> : vector<4x324xf32>
      %72 = tpu.matmul %70, %71, %cst_91 {dimension_numbers = #tpu.dot_dimension_numbers<[1], [0], [0], [1], [0, 0, 1, 1], [], []>} : vector<4x4xbf16>, vector<4x324xbf16>, vector<4x324xf32> -> vector<4x324xf32>
      %73 = arith.addf %68, %72 : vector<4x324xf32>
      %c0_92 = arith.constant 0 : index
      %c1_93 = arith.constant 1 : index
      %c2_94 = arith.constant 2 : index
      %c0_95 = arith.constant 0 : index
      %c0_96 = arith.constant 0 : index
      %74 = vector.load %arg5[%c0_92, %c1_93, %c2_94, %c0_95, %c0_96] : memref<3x3x3x4x4xbf16, #tpu.memory_space<vmem>>, vector<1x1x1x4x4xbf16>
      %75 = vector.shape_cast %74 : vector<1x1x1x4x4xbf16> to vector<4x4xbf16>
      %76 = vector.extract_strided_slice %18 {offsets = [0, 20], sizes = [4, 324], strides = [1, 1]} : vector<4x362xbf16> to vector<4x324xbf16>
      %cst_97 = arith.constant dense<0.000000e+00> : vector<4x324xf32>
      %77 = tpu.matmul %75, %76, %cst_97 {dimension_numbers = #tpu.dot_dimension_numbers<[1], [0], [0], [1], [0, 0, 1, 1], [], []>} : vector<4x4xbf16>, vector<4x324xbf16>, vector<4x324xf32> -> vector<4x324xf32>
      %78 = arith.addf %73, %77 : vector<4x324xf32>
      %c0_98 = arith.constant 0 : index
      %c2_99 = arith.constant 2 : index
      %c0_100 = arith.constant 0 : index
      %c0_101 = arith.constant 0 : index
      %c0_102 = arith.constant 0 : index
      %79 = vector.load %arg4[%c0_98, %c2_99, %c0_100, %c0_101, %c0_102] : memref<3x3x3x4x4xbf16, #tpu.memory_space<vmem>>, vector<1x1x1x4x4xbf16>
      %80 = vector.shape_cast %79 : vector<1x1x1x4x4xbf16> to vector<4x4xbf16>
      %81 = vector.extract_strided_slice %14 {offsets = [0, 36], sizes = [4, 324], strides = [1, 1]} : vector<4x362xbf16> to vector<4x324xbf16>
      %cst_103 = arith.constant dense<0.000000e+00> : vector<4x324xf32>
      %82 = tpu.matmul %80, %81, %cst_103 {dimension_numbers = #tpu.dot_dimension_numbers<[1], [0], [0], [1], [0, 0, 1, 1], [], []>} : vector<4x4xbf16>, vector<4x324xbf16>, vector<4x324xf32> -> vector<4x324xf32>
      %83 = arith.addf %78, %82 : vector<4x324xf32>
      %c0_104 = arith.constant 0 : index
      %c2_105 = arith.constant 2 : index
      %c0_106 = arith.constant 0 : index
      %c0_107 = arith.constant 0 : index
      %c0_108 = arith.constant 0 : index
      %84 = vector.load %arg5[%c0_104, %c2_105, %c0_106, %c0_107, %c0_108] : memref<3x3x3x4x4xbf16, #tpu.memory_space<vmem>>, vector<1x1x1x4x4xbf16>
      %85 = vector.shape_cast %84 : vector<1x1x1x4x4xbf16> to vector<4x4xbf16>
      %86 = vector.extract_strided_slice %18 {offsets = [0, 36], sizes = [4, 324], strides = [1, 1]} : vector<4x362xbf16> to vector<4x324xbf16>
      %cst_109 = arith.constant dense<0.000000e+00> : vector<4x324xf32>
      %87 = tpu.matmul %85, %86, %cst_109 {dimension_numbers = #tpu.dot_dimension_numbers<[1], [0], [0], [1], [0, 0, 1, 1], [], []>} : vector<4x4xbf16>, vector<4x324xbf16>, vector<4x324xf32> -> vector<4x324xf32>
      %88 = arith.addf %83, %87 : vector<4x324xf32>
      %c0_110 = arith.constant 0 : index
      %c2_111 = arith.constant 2 : index
      %c1_112 = arith.constant 1 : index
      %c0_113 = arith.constant 0 : index
      %c0_114 = arith.constant 0 : index
      %89 = vector.load %arg4[%c0_110, %c2_111, %c1_112, %c0_113, %c0_114] : memref<3x3x3x4x4xbf16, #tpu.memory_space<vmem>>, vector<1x1x1x4x4xbf16>
      %90 = vector.shape_cast %89 : vector<1x1x1x4x4xbf16> to vector<4x4xbf16>
      %91 = vector.extract_strided_slice %14 {offsets = [0, 37], sizes = [4, 324], strides = [1, 1]} : vector<4x362xbf16> to vector<4x324xbf16>
      %cst_115 = arith.constant dense<0.000000e+00> : vector<4x324xf32>
      %92 = tpu.matmul %90, %91, %cst_115 {dimension_numbers = #tpu.dot_dimension_numbers<[1], [0], [0], [1], [0, 0, 1, 1], [], []>} : vector<4x4xbf16>, vector<4x324xbf16>, vector<4x324xf32> -> vector<4x324xf32>
      %93 = arith.addf %88, %92 : vector<4x324xf32>
      %c0_116 = arith.constant 0 : index
      %c2_117 = arith.constant 2 : index
      %c1_118 = arith.constant 1 : index
      %c0_119 = arith.constant 0 : index
      %c0_120 = arith.constant 0 : index
      %94 = vector.load %arg5[%c0_116, %c2_117, %c1_118, %c0_119, %c0_120] : memref<3x3x3x4x4xbf16, #tpu.memory_space<vmem>>, vector<1x1x1x4x4xbf16>
      %95 = vector.shape_cast %94 : vector<1x1x1x4x4xbf16> to vector<4x4xbf16>
      %96 = vector.extract_strided_slice %18 {offsets = [0, 37], sizes = [4, 324], strides = [1, 1]} : vector<4x362xbf16> to vector<4x324xbf16>
      %cst_121 = arith.constant dense<0.000000e+00> : vector<4x324xf32>
      %97 = tpu.matmul %95, %96, %cst_121 {dimension_numbers = #tpu.dot_dimension_numbers<[1], [0], [0], [1], [0, 0, 1, 1], [], []>} : vector<4x4xbf16>, vector<4x324xbf16>, vector<4x324xf32> -> vector<4x324xf32>
      %98 = arith.addf %93, %97 : vector<4x324xf32>
      %c0_122 = arith.constant 0 : index
      %c2_123 = arith.constant 2 : index
      %c2_124 = arith.constant 2 : index
      %c0_125 = arith.constant 0 : index
      %c0_126 = arith.constant 0 : index
      %99 = vector.load %arg4[%c0_122, %c2_123, %c2_124, %c0_125, %c0_126] : memref<3x3x3x4x4xbf16, #tpu.memory_space<vmem>>, vector<1x1x1x4x4xbf16>
      %100 = vector.shape_cast %99 : vector<1x1x1x4x4xbf16> to vector<4x4xbf16>
      %101 = vector.extract_strided_slice %14 {offsets = [0, 38], sizes = [4, 324], strides = [1, 1]} : vector<4x362xbf16> to vector<4x324xbf16>
      %cst_127 = arith.constant dense<0.000000e+00> : vector<4x324xf32>
      %102 = tpu.matmul %100, %101, %cst_127 {dimension_numbers = #tpu.dot_dimension_numbers<[1], [0], [0], [1], [0, 0, 1, 1], [], []>} : vector<4x4xbf16>, vector<4x324xbf16>, vector<4x324xf32> -> vector<4x324xf32>
      %103 = arith.addf %98, %102 : vector<4x324xf32>
      %c0_128 = arith.constant 0 : index
      %c2_129 = arith.constant 2 : index
      %c2_130 = arith.constant 2 : index
      %c0_131 = arith.constant 0 : index
      %c0_132 = arith.constant 0 : index
      %104 = vector.load %arg5[%c0_128, %c2_129, %c2_130, %c0_131, %c0_132] : memref<3x3x3x4x4xbf16, #tpu.memory_space<vmem>>, vector<1x1x1x4x4xbf16>
      %105 = vector.shape_cast %104 : vector<1x1x1x4x4xbf16> to vector<4x4xbf16>
      %106 = vector.extract_strided_slice %18 {offsets = [0, 38], sizes = [4, 324], strides = [1, 1]} : vector<4x362xbf16> to vector<4x324xbf16>
      %cst_133 = arith.constant dense<0.000000e+00> : vector<4x324xf32>
      %107 = tpu.matmul %105, %106, %cst_133 {dimension_numbers = #tpu.dot_dimension_numbers<[1], [0], [0], [1], [0, 0, 1, 1], [], []>} : vector<4x4xbf16>, vector<4x324xbf16>, vector<4x324xf32> -> vector<4x324xf32>
      %108 = arith.addf %103, %107 : vector<4x324xf32>
      %c1_i32_134 = arith.constant 1 : i32
      %109 = arith.addi %arg14, %c1_i32_134 : i32
      %c0_135 = arith.constant 0 : index
      %c0_136 = arith.constant 0 : index
      %110 = arith.index_cast %109 : i32 to index
      %c0_137 = arith.constant 0 : index
      %c0_138 = arith.constant 0 : index
      %111 = vector.load %arg2[%c0_135, %c0_136, %110, %c0_137, %c0_138] : memref<1x1x12x4x362xbf16, #tpu.memory_space<vmem>>, vector<1x1x1x4x362xbf16>
      %112 = vector.shape_cast %111 : vector<1x1x1x4x362xbf16> to vector<4x362xbf16>
      %c1_i32_139 = arith.constant 1 : i32
      %113 = arith.addi %arg14, %c1_i32_139 : i32
      %c0_140 = arith.constant 0 : index
      %c0_141 = arith.constant 0 : index
      %114 = arith.index_cast %113 : i32 to index
      %c0_142 = arith.constant 0 : index
      %c0_143 = arith.constant 0 : index
      %115 = vector.load %arg3[%c0_140, %c0_141, %114, %c0_142, %c0_143] : memref<1x1x12x4x362xbf16, #tpu.memory_space<vmem>>, vector<1x1x1x4x362xbf16>
      %116 = vector.shape_cast %115 : vector<1x1x1x4x362xbf16> to vector<4x362xbf16>
      %c1_144 = arith.constant 1 : index
      %c0_145 = arith.constant 0 : index
      %c0_146 = arith.constant 0 : index
      %c0_147 = arith.constant 0 : index
      %c0_148 = arith.constant 0 : index
      %117 = vector.load %arg4[%c1_144, %c0_145, %c0_146, %c0_147, %c0_148] : memref<3x3x3x4x4xbf16, #tpu.memory_space<vmem>>, vector<1x1x1x4x4xbf16>
      %118 = vector.shape_cast %117 : vector<1x1x1x4x4xbf16> to vector<4x4xbf16>
      %119 = vector.extract_strided_slice %112 {offsets = [0, 0], sizes = [4, 324], strides = [1, 1]} : vector<4x362xbf16> to vector<4x324xbf16>
      %cst_149 = arith.constant dense<0.000000e+00> : vector<4x324xf32>
      %120 = tpu.matmul %118, %119, %cst_149 {dimension_numbers = #tpu.dot_dimension_numbers<[1], [0], [0], [1], [0, 0, 1, 1], [], []>} : vector<4x4xbf16>, vector<4x324xbf16>, vector<4x324xf32> -> vector<4x324xf32>
      %121 = arith.addf %108, %120 : vector<4x324xf32>
      %c1_150 = arith.constant 1 : index
      %c0_151 = arith.constant 0 : index
      %c0_152 = arith.constant 0 : index
      %c0_153 = arith.constant 0 : index
      %c0_154 = arith.constant 0 : index
      %122 = vector.load %arg5[%c1_150, %c0_151, %c0_152, %c0_153, %c0_154] : memref<3x3x3x4x4xbf16, #tpu.memory_space<vmem>>, vector<1x1x1x4x4xbf16>
      %123 = vector.shape_cast %122 : vector<1x1x1x4x4xbf16> to vector<4x4xbf16>
      %124 = vector.extract_strided_slice %116 {offsets = [0, 0], sizes = [4, 324], strides = [1, 1]} : vector<4x362xbf16> to vector<4x324xbf16>
      %cst_155 = arith.constant dense<0.000000e+00> : vector<4x324xf32>
      %125 = tpu.matmul %123, %124, %cst_155 {dimension_numbers = #tpu.dot_dimension_numbers<[1], [0], [0], [1], [0, 0, 1, 1], [], []>} : vector<4x4xbf16>, vector<4x324xbf16>, vector<4x324xf32> -> vector<4x324xf32>
      %126 = arith.addf %121, %125 : vector<4x324xf32>
      %c1_156 = arith.constant 1 : index
      %c0_157 = arith.constant 0 : index
      %c1_158 = arith.constant 1 : index
      %c0_159 = arith.constant 0 : index
      %c0_160 = arith.constant 0 : index
      %127 = vector.load %arg4[%c1_156, %c0_157, %c1_158, %c0_159, %c0_160] : memref<3x3x3x4x4xbf16, #tpu.memory_space<vmem>>, vector<1x1x1x4x4xbf16>
      %128 = vector.shape_cast %127 : vector<1x1x1x4x4xbf16> to vector<4x4xbf16>
      %129 = vector.extract_strided_slice %112 {offsets = [0, 1], sizes = [4, 324], strides = [1, 1]} : vector<4x362xbf16> to vector<4x324xbf16>
      %cst_161 = arith.constant dense<0.000000e+00> : vector<4x324xf32>
      %130 = tpu.matmul %128, %129, %cst_161 {dimension_numbers = #tpu.dot_dimension_numbers<[1], [0], [0], [1], [0, 0, 1, 1], [], []>} : vector<4x4xbf16>, vector<4x324xbf16>, vector<4x324xf32> -> vector<4x324xf32>
      %131 = arith.addf %126, %130 : vector<4x324xf32>
      %c1_162 = arith.constant 1 : index
      %c0_163 = arith.constant 0 : index
      %c1_164 = arith.constant 1 : index
      %c0_165 = arith.constant 0 : index
      %c0_166 = arith.constant 0 : index
      %132 = vector.load %arg5[%c1_162, %c0_163, %c1_164, %c0_165, %c0_166] : memref<3x3x3x4x4xbf16, #tpu.memory_space<vmem>>, vector<1x1x1x4x4xbf16>
      %133 = vector.shape_cast %132 : vector<1x1x1x4x4xbf16> to vector<4x4xbf16>
      %134 = vector.extract_strided_slice %116 {offsets = [0, 1], sizes = [4, 324], strides = [1, 1]} : vector<4x362xbf16> to vector<4x324xbf16>
      %cst_167 = arith.constant dense<0.000000e+00> : vector<4x324xf32>
      %135 = tpu.matmul %133, %134, %cst_167 {dimension_numbers = #tpu.dot_dimension_numbers<[1], [0], [0], [1], [0, 0, 1, 1], [], []>} : vector<4x4xbf16>, vector<4x324xbf16>, vector<4x324xf32> -> vector<4x324xf32>
      %136 = arith.addf %131, %135 : vector<4x324xf32>
      %c1_168 = arith.constant 1 : index
      %c0_169 = arith.constant 0 : index
      %c2_170 = arith.constant 2 : index
      %c0_171 = arith.constant 0 : index
      %c0_172 = arith.constant 0 : index
      %137 = vector.load %arg4[%c1_168, %c0_169, %c2_170, %c0_171, %c0_172] : memref<3x3x3x4x4xbf16, #tpu.memory_space<vmem>>, vector<1x1x1x4x4xbf16>
      %138 = vector.shape_cast %137 : vector<1x1x1x4x4xbf16> to vector<4x4xbf16>
      %139 = vector.extract_strided_slice %112 {offsets = [0, 2], sizes = [4, 324], strides = [1, 1]} : vector<4x362xbf16> to vector<4x324xbf16>
      %cst_173 = arith.constant dense<0.000000e+00> : vector<4x324xf32>
      %140 = tpu.matmul %138, %139, %cst_173 {dimension_numbers = #tpu.dot_dimension_numbers<[1], [0], [0], [1], [0, 0, 1, 1], [], []>} : vector<4x4xbf16>, vector<4x324xbf16>, vector<4x324xf32> -> vector<4x324xf32>
      %141 = arith.addf %136, %140 : vector<4x324xf32>
      %c1_174 = arith.constant 1 : index
      %c0_175 = arith.constant 0 : index
      %c2_176 = arith.constant 2 : index
      %c0_177 = arith.constant 0 : index
      %c0_178 = arith.constant 0 : index
      %142 = vector.load %arg5[%c1_174, %c0_175, %c2_176, %c0_177, %c0_178] : memref<3x3x3x4x4xbf16, #tpu.memory_space<vmem>>, vector<1x1x1x4x4xbf16>
      %143 = vector.shape_cast %142 : vector<1x1x1x4x4xbf16> to vector<4x4xbf16>
      %144 = vector.extract_strided_slice %116 {offsets = [0, 2], sizes = [4, 324], strides = [1, 1]} : vector<4x362xbf16> to vector<4x324xbf16>
      %cst_179 = arith.constant dense<0.000000e+00> : vector<4x324xf32>
      %145 = tpu.matmul %143, %144, %cst_179 {dimension_numbers = #tpu.dot_dimension_numbers<[1], [0], [0], [1], [0, 0, 1, 1], [], []>} : vector<4x4xbf16>, vector<4x324xbf16>, vector<4x324xf32> -> vector<4x324xf32>
      %146 = arith.addf %141, %145 : vector<4x324xf32>
      %c1_180 = arith.constant 1 : index
      %c1_181 = arith.constant 1 : index
      %c0_182 = arith.constant 0 : index
      %c0_183 = arith.constant 0 : index
      %c0_184 = arith.constant 0 : index
      %147 = vector.load %arg4[%c1_180, %c1_181, %c0_182, %c0_183, %c0_184] : memref<3x3x3x4x4xbf16, #tpu.memory_space<vmem>>, vector<1x1x1x4x4xbf16>
      %148 = vector.shape_cast %147 : vector<1x1x1x4x4xbf16> to vector<4x4xbf16>
      %149 = vector.extract_strided_slice %112 {offsets = [0, 18], sizes = [4, 324], strides = [1, 1]} : vector<4x362xbf16> to vector<4x324xbf16>
      %cst_185 = arith.constant dense<0.000000e+00> : vector<4x324xf32>
      %150 = tpu.matmul %148, %149, %cst_185 {dimension_numbers = #tpu.dot_dimension_numbers<[1], [0], [0], [1], [0, 0, 1, 1], [], []>} : vector<4x4xbf16>, vector<4x324xbf16>, vector<4x324xf32> -> vector<4x324xf32>
      %151 = arith.addf %146, %150 : vector<4x324xf32>
      %c1_186 = arith.constant 1 : index
      %c1_187 = arith.constant 1 : index
      %c0_188 = arith.constant 0 : index
      %c0_189 = arith.constant 0 : index
      %c0_190 = arith.constant 0 : index
      %152 = vector.load %arg5[%c1_186, %c1_187, %c0_188, %c0_189, %c0_190] : memref<3x3x3x4x4xbf16, #tpu.memory_space<vmem>>, vector<1x1x1x4x4xbf16>
      %153 = vector.shape_cast %152 : vector<1x1x1x4x4xbf16> to vector<4x4xbf16>
      %154 = vector.extract_strided_slice %116 {offsets = [0, 18], sizes = [4, 324], strides = [1, 1]} : vector<4x362xbf16> to vector<4x324xbf16>
      %cst_191 = arith.constant dense<0.000000e+00> : vector<4x324xf32>
      %155 = tpu.matmul %153, %154, %cst_191 {dimension_numbers = #tpu.dot_dimension_numbers<[1], [0], [0], [1], [0, 0, 1, 1], [], []>} : vector<4x4xbf16>, vector<4x324xbf16>, vector<4x324xf32> -> vector<4x324xf32>
      %156 = arith.addf %151, %155 : vector<4x324xf32>
      %c1_192 = arith.constant 1 : index
      %c1_193 = arith.constant 1 : index
      %c1_194 = arith.constant 1 : index
      %c0_195 = arith.constant 0 : index
      %c0_196 = arith.constant 0 : index
      %157 = vector.load %arg4[%c1_192, %c1_193, %c1_194, %c0_195, %c0_196] : memref<3x3x3x4x4xbf16, #tpu.memory_space<vmem>>, vector<1x1x1x4x4xbf16>
      %158 = vector.shape_cast %157 : vector<1x1x1x4x4xbf16> to vector<4x4xbf16>
      %159 = vector.extract_strided_slice %112 {offsets = [0, 19], sizes = [4, 324], strides = [1, 1]} : vector<4x362xbf16> to vector<4x324xbf16>
      %cst_197 = arith.constant dense<0.000000e+00> : vector<4x324xf32>
      %160 = tpu.matmul %158, %159, %cst_197 {dimension_numbers = #tpu.dot_dimension_numbers<[1], [0], [0], [1], [0, 0, 1, 1], [], []>} : vector<4x4xbf16>, vector<4x324xbf16>, vector<4x324xf32> -> vector<4x324xf32>
      %161 = arith.addf %156, %160 : vector<4x324xf32>
      %c1_198 = arith.constant 1 : index
      %c1_199 = arith.constant 1 : index
      %c1_200 = arith.constant 1 : index
      %c0_201 = arith.constant 0 : index
      %c0_202 = arith.constant 0 : index
      %162 = vector.load %arg5[%c1_198, %c1_199, %c1_200, %c0_201, %c0_202] : memref<3x3x3x4x4xbf16, #tpu.memory_space<vmem>>, vector<1x1x1x4x4xbf16>
      %163 = vector.shape_cast %162 : vector<1x1x1x4x4xbf16> to vector<4x4xbf16>
      %164 = vector.extract_strided_slice %116 {offsets = [0, 19], sizes = [4, 324], strides = [1, 1]} : vector<4x362xbf16> to vector<4x324xbf16>
      %cst_203 = arith.constant dense<0.000000e+00> : vector<4x324xf32>
      %165 = tpu.matmul %163, %164, %cst_203 {dimension_numbers = #tpu.dot_dimension_numbers<[1], [0], [0], [1], [0, 0, 1, 1], [], []>} : vector<4x4xbf16>, vector<4x324xbf16>, vector<4x324xf32> -> vector<4x324xf32>
      %166 = arith.addf %161, %165 : vector<4x324xf32>
      %c1_204 = arith.constant 1 : index
      %c1_205 = arith.constant 1 : index
      %c2_206 = arith.constant 2 : index
      %c0_207 = arith.constant 0 : index
      %c0_208 = arith.constant 0 : index
      %167 = vector.load %arg4[%c1_204, %c1_205, %c2_206, %c0_207, %c0_208] : memref<3x3x3x4x4xbf16, #tpu.memory_space<vmem>>, vector<1x1x1x4x4xbf16>
      %168 = vector.shape_cast %167 : vector<1x1x1x4x4xbf16> to vector<4x4xbf16>
      %169 = vector.extract_strided_slice %112 {offsets = [0, 20], sizes = [4, 324], strides = [1, 1]} : vector<4x362xbf16> to vector<4x324xbf16>
      %cst_209 = arith.constant dense<0.000000e+00> : vector<4x324xf32>
      %170 = tpu.matmul %168, %169, %cst_209 {dimension_numbers = #tpu.dot_dimension_numbers<[1], [0], [0], [1], [0, 0, 1, 1], [], []>} : vector<4x4xbf16>, vector<4x324xbf16>, vector<4x324xf32> -> vector<4x324xf32>
      %171 = arith.addf %166, %170 : vector<4x324xf32>
      %c1_210 = arith.constant 1 : index
      %c1_211 = arith.constant 1 : index
      %c2_212 = arith.constant 2 : index
      %c0_213 = arith.constant 0 : index
      %c0_214 = arith.constant 0 : index
      %172 = vector.load %arg5[%c1_210, %c1_211, %c2_212, %c0_213, %c0_214] : memref<3x3x3x4x4xbf16, #tpu.memory_space<vmem>>, vector<1x1x1x4x4xbf16>
      %173 = vector.shape_cast %172 : vector<1x1x1x4x4xbf16> to vector<4x4xbf16>
      %174 = vector.extract_strided_slice %116 {offsets = [0, 20], sizes = [4, 324], strides = [1, 1]} : vector<4x362xbf16> to vector<4x324xbf16>
      %cst_215 = arith.constant dense<0.000000e+00> : vector<4x324xf32>
      %175 = tpu.matmul %173, %174, %cst_215 {dimension_numbers = #tpu.dot_dimension_numbers<[1], [0], [0], [1], [0, 0, 1, 1], [], []>} : vector<4x4xbf16>, vector<4x324xbf16>, vector<4x324xf32> -> vector<4x324xf32>
      %176 = arith.addf %171, %175 : vector<4x324xf32>
      %c1_216 = arith.constant 1 : index
      %c2_217 = arith.constant 2 : index
      %c0_218 = arith.constant 0 : index
      %c0_219 = arith.constant 0 : index
      %c0_220 = arith.constant 0 : index
      %177 = vector.load %arg4[%c1_216, %c2_217, %c0_218, %c0_219, %c0_220] : memref<3x3x3x4x4xbf16, #tpu.memory_space<vmem>>, vector<1x1x1x4x4xbf16>
      %178 = vector.shape_cast %177 : vector<1x1x1x4x4xbf16> to vector<4x4xbf16>
      %179 = vector.extract_strided_slice %112 {offsets = [0, 36], sizes = [4, 324], strides = [1, 1]} : vector<4x362xbf16> to vector<4x324xbf16>
      %cst_221 = arith.constant dense<0.000000e+00> : vector<4x324xf32>
      %180 = tpu.matmul %178, %179, %cst_221 {dimension_numbers = #tpu.dot_dimension_numbers<[1], [0], [0], [1], [0, 0, 1, 1], [], []>} : vector<4x4xbf16>, vector<4x324xbf16>, vector<4x324xf32> -> vector<4x324xf32>
      %181 = arith.addf %176, %180 : vector<4x324xf32>
      %c1_222 = arith.constant 1 : index
      %c2_223 = arith.constant 2 : index
      %c0_224 = arith.constant 0 : index
      %c0_225 = arith.constant 0 : index
      %c0_226 = arith.constant 0 : index
      %182 = vector.load %arg5[%c1_222, %c2_223, %c0_224, %c0_225, %c0_226] : memref<3x3x3x4x4xbf16, #tpu.memory_space<vmem>>, vector<1x1x1x4x4xbf16>
      %183 = vector.shape_cast %182 : vector<1x1x1x4x4xbf16> to vector<4x4xbf16>
      %184 = vector.extract_strided_slice %116 {offsets = [0, 36], sizes = [4, 324], strides = [1, 1]} : vector<4x362xbf16> to vector<4x324xbf16>
      %cst_227 = arith.constant dense<0.000000e+00> : vector<4x324xf32>
      %185 = tpu.matmul %183, %184, %cst_227 {dimension_numbers = #tpu.dot_dimension_numbers<[1], [0], [0], [1], [0, 0, 1, 1], [], []>} : vector<4x4xbf16>, vector<4x324xbf16>, vector<4x324xf32> -> vector<4x324xf32>
      %186 = arith.addf %181, %185 : vector<4x324xf32>
      %c1_228 = arith.constant 1 : index
      %c2_229 = arith.constant 2 : index
      %c1_230 = arith.constant 1 : index
      %c0_231 = arith.constant 0 : index
      %c0_232 = arith.constant 0 : index
      %187 = vector.load %arg4[%c1_228, %c2_229, %c1_230, %c0_231, %c0_232] : memref<3x3x3x4x4xbf16, #tpu.memory_space<vmem>>, vector<1x1x1x4x4xbf16>
      %188 = vector.shape_cast %187 : vector<1x1x1x4x4xbf16> to vector<4x4xbf16>
      %189 = vector.extract_strided_slice %112 {offsets = [0, 37], sizes = [4, 324], strides = [1, 1]} : vector<4x362xbf16> to vector<4x324xbf16>
      %cst_233 = arith.constant dense<0.000000e+00> : vector<4x324xf32>
      %190 = tpu.matmul %188, %189, %cst_233 {dimension_numbers = #tpu.dot_dimension_numbers<[1], [0], [0], [1], [0, 0, 1, 1], [], []>} : vector<4x4xbf16>, vector<4x324xbf16>, vector<4x324xf32> -> vector<4x324xf32>
      %191 = arith.addf %186, %190 : vector<4x324xf32>
      %c1_234 = arith.constant 1 : index
      %c2_235 = arith.constant 2 : index
      %c1_236 = arith.constant 1 : index
      %c0_237 = arith.constant 0 : index
      %c0_238 = arith.constant 0 : index
      %192 = vector.load %arg5[%c1_234, %c2_235, %c1_236, %c0_237, %c0_238] : memref<3x3x3x4x4xbf16, #tpu.memory_space<vmem>>, vector<1x1x1x4x4xbf16>
      %193 = vector.shape_cast %192 : vector<1x1x1x4x4xbf16> to vector<4x4xbf16>
      %194 = vector.extract_strided_slice %116 {offsets = [0, 37], sizes = [4, 324], strides = [1, 1]} : vector<4x362xbf16> to vector<4x324xbf16>
      %cst_239 = arith.constant dense<0.000000e+00> : vector<4x324xf32>
      %195 = tpu.matmul %193, %194, %cst_239 {dimension_numbers = #tpu.dot_dimension_numbers<[1], [0], [0], [1], [0, 0, 1, 1], [], []>} : vector<4x4xbf16>, vector<4x324xbf16>, vector<4x324xf32> -> vector<4x324xf32>
      %196 = arith.addf %191, %195 : vector<4x324xf32>
      %c1_240 = arith.constant 1 : index
      %c2_241 = arith.constant 2 : index
      %c2_242 = arith.constant 2 : index
      %c0_243 = arith.constant 0 : index
      %c0_244 = arith.constant 0 : index
      %197 = vector.load %arg4[%c1_240, %c2_241, %c2_242, %c0_243, %c0_244] : memref<3x3x3x4x4xbf16, #tpu.memory_space<vmem>>, vector<1x1x1x4x4xbf16>
      %198 = vector.shape_cast %197 : vector<1x1x1x4x4xbf16> to vector<4x4xbf16>
      %199 = vector.extract_strided_slice %112 {offsets = [0, 38], sizes = [4, 324], strides = [1, 1]} : vector<4x362xbf16> to vector<4x324xbf16>
      %cst_245 = arith.constant dense<0.000000e+00> : vector<4x324xf32>
      %200 = tpu.matmul %198, %199, %cst_245 {dimension_numbers = #tpu.dot_dimension_numbers<[1], [0], [0], [1], [0, 0, 1, 1], [], []>} : vector<4x4xbf16>, vector<4x324xbf16>, vector<4x324xf32> -> vector<4x324xf32>
      %201 = arith.addf %196, %200 : vector<4x324xf32>
      %c1_246 = arith.constant 1 : index
      %c2_247 = arith.constant 2 : index
      %c2_248 = arith.constant 2 : index
      %c0_249 = arith.constant 0 : index
      %c0_250 = arith.constant 0 : index
      %202 = vector.load %arg5[%c1_246, %c2_247, %c2_248, %c0_249, %c0_250] : memref<3x3x3x4x4xbf16, #tpu.memory_space<vmem>>, vector<1x1x1x4x4xbf16>
      %203 = vector.shape_cast %202 : vector<1x1x1x4x4xbf16> to vector<4x4xbf16>
      %204 = vector.extract_strided_slice %116 {offsets = [0, 38], sizes = [4, 324], strides = [1, 1]} : vector<4x362xbf16> to vector<4x324xbf16>
      %cst_251 = arith.constant dense<0.000000e+00> : vector<4x324xf32>
      %205 = tpu.matmul %203, %204, %cst_251 {dimension_numbers = #tpu.dot_dimension_numbers<[1], [0], [0], [1], [0, 0, 1, 1], [], []>} : vector<4x4xbf16>, vector<4x324xbf16>, vector<4x324xf32> -> vector<4x324xf32>
      %206 = arith.addf %201, %205 : vector<4x324xf32>
      %c2_i32 = arith.constant 2 : i32
      %207 = arith.addi %arg14, %c2_i32 : i32
      %c0_252 = arith.constant 0 : index
      %c0_253 = arith.constant 0 : index
      %208 = arith.index_cast %207 : i32 to index
      %c0_254 = arith.constant 0 : index
      %c0_255 = arith.constant 0 : index
      %209 = vector.load %arg2[%c0_252, %c0_253, %208, %c0_254, %c0_255] : memref<1x1x12x4x362xbf16, #tpu.memory_space<vmem>>, vector<1x1x1x4x362xbf16>
      %210 = vector.shape_cast %209 : vector<1x1x1x4x362xbf16> to vector<4x362xbf16>
      %c2_i32_256 = arith.constant 2 : i32
      %211 = arith.addi %arg14, %c2_i32_256 : i32
      %c0_257 = arith.constant 0 : index
      %c0_258 = arith.constant 0 : index
      %212 = arith.index_cast %211 : i32 to index
      %c0_259 = arith.constant 0 : index
      %c0_260 = arith.constant 0 : index
      %213 = vector.load %arg3[%c0_257, %c0_258, %212, %c0_259, %c0_260] : memref<1x1x12x4x362xbf16, #tpu.memory_space<vmem>>, vector<1x1x1x4x362xbf16>
      %214 = vector.shape_cast %213 : vector<1x1x1x4x362xbf16> to vector<4x362xbf16>
      %c2_261 = arith.constant 2 : index
      %c0_262 = arith.constant 0 : index
      %c0_263 = arith.constant 0 : index
      %c0_264 = arith.constant 0 : index
      %c0_265 = arith.constant 0 : index
      %215 = vector.load %arg4[%c2_261, %c0_262, %c0_263, %c0_264, %c0_265] : memref<3x3x3x4x4xbf16, #tpu.memory_space<vmem>>, vector<1x1x1x4x4xbf16>
      %216 = vector.shape_cast %215 : vector<1x1x1x4x4xbf16> to vector<4x4xbf16>
      %217 = vector.extract_strided_slice %210 {offsets = [0, 0], sizes = [4, 324], strides = [1, 1]} : vector<4x362xbf16> to vector<4x324xbf16>
      %cst_266 = arith.constant dense<0.000000e+00> : vector<4x324xf32>
      %218 = tpu.matmul %216, %217, %cst_266 {dimension_numbers = #tpu.dot_dimension_numbers<[1], [0], [0], [1], [0, 0, 1, 1], [], []>} : vector<4x4xbf16>, vector<4x324xbf16>, vector<4x324xf32> -> vector<4x324xf32>
      %219 = arith.addf %206, %218 : vector<4x324xf32>
      %c2_267 = arith.constant 2 : index
      %c0_268 = arith.constant 0 : index
      %c0_269 = arith.constant 0 : index
      %c0_270 = arith.constant 0 : index
      %c0_271 = arith.constant 0 : index
      %220 = vector.load %arg5[%c2_267, %c0_268, %c0_269, %c0_270, %c0_271] : memref<3x3x3x4x4xbf16, #tpu.memory_space<vmem>>, vector<1x1x1x4x4xbf16>
      %221 = vector.shape_cast %220 : vector<1x1x1x4x4xbf16> to vector<4x4xbf16>
      %222 = vector.extract_strided_slice %214 {offsets = [0, 0], sizes = [4, 324], strides = [1, 1]} : vector<4x362xbf16> to vector<4x324xbf16>
      %cst_272 = arith.constant dense<0.000000e+00> : vector<4x324xf32>
      %223 = tpu.matmul %221, %222, %cst_272 {dimension_numbers = #tpu.dot_dimension_numbers<[1], [0], [0], [1], [0, 0, 1, 1], [], []>} : vector<4x4xbf16>, vector<4x324xbf16>, vector<4x324xf32> -> vector<4x324xf32>
      %224 = arith.addf %219, %223 : vector<4x324xf32>
      %c2_273 = arith.constant 2 : index
      %c0_274 = arith.constant 0 : index
      %c1_275 = arith.constant 1 : index
      %c0_276 = arith.constant 0 : index
      %c0_277 = arith.constant 0 : index
      %225 = vector.load %arg4[%c2_273, %c0_274, %c1_275, %c0_276, %c0_277] : memref<3x3x3x4x4xbf16, #tpu.memory_space<vmem>>, vector<1x1x1x4x4xbf16>
      %226 = vector.shape_cast %225 : vector<1x1x1x4x4xbf16> to vector<4x4xbf16>
      %227 = vector.extract_strided_slice %210 {offsets = [0, 1], sizes = [4, 324], strides = [1, 1]} : vector<4x362xbf16> to vector<4x324xbf16>
      %cst_278 = arith.constant dense<0.000000e+00> : vector<4x324xf32>
      %228 = tpu.matmul %226, %227, %cst_278 {dimension_numbers = #tpu.dot_dimension_numbers<[1], [0], [0], [1], [0, 0, 1, 1], [], []>} : vector<4x4xbf16>, vector<4x324xbf16>, vector<4x324xf32> -> vector<4x324xf32>
      %229 = arith.addf %224, %228 : vector<4x324xf32>
      %c2_279 = arith.constant 2 : index
      %c0_280 = arith.constant 0 : index
      %c1_281 = arith.constant 1 : index
      %c0_282 = arith.constant 0 : index
      %c0_283 = arith.constant 0 : index
      %230 = vector.load %arg5[%c2_279, %c0_280, %c1_281, %c0_282, %c0_283] : memref<3x3x3x4x4xbf16, #tpu.memory_space<vmem>>, vector<1x1x1x4x4xbf16>
      %231 = vector.shape_cast %230 : vector<1x1x1x4x4xbf16> to vector<4x4xbf16>
      %232 = vector.extract_strided_slice %214 {offsets = [0, 1], sizes = [4, 324], strides = [1, 1]} : vector<4x362xbf16> to vector<4x324xbf16>
      %cst_284 = arith.constant dense<0.000000e+00> : vector<4x324xf32>
      %233 = tpu.matmul %231, %232, %cst_284 {dimension_numbers = #tpu.dot_dimension_numbers<[1], [0], [0], [1], [0, 0, 1, 1], [], []>} : vector<4x4xbf16>, vector<4x324xbf16>, vector<4x324xf32> -> vector<4x324xf32>
      %234 = arith.addf %229, %233 : vector<4x324xf32>
      %c2_285 = arith.constant 2 : index
      %c0_286 = arith.constant 0 : index
      %c2_287 = arith.constant 2 : index
      %c0_288 = arith.constant 0 : index
      %c0_289 = arith.constant 0 : index
      %235 = vector.load %arg4[%c2_285, %c0_286, %c2_287, %c0_288, %c0_289] : memref<3x3x3x4x4xbf16, #tpu.memory_space<vmem>>, vector<1x1x1x4x4xbf16>
      %236 = vector.shape_cast %235 : vector<1x1x1x4x4xbf16> to vector<4x4xbf16>
      %237 = vector.extract_strided_slice %210 {offsets = [0, 2], sizes = [4, 324], strides = [1, 1]} : vector<4x362xbf16> to vector<4x324xbf16>
      %cst_290 = arith.constant dense<0.000000e+00> : vector<4x324xf32>
      %238 = tpu.matmul %236, %237, %cst_290 {dimension_numbers = #tpu.dot_dimension_numbers<[1], [0], [0], [1], [0, 0, 1, 1], [], []>} : vector<4x4xbf16>, vector<4x324xbf16>, vector<4x324xf32> -> vector<4x324xf32>
      %239 = arith.addf %234, %238 : vector<4x324xf32>
      %c2_291 = arith.constant 2 : index
      %c0_292 = arith.constant 0 : index
      %c2_293 = arith.constant 2 : index
      %c0_294 = arith.constant 0 : index
      %c0_295 = arith.constant 0 : index
      %240 = vector.load %arg5[%c2_291, %c0_292, %c2_293, %c0_294, %c0_295] : memref<3x3x3x4x4xbf16, #tpu.memory_space<vmem>>, vector<1x1x1x4x4xbf16>
      %241 = vector.shape_cast %240 : vector<1x1x1x4x4xbf16> to vector<4x4xbf16>
      %242 = vector.extract_strided_slice %214 {offsets = [0, 2], sizes = [4, 324], strides = [1, 1]} : vector<4x362xbf16> to vector<4x324xbf16>
      %cst_296 = arith.constant dense<0.000000e+00> : vector<4x324xf32>
      %243 = tpu.matmul %241, %242, %cst_296 {dimension_numbers = #tpu.dot_dimension_numbers<[1], [0], [0], [1], [0, 0, 1, 1], [], []>} : vector<4x4xbf16>, vector<4x324xbf16>, vector<4x324xf32> -> vector<4x324xf32>
      %244 = arith.addf %239, %243 : vector<4x324xf32>
      %c2_297 = arith.constant 2 : index
      %c1_298 = arith.constant 1 : index
      %c0_299 = arith.constant 0 : index
      %c0_300 = arith.constant 0 : index
      %c0_301 = arith.constant 0 : index
      %245 = vector.load %arg4[%c2_297, %c1_298, %c0_299, %c0_300, %c0_301] : memref<3x3x3x4x4xbf16, #tpu.memory_space<vmem>>, vector<1x1x1x4x4xbf16>
      %246 = vector.shape_cast %245 : vector<1x1x1x4x4xbf16> to vector<4x4xbf16>
      %247 = vector.extract_strided_slice %210 {offsets = [0, 18], sizes = [4, 324], strides = [1, 1]} : vector<4x362xbf16> to vector<4x324xbf16>
      %cst_302 = arith.constant dense<0.000000e+00> : vector<4x324xf32>
      %248 = tpu.matmul %246, %247, %cst_302 {dimension_numbers = #tpu.dot_dimension_numbers<[1], [0], [0], [1], [0, 0, 1, 1], [], []>} : vector<4x4xbf16>, vector<4x324xbf16>, vector<4x324xf32> -> vector<4x324xf32>
      %249 = arith.addf %244, %248 : vector<4x324xf32>
      %c2_303 = arith.constant 2 : index
      %c1_304 = arith.constant 1 : index
      %c0_305 = arith.constant 0 : index
      %c0_306 = arith.constant 0 : index
      %c0_307 = arith.constant 0 : index
      %250 = vector.load %arg5[%c2_303, %c1_304, %c0_305, %c0_306, %c0_307] : memref<3x3x3x4x4xbf16, #tpu.memory_space<vmem>>, vector<1x1x1x4x4xbf16>
      %251 = vector.shape_cast %250 : vector<1x1x1x4x4xbf16> to vector<4x4xbf16>
      %252 = vector.extract_strided_slice %214 {offsets = [0, 18], sizes = [4, 324], strides = [1, 1]} : vector<4x362xbf16> to vector<4x324xbf16>
      %cst_308 = arith.constant dense<0.000000e+00> : vector<4x324xf32>
      %253 = tpu.matmul %251, %252, %cst_308 {dimension_numbers = #tpu.dot_dimension_numbers<[1], [0], [0], [1], [0, 0, 1, 1], [], []>} : vector<4x4xbf16>, vector<4x324xbf16>, vector<4x324xf32> -> vector<4x324xf32>
      %254 = arith.addf %249, %253 : vector<4x324xf32>
      %c2_309 = arith.constant 2 : index
      %c1_310 = arith.constant 1 : index
      %c1_311 = arith.constant 1 : index
      %c0_312 = arith.constant 0 : index
      %c0_313 = arith.constant 0 : index
      %255 = vector.load %arg4[%c2_309, %c1_310, %c1_311, %c0_312, %c0_313] : memref<3x3x3x4x4xbf16, #tpu.memory_space<vmem>>, vector<1x1x1x4x4xbf16>
      %256 = vector.shape_cast %255 : vector<1x1x1x4x4xbf16> to vector<4x4xbf16>
      %257 = vector.extract_strided_slice %210 {offsets = [0, 19], sizes = [4, 324], strides = [1, 1]} : vector<4x362xbf16> to vector<4x324xbf16>
      %cst_314 = arith.constant dense<0.000000e+00> : vector<4x324xf32>
      %258 = tpu.matmul %256, %257, %cst_314 {dimension_numbers = #tpu.dot_dimension_numbers<[1], [0], [0], [1], [0, 0, 1, 1], [], []>} : vector<4x4xbf16>, vector<4x324xbf16>, vector<4x324xf32> -> vector<4x324xf32>
      %259 = arith.addf %254, %258 : vector<4x324xf32>
      %c2_315 = arith.constant 2 : index
      %c1_316 = arith.constant 1 : index
      %c1_317 = arith.constant 1 : index
      %c0_318 = arith.constant 0 : index
      %c0_319 = arith.constant 0 : index
      %260 = vector.load %arg5[%c2_315, %c1_316, %c1_317, %c0_318, %c0_319] : memref<3x3x3x4x4xbf16, #tpu.memory_space<vmem>>, vector<1x1x1x4x4xbf16>
      %261 = vector.shape_cast %260 : vector<1x1x1x4x4xbf16> to vector<4x4xbf16>
      %262 = vector.extract_strided_slice %214 {offsets = [0, 19], sizes = [4, 324], strides = [1, 1]} : vector<4x362xbf16> to vector<4x324xbf16>
      %cst_320 = arith.constant dense<0.000000e+00> : vector<4x324xf32>
      %263 = tpu.matmul %261, %262, %cst_320 {dimension_numbers = #tpu.dot_dimension_numbers<[1], [0], [0], [1], [0, 0, 1, 1], [], []>} : vector<4x4xbf16>, vector<4x324xbf16>, vector<4x324xf32> -> vector<4x324xf32>
      %264 = arith.addf %259, %263 : vector<4x324xf32>
      %c2_321 = arith.constant 2 : index
      %c1_322 = arith.constant 1 : index
      %c2_323 = arith.constant 2 : index
      %c0_324 = arith.constant 0 : index
      %c0_325 = arith.constant 0 : index
      %265 = vector.load %arg4[%c2_321, %c1_322, %c2_323, %c0_324, %c0_325] : memref<3x3x3x4x4xbf16, #tpu.memory_space<vmem>>, vector<1x1x1x4x4xbf16>
      %266 = vector.shape_cast %265 : vector<1x1x1x4x4xbf16> to vector<4x4xbf16>
      %267 = vector.extract_strided_slice %210 {offsets = [0, 20], sizes = [4, 324], strides = [1, 1]} : vector<4x362xbf16> to vector<4x324xbf16>
      %cst_326 = arith.constant dense<0.000000e+00> : vector<4x324xf32>
      %268 = tpu.matmul %266, %267, %cst_326 {dimension_numbers = #tpu.dot_dimension_numbers<[1], [0], [0], [1], [0, 0, 1, 1], [], []>} : vector<4x4xbf16>, vector<4x324xbf16>, vector<4x324xf32> -> vector<4x324xf32>
      %269 = arith.addf %264, %268 : vector<4x324xf32>
      %c2_327 = arith.constant 2 : index
      %c1_328 = arith.constant 1 : index
      %c2_329 = arith.constant 2 : index
      %c0_330 = arith.constant 0 : index
      %c0_331 = arith.constant 0 : index
      %270 = vector.load %arg5[%c2_327, %c1_328, %c2_329, %c0_330, %c0_331] : memref<3x3x3x4x4xbf16, #tpu.memory_space<vmem>>, vector<1x1x1x4x4xbf16>
      %271 = vector.shape_cast %270 : vector<1x1x1x4x4xbf16> to vector<4x4xbf16>
      %272 = vector.extract_strided_slice %214 {offsets = [0, 20], sizes = [4, 324], strides = [1, 1]} : vector<4x362xbf16> to vector<4x324xbf16>
      %cst_332 = arith.constant dense<0.000000e+00> : vector<4x324xf32>
      %273 = tpu.matmul %271, %272, %cst_332 {dimension_numbers = #tpu.dot_dimension_numbers<[1], [0], [0], [1], [0, 0, 1, 1], [], []>} : vector<4x4xbf16>, vector<4x324xbf16>, vector<4x324xf32> -> vector<4x324xf32>
      %274 = arith.addf %269, %273 : vector<4x324xf32>
      %c2_333 = arith.constant 2 : index
      %c2_334 = arith.constant 2 : index
      %c0_335 = arith.constant 0 : index
      %c0_336 = arith.constant 0 : index
      %c0_337 = arith.constant 0 : index
      %275 = vector.load %arg4[%c2_333, %c2_334, %c0_335, %c0_336, %c0_337] : memref<3x3x3x4x4xbf16, #tpu.memory_space<vmem>>, vector<1x1x1x4x4xbf16>
      %276 = vector.shape_cast %275 : vector<1x1x1x4x4xbf16> to vector<4x4xbf16>
      %277 = vector.extract_strided_slice %210 {offsets = [0, 36], sizes = [4, 324], strides = [1, 1]} : vector<4x362xbf16> to vector<4x324xbf16>
      %cst_338 = arith.constant dense<0.000000e+00> : vector<4x324xf32>
      %278 = tpu.matmul %276, %277, %cst_338 {dimension_numbers = #tpu.dot_dimension_numbers<[1], [0], [0], [1], [0, 0, 1, 1], [], []>} : vector<4x4xbf16>, vector<4x324xbf16>, vector<4x324xf32> -> vector<4x324xf32>
      %279 = arith.addf %274, %278 : vector<4x324xf32>
      %c2_339 = arith.constant 2 : index
      %c2_340 = arith.constant 2 : index
      %c0_341 = arith.constant 0 : index
      %c0_342 = arith.constant 0 : index
      %c0_343 = arith.constant 0 : index
      %280 = vector.load %arg5[%c2_339, %c2_340, %c0_341, %c0_342, %c0_343] : memref<3x3x3x4x4xbf16, #tpu.memory_space<vmem>>, vector<1x1x1x4x4xbf16>
      %281 = vector.shape_cast %280 : vector<1x1x1x4x4xbf16> to vector<4x4xbf16>
      %282 = vector.extract_strided_slice %214 {offsets = [0, 36], sizes = [4, 324], strides = [1, 1]} : vector<4x362xbf16> to vector<4x324xbf16>
      %cst_344 = arith.constant dense<0.000000e+00> : vector<4x324xf32>
      %283 = tpu.matmul %281, %282, %cst_344 {dimension_numbers = #tpu.dot_dimension_numbers<[1], [0], [0], [1], [0, 0, 1, 1], [], []>} : vector<4x4xbf16>, vector<4x324xbf16>, vector<4x324xf32> -> vector<4x324xf32>
      %284 = arith.addf %279, %283 : vector<4x324xf32>
      %c2_345 = arith.constant 2 : index
      %c2_346 = arith.constant 2 : index
      %c1_347 = arith.constant 1 : index
      %c0_348 = arith.constant 0 : index
      %c0_349 = arith.constant 0 : index
      %285 = vector.load %arg4[%c2_345, %c2_346, %c1_347, %c0_348, %c0_349] : memref<3x3x3x4x4xbf16, #tpu.memory_space<vmem>>, vector<1x1x1x4x4xbf16>
      %286 = vector.shape_cast %285 : vector<1x1x1x4x4xbf16> to vector<4x4xbf16>
      %287 = vector.extract_strided_slice %210 {offsets = [0, 37], sizes = [4, 324], strides = [1, 1]} : vector<4x362xbf16> to vector<4x324xbf16>
      %cst_350 = arith.constant dense<0.000000e+00> : vector<4x324xf32>
      %288 = tpu.matmul %286, %287, %cst_350 {dimension_numbers = #tpu.dot_dimension_numbers<[1], [0], [0], [1], [0, 0, 1, 1], [], []>} : vector<4x4xbf16>, vector<4x324xbf16>, vector<4x324xf32> -> vector<4x324xf32>
      %289 = arith.addf %284, %288 : vector<4x324xf32>
      %c2_351 = arith.constant 2 : index
      %c2_352 = arith.constant 2 : index
      %c1_353 = arith.constant 1 : index
      %c0_354 = arith.constant 0 : index
      %c0_355 = arith.constant 0 : index
      %290 = vector.load %arg5[%c2_351, %c2_352, %c1_353, %c0_354, %c0_355] : memref<3x3x3x4x4xbf16, #tpu.memory_space<vmem>>, vector<1x1x1x4x4xbf16>
      %291 = vector.shape_cast %290 : vector<1x1x1x4x4xbf16> to vector<4x4xbf16>
      %292 = vector.extract_strided_slice %214 {offsets = [0, 37], sizes = [4, 324], strides = [1, 1]} : vector<4x362xbf16> to vector<4x324xbf16>
      %cst_356 = arith.constant dense<0.000000e+00> : vector<4x324xf32>
      %293 = tpu.matmul %291, %292, %cst_356 {dimension_numbers = #tpu.dot_dimension_numbers<[1], [0], [0], [1], [0, 0, 1, 1], [], []>} : vector<4x4xbf16>, vector<4x324xbf16>, vector<4x324xf32> -> vector<4x324xf32>
      %294 = arith.addf %289, %293 : vector<4x324xf32>
      %c2_357 = arith.constant 2 : index
      %c2_358 = arith.constant 2 : index
      %c2_359 = arith.constant 2 : index
      %c0_360 = arith.constant 0 : index
      %c0_361 = arith.constant 0 : index
      %295 = vector.load %arg4[%c2_357, %c2_358, %c2_359, %c0_360, %c0_361] : memref<3x3x3x4x4xbf16, #tpu.memory_space<vmem>>, vector<1x1x1x4x4xbf16>
      %296 = vector.shape_cast %295 : vector<1x1x1x4x4xbf16> to vector<4x4xbf16>
      %297 = vector.extract_strided_slice %210 {offsets = [0, 38], sizes = [4, 324], strides = [1, 1]} : vector<4x362xbf16> to vector<4x324xbf16>
      %cst_362 = arith.constant dense<0.000000e+00> : vector<4x324xf32>
      %298 = tpu.matmul %296, %297, %cst_362 {dimension_numbers = #tpu.dot_dimension_numbers<[1], [0], [0], [1], [0, 0, 1, 1], [], []>} : vector<4x4xbf16>, vector<4x324xbf16>, vector<4x324xf32> -> vector<4x324xf32>
      %299 = arith.addf %294, %298 : vector<4x324xf32>
      %c2_363 = arith.constant 2 : index
      %c2_364 = arith.constant 2 : index
      %c2_365 = arith.constant 2 : index
      %c0_366 = arith.constant 0 : index
      %c0_367 = arith.constant 0 : index
      %300 = vector.load %arg5[%c2_363, %c2_364, %c2_365, %c0_366, %c0_367] : memref<3x3x3x4x4xbf16, #tpu.memory_space<vmem>>, vector<1x1x1x4x4xbf16>
      %301 = vector.shape_cast %300 : vector<1x1x1x4x4xbf16> to vector<4x4xbf16>
      %302 = vector.extract_strided_slice %214 {offsets = [0, 38], sizes = [4, 324], strides = [1, 1]} : vector<4x362xbf16> to vector<4x324xbf16>
      %cst_368 = arith.constant dense<0.000000e+00> : vector<4x324xf32>
      %303 = tpu.matmul %301, %302, %cst_368 {dimension_numbers = #tpu.dot_dimension_numbers<[1], [0], [0], [1], [0, 0, 1, 1], [], []>} : vector<4x4xbf16>, vector<4x324xbf16>, vector<4x324xf32> -> vector<4x324xf32>
      %304 = arith.addf %299, %303 : vector<4x324xf32>
      %305 = vector.broadcast %1 : vector<4x1xf32> to vector<4x324xf32>
      %306 = arith.mulf %304, %305 : vector<4x324xf32>
      %307 = vector.broadcast %2 : vector<4x1xf32> to vector<4x324xf32>
      %308 = arith.addf %306, %307 : vector<4x324xf32>
      %cst_369 = arith.constant 0.000000e+00 : f32
      %309 = vector.broadcast %cst_369 : f32 to vector<4x324xf32>
      %310 = arith.maximumf %308, %309 : vector<4x324xf32>
      %311 = arith.addi %0, %arg14 : i32
      %c1_i32_370 = arith.constant 1 : i32
      %312 = arith.subi %311, %c1_i32_370 : i32
      %c0_i32_371 = arith.constant 0 : i32
      %313 = arith.cmpi sge, %312, %c0_i32_371 : i32
      %c8_i32_372 = arith.constant 8 : i32
      %314 = arith.cmpi slt, %312, %c8_i32_372 : i32
      %315 = arith.andi %313, %314 : i1
      %316 = vector.broadcast %5 : vector<1x324xf32> to vector<4x324xf32>
      %317 = arith.mulf %310, %316 : vector<4x324xf32>
      %cst_373 = arith.constant 0.000000e+00 : f32
      %318 = vector.broadcast %cst_373 : f32 to vector<4x324xf32>
      %319 = arith.select %315, %317, %318 : vector<4x324xf32>
      %320 = arith.truncf %319 : vector<4x324xf32> to vector<4x324xbf16>
      %321 = arith.index_cast %arg14 : i32 to index
      %c0_374 = arith.constant 0 : index
      %c0_375 = arith.constant 0 : index
      %322 = vector.load %arg13[%321, %c0_374, %c0_375] : memref<10x4x362xbf16, #tpu.memory_space<vmem>>, vector<1x4x324xbf16>
      %323 = vector.shape_cast %322 : vector<1x4x324xbf16> to vector<4x324xbf16>
      %324 = vector.shape_cast %320 : vector<4x324xbf16> to vector<1x4x324xbf16>
      tpu.vector_store %arg13[%321, %c0_374, %c0_375], %324 {strides = array<i32>} : memref<10x4x362xbf16, #tpu.memory_space<vmem>>, vector<1x4x324xbf16>,
    }
    %c10_i32_12 = arith.constant 10 : i32
    %c0_i32_13 = arith.constant 0 : i32
    %c8_i32_14 = arith.constant 8 : i32
    %9 = arith.addi %c0_i32_13, %c8_i32_14 : i32
    %c1_i32_15 = arith.constant 1 : i32
    scf.for %arg14 = %c0_i32_13 to %9 step %c1_i32_15  : i32 {
      %cst_17 = arith.constant 0.000000e+00 : f32
      %10 = vector.broadcast %cst_17 : f32 to vector<4x324xf32>
      %c0_i32_18 = arith.constant 0 : i32
      %11 = arith.addi %arg14, %c0_i32_18 : i32
      %12 = arith.index_cast %11 : i32 to index
      %c0_19 = arith.constant 0 : index
      %c0_20 = arith.constant 0 : index
      %13 = vector.load %arg13[%12, %c0_19, %c0_20] : memref<10x4x362xbf16, #tpu.memory_space<vmem>>, vector<1x4x362xbf16>
      %14 = vector.shape_cast %13 : vector<1x4x362xbf16> to vector<4x362xbf16>
      %c0_21 = arith.constant 0 : index
      %c0_22 = arith.constant 0 : index
      %c0_23 = arith.constant 0 : index
      %c0_24 = arith.constant 0 : index
      %c0_25 = arith.constant 0 : index
      %15 = vector.load %arg6[%c0_21, %c0_22, %c0_23, %c0_24, %c0_25] : memref<3x3x3x4x4xbf16, #tpu.memory_space<vmem>>, vector<1x1x1x4x4xbf16>
      %16 = vector.shape_cast %15 : vector<1x1x1x4x4xbf16> to vector<4x4xbf16>
      %17 = vector.extract_strided_slice %14 {offsets = [0, 0], sizes = [4, 324], strides = [1, 1]} : vector<4x362xbf16> to vector<4x324xbf16>
      %cst_26 = arith.constant dense<0.000000e+00> : vector<4x324xf32>
      %18 = tpu.matmul %16, %17, %cst_26 {dimension_numbers = #tpu.dot_dimension_numbers<[1], [0], [0], [1], [0, 0, 1, 1], [], []>} : vector<4x4xbf16>, vector<4x324xbf16>, vector<4x324xf32> -> vector<4x324xf32>
      %19 = arith.addf %10, %18 : vector<4x324xf32>
      %c0_27 = arith.constant 0 : index
      %c0_28 = arith.constant 0 : index
      %c1 = arith.constant 1 : index
      %c0_29 = arith.constant 0 : index
      %c0_30 = arith.constant 0 : index
      %20 = vector.load %arg6[%c0_27, %c0_28, %c1, %c0_29, %c0_30] : memref<3x3x3x4x4xbf16, #tpu.memory_space<vmem>>, vector<1x1x1x4x4xbf16>
      %21 = vector.shape_cast %20 : vector<1x1x1x4x4xbf16> to vector<4x4xbf16>
      %22 = vector.extract_strided_slice %14 {offsets = [0, 1], sizes = [4, 324], strides = [1, 1]} : vector<4x362xbf16> to vector<4x324xbf16>
      %cst_31 = arith.constant dense<0.000000e+00> : vector<4x324xf32>
      %23 = tpu.matmul %21, %22, %cst_31 {dimension_numbers = #tpu.dot_dimension_numbers<[1], [0], [0], [1], [0, 0, 1, 1], [], []>} : vector<4x4xbf16>, vector<4x324xbf16>, vector<4x324xf32> -> vector<4x324xf32>
      %24 = arith.addf %19, %23 : vector<4x324xf32>
      %c0_32 = arith.constant 0 : index
      %c0_33 = arith.constant 0 : index
      %c2 = arith.constant 2 : index
      %c0_34 = arith.constant 0 : index
      %c0_35 = arith.constant 0 : index
      %25 = vector.load %arg6[%c0_32, %c0_33, %c2, %c0_34, %c0_35] : memref<3x3x3x4x4xbf16, #tpu.memory_space<vmem>>, vector<1x1x1x4x4xbf16>
      %26 = vector.shape_cast %25 : vector<1x1x1x4x4xbf16> to vector<4x4xbf16>
      %27 = vector.extract_strided_slice %14 {offsets = [0, 2], sizes = [4, 324], strides = [1, 1]} : vector<4x362xbf16> to vector<4x324xbf16>
      %cst_36 = arith.constant dense<0.000000e+00> : vector<4x324xf32>
      %28 = tpu.matmul %26, %27, %cst_36 {dimension_numbers = #tpu.dot_dimension_numbers<[1], [0], [0], [1], [0, 0, 1, 1], [], []>} : vector<4x4xbf16>, vector<4x324xbf16>, vector<4x324xf32> -> vector<4x324xf32>
      %29 = arith.addf %24, %28 : vector<4x324xf32>
      %c0_37 = arith.constant 0 : index
      %c1_38 = arith.constant 1 : index
      %c0_39 = arith.constant 0 : index
      %c0_40 = arith.constant 0 : index
      %c0_41 = arith.constant 0 : index
      %30 = vector.load %arg6[%c0_37, %c1_38, %c0_39, %c0_40, %c0_41] : memref<3x3x3x4x4xbf16, #tpu.memory_space<vmem>>, vector<1x1x1x4x4xbf16>
      %31 = vector.shape_cast %30 : vector<1x1x1x4x4xbf16> to vector<4x4xbf16>
      %32 = vector.extract_strided_slice %14 {offsets = [0, 18], sizes = [4, 324], strides = [1, 1]} : vector<4x362xbf16> to vector<4x324xbf16>
      %cst_42 = arith.constant dense<0.000000e+00> : vector<4x324xf32>
      %33 = tpu.matmul %31, %32, %cst_42 {dimension_numbers = #tpu.dot_dimension_numbers<[1], [0], [0], [1], [0, 0, 1, 1], [], []>} : vector<4x4xbf16>, vector<4x324xbf16>, vector<4x324xf32> -> vector<4x324xf32>
      %34 = arith.addf %29, %33 : vector<4x324xf32>
      %c0_43 = arith.constant 0 : index
      %c1_44 = arith.constant 1 : index
      %c1_45 = arith.constant 1 : index
      %c0_46 = arith.constant 0 : index
      %c0_47 = arith.constant 0 : index
      %35 = vector.load %arg6[%c0_43, %c1_44, %c1_45, %c0_46, %c0_47] : memref<3x3x3x4x4xbf16, #tpu.memory_space<vmem>>, vector<1x1x1x4x4xbf16>
      %36 = vector.shape_cast %35 : vector<1x1x1x4x4xbf16> to vector<4x4xbf16>
      %37 = vector.extract_strided_slice %14 {offsets = [0, 19], sizes = [4, 324], strides = [1, 1]} : vector<4x362xbf16> to vector<4x324xbf16>
      %cst_48 = arith.constant dense<0.000000e+00> : vector<4x324xf32>
      %38 = tpu.matmul %36, %37, %cst_48 {dimension_numbers = #tpu.dot_dimension_numbers<[1], [0], [0], [1], [0, 0, 1, 1], [], []>} : vector<4x4xbf16>, vector<4x324xbf16>, vector<4x324xf32> -> vector<4x324xf32>
      %39 = arith.addf %34, %38 : vector<4x324xf32>
      %c0_49 = arith.constant 0 : index
      %c1_50 = arith.constant 1 : index
      %c2_51 = arith.constant 2 : index
      %c0_52 = arith.constant 0 : index
      %c0_53 = arith.constant 0 : index
      %40 = vector.load %arg6[%c0_49, %c1_50, %c2_51, %c0_52, %c0_53] : memref<3x3x3x4x4xbf16, #tpu.memory_space<vmem>>, vector<1x1x1x4x4xbf16>
      %41 = vector.shape_cast %40 : vector<1x1x1x4x4xbf16> to vector<4x4xbf16>
      %42 = vector.extract_strided_slice %14 {offsets = [0, 20], sizes = [4, 324], strides = [1, 1]} : vector<4x362xbf16> to vector<4x324xbf16>
      %cst_54 = arith.constant dense<0.000000e+00> : vector<4x324xf32>
      %43 = tpu.matmul %41, %42, %cst_54 {dimension_numbers = #tpu.dot_dimension_numbers<[1], [0], [0], [1], [0, 0, 1, 1], [], []>} : vector<4x4xbf16>, vector<4x324xbf16>, vector<4x324xf32> -> vector<4x324xf32>
      %44 = arith.addf %39, %43 : vector<4x324xf32>
      %c0_55 = arith.constant 0 : index
      %c2_56 = arith.constant 2 : index
      %c0_57 = arith.constant 0 : index
      %c0_58 = arith.constant 0 : index
      %c0_59 = arith.constant 0 : index
      %45 = vector.load %arg6[%c0_55, %c2_56, %c0_57, %c0_58, %c0_59] : memref<3x3x3x4x4xbf16, #tpu.memory_space<vmem>>, vector<1x1x1x4x4xbf16>
      %46 = vector.shape_cast %45 : vector<1x1x1x4x4xbf16> to vector<4x4xbf16>
      %47 = vector.extract_strided_slice %14 {offsets = [0, 36], sizes = [4, 324], strides = [1, 1]} : vector<4x362xbf16> to vector<4x324xbf16>
      %cst_60 = arith.constant dense<0.000000e+00> : vector<4x324xf32>
      %48 = tpu.matmul %46, %47, %cst_60 {dimension_numbers = #tpu.dot_dimension_numbers<[1], [0], [0], [1], [0, 0, 1, 1], [], []>} : vector<4x4xbf16>, vector<4x324xbf16>, vector<4x324xf32> -> vector<4x324xf32>
      %49 = arith.addf %44, %48 : vector<4x324xf32>
      %c0_61 = arith.constant 0 : index
      %c2_62 = arith.constant 2 : index
      %c1_63 = arith.constant 1 : index
      %c0_64 = arith.constant 0 : index
      %c0_65 = arith.constant 0 : index
      %50 = vector.load %arg6[%c0_61, %c2_62, %c1_63, %c0_64, %c0_65] : memref<3x3x3x4x4xbf16, #tpu.memory_space<vmem>>, vector<1x1x1x4x4xbf16>
      %51 = vector.shape_cast %50 : vector<1x1x1x4x4xbf16> to vector<4x4xbf16>
      %52 = vector.extract_strided_slice %14 {offsets = [0, 37], sizes = [4, 324], strides = [1, 1]} : vector<4x362xbf16> to vector<4x324xbf16>
      %cst_66 = arith.constant dense<0.000000e+00> : vector<4x324xf32>
      %53 = tpu.matmul %51, %52, %cst_66 {dimension_numbers = #tpu.dot_dimension_numbers<[1], [0], [0], [1], [0, 0, 1, 1], [], []>} : vector<4x4xbf16>, vector<4x324xbf16>, vector<4x324xf32> -> vector<4x324xf32>
      %54 = arith.addf %49, %53 : vector<4x324xf32>
      %c0_67 = arith.constant 0 : index
      %c2_68 = arith.constant 2 : index
      %c2_69 = arith.constant 2 : index
      %c0_70 = arith.constant 0 : index
      %c0_71 = arith.constant 0 : index
      %55 = vector.load %arg6[%c0_67, %c2_68, %c2_69, %c0_70, %c0_71] : memref<3x3x3x4x4xbf16, #tpu.memory_space<vmem>>, vector<1x1x1x4x4xbf16>
      %56 = vector.shape_cast %55 : vector<1x1x1x4x4xbf16> to vector<4x4xbf16>
      %57 = vector.extract_strided_slice %14 {offsets = [0, 38], sizes = [4, 324], strides = [1, 1]} : vector<4x362xbf16> to vector<4x324xbf16>
      %cst_72 = arith.constant dense<0.000000e+00> : vector<4x324xf32>
      %58 = tpu.matmul %56, %57, %cst_72 {dimension_numbers = #tpu.dot_dimension_numbers<[1], [0], [0], [1], [0, 0, 1, 1], [], []>} : vector<4x4xbf16>, vector<4x324xbf16>, vector<4x324xf32> -> vector<4x324xf32>
      %59 = arith.addf %54, %58 : vector<4x324xf32>
      %c1_i32_73 = arith.constant 1 : i32
      %60 = arith.addi %arg14, %c1_i32_73 : i32
      %61 = arith.index_cast %60 : i32 to index
      %c0_74 = arith.constant 0 : index
      %c0_75 = arith.constant 0 : index
      %62 = vector.load %arg13[%61, %c0_74, %c0_75] : memref<10x4x362xbf16, #tpu.memory_space<vmem>>, vector<1x4x362xbf16>
      %63 = vector.shape_cast %62 : vector<1x4x362xbf16> to vector<4x362xbf16>
      %c1_76 = arith.constant 1 : index
      %c0_77 = arith.constant 0 : index
      %c0_78 = arith.constant 0 : index
      %c0_79 = arith.constant 0 : index
      %c0_80 = arith.constant 0 : index
      %64 = vector.load %arg6[%c1_76, %c0_77, %c0_78, %c0_79, %c0_80] : memref<3x3x3x4x4xbf16, #tpu.memory_space<vmem>>, vector<1x1x1x4x4xbf16>
      %65 = vector.shape_cast %64 : vector<1x1x1x4x4xbf16> to vector<4x4xbf16>
      %66 = vector.extract_strided_slice %63 {offsets = [0, 0], sizes = [4, 324], strides = [1, 1]} : vector<4x362xbf16> to vector<4x324xbf16>
      %cst_81 = arith.constant dense<0.000000e+00> : vector<4x324xf32>
      %67 = tpu.matmul %65, %66, %cst_81 {dimension_numbers = #tpu.dot_dimension_numbers<[1], [0], [0], [1], [0, 0, 1, 1], [], []>} : vector<4x4xbf16>, vector<4x324xbf16>, vector<4x324xf32> -> vector<4x324xf32>
      %68 = arith.addf %59, %67 : vector<4x324xf32>
      %c1_82 = arith.constant 1 : index
      %c0_83 = arith.constant 0 : index
      %c1_84 = arith.constant 1 : index
      %c0_85 = arith.constant 0 : index
      %c0_86 = arith.constant 0 : index
      %69 = vector.load %arg6[%c1_82, %c0_83, %c1_84, %c0_85, %c0_86] : memref<3x3x3x4x4xbf16, #tpu.memory_space<vmem>>, vector<1x1x1x4x4xbf16>
      %70 = vector.shape_cast %69 : vector<1x1x1x4x4xbf16> to vector<4x4xbf16>
      %71 = vector.extract_strided_slice %63 {offsets = [0, 1], sizes = [4, 324], strides = [1, 1]} : vector<4x362xbf16> to vector<4x324xbf16>
      %cst_87 = arith.constant dense<0.000000e+00> : vector<4x324xf32>
      %72 = tpu.matmul %70, %71, %cst_87 {dimension_numbers = #tpu.dot_dimension_numbers<[1], [0], [0], [1], [0, 0, 1, 1], [], []>} : vector<4x4xbf16>, vector<4x324xbf16>, vector<4x324xf32> -> vector<4x324xf32>
      %73 = arith.addf %68, %72 : vector<4x324xf32>
      %c1_88 = arith.constant 1 : index
      %c0_89 = arith.constant 0 : index
      %c2_90 = arith.constant 2 : index
      %c0_91 = arith.constant 0 : index
      %c0_92 = arith.constant 0 : index
      %74 = vector.load %arg6[%c1_88, %c0_89, %c2_90, %c0_91, %c0_92] : memref<3x3x3x4x4xbf16, #tpu.memory_space<vmem>>, vector<1x1x1x4x4xbf16>
      %75 = vector.shape_cast %74 : vector<1x1x1x4x4xbf16> to vector<4x4xbf16>
      %76 = vector.extract_strided_slice %63 {offsets = [0, 2], sizes = [4, 324], strides = [1, 1]} : vector<4x362xbf16> to vector<4x324xbf16>
      %cst_93 = arith.constant dense<0.000000e+00> : vector<4x324xf32>
      %77 = tpu.matmul %75, %76, %cst_93 {dimension_numbers = #tpu.dot_dimension_numbers<[1], [0], [0], [1], [0, 0, 1, 1], [], []>} : vector<4x4xbf16>, vector<4x324xbf16>, vector<4x324xf32> -> vector<4x324xf32>
      %78 = arith.addf %73, %77 : vector<4x324xf32>
      %c1_94 = arith.constant 1 : index
      %c1_95 = arith.constant 1 : index
      %c0_96 = arith.constant 0 : index
      %c0_97 = arith.constant 0 : index
      %c0_98 = arith.constant 0 : index
      %79 = vector.load %arg6[%c1_94, %c1_95, %c0_96, %c0_97, %c0_98] : memref<3x3x3x4x4xbf16, #tpu.memory_space<vmem>>, vector<1x1x1x4x4xbf16>
      %80 = vector.shape_cast %79 : vector<1x1x1x4x4xbf16> to vector<4x4xbf16>
      %81 = vector.extract_strided_slice %63 {offsets = [0, 18], sizes = [4, 324], strides = [1, 1]} : vector<4x362xbf16> to vector<4x324xbf16>
      %cst_99 = arith.constant dense<0.000000e+00> : vector<4x324xf32>
      %82 = tpu.matmul %80, %81, %cst_99 {dimension_numbers = #tpu.dot_dimension_numbers<[1], [0], [0], [1], [0, 0, 1, 1], [], []>} : vector<4x4xbf16>, vector<4x324xbf16>, vector<4x324xf32> -> vector<4x324xf32>
      %83 = arith.addf %78, %82 : vector<4x324xf32>
      %c1_100 = arith.constant 1 : index
      %c1_101 = arith.constant 1 : index
      %c1_102 = arith.constant 1 : index
      %c0_103 = arith.constant 0 : index
      %c0_104 = arith.constant 0 : index
      %84 = vector.load %arg6[%c1_100, %c1_101, %c1_102, %c0_103, %c0_104] : memref<3x3x3x4x4xbf16, #tpu.memory_space<vmem>>, vector<1x1x1x4x4xbf16>
      %85 = vector.shape_cast %84 : vector<1x1x1x4x4xbf16> to vector<4x4xbf16>
      %86 = vector.extract_strided_slice %63 {offsets = [0, 19], sizes = [4, 324], strides = [1, 1]} : vector<4x362xbf16> to vector<4x324xbf16>
      %cst_105 = arith.constant dense<0.000000e+00> : vector<4x324xf32>
      %87 = tpu.matmul %85, %86, %cst_105 {dimension_numbers = #tpu.dot_dimension_numbers<[1], [0], [0], [1], [0, 0, 1, 1], [], []>} : vector<4x4xbf16>, vector<4x324xbf16>, vector<4x324xf32> -> vector<4x324xf32>
      %88 = arith.addf %83, %87 : vector<4x324xf32>
      %c1_106 = arith.constant 1 : index
      %c1_107 = arith.constant 1 : index
      %c2_108 = arith.constant 2 : index
      %c0_109 = arith.constant 0 : index
      %c0_110 = arith.constant 0 : index
      %89 = vector.load %arg6[%c1_106, %c1_107, %c2_108, %c0_109, %c0_110] : memref<3x3x3x4x4xbf16, #tpu.memory_space<vmem>>, vector<1x1x1x4x4xbf16>
      %90 = vector.shape_cast %89 : vector<1x1x1x4x4xbf16> to vector<4x4xbf16>
      %91 = vector.extract_strided_slice %63 {offsets = [0, 20], sizes = [4, 324], strides = [1, 1]} : vector<4x362xbf16> to vector<4x324xbf16>
      %cst_111 = arith.constant dense<0.000000e+00> : vector<4x324xf32>
      %92 = tpu.matmul %90, %91, %cst_111 {dimension_numbers = #tpu.dot_dimension_numbers<[1], [0], [0], [1], [0, 0, 1, 1], [], []>} : vector<4x4xbf16>, vector<4x324xbf16>, vector<4x324xf32> -> vector<4x324xf32>
      %93 = arith.addf %88, %92 : vector<4x324xf32>
      %c1_112 = arith.constant 1 : index
      %c2_113 = arith.constant 2 : index
      %c0_114 = arith.constant 0 : index
      %c0_115 = arith.constant 0 : index
      %c0_116 = arith.constant 0 : index
      %94 = vector.load %arg6[%c1_112, %c2_113, %c0_114, %c0_115, %c0_116] : memref<3x3x3x4x4xbf16, #tpu.memory_space<vmem>>, vector<1x1x1x4x4xbf16>
      %95 = vector.shape_cast %94 : vector<1x1x1x4x4xbf16> to vector<4x4xbf16>
      %96 = vector.extract_strided_slice %63 {offsets = [0, 36], sizes = [4, 324], strides = [1, 1]} : vector<4x362xbf16> to vector<4x324xbf16>
      %cst_117 = arith.constant dense<0.000000e+00> : vector<4x324xf32>
      %97 = tpu.matmul %95, %96, %cst_117 {dimension_numbers = #tpu.dot_dimension_numbers<[1], [0], [0], [1], [0, 0, 1, 1], [], []>} : vector<4x4xbf16>, vector<4x324xbf16>, vector<4x324xf32> -> vector<4x324xf32>
      %98 = arith.addf %93, %97 : vector<4x324xf32>
      %c1_118 = arith.constant 1 : index
      %c2_119 = arith.constant 2 : index
      %c1_120 = arith.constant 1 : index
      %c0_121 = arith.constant 0 : index
      %c0_122 = arith.constant 0 : index
      %99 = vector.load %arg6[%c1_118, %c2_119, %c1_120, %c0_121, %c0_122] : memref<3x3x3x4x4xbf16, #tpu.memory_space<vmem>>, vector<1x1x1x4x4xbf16>
      %100 = vector.shape_cast %99 : vector<1x1x1x4x4xbf16> to vector<4x4xbf16>
      %101 = vector.extract_strided_slice %63 {offsets = [0, 37], sizes = [4, 324], strides = [1, 1]} : vector<4x362xbf16> to vector<4x324xbf16>
      %cst_123 = arith.constant dense<0.000000e+00> : vector<4x324xf32>
      %102 = tpu.matmul %100, %101, %cst_123 {dimension_numbers = #tpu.dot_dimension_numbers<[1], [0], [0], [1], [0, 0, 1, 1], [], []>} : vector<4x4xbf16>, vector<4x324xbf16>, vector<4x324xf32> -> vector<4x324xf32>
      %103 = arith.addf %98, %102 : vector<4x324xf32>
      %c1_124 = arith.constant 1 : index
      %c2_125 = arith.constant 2 : index
      %c2_126 = arith.constant 2 : index
      %c0_127 = arith.constant 0 : index
      %c0_128 = arith.constant 0 : index
      %104 = vector.load %arg6[%c1_124, %c2_125, %c2_126, %c0_127, %c0_128] : memref<3x3x3x4x4xbf16, #tpu.memory_space<vmem>>, vector<1x1x1x4x4xbf16>
      %105 = vector.shape_cast %104 : vector<1x1x1x4x4xbf16> to vector<4x4xbf16>
      %106 = vector.extract_strided_slice %63 {offsets = [0, 38], sizes = [4, 324], strides = [1, 1]} : vector<4x362xbf16> to vector<4x324xbf16>
      %cst_129 = arith.constant dense<0.000000e+00> : vector<4x324xf32>
      %107 = tpu.matmul %105, %106, %cst_129 {dimension_numbers = #tpu.dot_dimension_numbers<[1], [0], [0], [1], [0, 0, 1, 1], [], []>} : vector<4x4xbf16>, vector<4x324xbf16>, vector<4x324xf32> -> vector<4x324xf32>
      %108 = arith.addf %103, %107 : vector<4x324xf32>
      %c2_i32 = arith.constant 2 : i32
      %109 = arith.addi %arg14, %c2_i32 : i32
      %110 = arith.index_cast %109 : i32 to index
      %c0_130 = arith.constant 0 : index
      %c0_131 = arith.constant 0 : index
      %111 = vector.load %arg13[%110, %c0_130, %c0_131] : memref<10x4x362xbf16, #tpu.memory_space<vmem>>, vector<1x4x362xbf16>
      %112 = vector.shape_cast %111 : vector<1x4x362xbf16> to vector<4x362xbf16>
      %c2_132 = arith.constant 2 : index
      %c0_133 = arith.constant 0 : index
      %c0_134 = arith.constant 0 : index
      %c0_135 = arith.constant 0 : index
      %c0_136 = arith.constant 0 : index
      %113 = vector.load %arg6[%c2_132, %c0_133, %c0_134, %c0_135, %c0_136] : memref<3x3x3x4x4xbf16, #tpu.memory_space<vmem>>, vector<1x1x1x4x4xbf16>
      %114 = vector.shape_cast %113 : vector<1x1x1x4x4xbf16> to vector<4x4xbf16>
      %115 = vector.extract_strided_slice %112 {offsets = [0, 0], sizes = [4, 324], strides = [1, 1]} : vector<4x362xbf16> to vector<4x324xbf16>
      %cst_137 = arith.constant dense<0.000000e+00> : vector<4x324xf32>
      %116 = tpu.matmul %114, %115, %cst_137 {dimension_numbers = #tpu.dot_dimension_numbers<[1], [0], [0], [1], [0, 0, 1, 1], [], []>} : vector<4x4xbf16>, vector<4x324xbf16>, vector<4x324xf32> -> vector<4x324xf32>
      %117 = arith.addf %108, %116 : vector<4x324xf32>
      %c2_138 = arith.constant 2 : index
      %c0_139 = arith.constant 0 : index
      %c1_140 = arith.constant 1 : index
      %c0_141 = arith.constant 0 : index
      %c0_142 = arith.constant 0 : index
      %118 = vector.load %arg6[%c2_138, %c0_139, %c1_140, %c0_141, %c0_142] : memref<3x3x3x4x4xbf16, #tpu.memory_space<vmem>>, vector<1x1x1x4x4xbf16>
      %119 = vector.shape_cast %118 : vector<1x1x1x4x4xbf16> to vector<4x4xbf16>
      %120 = vector.extract_strided_slice %112 {offsets = [0, 1], sizes = [4, 324], strides = [1, 1]} : vector<4x362xbf16> to vector<4x324xbf16>
      %cst_143 = arith.constant dense<0.000000e+00> : vector<4x324xf32>
      %121 = tpu.matmul %119, %120, %cst_143 {dimension_numbers = #tpu.dot_dimension_numbers<[1], [0], [0], [1], [0, 0, 1, 1], [], []>} : vector<4x4xbf16>, vector<4x324xbf16>, vector<4x324xf32> -> vector<4x324xf32>
      %122 = arith.addf %117, %121 : vector<4x324xf32>
      %c2_144 = arith.constant 2 : index
      %c0_145 = arith.constant 0 : index
      %c2_146 = arith.constant 2 : index
      %c0_147 = arith.constant 0 : index
      %c0_148 = arith.constant 0 : index
      %123 = vector.load %arg6[%c2_144, %c0_145, %c2_146, %c0_147, %c0_148] : memref<3x3x3x4x4xbf16, #tpu.memory_space<vmem>>, vector<1x1x1x4x4xbf16>
      %124 = vector.shape_cast %123 : vector<1x1x1x4x4xbf16> to vector<4x4xbf16>
      %125 = vector.extract_strided_slice %112 {offsets = [0, 2], sizes = [4, 324], strides = [1, 1]} : vector<4x362xbf16> to vector<4x324xbf16>
      %cst_149 = arith.constant dense<0.000000e+00> : vector<4x324xf32>
      %126 = tpu.matmul %124, %125, %cst_149 {dimension_numbers = #tpu.dot_dimension_numbers<[1], [0], [0], [1], [0, 0, 1, 1], [], []>} : vector<4x4xbf16>, vector<4x324xbf16>, vector<4x324xf32> -> vector<4x324xf32>
      %127 = arith.addf %122, %126 : vector<4x324xf32>
      %c2_150 = arith.constant 2 : index
      %c1_151 = arith.constant 1 : index
      %c0_152 = arith.constant 0 : index
      %c0_153 = arith.constant 0 : index
      %c0_154 = arith.constant 0 : index
      %128 = vector.load %arg6[%c2_150, %c1_151, %c0_152, %c0_153, %c0_154] : memref<3x3x3x4x4xbf16, #tpu.memory_space<vmem>>, vector<1x1x1x4x4xbf16>
      %129 = vector.shape_cast %128 : vector<1x1x1x4x4xbf16> to vector<4x4xbf16>
      %130 = vector.extract_strided_slice %112 {offsets = [0, 18], sizes = [4, 324], strides = [1, 1]} : vector<4x362xbf16> to vector<4x324xbf16>
      %cst_155 = arith.constant dense<0.000000e+00> : vector<4x324xf32>
      %131 = tpu.matmul %129, %130, %cst_155 {dimension_numbers = #tpu.dot_dimension_numbers<[1], [0], [0], [1], [0, 0, 1, 1], [], []>} : vector<4x4xbf16>, vector<4x324xbf16>, vector<4x324xf32> -> vector<4x324xf32>
      %132 = arith.addf %127, %131 : vector<4x324xf32>
      %c2_156 = arith.constant 2 : index
      %c1_157 = arith.constant 1 : index
      %c1_158 = arith.constant 1 : index
      %c0_159 = arith.constant 0 : index
      %c0_160 = arith.constant 0 : index
      %133 = vector.load %arg6[%c2_156, %c1_157, %c1_158, %c0_159, %c0_160] : memref<3x3x3x4x4xbf16, #tpu.memory_space<vmem>>, vector<1x1x1x4x4xbf16>
      %134 = vector.shape_cast %133 : vector<1x1x1x4x4xbf16> to vector<4x4xbf16>
      %135 = vector.extract_strided_slice %112 {offsets = [0, 19], sizes = [4, 324], strides = [1, 1]} : vector<4x362xbf16> to vector<4x324xbf16>
      %cst_161 = arith.constant dense<0.000000e+00> : vector<4x324xf32>
      %136 = tpu.matmul %134, %135, %cst_161 {dimension_numbers = #tpu.dot_dimension_numbers<[1], [0], [0], [1], [0, 0, 1, 1], [], []>} : vector<4x4xbf16>, vector<4x324xbf16>, vector<4x324xf32> -> vector<4x324xf32>
      %137 = arith.addf %132, %136 : vector<4x324xf32>
      %c2_162 = arith.constant 2 : index
      %c1_163 = arith.constant 1 : index
      %c2_164 = arith.constant 2 : index
      %c0_165 = arith.constant 0 : index
      %c0_166 = arith.constant 0 : index
      %138 = vector.load %arg6[%c2_162, %c1_163, %c2_164, %c0_165, %c0_166] : memref<3x3x3x4x4xbf16, #tpu.memory_space<vmem>>, vector<1x1x1x4x4xbf16>
      %139 = vector.shape_cast %138 : vector<1x1x1x4x4xbf16> to vector<4x4xbf16>
      %140 = vector.extract_strided_slice %112 {offsets = [0, 20], sizes = [4, 324], strides = [1, 1]} : vector<4x362xbf16> to vector<4x324xbf16>
      %cst_167 = arith.constant dense<0.000000e+00> : vector<4x324xf32>
      %141 = tpu.matmul %139, %140, %cst_167 {dimension_numbers = #tpu.dot_dimension_numbers<[1], [0], [0], [1], [0, 0, 1, 1], [], []>} : vector<4x4xbf16>, vector<4x324xbf16>, vector<4x324xf32> -> vector<4x324xf32>
      %142 = arith.addf %137, %141 : vector<4x324xf32>
      %c2_168 = arith.constant 2 : index
      %c2_169 = arith.constant 2 : index
      %c0_170 = arith.constant 0 : index
      %c0_171 = arith.constant 0 : index
      %c0_172 = arith.constant 0 : index
      %143 = vector.load %arg6[%c2_168, %c2_169, %c0_170, %c0_171, %c0_172] : memref<3x3x3x4x4xbf16, #tpu.memory_space<vmem>>, vector<1x1x1x4x4xbf16>
      %144 = vector.shape_cast %143 : vector<1x1x1x4x4xbf16> to vector<4x4xbf16>
      %145 = vector.extract_strided_slice %112 {offsets = [0, 36], sizes = [4, 324], strides = [1, 1]} : vector<4x362xbf16> to vector<4x324xbf16>
      %cst_173 = arith.constant dense<0.000000e+00> : vector<4x324xf32>
      %146 = tpu.matmul %144, %145, %cst_173 {dimension_numbers = #tpu.dot_dimension_numbers<[1], [0], [0], [1], [0, 0, 1, 1], [], []>} : vector<4x4xbf16>, vector<4x324xbf16>, vector<4x324xf32> -> vector<4x324xf32>
      %147 = arith.addf %142, %146 : vector<4x324xf32>
      %c2_174 = arith.constant 2 : index
      %c2_175 = arith.constant 2 : index
      %c1_176 = arith.constant 1 : index
      %c0_177 = arith.constant 0 : index
      %c0_178 = arith.constant 0 : index
      %148 = vector.load %arg6[%c2_174, %c2_175, %c1_176, %c0_177, %c0_178] : memref<3x3x3x4x4xbf16, #tpu.memory_space<vmem>>, vector<1x1x1x4x4xbf16>
      %149 = vector.shape_cast %148 : vector<1x1x1x4x4xbf16> to vector<4x4xbf16>
      %150 = vector.extract_strided_slice %112 {offsets = [0, 37], sizes = [4, 324], strides = [1, 1]} : vector<4x362xbf16> to vector<4x324xbf16>
      %cst_179 = arith.constant dense<0.000000e+00> : vector<4x324xf32>
      %151 = tpu.matmul %149, %150, %cst_179 {dimension_numbers = #tpu.dot_dimension_numbers<[1], [0], [0], [1], [0, 0, 1, 1], [], []>} : vector<4x4xbf16>, vector<4x324xbf16>, vector<4x324xf32> -> vector<4x324xf32>
      %152 = arith.addf %147, %151 : vector<4x324xf32>
      %c2_180 = arith.constant 2 : index
      %c2_181 = arith.constant 2 : index
      %c2_182 = arith.constant 2 : index
      %c0_183 = arith.constant 0 : index
      %c0_184 = arith.constant 0 : index
      %153 = vector.load %arg6[%c2_180, %c2_181, %c2_182, %c0_183, %c0_184] : memref<3x3x3x4x4xbf16, #tpu.memory_space<vmem>>, vector<1x1x1x4x4xbf16>
      %154 = vector.shape_cast %153 : vector<1x1x1x4x4xbf16> to vector<4x4xbf16>
      %155 = vector.extract_strided_slice %112 {offsets = [0, 38], sizes = [4, 324], strides = [1, 1]} : vector<4x362xbf16> to vector<4x324xbf16>
      %cst_185 = arith.constant dense<0.000000e+00> : vector<4x324xf32>
      %156 = tpu.matmul %154, %155, %cst_185 {dimension_numbers = #tpu.dot_dimension_numbers<[1], [0], [0], [1], [0, 0, 1, 1], [], []>} : vector<4x4xbf16>, vector<4x324xbf16>, vector<4x324xf32> -> vector<4x324xf32>
      %157 = arith.addf %152, %156 : vector<4x324xf32>
      %158 = vector.broadcast %3 : vector<4x1xf32> to vector<4x324xf32>
      %159 = arith.mulf %157, %158 : vector<4x324xf32>
      %160 = vector.broadcast %4 : vector<4x1xf32> to vector<4x324xf32>
      %161 = arith.addf %159, %160 : vector<4x324xf32>
      %cst_186 = arith.constant 0.000000e+00 : f32
      %162 = vector.broadcast %cst_186 : f32 to vector<4x324xf32>
      %163 = arith.maximumf %161, %162 : vector<4x324xf32>
      %c0_187 = arith.constant 0 : index
      %164 = arith.index_cast %arg14 : i32 to index
      %c0_188 = arith.constant 0 : index
      %c0_189 = arith.constant 0 : index
      %165 = vector.load %arg12[%c0_187, %164, %c0_188, %c0_189] : memref<1x8x4x324xf32, #tpu.memory_space<vmem>>, vector<1x1x4x324xf32>
      %166 = vector.shape_cast %165 : vector<1x1x4x324xf32> to vector<4x324xf32>
      %167 = vector.shape_cast %163 : vector<4x324xf32> to vector<1x1x4x324xf32>
      tpu.vector_store %arg12[%c0_187, %164, %c0_188, %c0_189], %167 {strides = array<i32>} : memref<1x8x4x324xf32, #tpu.memory_space<vmem>>, vector<1x1x4x324xf32>,
    }
    %c8_i32_16 = arith.constant 8 : i32
    return
  }
  func.func @transform_0(%arg0: i32, %arg1: i32) -> (i32, i32, i32, i32, i32) {
    %c0_i32 = arith.constant 0 : i32
    %c0_i32_0 = arith.constant 0 : i32
    %c0_i32_1 = arith.constant 0 : i32
    %c0_i32_2 = arith.constant 0 : i32
    return %arg0, %arg1, %c0_i32, %c0_i32_0, %c0_i32_1 : i32, i32, i32, i32, i32
  }
  func.func @transform_1(%arg0: i32, %arg1: i32) -> (i32, i32, i32, i32, i32) {
    %c0_i32 = arith.constant 0 : i32
    %c0_i32_0 = arith.constant 0 : i32
    %c0_i32_1 = arith.constant 0 : i32
    %c0_i32_2 = arith.constant 0 : i32
    return %arg0, %arg1, %c0_i32, %c0_i32_0, %c0_i32_1 : i32, i32, i32, i32, i32
  }
  func.func @transform_2(%arg0: i32, %arg1: i32) -> (i32, i32, i32, i32, i32) {
    %c0_i32 = arith.constant 0 : i32
    %c0_i32_0 = arith.constant 0 : i32
    %c0_i32_1 = arith.constant 0 : i32
    %c0_i32_2 = arith.constant 0 : i32
    %c0_i32_3 = arith.constant 0 : i32
    %c0_i32_4 = arith.constant 0 : i32
    return %c0_i32, %c0_i32_0, %c0_i32_1, %c0_i32_2, %c0_i32_3 : i32, i32, i32, i32, i32
  }
  func.func @transform_3(%arg0: i32, %arg1: i32) -> (i32, i32, i32, i32, i32) {
    %c0_i32 = arith.constant 0 : i32
    %c0_i32_0 = arith.constant 0 : i32
    %c0_i32_1 = arith.constant 0 : i32
    %c0_i32_2 = arith.constant 0 : i32
    %c0_i32_3 = arith.constant 0 : i32
    %c0_i32_4 = arith.constant 0 : i32
    return %c0_i32, %c0_i32_0, %c0_i32_1, %c0_i32_2, %c0_i32_3 : i32, i32, i32, i32, i32
  }
  func.func @transform_4(%arg0: i32, %arg1: i32) -> (i32, i32, i32, i32, i32) {
    %c0_i32 = arith.constant 0 : i32
    %c0_i32_0 = arith.constant 0 : i32
    %c0_i32_1 = arith.constant 0 : i32
    %c0_i32_2 = arith.constant 0 : i32
    %c0_i32_3 = arith.constant 0 : i32
    %c0_i32_4 = arith.constant 0 : i32
    return %c0_i32, %c0_i32_0, %c0_i32_1, %c0_i32_2, %c0_i32_3 : i32, i32, i32, i32, i32
  }
  func.func @transform_5(%arg0: i32, %arg1: i32) -> (i32, i32) {
    %c0_i32 = arith.constant 0 : i32
    %c0_i32_0 = arith.constant 0 : i32
    %c0_i32_1 = arith.constant 0 : i32
    return %c0_i32, %c0_i32_0 : i32, i32
  }
  func.func @transform_6(%arg0: i32, %arg1: i32) -> (i32, i32) {
    %c0_i32 = arith.constant 0 : i32
    %c0_i32_0 = arith.constant 0 : i32
    %c0_i32_1 = arith.constant 0 : i32
    return %c0_i32, %c0_i32_0 : i32, i32
  }
  func.func @transform_7(%arg0: i32, %arg1: i32) -> (i32, i32) {
    %c0_i32 = arith.constant 0 : i32
    %c0_i32_0 = arith.constant 0 : i32
    %c0_i32_1 = arith.constant 0 : i32
    return %c0_i32, %c0_i32_0 : i32, i32
  }
  func.func @transform_8(%arg0: i32, %arg1: i32) -> (i32, i32) {
    %c0_i32 = arith.constant 0 : i32
    %c0_i32_0 = arith.constant 0 : i32
    %c0_i32_1 = arith.constant 0 : i32
    return %c0_i32, %c0_i32_0 : i32, i32
  }
  func.func @transform_9(%arg0: i32, %arg1: i32) -> (i32, i32) {
    %c0_i32 = arith.constant 0 : i32
    %c0_i32_0 = arith.constant 0 : i32
    %c0_i32_1 = arith.constant 0 : i32
    return %c0_i32, %c0_i32_0 : i32, i32
  }
  func.func @transform_10(%arg0: i32, %arg1: i32) -> (i32, i32, i32, i32) {
    %c0_i32 = arith.constant 0 : i32
    %c0_i32_0 = arith.constant 0 : i32
    %c0_i32_1 = arith.constant 0 : i32
    return %arg0, %arg1, %c0_i32, %c0_i32_0 : i32, i32, i32, i32
  }
}

</mosaic_0001>

<llo_original>
// kernel: upsample_block_forward.1
$region0: #{upsample_block_forward.1}
  #allocation0 [shape = 'u32[]', space=smem, size = 0x4, offset = 0x4, fixed_abs, tag = 'smem constant byte address 0x4 - core index']
  #allocation1 [shape = 'u32[144,128]{1,0:T(1,128)}', space=vmem, size = 0x12000, scoped, tag = 'internal scratch']
  #allocation2 [shape = 'bf16[10,4,362]{2,1,0:T(4,128)(2,1)}', space=vmem, size = 0x7800, scoped, tag = 'scratch operand']
  %s0 = inlined_call_operand.vmem [shape: bf16[2,1,12,4,362], index: 0, kind: input, shape index: {}]
  %s1 = inlined_call_operand.vmem [shape: bf16[2,1,12,4,362], index: 1, kind: input, shape index: {}]
  %s2 = inlined_call_operand.vmem [shape: bf16[3,3,3,4,4], index: 2, kind: input, shape index: {}]
  %s3 = inlined_call_operand.vmem [shape: bf16[3,3,3,4,4], index: 3, kind: input, shape index: {}]
  %s4 = inlined_call_operand.vmem [shape: bf16[3,3,3,4,4], index: 4, kind: input, shape index: {}]
  %s5 = inlined_call_operand.vmem [shape: f32[4,1], index: 5, kind: input, shape index: {}]
  %s6 = inlined_call_operand.vmem [shape: f32[4,1], index: 6, kind: input, shape index: {}]
  %s7 = inlined_call_operand.vmem [shape: f32[4,1], index: 7, kind: input, shape index: {}]
  %s8 = inlined_call_operand.vmem [shape: f32[4,1], index: 8, kind: input, shape index: {}]
  %s9 = inlined_call_operand.vmem [shape: f32[1,324], index: 9, kind: input, shape index: {}]
  %s10 = inlined_call_operand.vmem [shape: f32[2,8,4,324], index: 10, kind: output, shape index: {}]
  %s11 = sld [smem:[#allocation0]]
  $region87: #{upsample_block_forward.1} parent=0
    _
  %s13 = ssub.s32 1, %s11
  %s14 = scalar_select 0, %s13, %s11
  loop: start=0, step=1, limit=4
  $region2: #{upsample_block_forward.1} parent=0 // loop_pre_header
    _
  $region3: #{upsample_block_forward.1} parent=0 // loop_header
    %s16 = sphi 0, %s20
    %p17 = scmp.ge.s32.totalorder %s16, 4
    %s23 = sphi 0, %s35
    %s24 = sphi 0, %s31
    %s25 = sphi 0, %s23
    %s26 = sphi 0, %s24
    %s27 = sphi 0, %s25
    %s28 = sphi 0, %s26
    %s40 = sphi 0, %s42
    %s43 = sphi 0, %s40
    %s44 = sphi 0, %s43
    %s60 = sphi 0, %s44
    %s68 = sphi 0, %s70
    %s71 = sphi 0, %s68
    %s72 = sphi 0, %s71
    %s88 = sphi 0, %s72
    %s92 = sphi 0, %s92
    %s94 = sphi 0, %s92
    %s95 = sphi 0, %s94
    %s109 = sphi 0, %s95
    %s113 = sphi 0, %s113
    %s115 = sphi 0, %s113
    %s116 = sphi 0, %s115
    %s130 = sphi 0, %s116
    %s134 = sphi 0, %s134
    %s136 = sphi 0, %s134
    %s137 = sphi 0, %s136
    %s151 = sphi 0, %s137
    %s155 = sphi 0, %s155
    %s157 = sphi 0, %s155
    %s158 = sphi 0, %s157
    %s172 = sphi 0, %s158
    %s176 = sphi 0, %s176
    %s178 = sphi 0, %s176
    %s179 = sphi 0, %s178
    %s193 = sphi 0, %s179
    %s197 = sphi 0, %s197
    %s199 = sphi 0, %s197
    %s200 = sphi 0, %s199
    %s214 = sphi 0, %s200
    %s218 = sphi 0, %s218
    %s220 = sphi 0, %s218
    %s221 = sphi 0, %s220
    %s235 = sphi 0, %s221
    %s239 = sphi 0, %s239
    %s241 = sphi 0, %s239
    %s242 = sphi 0, %s241
    %s256 = sphi 0, %s242
    %s264 = sphi 0, %s266
    %s267 = sphi 0, %s264
    %s268 = sphi 0, %s267
    %s284 = sphi 0, %s268
  $region4: #{upsample_block_forward.1} parent=0 // loop_header_branch
    %19 = sbr.rel (%p17) target = $region8
  $region5: #{upsample_block_forward.1} parent=0 // loop_body
    %s21 = ssub.s32 %s16, 1
    %s22 = ssub.s32 %s16, 2
    %s29 = sadd.s32 1, %s24
    %p30 = scmp.ge.s32.totalorder %s29, 1
    %s31 = scalar_select %p30, 0, %s29
    %s32 = sadd.s32 1, %s23
    %s33 = scalar_select %p30, %s32, %s23
    %p34 = scmp.ge.s32.totalorder %s33, 2
    %s35 = scalar_select %p34, 0, %s33
    %s36 = ssub.s32 %s23, %s35
    %s37 = ssub.s32 %s24, %s31
    %s38 = sor.u32 %s36, %s37
    %p39 = scmp.eq.s32.totalorder %s38, 0
    %s41 = sadd.s32 %s40, 1
    %s42 = scalar_select %p39, %s40, %s41
    %p45 = pneg %p39
    %p46 = scmp.eq.s32.totalorder %s16, 1
    %p47 = por %p45, %p46
    %p48 = scmp.ne.s32.totalorder %s40, %s43
    %p49 = scmp.eq.s32.totalorder %s16, 0
    %p50 = por %p48, %p49
    %p51 = scmp.ne.s32.totalorder %s40, %s43
    %p52 = scmp.eq.s32.totalorder %s21, 1
    %p53 = por %p51, %p52
    %p54 = scmp.ne.s32.totalorder %s43, %s44
    %p55 = scmp.eq.s32.totalorder %s21, 0
    %p56 = por %p54, %p55
    %p57 = scmp.ne.s32.totalorder %s43, %s44
    %p58 = scmp.eq.s32.totalorder %s22, 1
    %p59 = por %p57, %p58
    %p61 = scmp.ne.s32.totalorder %s44, %s60
    %p62 = scmp.eq.s32.totalorder %s22, 0
    %p63 = por %p61, %p62
    %s64 = ssub.s32 %s23, %s35
    %s65 = ssub.s32 %s24, %s31
    %s66 = sor.u32 %s64, %s65
    %p67 = scmp.eq.s32.totalorder %s66, 0
    %s69 = sadd.s32 %s68, 1
    %s70 = scalar_select %p67, %s68, %s69
    %p73 = pneg %p67
    %p74 = scmp.eq.s32.totalorder %s16, 1
    %p75 = por %p73, %p74
    %p76 = scmp.ne.s32.totalorder %s68, %s71
    %p77 = scmp.eq.s32.totalorder %s16, 0
    %p78 = por %p76, %p77
    %p79 = scmp.ne.s32.totalorder %s68, %s71
    %p80 = scmp.eq.s32.totalorder %s21, 1
    %p81 = por %p79, %p80
    %p82 = scmp.ne.s32.totalorder %s71, %s72
    %p83 = scmp.eq.s32.totalorder %s21, 0
    %p84 = por %p82, %p83
    %p85 = scmp.ne.s32.totalorder %s71, %s72
    %p86 = scmp.eq.s32.totalorder %s22, 1
    %p87 = por %p85, %p86
    %p89 = scmp.ne.s32.totalorder %s72, %s88
    %p90 = scmp.eq.s32.totalorder %s22, 0
    %p91 = por %p89, %p90
    %s93 = sadd.s32 %s92, 1
    %p96 = scmp.eq.s32.totalorder %s16, 1
    %p97 = scmp.ne.s32.totalorder %s92, %s94
    %p98 = scmp.eq.s32.totalorder %s16, 0
    %p99 = por %p97, %p98
    %p100 = scmp.ne.s32.totalorder %s92, %s94
    %p101 = scmp.eq.s32.totalorder %s21, 1
    %p102 = por %p100, %p101
    %p103 = scmp.ne.s32.totalorder %s94, %s95
    %p104 = scmp.eq.s32.totalorder %s21, 0
    %p105 = por %p103, %p104
    %p106 = scmp.ne.s32.totalorder %s94, %s95
    %p107 = scmp.eq.s32.totalorder %s22, 1
    %p108 = por %p106, %p107
    %p110 = scmp.ne.s32.totalorder %s95, %s109
    %p111 = scmp.eq.s32.totalorder %s22, 0
    %p112 = por %p110, %p111
    %s114 = sadd.s32 %s113, 1
    %p117 = scmp.eq.s32.totalorder %s16, 1
    %p118 = scmp.ne.s32.totalorder %s113, %s115
    %p119 = scmp.eq.s32.totalorder %s16, 0
    %p120 = por %p118, %p119
    %p121 = scmp.ne.s32.totalorder %s113, %s115
    %p122 = scmp.eq.s32.totalorder %s21, 1
    %p123 = por %p121, %p122
    %p124 = scmp.ne.s32.totalorder %s115, %s116
    %p125 = scmp.eq.s32.totalorder %s21, 0
    %p126 = por %p124, %p125
    %p127 = scmp.ne.s32.totalorder %s115, %s116
    %p128 = scmp.eq.s32.totalorder %s22, 1
    %p129 = por %p127, %p128
    %p131 = scmp.ne.s32.totalorder %s116, %s130
    %p132 = scmp.eq.s32.totalorder %s22, 0
    %p133 = por %p131, %p132
    %s135 = sadd.s32 %s134, 1
    %p138 = scmp.eq.s32.totalorder %s16, 1
    %p139 = scmp.ne.s32.totalorder %s134, %s136
    %p140 = scmp.eq.s32.totalorder %s16, 0
    %p141 = por %p139, %p140
    %p142 = scmp.ne.s32.totalorder %s134, %s136
    %p143 = scmp.eq.s32.totalorder %s21, 1
    %p144 = por %p142, %p143
    %p145 = scmp.ne.s32.totalorder %s136, %s137
    %p146 = scmp.eq.s32.totalorder %s21, 0
    %p147 = por %p145, %p146
    %p148 = scmp.ne.s32.totalorder %s136, %s137
    %p149 = scmp.eq.s32.totalorder %s22, 1
    %p150 = por %p148, %p149
    %p152 = scmp.ne.s32.totalorder %s137, %s151
    %p153 = scmp.eq.s32.totalorder %s22, 0
    %p154 = por %p152, %p153
    %s156 = sadd.s32 %s155, 1
    %p159 = scmp.eq.s32.totalorder %s16, 1
    %p160 = scmp.ne.s32.totalorder %s155, %s157
    %p161 = scmp.eq.s32.totalorder %s16, 0
    %p162 = por %p160, %p161
    %p163 = scmp.ne.s32.totalorder %s155, %s157
    %p164 = scmp.eq.s32.totalorder %s21, 1
    %p165 = por %p163, %p164
    %p166 = scmp.ne.s32.totalorder %s157, %s158
    %p167 = scmp.eq.s32.totalorder %s21, 0
    %p168 = por %p166, %p167
    %p169 = scmp.ne.s32.totalorder %s157, %s158
    %p170 = scmp.eq.s32.totalorder %s22, 1
    %p171 = por %p169, %p170
    %p173 = scmp.ne.s32.totalorder %s158, %s172
    %p174 = scmp.eq.s32.totalorder %s22, 0
    %p175 = por %p173, %p174
    %s177 = sadd.s32 %s176, 1
    %p180 = scmp.eq.s32.totalorder %s16, 1
    %p181 = scmp.ne.s32.totalorder %s176, %s178
    %p182 = scmp.eq.s32.totalorder %s16, 0
    %p183 = por %p181, %p182
    %p184 = scmp.ne.s32.totalorder %s176, %s178
    %p185 = scmp.eq.s32.totalorder %s21, 1
    %p186 = por %p184, %p185
    %p187 = scmp.ne.s32.totalorder %s178, %s179
    %p188 = scmp.eq.s32.totalorder %s21, 0
    %p189 = por %p187, %p188
    %p190 = scmp.ne.s32.totalorder %s178, %s179
    %p191 = scmp.eq.s32.totalorder %s22, 1
    %p192 = por %p190, %p191
    %p194 = scmp.ne.s32.totalorder %s179, %s193
    %p195 = scmp.eq.s32.totalorder %s22, 0
    %p196 = por %p194, %p195
    %s198 = sadd.s32 %s197, 1
    %p201 = scmp.eq.s32.totalorder %s16, 1
    %p202 = scmp.ne.s32.totalorder %s197, %s199
    %p203 = scmp.eq.s32.totalorder %s16, 0
    %p204 = por %p202, %p203
    %p205 = scmp.ne.s32.totalorder %s197, %s199
    %p206 = scmp.eq.s32.totalorder %s21, 1
    %p207 = por %p205, %p206
    %p208 = scmp.ne.s32.totalorder %s199, %s200
    %p209 = scmp.eq.s32.totalorder %s21, 0
    %p210 = por %p208, %p209
    %p211 = scmp.ne.s32.totalorder %s199, %s200
    %p212 = scmp.eq.s32.totalorder %s22, 1
    %p213 = por %p211, %p212
    %p215 = scmp.ne.s32.totalorder %s200, %s214
    %p216 = scmp.eq.s32.totalorder %s22, 0
    %p217 = por %p215, %p216
    %s219 = sadd.s32 %s218, 1
    %p222 = scmp.eq.s32.totalorder %s16, 1
    %p223 = scmp.ne.s32.totalorder %s218, %s220
    %p224 = scmp.eq.s32.totalorder %s16, 0
    %p225 = por %p223, %p224
    %p226 = scmp.ne.s32.totalorder %s218, %s220
    %p227 = scmp.eq.s32.totalorder %s21, 1
    %p228 = por %p226, %p227
    %p229 = scmp.ne.s32.totalorder %s220, %s221
    %p230 = scmp.eq.s32.totalorder %s21, 0
    %p231 = por %p229, %p230
    %p232 = scmp.ne.s32.totalorder %s220, %s221
    %p233 = scmp.eq.s32.totalorder %s22, 1
    %p234 = por %p232, %p233
    %p236 = scmp.ne.s32.totalorder %s221, %s235
    %p237 = scmp.eq.s32.totalorder %s22, 0
    %p238 = por %p236, %p237
    %s240 = sadd.s32 %s239, 1
    %p243 = scmp.eq.s32.totalorder %s16, 1
    %p244 = scmp.ne.s32.totalorder %s239, %s241
    %p245 = scmp.eq.s32.totalorder %s16, 0
    %p246 = por %p244, %p245
    %p247 = scmp.ne.s32.totalorder %s239, %s241
    %p248 = scmp.eq.s32.totalorder %s21, 1
    %p249 = por %p247, %p248
    %p250 = scmp.ne.s32.totalorder %s241, %s242
    %p251 = scmp.eq.s32.totalorder %s21, 0
    %p252 = por %p250, %p251
    %p253 = scmp.ne.s32.totalorder %s241, %s242
    %p254 = scmp.eq.s32.totalorder %s22, 1
    %p255 = por %p253, %p254
    %p257 = scmp.ne.s32.totalorder %s242, %s256
    %p258 = scmp.eq.s32.totalorder %s22, 0
    %p259 = por %p257, %p258
    %s260 = ssub.s32 %s23, %s35
    %s261 = ssub.s32 %s24, %s31
    %s262 = sor.u32 %s260, %s261
    %p263 = scmp.eq.s32.totalorder %s262, 0
    %s265 = sadd.s32 %s264, 1
    %s266 = scalar_select %p263, %s264, %s265
    %p269 = pneg %p263
    %p270 = scmp.eq.s32.totalorder %s16, 1
    %p271 = por %p269, %p270
    %p272 = scmp.ne.s32.totalorder %s264, %s267
    %p273 = scmp.eq.s32.totalorder %s16, 0
    %p274 = por %p272, %p273
    %p275 = scmp.ne.s32.totalorder %s264, %s267
    %p276 = scmp.eq.s32.totalorder %s21, 1
    %p277 = por %p275, %p276
    %p278 = scmp.ne.s32.totalorder %s267, %s268
    %p279 = scmp.eq.s32.totalorder %s21, 0
    %p280 = por %p278, %p279
    %p281 = scmp.ne.s32.totalorder %s267, %s268
    %p282 = scmp.eq.s32.totalorder %s22, 1
    %p283 = por %p281, %p282
    %p285 = scmp.ne.s32.totalorder %s268, %s284
    %p286 = scmp.eq.s32.totalorder %s22, 0
    %p287 = por %p285, %p286
    %p288 = scmp.le.s32.totalorder 1, %s16
    %p289 = scmp.lt.s32.totalorder %s16, 3
    %p290 = pnand %p288, %p289
    %p291 = pneg %p290
    // Predicated region
    $region9: #{upsample_block_forward.1} parent=5 // pred_check
      _
    $region10: #{upsample_block_forward.1} parent=5 // pred_check_branch
      %293 = sbr.rel (%p290) target = $region12
    $region11: #{upsample_block_forward.1} parent=5 // pred_region
      %s294 = ssub.s32 %s16, 1
      // Predicated region
      $region13: #{upsample_block_forward.1} parent=11 // pred_check
        %p295 = pneg %p105
      $region14: #{upsample_block_forward.1} parent=11 // pred_check_branch
        %297 = sbr.rel (%p295) target = $region16
      $region15: #{upsample_block_forward.1} parent=11 // pred_region
        _
      $region16: #{upsample_block_forward.1} parent=11 // pred_fallthru
        _
      // Predicated region
      $region17: #{upsample_block_forward.1} parent=11 // pred_check
        %p298 = pneg %p126
      $region18: #{upsample_block_forward.1} parent=11 // pred_check_branch
        %300 = sbr.rel (%p298) target = $region20
      $region19: #{upsample_block_forward.1} parent=11 // pred_region
        _
      $region20: #{upsample_block_forward.1} parent=11 // pred_fallthru
        _
      // Predicated region
      $region21: #{upsample_block_forward.1} parent=11 // pred_check
        %p301 = pneg %p147
      $region22: #{upsample_block_forward.1} parent=11 // pred_check_branch
        %303 = sbr.rel (%p301) target = $region24
      $region23: #{upsample_block_forward.1} parent=11 // pred_region
        _
      $region24: #{upsample_block_forward.1} parent=11 // pred_fallthru
        _
      // Predicated region
      $region25: #{upsample_block_forward.1} parent=11 // pred_check
        %p304 = pneg %p168
      $region26: #{upsample_block_forward.1} parent=11 // pred_check_branch
        %306 = sbr.rel (%p304) target = $region28
      $region27: #{upsample_block_forward.1} parent=11 // pred_region
        _
      $region28: #{upsample_block_forward.1} parent=11 // pred_fallthru
        _
      // Predicated region
      $region29: #{upsample_block_forward.1} parent=11 // pred_check
        %p307 = pneg %p189
      $region30: #{upsample_block_forward.1} parent=11 // pred_check_branch
        %309 = sbr.rel (%p307) target = $region32
      $region31: #{upsample_block_forward.1} parent=11 // pred_region
        _
      $region32: #{upsample_block_forward.1} parent=11 // pred_fallthru
        _
      // Predicated region
      $region33: #{upsample_block_forward.1} parent=11 // pred_check
        %p310 = pneg %p210
      $region34: #{upsample_block_forward.1} parent=11 // pred_check_branch
        %312 = sbr.rel (%p310) target = $region36
      $region35: #{upsample_block_forward.1} parent=11 // pred_region
        _
      $region36: #{upsample_block_forward.1} parent=11 // pred_fallthru
        _
      // Predicated region
      $region37: #{upsample_block_forward.1} parent=11 // pred_check
        %p313 = pneg %p231
      $region38: #{upsample_block_forward.1} parent=11 // pred_check_branch
        %315 = sbr.rel (%p313) target = $region40
      $region39: #{upsample_block_forward.1} parent=11 // pred_region
        _
      $region40: #{upsample_block_forward.1} parent=11 // pred_fallthru
        _
      // Predicated region
      $region41: #{upsample_block_forward.1} parent=11 // pred_check
        %p316 = pneg %p252
      $region42: #{upsample_block_forward.1} parent=11 // pred_check_branch
        %318 = sbr.rel (%p316) target = $region44
      $region43: #{upsample_block_forward.1} parent=11 // pred_region
        _
      $region44: #{upsample_block_forward.1} parent=11 // pred_fallthru
        _
    $region12: #{upsample_block_forward.1} parent=5 // pred_fallthru
      _
    %p319 = scmp.lt.s32.totalorder %s16, 2
    // Predicated region
    $region45: #{upsample_block_forward.1} parent=5 // pred_check
      %p320 = pneg %p319
    $region46: #{upsample_block_forward.1} parent=5 // pred_check_branch
      %322 = sbr.rel (%p320) target = $region48
    $region47: #{upsample_block_forward.1} parent=5 // pred_region
      // Predicated region
      $region49: #{upsample_block_forward.1} parent=47 // pred_check
        %p323 = pneg %p50
      $region50: #{upsample_block_forward.1} parent=47 // pred_check_branch
        %325 = sbr.rel (%p323) target = $region52
      $region51: #{upsample_block_forward.1} parent=47 // pred_region
        %p326 = scmp.lt.s32.totalorder %s23, 1
        %s327 = scalar_select %p326, %s23, 1
        %p328 = scmp.lt.s32.totalorder %s24, 0
        %s329 = scalar_select %p328, %s24, 0
        %s330 = smul.addr %s329, 36
        %s331 = smul.addr %s327, 36
        %s332 = sadd.s32 %s330, %s331
        %s333 = smul.addr %s332, 2
        %s334 = scalar_lea.vmem %s0, %s333
      $region52: #{upsample_block_forward.1} parent=47 // pred_fallthru
        _
      // Predicated region
      $region53: #{upsample_block_forward.1} parent=47 // pred_check
        %p335 = pneg %p78
      $region54: #{upsample_block_forward.1} parent=47 // pred_check_branch
        %337 = sbr.rel (%p335) target = $region56
      $region55: #{upsample_block_forward.1} parent=47 // pred_region
        %p338 = scmp.lt.s32.totalorder %s23, 1
        %s339 = scalar_select %p338, %s23, 1
        %p340 = scmp.lt.s32.totalorder %s24, 0
        %s341 = scalar_select %p340, %s24, 0
        %s342 = smul.addr %s341, 36
        %s343 = smul.addr %s339, 36
        %s344 = sadd.s32 %s342, %s343
        %s345 = smul.addr %s344, 2
        %s346 = scalar_lea.vmem %s1, %s345
      $region56: #{upsample_block_forward.1} parent=47 // pred_fallthru
        _
    $region48: #{upsample_block_forward.1} parent=5 // pred_fallthru
      _
    %p347 = scmp.le.s32.totalorder 1, %s16
    %p348 = scmp.lt.s32.totalorder %s16, 3
    %p349 = pnand %p347, %p348
    %p350 = pneg %p349
    // Predicated region
    $region57: #{upsample_block_forward.1} parent=5 // pred_check
      _
    $region58: #{upsample_block_forward.1} parent=5 // pred_check_branch
      %352 = sbr.rel (%p349) target = $region60
    $region59: #{upsample_block_forward.1} parent=5 // pred_region
      %s353 = ssub.s32 %s16, 1
      %p354 = scmp.lt.s32.totalorder %s25, 1
      %s355 = scalar_select %p354, %s25, 1
      %p356 = scmp.lt.s32.totalorder %s26, 0
      %s357 = scalar_select %p356, %s26, 0
      %s358 = smul.addr %s357, 36
      %s359 = smul.addr %s355, 36
      %s360 = sadd.s32 %s358, %s359
      %s361 = smul.addr %s360, 2
      %s362 = scalar_lea.vmem %s0, %s361
      %p363 = pneg %p56
      %p364 = pneg %p53
      %p365 = scmp.lt.s32.totalorder %s25, 1
      %s366 = scalar_select %p365, %s25, 1
      %p367 = scmp.lt.s32.totalorder %s26, 0
      %s368 = scalar_select %p367, %s26, 0
      %s369 = smul.addr %s368, 36
      %s370 = smul.addr %s366, 36
      %s371 = sadd.s32 %s369, %s370
      %s372 = smul.addr %s371, 2
      %s373 = scalar_lea.vmem %s1, %s372
      %p374 = pneg %p84
      %p375 = pneg %p81
      %p376 = pneg %p105
      %p377 = pneg %p102
      %p378 = pneg %p126
      %p379 = pneg %p123
      %p380 = pneg %p147
      %p381 = pneg %p144
      %p382 = pneg %p168
      %p383 = pneg %p165
      %p384 = pneg %p189
      %p385 = pneg %p186
      %p386 = pneg %p210
      %p387 = pneg %p207
      %p388 = pneg %p231
      %p389 = pneg %p228
      %p390 = pneg %p252
      %p391 = pneg %p249
      %p392 = pneg %p280
      %p393 = pneg %p277
      %s394 = smul.u32 8, %s26
      %p395 = scmp.lt.s32.totalorder %s25, 1
      %s396 = scalar_select %p395, %s25, 1
      %p397 = scmp.lt.s32.totalorder %s394, 7
      %s398 = scalar_select %p397, %s394, 7
      %s399 = smul.addr %s398, 3
      %s400 = smul.addr %s396, 24
      %s401 = sadd.s32 %s399, %s400
      %s402 = smul.addr %s401, 4
      %s403 = scalar_lea.vmem %s10, %s402
      %p404 = scmp.lt.s32.totalorder %s25, 1
      %s405 = scalar_select %p404, %s25, 1
      %p406 = scmp.lt.s32.totalorder %s26, 0
      %s407 = scalar_select %p406, %s26, 0
      %s408 = smul.addr %s407, 36
      %s409 = smul.addr %s405, 36
      %s410 = sadd.s32 %s408, %s409
      %s411 = smul.addr %s410, 2
      %s412 = scalar_lea.vmem %s0, %s411
      %p413 = scmp.lt.s32.totalorder %s25, 1
      %s414 = scalar_select %p413, %s25, 1
      %p415 = scmp.lt.s32.totalorder %s26, 0
      %s416 = scalar_select %p415, %s26, 0
      %s417 = smul.addr %s416, 36
      %s418 = smul.addr %s414, 36
      %s419 = sadd.s32 %s417, %s418
      %s420 = smul.addr %s419, 2
      %s421 = scalar_lea.vmem %s1, %s420
      %s422 = smul.u32 8, %s26
      %p423 = scmp.lt.s32.totalorder %s25, 1
      %s424 = scalar_select %p423, %s25, 1
      %p425 = scmp.lt.s32.totalorder %s422, 7
      %s426 = scalar_select %p425, %s422, 7
      %s427 = smul.addr %s426, 3
      %s428 = smul.addr %s424, 24
      %s429 = sadd.s32 %s427, %s428
      %s430 = smul.addr %s429, 4
      %s431 = scalar_lea.vmem %s10, %s430
      %s432 = smul.u32 8, %s26
      %s434 = smul.u32 %s26, 8
      %v435 = vld [vmem:[%s5] sm:$0xf]
      %v436 = vld [vmem:[%s6] sm:$0xf]
      %v437 = vld [vmem:[%s7] sm:$0xf]
      %v438 = vld [vmem:[%s8] sm:$0xf]
      %v439 = vld [vmem:[%s9] sm:$0x7]
      %vm440 = vcmask 1041408
      %vm441 = vcmask 1043458
      %vm442 = vmor %vm441, %vm440
      %vm443 = vcmask 865284
      %vm444 = vmor %vm443, %vm442
      %445 = vst.msk [vmem:[#allocation2] sm:$0x3f] %vm444, 0
      %446 = vst.msk [vmem:[#allocation2 + $0x6] sm:$0x3f] %vm444, 0
      %447 = vst.msk [vmem:[#allocation2 + $0xc] sm:$0x3f] %vm444, 0
      %448 = vst.msk [vmem:[#allocation2 + $0x12] sm:$0x3f] %vm444, 0
      %449 = vst.msk [vmem:[#allocation2 + $0x18] sm:$0x3f] %vm444, 0
      %450 = vst.msk [vmem:[#allocation2 + $0x1e] sm:$0x3f] %vm444, 0
      %451 = vst.msk [vmem:[#allocation2 + $0x24] sm:$0x3f] %vm444, 0
      %452 = vst.msk [vmem:[#allocation2 + $0x2a] sm:$0x3f] %vm444, 0
      %453 = vst.msk [vmem:[#allocation2 + $0x30] sm:$0x3f] %vm444, 0
      %454 = vst.msk [vmem:[#allocation2 + $0x36] sm:$0x3f] %vm444, 0
      loop: start=0, step=1, limit=10
      $region61: #{upsample_block_forward.1} parent=59 // loop_pre_header
        _
      $region62: #{upsample_block_forward.1} parent=59 // loop_header
        %s456 = sphi 0, %s460
        %p457 = scmp.ge.s32.totalorder %s456, 10
      $region63: #{upsample_block_forward.1} parent=59 // loop_header_branch
        %459 = sbr.rel (%p457) target = $region67
      $region64: #{upsample_block_forward.1} parent=59 // loop_body
        %s461 = smul.u32 %s456, 3
        %s462 = smul.addr %s461, 2
        %s463 = scalar_lea.vmem %s412, %s462
        %v464 = vld [vmem:[%s463] sm:$0x3f]
        %s465 = smul.addr %s461, 2
        %s466 = scalar_lea.vmem %s421, %s465
        %v467 = vld [vmem:[%s466] sm:$0x3f]
        %v468 = vld [vmem:[%s2] sm:$0x3]
        %v469 = vld [vmem:[%s3] sm:$0x3]
        %v471 = vcombine.high %v467, %v467
        %v473 = vunpack.c.l.s4 1983009808
        %v474 = vunpack.c.0.s8 %v473
        %v475 = vlaneseq
        %v476 = vshrl.u32 %v475, 7
        %v477 = vsub.s32 %v474, %v476
        %v478 = vrot.slane %v467, %v477
        %v480 = vunpack.c.l.s4 1983009808
        %v481 = vunpack.c.0.s8 %v480
        %v482 = vlaneseq
        %v483 = vshrl.u32 %v482, 7
        %v484 = vsub.s32 %v481, %v483
        %v485 = vrot.slane %v471, %v484
        %v486 = vcombine.high %v478, %v478
        %vm487 = vcmask 31744
        %v489 = vsel %vm487, %v469, 0
        %v492 = vsel %vm440, %v478, 0
        %v495 = vsel %vm440, %v486, 0
        %v498 = vsel %vm440, %v485, 0
        %500 = vmatprep.subr.bf16.mxu0 0
        %501 = vmatpush1.bf16.msra.mxu0 0
        %502 = vmatprep.subr.bf16.mxu0 0
        %503 = vmatpush1.bf16.msra.mxu0 0
        %504 = vmatprep.subr.bf16.mxu0 0
        %505 = vmatpush1.bf16.msra.mxu0 0
        %506 = vmatprep.subr.bf16.mxu0 0
        %507 = vmatpush1.bf16.msra.mxu0 0
        %508 = vmatprep.subr.bf16.mxu0 0
        %509 = vmatpush1.bf16.msra.mxu0 0
        %510 = vmatprep.subr.bf16.mxu0 0
        %511 = vmatpush1.bf16.msra.mxu0 0
        %512 = vmatprep.subr.bf16.mxu0 0
        %513 = vmatpush1.bf16.msra.mxu0 0
        %514 = vmatprep.subr.bf16.mxu0 %v495
        %515 = vmatpush1.bf16.msra.mxu0 %v492
        %516 = vmatprep.subr.bf16.mxu0 0
        %517 = vmatpush2.bf16.msra.mxu0 0
        %518 = vmatprep.subr.bf16.mxu0 0
        %519 = vmatpush2.bf16.msra.mxu0 0
        %520 = vmatprep.subr.bf16.mxu0 0
        %521 = vmatpush2.bf16.msra.mxu0 0
        %522 = vmatprep.subr.bf16.mxu0 0
        %523 = vmatpush2.bf16.msra.mxu0 0
        %524 = vmatprep.subr.bf16.mxu0 0
        %525 = vmatpush2.bf16.msra.mxu0 0
        %526 = vmatprep.subr.bf16.mxu0 0
        %527 = vmatpush2.bf16.msra.mxu0 0
        %528 = vmatprep.subr.bf16.mxu0 0
        %529 = vmatpush2.bf16.msra.mxu0 0
        %530 = vmatprep.subr.bf16.mxu0 0
        %531 = vmatpush2.bf16.msra.mxu0 0
        %532 = vmatprep.mubr.bf16.mxu0 0
        %533 = vmatmul.mubr.bf16.gmra.mxu0 %v489
        %v534 = vpop.f32.mrf.mxu0
        %v535 = vadd.f32 0.0, %v534
        %v536 = vpop.f32.mrf.mxu0
        %v537 = vadd.f32 0.0, %v536
        %v538 = vpop.f32.mrf.mxu0
        %v539 = vpop.f32.mrf.mxu0
        %540 = vdwg.mxu0
        %541 = vmatprep.subr.bf16.mxu0 0
        %542 = vmatpush1.bf16.msra.mxu0 0
        %543 = vmatprep.subr.bf16.mxu0 0
        %544 = vmatpush1.bf16.msra.mxu0 0
        %545 = vmatprep.subr.bf16.mxu0 0
        %546 = vmatpush1.bf16.msra.mxu0 0
        %547 = vmatprep.subr.bf16.mxu0 0
        %548 = vmatpush1.bf16.msra.mxu0 0
        %549 = vmatprep.subr.bf16.mxu0 0
        %550 = vmatpush1.bf16.msra.mxu0 0
        %551 = vmatprep.subr.bf16.mxu0 0
        %552 = vmatpush1.bf16.msra.mxu0 0
        %553 = vmatprep.subr.bf16.mxu0 0
        %554 = vmatpush1.bf16.msra.mxu0 0
        %555 = vmatprep.subr.bf16.mxu0 0
        %556 = vmatpush1.bf16.msra.mxu0 %v498
        %557 = vmatprep.subr.bf16.mxu0 0
        %558 = vmatpush2.bf16.msra.mxu0 0
        %559 = vmatprep.subr.bf16.mxu0 0
        %560 = vmatpush2.bf16.msra.mxu0 0
        %561 = vmatprep.subr.bf16.mxu0 0
        %562 = vmatpush2.bf16.msra.mxu0 0
        %563 = vmatprep.subr.bf16.mxu0 0
        %564 = vmatpush2.bf16.msra.mxu0 0
        %565 = vmatprep.subr.bf16.mxu0 0
        %566 = vmatpush2.bf16.msra.mxu0 0
        %567 = vmatprep.subr.bf16.mxu0 0
        %568 = vmatpush2.bf16.msra.mxu0 0
        %569 = vmatprep.subr.bf16.mxu0 0
        %570 = vmatpush2.bf16.msra.mxu0 0
        %571 = vmatprep.subr.bf16.mxu0 0
        %572 = vmatpush2.bf16.msra.mxu0 0
        %573 = vmatprep.mubr.bf16.mxu0 0
        %574 = vmatmul.mubr.bf16.gmra.mxu0 %v489
        %v575 = vpop.f32.mrf.mxu0
        %v576 = vadd.f32 0.0, %v575
        %v577 = vpop.f32.mrf.mxu0
        %v578 = vpop.f32.mrf.mxu0
        %v579 = vpop.f32.mrf.mxu0
        %580 = vdwg.mxu0
        %v582 = vcombine.high %v464, %v464
        %v584 = vunpack.c.l.s4 1983009808
        %v585 = vunpack.c.0.s8 %v584
        %v586 = vlaneseq
        %v587 = vshrl.u32 %v586, 7
        %v588 = vsub.s32 %v585, %v587
        %v589 = vrot.slane %v464, %v588
        %v591 = vunpack.c.l.s4 1983009808
        %v592 = vunpack.c.0.s8 %v591
        %v593 = vlaneseq
        %v594 = vshrl.u32 %v593, 7
        %v595 = vsub.s32 %v592, %v594
        %v596 = vrot.slane %v582, %v595
        %v597 = vcombine.high %v589, %v589
        %v599 = vsel %vm487, %v468, 0
        %v602 = vsel %vm440, %v589, 0
        %v605 = vsel %vm440, %v597, 0
        %v608 = vsel %vm440, %v596, 0
        %610 = vmatprep.subr.bf16.mxu0 0
        %611 = vmatpush1.bf16.msra.mxu0 0
        %612 = vmatprep.subr.bf16.mxu0 0
        %613 = vmatpush1.bf16.msra.mxu0 0
        %614 = vmatprep.subr.bf16.mxu0 0
        %615 = vmatpush1.bf16.msra.mxu0 0
        %616 = vmatprep.subr.bf16.mxu0 0
        %617 = vmatpush1.bf16.msra.mxu0 0
        %618 = vmatprep.subr.bf16.mxu0 0
        %619 = vmatpush1.bf16.msra.mxu0 0
        %620 = vmatprep.subr.bf16.mxu0 0
        %621 = vmatpush1.bf16.msra.mxu0 0
        %622 = vmatprep.subr.bf16.mxu0 0
        %623 = vmatpush1.bf16.msra.mxu0 0
        %624 = vmatprep.subr.bf16.mxu0 %v605
        %625 = vmatpush1.bf16.msra.mxu0 %v602
        %626 = vmatprep.subr.bf16.mxu0 0
        %627 = vmatpush2.bf16.msra.mxu0 0
        %628 = vmatprep.subr.bf16.mxu0 0
        %629 = vmatpush2.bf16.msra.mxu0 0
        %630 = vmatprep.subr.bf16.mxu0 0
        %631 = vmatpush2.bf16.msra.mxu0 0
        %632 = vmatprep.subr.bf16.mxu0 0
        %633 = vmatpush2.bf16.msra.mxu0 0
        %634 = vmatprep.subr.bf16.mxu0 0
        %635 = vmatpush2.bf16.msra.mxu0 0
        %636 = vmatprep.subr.bf16.mxu0 0
        %637 = vmatpush2.bf16.msra.mxu0 0
        %638 = vmatprep.subr.bf16.mxu0 0
        %639 = vmatpush2.bf16.msra.mxu0 0
        %640 = vmatprep.subr.bf16.mxu0 0
        %641 = vmatpush2.bf16.msra.mxu0 0
        %642 = vmatprep.mubr.bf16.mxu0 0
        %643 = vmatmul.mubr.bf16.gmra.mxu0 %v599
        %v644 = vpop.f32.mrf.mxu0
        %v645 = vadd.f32 %v535, %v644
        %v646 = vpop.f32.mrf.mxu0
        %v647 = vadd.f32 %v537, %v646
        %v648 = vpop.f32.mrf.mxu0
        %v649 = vpop.f32.mrf.mxu0
        %650 = vdwg.mxu0
        %651 = vmatprep.subr.bf16.mxu0 0
        %652 = vmatpush1.bf16.msra.mxu0 0
        %653 = vmatprep.subr.bf16.mxu0 0
        %654 = vmatpush1.bf16.msra.mxu0 0
        %655 = vmatprep.subr.bf16.mxu0 0
        %656 = vmatpush1.bf16.msra.mxu0 0
        %657 = vmatprep.subr.bf16.mxu0 0
        %658 = vmatpush1.bf16.msra.mxu0 0
        %659 = vmatprep.subr.bf16.mxu0 0
        %660 = vmatpush1.bf16.msra.mxu0 0
        %661 = vmatprep.subr.bf16.mxu0 0
        %662 = vmatpush1.bf16.msra.mxu0 0
        %663 = vmatprep.subr.bf16.mxu0 0
        %664 = vmatpush1.bf16.msra.mxu0 0
        %665 = vmatprep.subr.bf16.mxu0 0
        %666 = vmatpush1.bf16.msra.mxu0 %v608
        %667 = vmatprep.subr.bf16.mxu0 0
        %668 = vmatpush2.bf16.msra.mxu0 0
        %669 = vmatprep.subr.bf16.mxu0 0
        %670 = vmatpush2.bf16.msra.mxu0 0
        %671 = vmatprep.subr.bf16.mxu0 0
        %672 = vmatpush2.bf16.msra.mxu0 0
        %673 = vmatprep.subr.bf16.mxu0 0
        %674 = vmatpush2.bf16.msra.mxu0 0
        %675 = vmatprep.subr.bf16.mxu0 0
        %676 = vmatpush2.bf16.msra.mxu0 0
        %677 = vmatprep.subr.bf16.mxu0 0
        %678 = vmatpush2.bf16.msra.mxu0 0
        %679 = vmatprep.subr.bf16.mxu0 0
        %680 = vmatpush2.bf16.msra.mxu0 0
        %681 = vmatprep.subr.bf16.mxu0 0
        %682 = vmatpush2.bf16.msra.mxu0 0
        %683 = vmatprep.mubr.bf16.mxu0 0
        %684 = vmatmul.mubr.bf16.gmra.mxu0 %v599
        %v685 = vpop.f32.mrf.mxu0
        %v686 = vadd.f32 %v576, %v685
        %v687 = vpop.f32.mrf.mxu0
        %v688 = vpop.f32.mrf.mxu0
        %v689 = vpop.f32.mrf.mxu0
        %690 = vdwg.mxu0
        %s691 = scalar_lea.vmem %s2, 2
        %v692 = vld [vmem:[%s691] sm:$0x3]
        %693 = vrot.lane.b32.xlu0 %v589, 127
        %v694 = vpop.permute.xlu0 %693
        %695 = vrot.lane.b32.xlu0 %v597, 127
        %v696 = vpop.permute.xlu0 %695
        %697 = vrot.lane.b32.xlu0 %v596, 127
        %v698 = vpop.permute.xlu0 %697
        %vm699 = vcmask 1039360
        %v700 = vsel %vm699, %v694, %v696
        %v701 = vsel %vm699, %v696, %v698
        %v703 = vsel %vm487, %v692, 0
        %v706 = vsel %vm440, %v700, 0
        %v709 = vsel %vm440, %v701, 0
        %v712 = vsel %vm440, %v698, 0
        %714 = vmatprep.subr.bf16.mxu0 0
        %715 = vmatpush1.bf16.msra.mxu0 0
        %716 = vmatprep.subr.bf16.mxu0 0
        %717 = vmatpush1.bf16.msra.mxu0 0
        %718 = vmatprep.subr.bf16.mxu0 0
        %719 = vmatpush1.bf16.msra.mxu0 0
        %720 = vmatprep.subr.bf16.mxu0 0
        %721 = vmatpush1.bf16.msra.mxu0 0
        %722 = vmatprep.subr.bf16.mxu0 0
        %723 = vmatpush1.bf16.msra.mxu0 0
        %724 = vmatprep.subr.bf16.mxu0 0
        %725 = vmatpush1.bf16.msra.mxu0 0
        %726 = vmatprep.subr.bf16.mxu0 0
        %727 = vmatpush1.bf16.msra.mxu0 0
        %728 = vmatprep.subr.bf16.mxu0 %v709
        %729 = vmatpush1.bf16.msra.mxu0 %v706
        %730 = vmatprep.subr.bf16.mxu0 0
        %731 = vmatpush2.bf16.msra.mxu0 0
        %732 = vmatprep.subr.bf16.mxu0 0
        %733 = vmatpush2.bf16.msra.mxu0 0
        %734 = vmatprep.subr.bf16.mxu0 0
        %735 = vmatpush2.bf16.msra.mxu0 0
        %736 = vmatprep.subr.bf16.mxu0 0
        %737 = vmatpush2.bf16.msra.mxu0 0
        %738 = vmatprep.subr.bf16.mxu0 0
        %739 = vmatpush2.bf16.msra.mxu0 0
        %740 = vmatprep.subr.bf16.mxu0 0
        %741 = vmatpush2.bf16.msra.mxu0 0
        %742 = vmatprep.subr.bf16.mxu0 0
        %743 = vmatpush2.bf16.msra.mxu0 0
        %744 = vmatprep.subr.bf16.mxu0 0
        %745 = vmatpush2.bf16.msra.mxu0 0
        %746 = vmatprep.mubr.bf16.mxu0 0
        %747 = vmatmul.mubr.bf16.gmra.mxu0 %v703
        %v748 = vpop.f32.mrf.mxu0
        %v749 = vadd.f32 0.0, %v748
        %v750 = vpop.f32.mrf.mxu0
        %v751 = vadd.f32 0.0, %v750
        %v752 = vpop.f32.mrf.mxu0
        %v753 = vpop.f32.mrf.mxu0
        %754 = vdwg.mxu0
        %755 = vmatprep.subr.bf16.mxu0 0
        %756 = vmatpush1.bf16.msra.mxu0 0
        %757 = vmatprep.subr.bf16.mxu0 0
        %758 = vmatpush1.bf16.msra.mxu0 0
        %759 = vmatprep.subr.bf16.mxu0 0
        %760 = vmatpush1.bf16.msra.mxu0 0
        %761 = vmatprep.subr.bf16.mxu0 0
        %762 = vmatpush1.bf16.msra.mxu0 0
        %763 = vmatprep.subr.bf16.mxu0 0
        %764 = vmatpush1.bf16.msra.mxu0 0
        %765 = vmatprep.subr.bf16.mxu0 0
        %766 = vmatpush1.bf16.msra.mxu0 0
        %767 = vmatprep.subr.bf16.mxu0 0
        %768 = vmatpush1.bf16.msra.mxu0 0
        %769 = vmatprep.subr.bf16.mxu0 0
        %770 = vmatpush1.bf16.msra.mxu0 %v712
        %771 = vmatprep.subr.bf16.mxu0 0
        %772 = vmatpush2.bf16.msra.mxu0 0
        %773 = vmatprep.subr.bf16.mxu0 0
        %774 = vmatpush2.bf16.msra.mxu0 0
        %775 = vmatprep.subr.bf16.mxu0 0
        %776 = vmatpush2.bf16.msra.mxu0 0
        %777 = vmatprep.subr.bf16.mxu0 0
        %778 = vmatpush2.bf16.msra.mxu0 0
        %779 = vmatprep.subr.bf16.mxu0 0
        %780 = vmatpush2.bf16.msra.mxu0 0
        %781 = vmatprep.subr.bf16.mxu0 0
        %782 = vmatpush2.bf16.msra.mxu0 0
        %783 = vmatprep.subr.bf16.mxu0 0
        %784 = vmatpush2.bf16.msra.mxu0 0
        %785 = vmatprep.subr.bf16.mxu0 0
        %786 = vmatpush2.bf16.msra.mxu0 0
        %787 = vmatprep.mubr.bf16.mxu0 0
        %788 = vmatmul.mubr.bf16.gmra.mxu0 %v703
        %v789 = vpop.f32.mrf.mxu0
        %v790 = vadd.f32 0.0, %v789
        %v791 = vpop.f32.mrf.mxu0
        %v792 = vpop.f32.mrf.mxu0
        %v793 = vpop.f32.mrf.mxu0
        %794 = vdwg.mxu0
        %v795 = vadd.f32 %v645, %v749
        %v796 = vadd.f32 %v647, %v751
        %v797 = vadd.f32 %v686, %v790
        %s798 = scalar_lea.vmem %s3, 2
        %v799 = vld [vmem:[%s798] sm:$0x3]
        %800 = vrot.lane.b32.xlu0 %v478, 127
        %v801 = vpop.permute.xlu0 %800
        %802 = vrot.lane.b32.xlu0 %v486, 127
        %v803 = vpop.permute.xlu0 %802
        %804 = vrot.lane.b32.xlu0 %v485, 127
        %v805 = vpop.permute.xlu0 %804
        %v806 = vsel %vm699, %v801, %v803
        %v807 = vsel %vm699, %v803, %v805
        %v809 = vsel %vm487, %v799, 0
        %v812 = vsel %vm440, %v806, 0
        %v815 = vsel %vm440, %v807, 0
        %v818 = vsel %vm440, %v805, 0
        %820 = vmatprep.subr.bf16.mxu0 0
        %821 = vmatpush1.bf16.msra.mxu0 0
        %822 = vmatprep.subr.bf16.mxu0 0
        %823 = vmatpush1.bf16.msra.mxu0 0
        %824 = vmatprep.subr.bf16.mxu0 0
        %825 = vmatpush1.bf16.msra.mxu0 0
        %826 = vmatprep.subr.bf16.mxu0 0
        %827 = vmatpush1.bf16.msra.mxu0 0
        %828 = vmatprep.subr.bf16.mxu0 0
        %829 = vmatpush1.bf16.msra.mxu0 0
        %830 = vmatprep.subr.bf16.mxu0 0
        %831 = vmatpush1.bf16.msra.mxu0 0
        %832 = vmatprep.subr.bf16.mxu0 0
        %833 = vmatpush1.bf16.msra.mxu0 0
        %834 = vmatprep.subr.bf16.mxu0 %v815
        %835 = vmatpush1.bf16.msra.mxu0 %v812
        %836 = vmatprep.subr.bf16.mxu0 0
        %837 = vmatpush2.bf16.msra.mxu0 0
        %838 = vmatprep.subr.bf16.mxu0 0
        %839 = vmatpush2.bf16.msra.mxu0 0
        %840 = vmatprep.subr.bf16.mxu0 0
        %841 = vmatpush2.bf16.msra.mxu0 0
        %842 = vmatprep.subr.bf16.mxu0 0
        %843 = vmatpush2.bf16.msra.mxu0 0
        %844 = vmatprep.subr.bf16.mxu0 0
        %845 = vmatpush2.bf16.msra.mxu0 0
        %846 = vmatprep.subr.bf16.mxu0 0
        %847 = vmatpush2.bf16.msra.mxu0 0
        %848 = vmatprep.subr.bf16.mxu0 0
        %849 = vmatpush2.bf16.msra.mxu0 0
        %850 = vmatprep.subr.bf16.mxu0 0
        %851 = vmatpush2.bf16.msra.mxu0 0
        %852 = vmatprep.mubr.bf16.mxu0 0
        %853 = vmatmul.mubr.bf16.gmra.mxu0 %v809
        %v854 = vpop.f32.mrf.mxu0
        %v855 = vadd.f32 0.0, %v854
        %v856 = vpop.f32.mrf.mxu0
        %v857 = vadd.f32 0.0, %v856
        %v858 = vpop.f32.mrf.mxu0
        %v859 = vpop.f32.mrf.mxu0
        %860 = vdwg.mxu0
        %861 = vmatprep.subr.bf16.mxu0 0
        %862 = vmatpush1.bf16.msra.mxu0 0
        %863 = vmatprep.subr.bf16.mxu0 0
        %864 = vmatpush1.bf16.msra.mxu0 0
        %865 = vmatprep.subr.bf16.mxu0 0
        %866 = vmatpush1.bf16.msra.mxu0 0
        %867 = vmatprep.subr.bf16.mxu0 0
        %868 = vmatpush1.bf16.msra.mxu0 0
        %869 = vmatprep.subr.bf16.mxu0 0
        %870 = vmatpush1.bf16.msra.mxu0 0
        %871 = vmatprep.subr.bf16.mxu0 0
        %872 = vmatpush1.bf16.msra.mxu0 0
        %873 = vmatprep.subr.bf16.mxu0 0
        %874 = vmatpush1.bf16.msra.mxu0 0
        %875 = vmatprep.subr.bf16.mxu0 0
        %876 = vmatpush1.bf16.msra.mxu0 %v818
        %877 = vmatprep.subr.bf16.mxu0 0
        %878 = vmatpush2.bf16.msra.mxu0 0
        %879 = vmatprep.subr.bf16.mxu0 0
        %880 = vmatpush2.bf16.msra.mxu0 0
        %881 = vmatprep.subr.bf16.mxu0 0
        %882 = vmatpush2.bf16.msra.mxu0 0
        %883 = vmatprep.subr.bf16.mxu0 0
        %884 = vmatpush2.bf16.msra.mxu0 0
        %885 = vmatprep.subr.bf16.mxu0 0
        %886 = vmatpush2.bf16.msra.mxu0 0
        %887 = vmatprep.subr.bf16.mxu0 0
        %888 = vmatpush2.bf16.msra.mxu0 0
        %889 = vmatprep.subr.bf16.mxu0 0
        %890 = vmatpush2.bf16.msra.mxu0 0
        %891 = vmatprep.subr.bf16.mxu0 0
        %892 = vmatpush2.bf16.msra.mxu0 0
        %893 = vmatprep.mubr.bf16.mxu0 0
        %894 = vmatmul.mubr.bf16.gmra.mxu0 %v809
        %v895 = vpop.f32.mrf.mxu0
        %v896 = vadd.f32 0.0, %v895
        %v897 = vpop.f32.mrf.mxu0
        %v898 = vpop.f32.mrf.mxu0
        %v899 = vpop.f32.mrf.mxu0
        %900 = vdwg.mxu0
        %v901 = vadd.f32 %v795, %v855
        %v902 = vadd.f32 %v796, %v857
        %v903 = vadd.f32 %v797, %v896
        %s904 = scalar_lea.vmem %s2, 4
        %v905 = vld [vmem:[%s904] sm:$0x3]
        %906 = vrot.lane.b32.xlu0 %v589, 126
        %v907 = vpop.permute.xlu0 %906
        %908 = vrot.lane.b32.xlu0 %v597, 126
        %v909 = vpop.permute.xlu0 %908
        %910 = vrot.lane.b32.xlu0 %v596, 126
        %v911 = vpop.permute.xlu0 %910
        %vm912 = vcmask 1031168
        %v913 = vsel %vm912, %v907, %v909
        %v914 = vsel %vm912, %v909, %v911
        %v916 = vsel %vm487, %v905, 0
        %v919 = vsel %vm440, %v913, 0
        %v922 = vsel %vm440, %v914, 0
        %v925 = vsel %vm440, %v911, 0
        %927 = vmatprep.subr.bf16.mxu0 0
        %928 = vmatpush1.bf16.msra.mxu0 0
        %929 = vmatprep.subr.bf16.mxu0 0
        %930 = vmatpush1.bf16.msra.mxu0 0
        %931 = vmatprep.subr.bf16.mxu0 0
        %932 = vmatpush1.bf16.msra.mxu0 0
        %933 = vmatprep.subr.bf16.mxu0 0
        %934 = vmatpush1.bf16.msra.mxu0 0
        %935 = vmatprep.subr.bf16.mxu0 0
        %936 = vmatpush1.bf16.msra.mxu0 0
        %937 = vmatprep.subr.bf16.mxu0 0
        %938 = vmatpush1.bf16.msra.mxu0 0
        %939 = vmatprep.subr.bf16.mxu0 0
        %940 = vmatpush1.bf16.msra.mxu0 0
        %941 = vmatprep.subr.bf16.mxu0 %v922
        %942 = vmatpush1.bf16.msra.mxu0 %v919
        %943 = vmatprep.subr.bf16.mxu0 0
        %944 = vmatpush2.bf16.msra.mxu0 0
        %945 = vmatprep.subr.bf16.mxu0 0
        %946 = vmatpush2.bf16.msra.mxu0 0
        %947 = vmatprep.subr.bf16.mxu0 0
        %948 = vmatpush2.bf16.msra.mxu0 0
        %949 = vmatprep.subr.bf16.mxu0 0
        %950 = vmatpush2.bf16.msra.mxu0 0
        %951 = vmatprep.subr.bf16.mxu0 0
        %952 = vmatpush2.bf16.msra.mxu0 0
        %953 = vmatprep.subr.bf16.mxu0 0
        %954 = vmatpush2.bf16.msra.mxu0 0
        %955 = vmatprep.subr.bf16.mxu0 0
        %956 = vmatpush2.bf16.msra.mxu0 0
        %957 = vmatprep.subr.bf16.mxu0 0
        %958 = vmatpush2.bf16.msra.mxu0 0
        %959 = vmatprep.mubr.bf16.mxu0 0
        %960 = vmatmul.mubr.bf16.gmra.mxu0 %v916
        %v961 = vpop.f32.mrf.mxu0
        %v962 = vadd.f32 0.0, %v961
        %v963 = vpop.f32.mrf.mxu0
        %v964 = vadd.f32 0.0, %v963
        %v965 = vpop.f32.mrf.mxu0
        %v966 = vpop.f32.mrf.mxu0
        %967 = vdwg.mxu0
        %968 = vmatprep.subr.bf16.mxu0 0
        %969 = vmatpush1.bf16.msra.mxu0 0
        %970 = vmatprep.subr.bf16.mxu0 0
        %971 = vmatpush1.bf16.msra.mxu0 0
        %972 = vmatprep.subr.bf16.mxu0 0
        %973 = vmatpush1.bf16.msra.mxu0 0
        %974 = vmatprep.subr.bf16.mxu0 0
        %975 = vmatpush1.bf16.msra.mxu0 0
        %976 = vmatprep.subr.bf16.mxu0 0
        %977 = vmatpush1.bf16.msra.mxu0 0
        %978 = vmatprep.subr.bf16.mxu0 0
        %979 = vmatpush1.bf16.msra.mxu0 0
        %980 = vmatprep.subr.bf16.mxu0 0
        %981 = vmatpush1.bf16.msra.mxu0 0
        %982 = vmatprep.subr.bf16.mxu0 0
        %983 = vmatpush1.bf16.msra.mxu0 %v925
        %984 = vmatprep.subr.bf16.mxu0 0
        %985 = vmatpush2.bf16.msra.mxu0 0
        %986 = vmatprep.subr.bf16.mxu0 0
        %987 = vmatpush2.bf16.msra.mxu0 0
        %988 = vmatprep.subr.bf16.mxu0 0
        %989 = vmatpush2.bf16.msra.mxu0 0
        %990 = vmatprep.subr.bf16.mxu0 0
        %991 = vmatpush2.bf16.msra.mxu0 0
        %992 = vmatprep.subr.bf16.mxu0 0
        %993 = vmatpush2.bf16.msra.mxu0 0
        %994 = vmatprep.subr.bf16.mxu0 0
        %995 = vmatpush2.bf16.msra.mxu0 0
        %996 = vmatprep.subr.bf16.mxu0 0
        %997 = vmatpush2.bf16.msra.mxu0 0
        %998 = vmatprep.subr.bf16.mxu0 0
        %999 = vmatpush2.bf16.msra.mxu0 0
        %1000 = vmatprep.mubr.bf16.mxu0 0
        %1001 = vmatmul.mubr.bf16.gmra.mxu0 %v916
        %v1002 = vpop.f32.mrf.mxu0
        %v1003 = vadd.f32 0.0, %v1002
        %v1004 = vpop.f32.mrf.mxu0
        %v1005 = vpop.f32.mrf.mxu0
        %v1006 = vpop.f32.mrf.mxu0
        %1007 = vdwg.mxu0
        %v1008 = vadd.f32 %v901, %v962
        %v1009 = vadd.f32 %v902, %v964
        %v1010 = vadd.f32 %v903, %v1003
        %s1011 = scalar_lea.vmem %s3, 4
        %v1012 = vld [vmem:[%s1011] sm:$0x3]
        %1013 = vrot.lane.b32.xlu0 %v478, 126
        %v1014 = vpop.permute.xlu0 %1013
        %1015 = vrot.lane.b32.xlu0 %v486, 126
        %v1016 = vpop.permute.xlu0 %1015
        %1017 = vrot.lane.b32.xlu0 %v485, 126
        %v1018 = vpop.permute.xlu0 %1017
        %v1019 = vsel %vm912, %v1014, %v1016
        %v1020 = vsel %vm912, %v1016, %v1018
        %v1022 = vsel %vm487, %v1012, 0
        %v1025 = vsel %vm440, %v1019, 0
        %v1028 = vsel %vm440, %v1020, 0
        %v1031 = vsel %vm440, %v1018, 0
        %1033 = vmatprep.subr.bf16.mxu0 0
        %1034 = vmatpush1.bf16.msra.mxu0 0
        %1035 = vmatprep.subr.bf16.mxu0 0
        %1036 = vmatpush1.bf16.msra.mxu0 0
        %1037 = vmatprep.subr.bf16.mxu0 0
        %1038 = vmatpush1.bf16.msra.mxu0 0
        %1039 = vmatprep.subr.bf16.mxu0 0
        %1040 = vmatpush1.bf16.msra.mxu0 0
        %1041 = vmatprep.subr.bf16.mxu0 0
        %1042 = vmatpush1.bf16.msra.mxu0 0
        %1043 = vmatprep.subr.bf16.mxu0 0
        %1044 = vmatpush1.bf16.msra.mxu0 0
        %1045 = vmatprep.subr.bf16.mxu0 0
        %1046 = vmatpush1.bf16.msra.mxu0 0
        %1047 = vmatprep.subr.bf16.mxu0 %v1028
        %1048 = vmatpush1.bf16.msra.mxu0 %v1025
        %1049 = vmatprep.subr.bf16.mxu0 0
        %1050 = vmatpush2.bf16.msra.mxu0 0
        %1051 = vmatprep.subr.bf16.mxu0 0
        %1052 = vmatpush2.bf16.msra.mxu0 0
        %1053 = vmatprep.subr.bf16.mxu0 0
        %1054 = vmatpush2.bf16.msra.mxu0 0
        %1055 = vmatprep.subr.bf16.mxu0 0
        %1056 = vmatpush2.bf16.msra.mxu0 0
        %1057 = vmatprep.subr.bf16.mxu0 0
        %1058 = vmatpush2.bf16.msra.mxu0 0
        %1059 = vmatprep.subr.bf16.mxu0 0
        %1060 = vmatpush2.bf16.msra.mxu0 0
        %1061 = vmatprep.subr.bf16.mxu0 0
        %1062 = vmatpush2.bf16.msra.mxu0 0
        %1063 = vmatprep.subr.bf16.mxu0 0
        %1064 = vmatpush2.bf16.msra.mxu0 0
        %1065 = vmatprep.mubr.bf16.mxu0 0
        %1066 = vmatmul.mubr.bf16.gmra.mxu0 %v1022
        %v1067 = vpop.f32.mrf.mxu0
        %v1068 = vadd.f32 0.0, %v1067
        %v1069 = vpop.f32.mrf.mxu0
        %v1070 = vadd.f32 0.0, %v1069
        %v1071 = vpop.f32.mrf.mxu0
        %v1072 = vpop.f32.mrf.mxu0
        %1073 = vdwg.mxu0
        %1074 = vmatprep.subr.bf16.mxu0 0
        %1075 = vmatpush1.bf16.msra.mxu0 0
        %1076 = vmatprep.subr.bf16.mxu0 0
        %1077 = vmatpush1.bf16.msra.mxu0 0
        %1078 = vmatprep.subr.bf16.mxu0 0
        %1079 = vmatpush1.bf16.msra.mxu0 0
        %1080 = vmatprep.subr.bf16.mxu0 0
        %1081 = vmatpush1.bf16.msra.mxu0 0
        %1082 = vmatprep.subr.bf16.mxu0 0
        %1083 = vmatpush1.bf16.msra.mxu0 0
        %1084 = vmatprep.subr.bf16.mxu0 0
        %1085 = vmatpush1.bf16.msra.mxu0 0
        %1086 = vmatprep.subr.bf16.mxu0 0
        %1087 = vmatpush1.bf16.msra.mxu0 0
        %1088 = vmatprep.subr.bf16.mxu0 0
        %1089 = vmatpush1.bf16.msra.mxu0 %v1031
        %1090 = vmatprep.subr.bf16.mxu0 0
        %1091 = vmatpush2.bf16.msra.mxu0 0
        %1092 = vmatprep.subr.bf16.mxu0 0
        %1093 = vmatpush2.bf16.msra.mxu0 0
        %1094 = vmatprep.subr.bf16.mxu0 0
        %1095 = vmatpush2.bf16.msra.mxu0 0
        %1096 = vmatprep.subr.bf16.mxu0 0
        %1097 = vmatpush2.bf16.msra.mxu0 0
        %1098 = vmatprep.subr.bf16.mxu0 0
        %1099 = vmatpush2.bf16.msra.mxu0 0
        %1100 = vmatprep.subr.bf16.mxu0 0
        %1101 = vmatpush2.bf16.msra.mxu0 0
        %1102 = vmatprep.subr.bf16.mxu0 0
        %1103 = vmatpush2.bf16.msra.mxu0 0
        %1104 = vmatprep.subr.bf16.mxu0 0
        %1105 = vmatpush2.bf16.msra.mxu0 0
        %1106 = vmatprep.mubr.bf16.mxu0 0
        %1107 = vmatmul.mubr.bf16.gmra.mxu0 %v1022
        %v1108 = vpop.f32.mrf.mxu0
        %v1109 = vadd.f32 0.0, %v1108
        %v1110 = vpop.f32.mrf.mxu0
        %v1111 = vpop.f32.mrf.mxu0
        %v1112 = vpop.f32.mrf.mxu0
        %1113 = vdwg.mxu0
        %v1114 = vadd.f32 %v1008, %v1068
        %v1115 = vadd.f32 %v1009, %v1070
        %v1116 = vadd.f32 %v1010, %v1109
        %s1117 = scalar_lea.vmem %s2, 6
        %v1118 = vld [vmem:[%s1117] sm:$0x3]
        %1119 = vrot.lane.b32.xlu0 %v589, 110
        %v1120 = vpop.permute.xlu0 %1119
        %1121 = vrot.lane.b32.xlu0 %v597, 110
        %v1122 = vpop.permute.xlu0 %1121
        %1123 = vrot.lane.b32.xlu0 %v596, 110
        %v1124 = vpop.permute.xlu0 %1123
        %vm1125 = vcmask 900096
        %v1126 = vsel %vm1125, %v1120, %v1122
        %v1127 = vsel %vm1125, %v1122, %v1124
        %v1129 = vsel %vm487, %v1118, 0
        %v1132 = vsel %vm440, %v1126, 0
        %v1135 = vsel %vm440, %v1127, 0
        %v1138 = vsel %vm440, %v1124, 0
        %1140 = vmatprep.subr.bf16.mxu0 0
        %1141 = vmatpush1.bf16.msra.mxu0 0
        %1142 = vmatprep.subr.bf16.mxu0 0
        %1143 = vmatpush1.bf16.msra.mxu0 0
        %1144 = vmatprep.subr.bf16.mxu0 0
        %1145 = vmatpush1.bf16.msra.mxu0 0
        %1146 = vmatprep.subr.bf16.mxu0 0
        %1147 = vmatpush1.bf16.msra.mxu0 0
        %1148 = vmatprep.subr.bf16.mxu0 0
        %1149 = vmatpush1.bf16.msra.mxu0 0
        %1150 = vmatprep.subr.bf16.mxu0 0
        %1151 = vmatpush1.bf16.msra.mxu0 0
        %1152 = vmatprep.subr.bf16.mxu0 0
        %1153 = vmatpush1.bf16.msra.mxu0 0
        %1154 = vmatprep.subr.bf16.mxu0 %v1135
        %1155 = vmatpush1.bf16.msra.mxu0 %v1132
        %1156 = vmatprep.subr.bf16.mxu0 0
        %1157 = vmatpush2.bf16.msra.mxu0 0
        %1158 = vmatprep.subr.bf16.mxu0 0
        %1159 = vmatpush2.bf16.msra.mxu0 0
        %1160 = vmatprep.subr.bf16.mxu0 0
        %1161 = vmatpush2.bf16.msra.mxu0 0
        %1162 = vmatprep.subr.bf16.mxu0 0
        %1163 = vmatpush2.bf16.msra.mxu0 0
        %1164 = vmatprep.subr.bf16.mxu0 0
        %1165 = vmatpush2.bf16.msra.mxu0 0
        %1166 = vmatprep.subr.bf16.mxu0 0
        %1167 = vmatpush2.bf16.msra.mxu0 0
        %1168 = vmatprep.subr.bf16.mxu0 0
        %1169 = vmatpush2.bf16.msra.mxu0 0
        %1170 = vmatprep.subr.bf16.mxu0 0
        %1171 = vmatpush2.bf16.msra.mxu0 0
        %1172 = vmatprep.mubr.bf16.mxu0 0
        %1173 = vmatmul.mubr.bf16.gmra.mxu0 %v1129
        %v1174 = vpop.f32.mrf.mxu0
        %v1175 = vadd.f32 0.0, %v1174
        %v1176 = vpop.f32.mrf.mxu0
        %v1177 = vadd.f32 0.0, %v1176
        %v1178 = vpop.f32.mrf.mxu0
        %v1179 = vpop.f32.mrf.mxu0
        %1180 = vdwg.mxu0
        %1181 = vmatprep.subr.bf16.mxu0 0
        %1182 = vmatpush1.bf16.msra.mxu0 0
        %1183 = vmatprep.subr.bf16.mxu0 0
        %1184 = vmatpush1.bf16.msra.mxu0 0
        %1185 = vmatprep.subr.bf16.mxu0 0
        %1186 = vmatpush1.bf16.msra.mxu0 0
        %1187 = vmatprep.subr.bf16.mxu0 0
        %1188 = vmatpush1.bf16.msra.mxu0 0
        %1189 = vmatprep.subr.bf16.mxu0 0
        %1190 = vmatpush1.bf16.msra.mxu0 0
        %1191 = vmatprep.subr.bf16.mxu0 0
        %1192 = vmatpush1.bf16.msra.mxu0 0
        %1193 = vmatprep.subr.bf16.mxu0 0
        %1194 = vmatpush1.bf16.msra.mxu0 0
        %1195 = vmatprep.subr.bf16.mxu0 0
        %1196 = vmatpush1.bf16.msra.mxu0 %v1138
        %1197 = vmatprep.subr.bf16.mxu0 0
        %1198 = vmatpush2.bf16.msra.mxu0 0
        %1199 = vmatprep.subr.bf16.mxu0 0
        %1200 = vmatpush2.bf16.msra.mxu0 0
        %1201 = vmatprep.subr.bf16.mxu0 0
        %1202 = vmatpush2.bf16.msra.mxu0 0
        %1203 = vmatprep.subr.bf16.mxu0 0
        %1204 = vmatpush2.bf16.msra.mxu0 0
        %1205 = vmatprep.subr.bf16.mxu0 0
        %1206 = vmatpush2.bf16.msra.mxu0 0
        %1207 = vmatprep.subr.bf16.mxu0 0
        %1208 = vmatpush2.bf16.msra.mxu0 0
        %1209 = vmatprep.subr.bf16.mxu0 0
        %1210 = vmatpush2.bf16.msra.mxu0 0
        %1211 = vmatprep.subr.bf16.mxu0 0
        %1212 = vmatpush2.bf16.msra.mxu0 0
        %1213 = vmatprep.mubr.bf16.mxu0 0
        %1214 = vmatmul.mubr.bf16.gmra.mxu0 %v1129
        %v1215 = vpop.f32.mrf.mxu0
        %v1216 = vadd.f32 0.0, %v1215
        %v1217 = vpop.f32.mrf.mxu0
        %v1218 = vpop.f32.mrf.mxu0
        %v1219 = vpop.f32.mrf.mxu0
        %1220 = vdwg.mxu0
        %v1221 = vadd.f32 %v1114, %v1175
        %v1222 = vadd.f32 %v1115, %v1177
        %v1223 = vadd.f32 %v1116, %v1216
        %s1224 = scalar_lea.vmem %s3, 6
        %v1225 = vld [vmem:[%s1224] sm:$0x3]
        %1226 = vrot.lane.b32.xlu0 %v478, 110
        %v1227 = vpop.permute.xlu0 %1226
        %1228 = vrot.lane.b32.xlu0 %v486, 110
        %v1229 = vpop.permute.xlu0 %1228
        %1230 = vrot.lane.b32.xlu0 %v485, 110
        %v1231 = vpop.permute.xlu0 %1230
        %v1232 = vsel %vm1125, %v1227, %v1229
        %v1233 = vsel %vm1125, %v1229, %v1231
        %v1235 = vsel %vm487, %v1225, 0
        %v1238 = vsel %vm440, %v1232, 0
        %v1241 = vsel %vm440, %v1233, 0
        %v1244 = vsel %vm440, %v1231, 0
        %1246 = vmatprep.subr.bf16.mxu0 0
        %1247 = vmatpush1.bf16.msra.mxu0 0
        %1248 = vmatprep.subr.bf16.mxu0 0
        %1249 = vmatpush1.bf16.msra.mxu0 0
        %1250 = vmatprep.subr.bf16.mxu0 0
        %1251 = vmatpush1.bf16.msra.mxu0 0
        %1252 = vmatprep.subr.bf16.mxu0 0
        %1253 = vmatpush1.bf16.msra.mxu0 0
        %1254 = vmatprep.subr.bf16.mxu0 0
        %1255 = vmatpush1.bf16.msra.mxu0 0
        %1256 = vmatprep.subr.bf16.mxu0 0
        %1257 = vmatpush1.bf16.msra.mxu0 0
        %1258 = vmatprep.subr.bf16.mxu0 0
        %1259 = vmatpush1.bf16.msra.mxu0 0
        %1260 = vmatprep.subr.bf16.mxu0 %v1241
        %1261 = vmatpush1.bf16.msra.mxu0 %v1238
        %1262 = vmatprep.subr.bf16.mxu0 0
        %1263 = vmatpush2.bf16.msra.mxu0 0
        %1264 = vmatprep.subr.bf16.mxu0 0
        %1265 = vmatpush2.bf16.msra.mxu0 0
        %1266 = vmatprep.subr.bf16.mxu0 0
        %1267 = vmatpush2.bf16.msra.mxu0 0
        %1268 = vmatprep.subr.bf16.mxu0 0
        %1269 = vmatpush2.bf16.msra.mxu0 0
        %1270 = vmatprep.subr.bf16.mxu0 0
        %1271 = vmatpush2.bf16.msra.mxu0 0
        %1272 = vmatprep.subr.bf16.mxu0 0
        %1273 = vmatpush2.bf16.msra.mxu0 0
        %1274 = vmatprep.subr.bf16.mxu0 0
        %1275 = vmatpush2.bf16.msra.mxu0 0
        %1276 = vmatprep.subr.bf16.mxu0 0
        %1277 = vmatpush2.bf16.msra.mxu0 0
        %1278 = vmatprep.mubr.bf16.mxu0 0
        %1279 = vmatmul.mubr.bf16.gmra.mxu0 %v1235
        %v1280 = vpop.f32.mrf.mxu0
        %v1281 = vadd.f32 0.0, %v1280
        %v1282 = vpop.f32.mrf.mxu0
        %v1283 = vadd.f32 0.0, %v1282
        %v1284 = vpop.f32.mrf.mxu0
        %v1285 = vpop.f32.mrf.mxu0
        %1286 = vdwg.mxu0
        %1287 = vmatprep.subr.bf16.mxu0 0
        %1288 = vmatpush1.bf16.msra.mxu0 0
        %1289 = vmatprep.subr.bf16.mxu0 0
        %1290 = vmatpush1.bf16.msra.mxu0 0
        %1291 = vmatprep.subr.bf16.mxu0 0
        %1292 = vmatpush1.bf16.msra.mxu0 0
        %1293 = vmatprep.subr.bf16.mxu0 0
        %1294 = vmatpush1.bf16.msra.mxu0 0
        %1295 = vmatprep.subr.bf16.mxu0 0
        %1296 = vmatpush1.bf16.msra.mxu0 0
        %1297 = vmatprep.subr.bf16.mxu0 0
        %1298 = vmatpush1.bf16.msra.mxu0 0
        %1299 = vmatprep.subr.bf16.mxu0 0
        %1300 = vmatpush1.bf16.msra.mxu0 0
        %1301 = vmatprep.subr.bf16.mxu0 0
        %1302 = vmatpush1.bf16.msra.mxu0 %v1244
        %1303 = vmatprep.subr.bf16.mxu0 0
        %1304 = vmatpush2.bf16.msra.mxu0 0
        %1305 = vmatprep.subr.bf16.mxu0 0
        %1306 = vmatpush2.bf16.msra.mxu0 0
        %1307 = vmatprep.subr.bf16.mxu0 0
        %1308 = vmatpush2.bf16.msra.mxu0 0
        %1309 = vmatprep.subr.bf16.mxu0 0
        %1310 = vmatpush2.bf16.msra.mxu0 0
        %1311 = vmatprep.subr.bf16.mxu0 0
        %1312 = vmatpush2.bf16.msra.mxu0 0
        %1313 = vmatprep.subr.bf16.mxu0 0
        %1314 = vmatpush2.bf16.msra.mxu0 0
        %1315 = vmatprep.subr.bf16.mxu0 0
        %1316 = vmatpush2.bf16.msra.mxu0 0
        %1317 = vmatprep.subr.bf16.mxu0 0
        %1318 = vmatpush2.bf16.msra.mxu0 0
        %1319 = vmatprep.mubr.bf16.mxu0 0
        %1320 = vmatmul.mubr.bf16.gmra.mxu0 %v1235
        %v1321 = vpop.f32.mrf.mxu0
        %v1322 = vadd.f32 0.0, %v1321
        %v1323 = vpop.f32.mrf.mxu0
        %v1324 = vpop.f32.mrf.mxu0
        %v1325 = vpop.f32.mrf.mxu0
        %1326 = vdwg.mxu0
        %v1327 = vadd.f32 %v1221, %v1281
        %v1328 = vadd.f32 %v1222, %v1283
        %v1329 = vadd.f32 %v1223, %v1322
        %s1330 = scalar_lea.vmem %s2, 8
        %v1331 = vld [vmem:[%s1330] sm:$0x3]
        %1332 = vrot.lane.b32.xlu0 %v589, 109
        %v1333 = vpop.permute.xlu0 %1332
        %1334 = vrot.lane.b32.xlu0 %v597, 109
        %v1335 = vpop.permute.xlu0 %1334
        %1336 = vrot.lane.b32.xlu0 %v596, 109
        %v1337 = vpop.permute.xlu0 %1336
        %vm1338 = vcmask 891904
        %v1339 = vsel %vm1338, %v1333, %v1335
        %v1340 = vsel %vm1338, %v1335, %v1337
        %v1342 = vsel %vm487, %v1331, 0
        %v1345 = vsel %vm440, %v1339, 0
        %v1348 = vsel %vm440, %v1340, 0
        %v1351 = vsel %vm440, %v1337, 0
        %1353 = vmatprep.subr.bf16.mxu0 0
        %1354 = vmatpush1.bf16.msra.mxu0 0
        %1355 = vmatprep.subr.bf16.mxu0 0
        %1356 = vmatpush1.bf16.msra.mxu0 0
        %1357 = vmatprep.subr.bf16.mxu0 0
        %1358 = vmatpush1.bf16.msra.mxu0 0
        %1359 = vmatprep.subr.bf16.mxu0 0
        %1360 = vmatpush1.bf16.msra.mxu0 0
        %1361 = vmatprep.subr.bf16.mxu0 0
        %1362 = vmatpush1.bf16.msra.mxu0 0
        %1363 = vmatprep.subr.bf16.mxu0 0
        %1364 = vmatpush1.bf16.msra.mxu0 0
        %1365 = vmatprep.subr.bf16.mxu0 0
        %1366 = vmatpush1.bf16.msra.mxu0 0
        %1367 = vmatprep.subr.bf16.mxu0 %v1348
        %1368 = vmatpush1.bf16.msra.mxu0 %v1345
        %1369 = vmatprep.subr.bf16.mxu0 0
        %1370 = vmatpush2.bf16.msra.mxu0 0
        %1371 = vmatprep.subr.bf16.mxu0 0
        %1372 = vmatpush2.bf16.msra.mxu0 0
        %1373 = vmatprep.subr.bf16.mxu0 0
        %1374 = vmatpush2.bf16.msra.mxu0 0
        %1375 = vmatprep.subr.bf16.mxu0 0
        %1376 = vmatpush2.bf16.msra.mxu0 0
        %1377 = vmatprep.subr.bf16.mxu0 0
        %1378 = vmatpush2.bf16.msra.mxu0 0
        %1379 = vmatprep.subr.bf16.mxu0 0
        %1380 = vmatpush2.bf16.msra.mxu0 0
        %1381 = vmatprep.subr.bf16.mxu0 0
        %1382 = vmatpush2.bf16.msra.mxu0 0
        %1383 = vmatprep.subr.bf16.mxu0 0
        %1384 = vmatpush2.bf16.msra.mxu0 0
        %1385 = vmatprep.mubr.bf16.mxu0 0
        %1386 = vmatmul.mubr.bf16.gmra.mxu0 %v1342
        %v1387 = vpop.f32.mrf.mxu0
        %v1388 = vadd.f32 0.0, %v1387
        %v1389 = vpop.f32.mrf.mxu0
        %v1390 = vadd.f32 0.0, %v1389
        %v1391 = vpop.f32.mrf.mxu0
        %v1392 = vpop.f32.mrf.mxu0
        %1393 = vdwg.mxu0
        %1394 = vmatprep.subr.bf16.mxu0 0
        %1395 = vmatpush1.bf16.msra.mxu0 0
        %1396 = vmatprep.subr.bf16.mxu0 0
        %1397 = vmatpush1.bf16.msra.mxu0 0
        %1398 = vmatprep.subr.bf16.mxu0 0
        %1399 = vmatpush1.bf16.msra.mxu0 0
        %1400 = vmatprep.subr.bf16.mxu0 0
        %1401 = vmatpush1.bf16.msra.mxu0 0
        %1402 = vmatprep.subr.bf16.mxu0 0
        %1403 = vmatpush1.bf16.msra.mxu0 0
        %1404 = vmatprep.subr.bf16.mxu0 0
        %1405 = vmatpush1.bf16.msra.mxu0 0
        %1406 = vmatprep.subr.bf16.mxu0 0
        %1407 = vmatpush1.bf16.msra.mxu0 0
        %1408 = vmatprep.subr.bf16.mxu0 0
        %1409 = vmatpush1.bf16.msra.mxu0 %v1351
        %1410 = vmatprep.subr.bf16.mxu0 0
        %1411 = vmatpush2.bf16.msra.mxu0 0
        %1412 = vmatprep.subr.bf16.mxu0 0
        %1413 = vmatpush2.bf16.msra.mxu0 0
        %1414 = vmatprep.subr.bf16.mxu0 0
        %1415 = vmatpush2.bf16.msra.mxu0 0
        %1416 = vmatprep.subr.bf16.mxu0 0
        %1417 = vmatpush2.bf16.msra.mxu0 0
        %1418 = vmatprep.subr.bf16.mxu0 0
        %1419 = vmatpush2.bf16.msra.mxu0 0
        %1420 = vmatprep.subr.bf16.mxu0 0
        %1421 = vmatpush2.bf16.msra.mxu0 0
        %1422 = vmatprep.subr.bf16.mxu0 0
        %1423 = vmatpush2.bf16.msra.mxu0 0
        %1424 = vmatprep.subr.bf16.mxu0 0
        %1425 = vmatpush2.bf16.msra.mxu0 0
        %1426 = vmatprep.mubr.bf16.mxu0 0
        %1427 = vmatmul.mubr.bf16.gmra.mxu0 %v1342
        %v1428 = vpop.f32.mrf.mxu0
        %v1429 = vadd.f32 0.0, %v1428
        %v1430 = vpop.f32.mrf.mxu0
        %v1431 = vpop.f32.mrf.mxu0
        %v1432 = vpop.f32.mrf.mxu0
        %1433 = vdwg.mxu0
        %v1434 = vadd.f32 %v1327, %v1388
        %v1435 = vadd.f32 %v1328, %v1390
        %v1436 = vadd.f32 %v1329, %v1429
        %s1437 = scalar_lea.vmem %s3, 8
        %v1438 = vld [vmem:[%s1437] sm:$0x3]
        %1439 = vrot.lane.b32.xlu0 %v478, 109
        %v1440 = vpop.permute.xlu0 %1439
        %1441 = vrot.lane.b32.xlu0 %v486, 109
        %v1442 = vpop.permute.xlu0 %1441
        %1443 = vrot.lane.b32.xlu0 %v485, 109
        %v1444 = vpop.permute.xlu0 %1443
        %v1445 = vsel %vm1338, %v1440, %v1442
        %v1446 = vsel %vm1338, %v1442, %v1444
        %v1448 = vsel %vm487, %v1438, 0
        %v1451 = vsel %vm440, %v1445, 0
        %v1454 = vsel %vm440, %v1446, 0
        %v1457 = vsel %vm440, %v1444, 0
        %1459 = vmatprep.subr.bf16.mxu0 0
        %1460 = vmatpush1.bf16.msra.mxu0 0
        %1461 = vmatprep.subr.bf16.mxu0 0
        %1462 = vmatpush1.bf16.msra.mxu0 0
        %1463 = vmatprep.subr.bf16.mxu0 0
        %1464 = vmatpush1.bf16.msra.mxu0 0
        %1465 = vmatprep.subr.bf16.mxu0 0
        %1466 = vmatpush1.bf16.msra.mxu0 0
        %1467 = vmatprep.subr.bf16.mxu0 0
        %1468 = vmatpush1.bf16.msra.mxu0 0
        %1469 = vmatprep.subr.bf16.mxu0 0
        %1470 = vmatpush1.bf16.msra.mxu0 0
        %1471 = vmatprep.subr.bf16.mxu0 0
        %1472 = vmatpush1.bf16.msra.mxu0 0
        %1473 = vmatprep.subr.bf16.mxu0 %v1454
        %1474 = vmatpush1.bf16.msra.mxu0 %v1451
        %1475 = vmatprep.subr.bf16.mxu0 0
        %1476 = vmatpush2.bf16.msra.mxu0 0
        %1477 = vmatprep.subr.bf16.mxu0 0
        %1478 = vmatpush2.bf16.msra.mxu0 0
        %1479 = vmatprep.subr.bf16.mxu0 0
        %1480 = vmatpush2.bf16.msra.mxu0 0
        %1481 = vmatprep.subr.bf16.mxu0 0
        %1482 = vmatpush2.bf16.msra.mxu0 0
        %1483 = vmatprep.subr.bf16.mxu0 0
        %1484 = vmatpush2.bf16.msra.mxu0 0
        %1485 = vmatprep.subr.bf16.mxu0 0
        %1486 = vmatpush2.bf16.msra.mxu0 0
        %1487 = vmatprep.subr.bf16.mxu0 0
        %1488 = vmatpush2.bf16.msra.mxu0 0
        %1489 = vmatprep.subr.bf16.mxu0 0
        %1490 = vmatpush2.bf16.msra.mxu0 0
        %1491 = vmatprep.mubr.bf16.mxu0 0
        %1492 = vmatmul.mubr.bf16.gmra.mxu0 %v1448
        %v1493 = vpop.f32.mrf.mxu0
        %v1494 = vadd.f32 0.0, %v1493
        %v1495 = vpop.f32.mrf.mxu0
        %v1496 = vadd.f32 0.0, %v1495
        %v1497 = vpop.f32.mrf.mxu0
        %v1498 = vpop.f32.mrf.mxu0
        %1499 = vdwg.mxu0
        %1500 = vmatprep.subr.bf16.mxu0 0
        %1501 = vmatpush1.bf16.msra.mxu0 0
        %1502 = vmatprep.subr.bf16.mxu0 0
        %1503 = vmatpush1.bf16.msra.mxu0 0
        %1504 = vmatprep.subr.bf16.mxu0 0
        %1505 = vmatpush1.bf16.msra.mxu0 0
        %1506 = vmatprep.subr.bf16.mxu0 0
        %1507 = vmatpush1.bf16.msra.mxu0 0
        %1508 = vmatprep.subr.bf16.mxu0 0
        %1509 = vmatpush1.bf16.msra.mxu0 0
        %1510 = vmatprep.subr.bf16.mxu0 0
        %1511 = vmatpush1.bf16.msra.mxu0 0
        %1512 = vmatprep.subr.bf16.mxu0 0
        %1513 = vmatpush1.bf16.msra.mxu0 0
        %1514 = vmatprep.subr.bf16.mxu0 0
        %1515 = vmatpush1.bf16.msra.mxu0 %v1457
        %1516 = vmatprep.subr.bf16.mxu0 0
        %1517 = vmatpush2.bf16.msra.mxu0 0
        %1518 = vmatprep.subr.bf16.mxu0 0
        %1519 = vmatpush2.bf16.msra.mxu0 0
        %1520 = vmatprep.subr.bf16.mxu0 0
        %1521 = vmatpush2.bf16.msra.mxu0 0
        %1522 = vmatprep.subr.bf16.mxu0 0
        %1523 = vmatpush2.bf16.msra.mxu0 0
        %1524 = vmatprep.subr.bf16.mxu0 0
        %1525 = vmatpush2.bf16.msra.mxu0 0
        %1526 = vmatprep.subr.bf16.mxu0 0
        %1527 = vmatpush2.bf16.msra.mxu0 0
        %1528 = vmatprep.subr.bf16.mxu0 0
        %1529 = vmatpush2.bf16.msra.mxu0 0
        %1530 = vmatprep.subr.bf16.mxu0 0
        %1531 = vmatpush2.bf16.msra.mxu0 0
        %1532 = vmatprep.mubr.bf16.mxu0 0
        %1533 = vmatmul.mubr.bf16.gmra.mxu0 %v1448
        %v1534 = vpop.f32.mrf.mxu0
        %v1535 = vadd.f32 0.0, %v1534
        %v1536 = vpop.f32.mrf.mxu0
        %v1537 = vpop.f32.mrf.mxu0
        %v1538 = vpop.f32.mrf.mxu0
        %1539 = vdwg.mxu0
        %v1540 = vadd.f32 %v1434, %v1494
        %v1541 = vadd.f32 %v1435, %v1496
        %v1542 = vadd.f32 %v1436, %v1535
        %s1543 = scalar_lea.vmem %s2, 10
        %v1544 = vld [vmem:[%s1543] sm:$0x3]
        %1545 = vrot.lane.b32.xlu0 %v589, 108
        %v1546 = vpop.permute.xlu0 %1545
        %1547 = vrot.lane.b32.xlu0 %v597, 108
        %v1548 = vpop.permute.xlu0 %1547
        %1549 = vrot.lane.b32.xlu0 %v596, 108
        %v1550 = vpop.permute.xlu0 %1549
        %vm1551 = vcmask 883712
        %v1552 = vsel %vm1551, %v1546, %v1548
        %v1553 = vsel %vm1551, %v1548, %v1550
        %v1555 = vsel %vm487, %v1544, 0
        %v1558 = vsel %vm440, %v1552, 0
        %v1561 = vsel %vm440, %v1553, 0
        %v1564 = vsel %vm440, %v1550, 0
        %1566 = vmatprep.subr.bf16.mxu0 0
        %1567 = vmatpush1.bf16.msra.mxu0 0
        %1568 = vmatprep.subr.bf16.mxu0 0
        %1569 = vmatpush1.bf16.msra.mxu0 0
        %1570 = vmatprep.subr.bf16.mxu0 0
        %1571 = vmatpush1.bf16.msra.mxu0 0
        %1572 = vmatprep.subr.bf16.mxu0 0
        %1573 = vmatpush1.bf16.msra.mxu0 0
        %1574 = vmatprep.subr.bf16.mxu0 0
        %1575 = vmatpush1.bf16.msra.mxu0 0
        %1576 = vmatprep.subr.bf16.mxu0 0
        %1577 = vmatpush1.bf16.msra.mxu0 0
        %1578 = vmatprep.subr.bf16.mxu0 0
        %1579 = vmatpush1.bf16.msra.mxu0 0
        %1580 = vmatprep.subr.bf16.mxu0 %v1561
        %1581 = vmatpush1.bf16.msra.mxu0 %v1558
        %1582 = vmatprep.subr.bf16.mxu0 0
        %1583 = vmatpush2.bf16.msra.mxu0 0
        %1584 = vmatprep.subr.bf16.mxu0 0
        %1585 = vmatpush2.bf16.msra.mxu0 0
        %1586 = vmatprep.subr.bf16.mxu0 0
        %1587 = vmatpush2.bf16.msra.mxu0 0
        %1588 = vmatprep.subr.bf16.mxu0 0
        %1589 = vmatpush2.bf16.msra.mxu0 0
        %1590 = vmatprep.subr.bf16.mxu0 0
        %1591 = vmatpush2.bf16.msra.mxu0 0
        %1592 = vmatprep.subr.bf16.mxu0 0
        %1593 = vmatpush2.bf16.msra.mxu0 0
        %1594 = vmatprep.subr.bf16.mxu0 0
        %1595 = vmatpush2.bf16.msra.mxu0 0
        %1596 = vmatprep.subr.bf16.mxu0 0
        %1597 = vmatpush2.bf16.msra.mxu0 0
        %1598 = vmatprep.mubr.bf16.mxu0 0
        %1599 = vmatmul.mubr.bf16.gmra.mxu0 %v1555
        %v1600 = vpop.f32.mrf.mxu0
        %v1601 = vadd.f32 0.0, %v1600
        %v1602 = vpop.f32.mrf.mxu0
        %v1603 = vadd.f32 0.0, %v1602
        %v1604 = vpop.f32.mrf.mxu0
        %v1605 = vpop.f32.mrf.mxu0
        %1606 = vdwg.mxu0
        %1607 = vmatprep.subr.bf16.mxu0 0
        %1608 = vmatpush1.bf16.msra.mxu0 0
        %1609 = vmatprep.subr.bf16.mxu0 0
        %1610 = vmatpush1.bf16.msra.mxu0 0
        %1611 = vmatprep.subr.bf16.mxu0 0
        %1612 = vmatpush1.bf16.msra.mxu0 0
        %1613 = vmatprep.subr.bf16.mxu0 0
        %1614 = vmatpush1.bf16.msra.mxu0 0
        %1615 = vmatprep.subr.bf16.mxu0 0
        %1616 = vmatpush1.bf16.msra.mxu0 0
        %1617 = vmatprep.subr.bf16.mxu0 0
        %1618 = vmatpush1.bf16.msra.mxu0 0
        %1619 = vmatprep.subr.bf16.mxu0 0
        %1620 = vmatpush1.bf16.msra.mxu0 0
        %1621 = vmatprep.subr.bf16.mxu0 0
        %1622 = vmatpush1.bf16.msra.mxu0 %v1564
        %1623 = vmatprep.subr.bf16.mxu0 0
        %1624 = vmatpush2.bf16.msra.mxu0 0
        %1625 = vmatprep.subr.bf16.mxu0 0
        %1626 = vmatpush2.bf16.msra.mxu0 0
        %1627 = vmatprep.subr.bf16.mxu0 0
        %1628 = vmatpush2.bf16.msra.mxu0 0
        %1629 = vmatprep.subr.bf16.mxu0 0
        %1630 = vmatpush2.bf16.msra.mxu0 0
        %1631 = vmatprep.subr.bf16.mxu0 0
        %1632 = vmatpush2.bf16.msra.mxu0 0
        %1633 = vmatprep.subr.bf16.mxu0 0
        %1634 = vmatpush2.bf16.msra.mxu0 0
        %1635 = vmatprep.subr.bf16.mxu0 0
        %1636 = vmatpush2.bf16.msra.mxu0 0
        %1637 = vmatprep.subr.bf16.mxu0 0
        %1638 = vmatpush2.bf16.msra.mxu0 0
        %1639 = vmatprep.mubr.bf16.mxu0 0
        %1640 = vmatmul.mubr.bf16.gmra.mxu0 %v1555
        %v1641 = vpop.f32.mrf.mxu0
        %v1642 = vadd.f32 0.0, %v1641
        %v1643 = vpop.f32.mrf.mxu0
        %v1644 = vpop.f32.mrf.mxu0
        %v1645 = vpop.f32.mrf.mxu0
        %1646 = vdwg.mxu0
        %v1647 = vadd.f32 %v1540, %v1601
        %v1648 = vadd.f32 %v1541, %v1603
        %v1649 = vadd.f32 %v1542, %v1642
        %s1650 = scalar_lea.vmem %s3, 10
        %v1651 = vld [vmem:[%s1650] sm:$0x3]
        %1652 = vrot.lane.b32.xlu0 %v478, 108
        %v1653 = vpop.permute.xlu0 %1652
        %1654 = vrot.lane.b32.xlu0 %v486, 108
        %v1655 = vpop.permute.xlu0 %1654
        %1656 = vrot.lane.b32.xlu0 %v485, 108
        %v1657 = vpop.permute.xlu0 %1656
        %v1658 = vsel %vm1551, %v1653, %v1655
        %v1659 = vsel %vm1551, %v1655, %v1657
        %v1661 = vsel %vm487, %v1651, 0
        %v1664 = vsel %vm440, %v1658, 0
        %v1667 = vsel %vm440, %v1659, 0
        %v1670 = vsel %vm440, %v1657, 0
        %1672 = vmatprep.subr.bf16.mxu0 0
        %1673 = vmatpush1.bf16.msra.mxu0 0
        %1674 = vmatprep.subr.bf16.mxu0 0
        %1675 = vmatpush1.bf16.msra.mxu0 0
        %1676 = vmatprep.subr.bf16.mxu0 0
        %1677 = vmatpush1.bf16.msra.mxu0 0
        %1678 = vmatprep.subr.bf16.mxu0 0
        %1679 = vmatpush1.bf16.msra.mxu0 0
        %1680 = vmatprep.subr.bf16.mxu0 0
        %1681 = vmatpush1.bf16.msra.mxu0 0
        %1682 = vmatprep.subr.bf16.mxu0 0
        %1683 = vmatpush1.bf16.msra.mxu0 0
        %1684 = vmatprep.subr.bf16.mxu0 0
        %1685 = vmatpush1.bf16.msra.mxu0 0
        %1686 = vmatprep.subr.bf16.mxu0 %v1667
        %1687 = vmatpush1.bf16.msra.mxu0 %v1664
        %1688 = vmatprep.subr.bf16.mxu0 0
        %1689 = vmatpush2.bf16.msra.mxu0 0
        %1690 = vmatprep.subr.bf16.mxu0 0
        %1691 = vmatpush2.bf16.msra.mxu0 0
        %1692 = vmatprep.subr.bf16.mxu0 0
        %1693 = vmatpush2.bf16.msra.mxu0 0
        %1694 = vmatprep.subr.bf16.mxu0 0
        %1695 = vmatpush2.bf16.msra.mxu0 0
        %1696 = vmatprep.subr.bf16.mxu0 0
        %1697 = vmatpush2.bf16.msra.mxu0 0
        %1698 = vmatprep.subr.bf16.mxu0 0
        %1699 = vmatpush2.bf16.msra.mxu0 0
        %1700 = vmatprep.subr.bf16.mxu0 0
        %1701 = vmatpush2.bf16.msra.mxu0 0
        %1702 = vmatprep.subr.bf16.mxu0 0
        %1703 = vmatpush2.bf16.msra.mxu0 0
        %1704 = vmatprep.mubr.bf16.mxu0 0
        %1705 = vmatmul.mubr.bf16.gmra.mxu0 %v1661
        %v1706 = vpop.f32.mrf.mxu0
        %v1707 = vadd.f32 0.0, %v1706
        %v1708 = vpop.f32.mrf.mxu0
        %v1709 = vadd.f32 0.0, %v1708
        %v1710 = vpop.f32.mrf.mxu0
        %v1711 = vpop.f32.mrf.mxu0
        %1712 = vdwg.mxu0
        %1713 = vmatprep.subr.bf16.mxu0 0
        %1714 = vmatpush1.bf16.msra.mxu0 0
        %1715 = vmatprep.subr.bf16.mxu0 0
        %1716 = vmatpush1.bf16.msra.mxu0 0
        %1717 = vmatprep.subr.bf16.mxu0 0
        %1718 = vmatpush1.bf16.msra.mxu0 0
        %1719 = vmatprep.subr.bf16.mxu0 0
        %1720 = vmatpush1.bf16.msra.mxu0 0
        %1721 = vmatprep.subr.bf16.mxu0 0
        %1722 = vmatpush1.bf16.msra.mxu0 0
        %1723 = vmatprep.subr.bf16.mxu0 0
        %1724 = vmatpush1.bf16.msra.mxu0 0
        %1725 = vmatprep.subr.bf16.mxu0 0
        %1726 = vmatpush1.bf16.msra.mxu0 0
        %1727 = vmatprep.subr.bf16.mxu0 0
        %1728 = vmatpush1.bf16.msra.mxu0 %v1670
        %1729 = vmatprep.subr.bf16.mxu0 0
        %1730 = vmatpush2.bf16.msra.mxu0 0
        %1731 = vmatprep.subr.bf16.mxu0 0
        %1732 = vmatpush2.bf16.msra.mxu0 0
        %1733 = vmatprep.subr.bf16.mxu0 0
        %1734 = vmatpush2.bf16.msra.mxu0 0
        %1735 = vmatprep.subr.bf16.mxu0 0
        %1736 = vmatpush2.bf16.msra.mxu0 0
        %1737 = vmatprep.subr.bf16.mxu0 0
        %1738 = vmatpush2.bf16.msra.mxu0 0
        %1739 = vmatprep.subr.bf16.mxu0 0
        %1740 = vmatpush2.bf16.msra.mxu0 0
        %1741 = vmatprep.subr.bf16.mxu0 0
        %1742 = vmatpush2.bf16.msra.mxu0 0
        %1743 = vmatprep.subr.bf16.mxu0 0
        %1744 = vmatpush2.bf16.msra.mxu0 0
        %1745 = vmatprep.mubr.bf16.mxu0 0
        %1746 = vmatmul.mubr.bf16.gmra.mxu0 %v1661
        %v1747 = vpop.f32.mrf.mxu0
        %v1748 = vadd.f32 0.0, %v1747
        %v1749 = vpop.f32.mrf.mxu0
        %v1750 = vpop.f32.mrf.mxu0
        %v1751 = vpop.f32.mrf.mxu0
        %1752 = vdwg.mxu0
        %v1753 = vadd.f32 %v1647, %v1707
        %v1754 = vadd.f32 %v1648, %v1709
        %v1755 = vadd.f32 %v1649, %v1748
        %s1756 = scalar_lea.vmem %s2, 12
        %v1757 = vld [vmem:[%s1756] sm:$0x3]
        %1758 = vrot.lane.b32.xlu0 %v589, 92
        %v1759 = vpop.permute.xlu0 %1758
        %1760 = vrot.lane.b32.xlu0 %v597, 92
        %v1761 = vpop.permute.xlu0 %1760
        %1762 = vrot.lane.b32.xlu0 %v596, 92
        %v1763 = vpop.permute.xlu0 %1762
        %vm1764 = vcmask 752640
        %v1765 = vsel %vm1764, %v1759, %v1761
        %v1766 = vsel %vm1764, %v1761, %v1763
        %v1768 = vsel %vm487, %v1757, 0
        %v1771 = vsel %vm440, %v1765, 0
        %v1774 = vsel %vm440, %v1766, 0
        %v1777 = vsel %vm440, %v1763, 0
        %1779 = vmatprep.subr.bf16.mxu0 0
        %1780 = vmatpush1.bf16.msra.mxu0 0
        %1781 = vmatprep.subr.bf16.mxu0 0
        %1782 = vmatpush1.bf16.msra.mxu0 0
        %1783 = vmatprep.subr.bf16.mxu0 0
        %1784 = vmatpush1.bf16.msra.mxu0 0
        %1785 = vmatprep.subr.bf16.mxu0 0
        %1786 = vmatpush1.bf16.msra.mxu0 0
        %1787 = vmatprep.subr.bf16.mxu0 0
        %1788 = vmatpush1.bf16.msra.mxu0 0
        %1789 = vmatprep.subr.bf16.mxu0 0
        %1790 = vmatpush1.bf16.msra.mxu0 0
        %1791 = vmatprep.subr.bf16.mxu0 0
        %1792 = vmatpush1.bf16.msra.mxu0 0
        %1793 = vmatprep.subr.bf16.mxu0 %v1774
        %1794 = vmatpush1.bf16.msra.mxu0 %v1771
        %1795 = vmatprep.subr.bf16.mxu0 0
        %1796 = vmatpush2.bf16.msra.mxu0 0
        %1797 = vmatprep.subr.bf16.mxu0 0
        %1798 = vmatpush2.bf16.msra.mxu0 0
        %1799 = vmatprep.subr.bf16.mxu0 0
        %1800 = vmatpush2.bf16.msra.mxu0 0
        %1801 = vmatprep.subr.bf16.mxu0 0
        %1802 = vmatpush2.bf16.msra.mxu0 0
        %1803 = vmatprep.subr.bf16.mxu0 0
        %1804 = vmatpush2.bf16.msra.mxu0 0
        %1805 = vmatprep.subr.bf16.mxu0 0
        %1806 = vmatpush2.bf16.msra.mxu0 0
        %1807 = vmatprep.subr.bf16.mxu0 0
        %1808 = vmatpush2.bf16.msra.mxu0 0
        %1809 = vmatprep.subr.bf16.mxu0 0
        %1810 = vmatpush2.bf16.msra.mxu0 0
        %1811 = vmatprep.mubr.bf16.mxu0 0
        %1812 = vmatmul.mubr.bf16.gmra.mxu0 %v1768
        %v1813 = vpop.f32.mrf.mxu0
        %v1814 = vadd.f32 0.0, %v1813
        %v1815 = vpop.f32.mrf.mxu0
        %v1816 = vadd.f32 0.0, %v1815
        %v1817 = vpop.f32.mrf.mxu0
        %v1818 = vpop.f32.mrf.mxu0
        %1819 = vdwg.mxu0
        %1820 = vmatprep.subr.bf16.mxu0 0
        %1821 = vmatpush1.bf16.msra.mxu0 0
        %1822 = vmatprep.subr.bf16.mxu0 0
        %1823 = vmatpush1.bf16.msra.mxu0 0
        %1824 = vmatprep.subr.bf16.mxu0 0
        %1825 = vmatpush1.bf16.msra.mxu0 0
        %1826 = vmatprep.subr.bf16.mxu0 0
        %1827 = vmatpush1.bf16.msra.mxu0 0
        %1828 = vmatprep.subr.bf16.mxu0 0
        %1829 = vmatpush1.bf16.msra.mxu0 0
        %1830 = vmatprep.subr.bf16.mxu0 0
        %1831 = vmatpush1.bf16.msra.mxu0 0
        %1832 = vmatprep.subr.bf16.mxu0 0
        %1833 = vmatpush1.bf16.msra.mxu0 0
        %1834 = vmatprep.subr.bf16.mxu0 0
        %1835 = vmatpush1.bf16.msra.mxu0 %v1777
        %1836 = vmatprep.subr.bf16.mxu0 0
        %1837 = vmatpush2.bf16.msra.mxu0 0
        %1838 = vmatprep.subr.bf16.mxu0 0
        %1839 = vmatpush2.bf16.msra.mxu0 0
        %1840 = vmatprep.subr.bf16.mxu0 0
        %1841 = vmatpush2.bf16.msra.mxu0 0
        %1842 = vmatprep.subr.bf16.mxu0 0
        %1843 = vmatpush2.bf16.msra.mxu0 0
        %1844 = vmatprep.subr.bf16.mxu0 0
        %1845 = vmatpush2.bf16.msra.mxu0 0
        %1846 = vmatprep.subr.bf16.mxu0 0
        %1847 = vmatpush2.bf16.msra.mxu0 0
        %1848 = vmatprep.subr.bf16.mxu0 0
        %1849 = vmatpush2.bf16.msra.mxu0 0
        %1850 = vmatprep.subr.bf16.mxu0 0
        %1851 = vmatpush2.bf16.msra.mxu0 0
        %1852 = vmatprep.mubr.bf16.mxu0 0
        %1853 = vmatmul.mubr.bf16.gmra.mxu0 %v1768
        %v1854 = vpop.f32.mrf.mxu0
        %v1855 = vadd.f32 0.0, %v1854
        %v1856 = vpop.f32.mrf.mxu0
        %v1857 = vpop.f32.mrf.mxu0
        %v1858 = vpop.f32.mrf.mxu0
        %1859 = vdwg.mxu0
        %v1860 = vadd.f32 %v1753, %v1814
        %v1861 = vadd.f32 %v1754, %v1816
        %v1862 = vadd.f32 %v1755, %v1855
        %s1863 = scalar_lea.vmem %s3, 12
        %v1864 = vld [vmem:[%s1863] sm:$0x3]
        %1865 = vrot.lane.b32.xlu0 %v478, 92
        %v1866 = vpop.permute.xlu0 %1865
        %1867 = vrot.lane.b32.xlu0 %v486, 92
        %v1868 = vpop.permute.xlu0 %1867
        %1869 = vrot.lane.b32.xlu0 %v485, 92
        %v1870 = vpop.permute.xlu0 %1869
        %v1871 = vsel %vm1764, %v1866, %v1868
        %v1872 = vsel %vm1764, %v1868, %v1870
        %v1874 = vsel %vm487, %v1864, 0
        %v1877 = vsel %vm440, %v1871, 0
        %v1880 = vsel %vm440, %v1872, 0
        %v1883 = vsel %vm440, %v1870, 0
        %1885 = vmatprep.subr.bf16.mxu0 0
        %1886 = vmatpush1.bf16.msra.mxu0 0
        %1887 = vmatprep.subr.bf16.mxu0 0
        %1888 = vmatpush1.bf16.msra.mxu0 0
        %1889 = vmatprep.subr.bf16.mxu0 0
        %1890 = vmatpush1.bf16.msra.mxu0 0
        %1891 = vmatprep.subr.bf16.mxu0 0
        %1892 = vmatpush1.bf16.msra.mxu0 0
        %1893 = vmatprep.subr.bf16.mxu0 0
        %1894 = vmatpush1.bf16.msra.mxu0 0
        %1895 = vmatprep.subr.bf16.mxu0 0
        %1896 = vmatpush1.bf16.msra.mxu0 0
        %1897 = vmatprep.subr.bf16.mxu0 0
        %1898 = vmatpush1.bf16.msra.mxu0 0
        %1899 = vmatprep.subr.bf16.mxu0 %v1880
        %1900 = vmatpush1.bf16.msra.mxu0 %v1877
        %1901 = vmatprep.subr.bf16.mxu0 0
        %1902 = vmatpush2.bf16.msra.mxu0 0
        %1903 = vmatprep.subr.bf16.mxu0 0
        %1904 = vmatpush2.bf16.msra.mxu0 0
        %1905 = vmatprep.subr.bf16.mxu0 0
        %1906 = vmatpush2.bf16.msra.mxu0 0
        %1907 = vmatprep.subr.bf16.mxu0 0
        %1908 = vmatpush2.bf16.msra.mxu0 0
        %1909 = vmatprep.subr.bf16.mxu0 0
        %1910 = vmatpush2.bf16.msra.mxu0 0
        %1911 = vmatprep.subr.bf16.mxu0 0
        %1912 = vmatpush2.bf16.msra.mxu0 0
        %1913 = vmatprep.subr.bf16.mxu0 0
        %1914 = vmatpush2.bf16.msra.mxu0 0
        %1915 = vmatprep.subr.bf16.mxu0 0
        %1916 = vmatpush2.bf16.msra.mxu0 0
        %1917 = vmatprep.mubr.bf16.mxu0 0
        %1918 = vmatmul.mubr.bf16.gmra.mxu0 %v1874
        %v1919 = vpop.f32.mrf.mxu0
        %v1920 = vadd.f32 0.0, %v1919
        %v1921 = vpop.f32.mrf.mxu0
        %v1922 = vadd.f32 0.0, %v1921
        %v1923 = vpop.f32.mrf.mxu0
        %v1924 = vpop.f32.mrf.mxu0
        %1925 = vdwg.mxu0
        %1926 = vmatprep.subr.bf16.mxu0 0
        %1927 = vmatpush1.bf16.msra.mxu0 0
        %1928 = vmatprep.subr.bf16.mxu0 0
        %1929 = vmatpush1.bf16.msra.mxu0 0
        %1930 = vmatprep.subr.bf16.mxu0 0
        %1931 = vmatpush1.bf16.msra.mxu0 0
        %1932 = vmatprep.subr.bf16.mxu0 0
        %1933 = vmatpush1.bf16.msra.mxu0 0
        %1934 = vmatprep.subr.bf16.mxu0 0
        %1935 = vmatpush1.bf16.msra.mxu0 0
        %1936 = vmatprep.subr.bf16.mxu0 0
        %1937 = vmatpush1.bf16.msra.mxu0 0
        %1938 = vmatprep.subr.bf16.mxu0 0
        %1939 = vmatpush1.bf16.msra.mxu0 0
        %1940 = vmatprep.subr.bf16.mxu0 0
        %1941 = vmatpush1.bf16.msra.mxu0 %v1883
        %1942 = vmatprep.subr.bf16.mxu0 0
        %1943 = vmatpush2.bf16.msra.mxu0 0
        %1944 = vmatprep.subr.bf16.mxu0 0
        %1945 = vmatpush2.bf16.msra.mxu0 0
        %1946 = vmatprep.subr.bf16.mxu0 0
        %1947 = vmatpush2.bf16.msra.mxu0 0
        %1948 = vmatprep.subr.bf16.mxu0 0
        %1949 = vmatpush2.bf16.msra.mxu0 0
        %1950 = vmatprep.subr.bf16.mxu0 0
        %1951 = vmatpush2.bf16.msra.mxu0 0
        %1952 = vmatprep.subr.bf16.mxu0 0
        %1953 = vmatpush2.bf16.msra.mxu0 0
        %1954 = vmatprep.subr.bf16.mxu0 0
        %1955 = vmatpush2.bf16.msra.mxu0 0
        %1956 = vmatprep.subr.bf16.mxu0 0
        %1957 = vmatpush2.bf16.msra.mxu0 0
        %1958 = vmatprep.mubr.bf16.mxu0 0
        %1959 = vmatmul.mubr.bf16.gmra.mxu0 %v1874
        %v1960 = vpop.f32.mrf.mxu0
        %v1961 = vadd.f32 0.0, %v1960
        %v1962 = vpop.f32.mrf.mxu0
        %v1963 = vpop.f32.mrf.mxu0
        %v1964 = vpop.f32.mrf.mxu0
        %1965 = vdwg.mxu0
        %v1966 = vadd.f32 %v1860, %v1920
        %v1967 = vadd.f32 %v1861, %v1922
        %v1968 = vadd.f32 %v1862, %v1961
        %s1969 = scalar_lea.vmem %s2, 14
        %v1970 = vld [vmem:[%s1969] sm:$0x3]
        %1971 = vrot.lane.b32.xlu0 %v589, 91
        %v1972 = vpop.permute.xlu0 %1971
        %1973 = vrot.lane.b32.xlu0 %v597, 91
        %v1974 = vpop.permute.xlu0 %1973
        %1975 = vrot.lane.b32.xlu0 %v596, 91
        %v1976 = vpop.permute.xlu0 %1975
        %vm1977 = vcmask 744448
        %v1978 = vsel %vm1977, %v1972, %v1974
        %v1979 = vsel %vm1977, %v1974, %v1976
        %v1981 = vsel %vm487, %v1970, 0
        %v1984 = vsel %vm440, %v1978, 0
        %v1987 = vsel %vm440, %v1979, 0
        %v1990 = vsel %vm440, %v1976, 0
        %1992 = vmatprep.subr.bf16.mxu0 0
        %1993 = vmatpush1.bf16.msra.mxu0 0
        %1994 = vmatprep.subr.bf16.mxu0 0
        %1995 = vmatpush1.bf16.msra.mxu0 0
        %1996 = vmatprep.subr.bf16.mxu0 0
        %1997 = vmatpush1.bf16.msra.mxu0 0
        %1998 = vmatprep.subr.bf16.mxu0 0
        %1999 = vmatpush1.bf16.msra.mxu0 0
        %2000 = vmatprep.subr.bf16.mxu0 0
        %2001 = vmatpush1.bf16.msra.mxu0 0
        %2002 = vmatprep.subr.bf16.mxu0 0
        %2003 = vmatpush1.bf16.msra.mxu0 0
        %2004 = vmatprep.subr.bf16.mxu0 0
        %2005 = vmatpush1.bf16.msra.mxu0 0
        %2006 = vmatprep.subr.bf16.mxu0 %v1987
        %2007 = vmatpush1.bf16.msra.mxu0 %v1984
        %2008 = vmatprep.subr.bf16.mxu0 0
        %2009 = vmatpush2.bf16.msra.mxu0 0
        %2010 = vmatprep.subr.bf16.mxu0 0
        %2011 = vmatpush2.bf16.msra.mxu0 0
        %2012 = vmatprep.subr.bf16.mxu0 0
        %2013 = vmatpush2.bf16.msra.mxu0 0
        %2014 = vmatprep.subr.bf16.mxu0 0
        %2015 = vmatpush2.bf16.msra.mxu0 0
        %2016 = vmatprep.subr.bf16.mxu0 0
        %2017 = vmatpush2.bf16.msra.mxu0 0
        %2018 = vmatprep.subr.bf16.mxu0 0
        %2019 = vmatpush2.bf16.msra.mxu0 0
        %2020 = vmatprep.subr.bf16.mxu0 0
        %2021 = vmatpush2.bf16.msra.mxu0 0
        %2022 = vmatprep.subr.bf16.mxu0 0
        %2023 = vmatpush2.bf16.msra.mxu0 0
        %2024 = vmatprep.mubr.bf16.mxu0 0
        %2025 = vmatmul.mubr.bf16.gmra.mxu0 %v1981
        %v2026 = vpop.f32.mrf.mxu0
        %v2027 = vadd.f32 0.0, %v2026
        %v2028 = vpop.f32.mrf.mxu0
        %v2029 = vadd.f32 0.0, %v2028
        %v2030 = vpop.f32.mrf.mxu0
        %v2031 = vpop.f32.mrf.mxu0
        %2032 = vdwg.mxu0
        %2033 = vmatprep.subr.bf16.mxu0 0
        %2034 = vmatpush1.bf16.msra.mxu0 0
        %2035 = vmatprep.subr.bf16.mxu0 0
        %2036 = vmatpush1.bf16.msra.mxu0 0
        %2037 = vmatprep.subr.bf16.mxu0 0
        %2038 = vmatpush1.bf16.msra.mxu0 0
        %2039 = vmatprep.subr.bf16.mxu0 0
        %2040 = vmatpush1.bf16.msra.mxu0 0
        %2041 = vmatprep.subr.bf16.mxu0 0
        %2042 = vmatpush1.bf16.msra.mxu0 0
        %2043 = vmatprep.subr.bf16.mxu0 0
        %2044 = vmatpush1.bf16.msra.mxu0 0
        %2045 = vmatprep.subr.bf16.mxu0 0
        %2046 = vmatpush1.bf16.msra.mxu0 0
        %2047 = vmatprep.subr.bf16.mxu0 0
        %2048 = vmatpush1.bf16.msra.mxu0 %v1990
        %2049 = vmatprep.subr.bf16.mxu0 0
        %2050 = vmatpush2.bf16.msra.mxu0 0
        %2051 = vmatprep.subr.bf16.mxu0 0
        %2052 = vmatpush2.bf16.msra.mxu0 0
        %2053 = vmatprep.subr.bf16.mxu0 0
        %2054 = vmatpush2.bf16.msra.mxu0 0
        %2055 = vmatprep.subr.bf16.mxu0 0
        %2056 = vmatpush2.bf16.msra.mxu0 0
        %2057 = vmatprep.subr.bf16.mxu0 0
        %2058 = vmatpush2.bf16.msra.mxu0 0
        %2059 = vmatprep.subr.bf16.mxu0 0
        %2060 = vmatpush2.bf16.msra.mxu0 0
        %2061 = vmatprep.subr.bf16.mxu0 0
        %2062 = vmatpush2.bf16.msra.mxu0 0
        %2063 = vmatprep.subr.bf16.mxu0 0
        %2064 = vmatpush2.bf16.msra.mxu0 0
        %2065 = vmatprep.mubr.bf16.mxu0 0
        %2066 = vmatmul.mubr.bf16.gmra.mxu0 %v1981
        %v2067 = vpop.f32.mrf.mxu0
        %v2068 = vadd.f32 0.0, %v2067
        %v2069 = vpop.f32.mrf.mxu0
        %v2070 = vpop.f32.mrf.mxu0
        %v2071 = vpop.f32.mrf.mxu0
        %2072 = vdwg.mxu0
        %v2073 = vadd.f32 %v1966, %v2027
        %v2074 = vadd.f32 %v1967, %v2029
        %v2075 = vadd.f32 %v1968, %v2068
        %s2076 = scalar_lea.vmem %s3, 14
        %v2077 = vld [vmem:[%s2076] sm:$0x3]
        %2078 = vrot.lane.b32.xlu0 %v478, 91
        %v2079 = vpop.permute.xlu0 %2078
        %2080 = vrot.lane.b32.xlu0 %v486, 91
        %v2081 = vpop.permute.xlu0 %2080
        %2082 = vrot.lane.b32.xlu0 %v485, 91
        %v2083 = vpop.permute.xlu0 %2082
        %v2084 = vsel %vm1977, %v2079, %v2081
        %v2085 = vsel %vm1977, %v2081, %v2083
        %v2087 = vsel %vm487, %v2077, 0
        %v2090 = vsel %vm440, %v2084, 0
        %v2093 = vsel %vm440, %v2085, 0
        %v2096 = vsel %vm440, %v2083, 0
        %2098 = vmatprep.subr.bf16.mxu0 0
        %2099 = vmatpush1.bf16.msra.mxu0 0
        %2100 = vmatprep.subr.bf16.mxu0 0
        %2101 = vmatpush1.bf16.msra.mxu0 0
        %2102 = vmatprep.subr.bf16.mxu0 0
        %2103 = vmatpush1.bf16.msra.mxu0 0
        %2104 = vmatprep.subr.bf16.mxu0 0
        %2105 = vmatpush1.bf16.msra.mxu0 0
        %2106 = vmatprep.subr.bf16.mxu0 0
        %2107 = vmatpush1.bf16.msra.mxu0 0
        %2108 = vmatprep.subr.bf16.mxu0 0
        %2109 = vmatpush1.bf16.msra.mxu0 0
        %2110 = vmatprep.subr.bf16.mxu0 0
        %2111 = vmatpush1.bf16.msra.mxu0 0
        %2112 = vmatprep.subr.bf16.mxu0 %v2093
        %2113 = vmatpush1.bf16.msra.mxu0 %v2090
        %2114 = vmatprep.subr.bf16.mxu0 0
        %2115 = vmatpush2.bf16.msra.mxu0 0
        %2116 = vmatprep.subr.bf16.mxu0 0
        %2117 = vmatpush2.bf16.msra.mxu0 0
        %2118 = vmatprep.subr.bf16.mxu0 0
        %2119 = vmatpush2.bf16.msra.mxu0 0
        %2120 = vmatprep.subr.bf16.mxu0 0
        %2121 = vmatpush2.bf16.msra.mxu0 0
        %2122 = vmatprep.subr.bf16.mxu0 0
        %2123 = vmatpush2.bf16.msra.mxu0 0
        %2124 = vmatprep.subr.bf16.mxu0 0
        %2125 = vmatpush2.bf16.msra.mxu0 0
        %2126 = vmatprep.subr.bf16.mxu0 0
        %2127 = vmatpush2.bf16.msra.mxu0 0
        %2128 = vmatprep.subr.bf16.mxu0 0
        %2129 = vmatpush2.bf16.msra.mxu0 0
        %2130 = vmatprep.mubr.bf16.mxu0 0
        %2131 = vmatmul.mubr.bf16.gmra.mxu0 %v2087
        %v2132 = vpop.f32.mrf.mxu0
        %v2133 = vadd.f32 0.0, %v2132
        %v2134 = vpop.f32.mrf.mxu0
        %v2135 = vadd.f32 0.0, %v2134
        %v2136 = vpop.f32.mrf.mxu0
        %v2137 = vpop.f32.mrf.mxu0
        %2138 = vdwg.mxu0
        %2139 = vmatprep.subr.bf16.mxu0 0
        %2140 = vmatpush1.bf16.msra.mxu0 0
        %2141 = vmatprep.subr.bf16.mxu0 0
        %2142 = vmatpush1.bf16.msra.mxu0 0
        %2143 = vmatprep.subr.bf16.mxu0 0
        %2144 = vmatpush1.bf16.msra.mxu0 0
        %2145 = vmatprep.subr.bf16.mxu0 0
        %2146 = vmatpush1.bf16.msra.mxu0 0
        %2147 = vmatprep.subr.bf16.mxu0 0
        %2148 = vmatpush1.bf16.msra.mxu0 0
        %2149 = vmatprep.subr.bf16.mxu0 0
        %2150 = vmatpush1.bf16.msra.mxu0 0
        %2151 = vmatprep.subr.bf16.mxu0 0
        %2152 = vmatpush1.bf16.msra.mxu0 0
        %2153 = vmatprep.subr.bf16.mxu0 0
        %2154 = vmatpush1.bf16.msra.mxu0 %v2096
        %2155 = vmatprep.subr.bf16.mxu0 0
        %2156 = vmatpush2.bf16.msra.mxu0 0
        %2157 = vmatprep.subr.bf16.mxu0 0
        %2158 = vmatpush2.bf16.msra.mxu0 0
        %2159 = vmatprep.subr.bf16.mxu0 0
        %2160 = vmatpush2.bf16.msra.mxu0 0
        %2161 = vmatprep.subr.bf16.mxu0 0
        %2162 = vmatpush2.bf16.msra.mxu0 0
        %2163 = vmatprep.subr.bf16.mxu0 0
        %2164 = vmatpush2.bf16.msra.mxu0 0
        %2165 = vmatprep.subr.bf16.mxu0 0
        %2166 = vmatpush2.bf16.msra.mxu0 0
        %2167 = vmatprep.subr.bf16.mxu0 0
        %2168 = vmatpush2.bf16.msra.mxu0 0
        %2169 = vmatprep.subr.bf16.mxu0 0
        %2170 = vmatpush2.bf16.msra.mxu0 0
        %2171 = vmatprep.mubr.bf16.mxu0 0
        %2172 = vmatmul.mubr.bf16.gmra.mxu0 %v2087
        %v2173 = vpop.f32.mrf.mxu0
        %v2174 = vadd.f32 0.0, %v2173
        %v2175 = vpop.f32.mrf.mxu0
        %v2176 = vpop.f32.mrf.mxu0
        %v2177 = vpop.f32.mrf.mxu0
        %2178 = vdwg.mxu0
        %v2179 = vadd.f32 %v2073, %v2133
        %v2180 = vadd.f32 %v2074, %v2135
        %v2181 = vadd.f32 %v2075, %v2174
        %s2182 = scalar_lea.vmem %s2, 16
        %v2183 = vld [vmem:[%s2182] sm:$0x3]
        %2184 = vrot.lane.b32.xlu0 %v589, 90
        %v2185 = vpop.permute.xlu0 %2184
        %2186 = vrot.lane.b32.xlu0 %v597, 90
        %v2187 = vpop.permute.xlu0 %2186
        %2188 = vrot.lane.b32.xlu0 %v596, 90
        %v2189 = vpop.permute.xlu0 %2188
        %vm2190 = vcmask 736256
        %v2191 = vsel %vm2190, %v2185, %v2187
        %v2192 = vsel %vm2190, %v2187, %v2189
        %v2194 = vsel %vm487, %v2183, 0
        %v2197 = vsel %vm440, %v2191, 0
        %v2200 = vsel %vm440, %v2192, 0
        %v2203 = vsel %vm440, %v2189, 0
        %2205 = vmatprep.subr.bf16.mxu0 0
        %2206 = vmatpush1.bf16.msra.mxu0 0
        %2207 = vmatprep.subr.bf16.mxu0 0
        %2208 = vmatpush1.bf16.msra.mxu0 0
        %2209 = vmatprep.subr.bf16.mxu0 0
        %2210 = vmatpush1.bf16.msra.mxu0 0
        %2211 = vmatprep.subr.bf16.mxu0 0
        %2212 = vmatpush1.bf16.msra.mxu0 0
        %2213 = vmatprep.subr.bf16.mxu0 0
        %2214 = vmatpush1.bf16.msra.mxu0 0
        %2215 = vmatprep.subr.bf16.mxu0 0
        %2216 = vmatpush1.bf16.msra.mxu0 0
        %2217 = vmatprep.subr.bf16.mxu0 0
        %2218 = vmatpush1.bf16.msra.mxu0 0
        %2219 = vmatprep.subr.bf16.mxu0 %v2200
        %2220 = vmatpush1.bf16.msra.mxu0 %v2197
        %2221 = vmatprep.subr.bf16.mxu0 0
        %2222 = vmatpush2.bf16.msra.mxu0 0
        %2223 = vmatprep.subr.bf16.mxu0 0
        %2224 = vmatpush2.bf16.msra.mxu0 0
        %2225 = vmatprep.subr.bf16.mxu0 0
        %2226 = vmatpush2.bf16.msra.mxu0 0
        %2227 = vmatprep.subr.bf16.mxu0 0
        %2228 = vmatpush2.bf16.msra.mxu0 0
        %2229 = vmatprep.subr.bf16.mxu0 0
        %2230 = vmatpush2.bf16.msra.mxu0 0
        %2231 = vmatprep.subr.bf16.mxu0 0
        %2232 = vmatpush2.bf16.msra.mxu0 0
        %2233 = vmatprep.subr.bf16.mxu0 0
        %2234 = vmatpush2.bf16.msra.mxu0 0
        %2235 = vmatprep.subr.bf16.mxu0 0
        %2236 = vmatpush2.bf16.msra.mxu0 0
        %2237 = vmatprep.mubr.bf16.mxu0 0
        %2238 = vmatmul.mubr.bf16.gmra.mxu0 %v2194
        %v2239 = vpop.f32.mrf.mxu0
        %v2240 = vadd.f32 0.0, %v2239
        %v2241 = vpop.f32.mrf.mxu0
        %v2242 = vadd.f32 0.0, %v2241
        %v2243 = vpop.f32.mrf.mxu0
        %v2244 = vpop.f32.mrf.mxu0
        %2245 = vdwg.mxu0
        %2246 = vmatprep.subr.bf16.mxu0 0
        %2247 = vmatpush1.bf16.msra.mxu0 0
        %2248 = vmatprep.subr.bf16.mxu0 0
        %2249 = vmatpush1.bf16.msra.mxu0 0
        %2250 = vmatprep.subr.bf16.mxu0 0
        %2251 = vmatpush1.bf16.msra.mxu0 0
        %2252 = vmatprep.subr.bf16.mxu0 0
        %2253 = vmatpush1.bf16.msra.mxu0 0
        %2254 = vmatprep.subr.bf16.mxu0 0
        %2255 = vmatpush1.bf16.msra.mxu0 0
        %2256 = vmatprep.subr.bf16.mxu0 0
        %2257 = vmatpush1.bf16.msra.mxu0 0
        %2258 = vmatprep.subr.bf16.mxu0 0
        %2259 = vmatpush1.bf16.msra.mxu0 0
        %2260 = vmatprep.subr.bf16.mxu0 0
        %2261 = vmatpush1.bf16.msra.mxu0 %v2203
        %2262 = vmatprep.subr.bf16.mxu0 0
        %2263 = vmatpush2.bf16.msra.mxu0 0
        %2264 = vmatprep.subr.bf16.mxu0 0
        %2265 = vmatpush2.bf16.msra.mxu0 0
        %2266 = vmatprep.subr.bf16.mxu0 0
        %2267 = vmatpush2.bf16.msra.mxu0 0
        %2268 = vmatprep.subr.bf16.mxu0 0
        %2269 = vmatpush2.bf16.msra.mxu0 0
        %2270 = vmatprep.subr.bf16.mxu0 0
        %2271 = vmatpush2.bf16.msra.mxu0 0
        %2272 = vmatprep.subr.bf16.mxu0 0
        %2273 = vmatpush2.bf16.msra.mxu0 0
        %2274 = vmatprep.subr.bf16.mxu0 0
        %2275 = vmatpush2.bf16.msra.mxu0 0
        %2276 = vmatprep.subr.bf16.mxu0 0
        %2277 = vmatpush2.bf16.msra.mxu0 0
        %2278 = vmatprep.mubr.bf16.mxu0 0
        %2279 = vmatmul.mubr.bf16.gmra.mxu0 %v2194
        %v2280 = vpop.f32.mrf.mxu0
        %v2281 = vadd.f32 0.0, %v2280
        %v2282 = vpop.f32.mrf.mxu0
        %v2283 = vpop.f32.mrf.mxu0
        %v2284 = vpop.f32.mrf.mxu0
        %2285 = vdwg.mxu0
        %v2286 = vadd.f32 %v2179, %v2240
        %v2287 = vadd.f32 %v2180, %v2242
        %v2288 = vadd.f32 %v2181, %v2281
        %s2289 = scalar_lea.vmem %s3, 16
        %v2290 = vld [vmem:[%s2289] sm:$0x3]
        %2291 = vrot.lane.b32.xlu0 %v478, 90
        %v2292 = vpop.permute.xlu0 %2291
        %2293 = vrot.lane.b32.xlu0 %v486, 90
        %v2294 = vpop.permute.xlu0 %2293
        %2295 = vrot.lane.b32.xlu0 %v485, 90
        %v2296 = vpop.permute.xlu0 %2295
        %v2297 = vsel %vm2190, %v2292, %v2294
        %v2298 = vsel %vm2190, %v2294, %v2296
        %v2300 = vsel %vm487, %v2290, 0
        %v2303 = vsel %vm440, %v2297, 0
        %v2306 = vsel %vm440, %v2298, 0
        %v2309 = vsel %vm440, %v2296, 0
        %2311 = vmatprep.subr.bf16.mxu0 0
        %2312 = vmatpush1.bf16.msra.mxu0 0
        %2313 = vmatprep.subr.bf16.mxu0 0
        %2314 = vmatpush1.bf16.msra.mxu0 0
        %2315 = vmatprep.subr.bf16.mxu0 0
        %2316 = vmatpush1.bf16.msra.mxu0 0
        %2317 = vmatprep.subr.bf16.mxu0 0
        %2318 = vmatpush1.bf16.msra.mxu0 0
        %2319 = vmatprep.subr.bf16.mxu0 0
        %2320 = vmatpush1.bf16.msra.mxu0 0
        %2321 = vmatprep.subr.bf16.mxu0 0
        %2322 = vmatpush1.bf16.msra.mxu0 0
        %2323 = vmatprep.subr.bf16.mxu0 0
        %2324 = vmatpush1.bf16.msra.mxu0 0
        %2325 = vmatprep.subr.bf16.mxu0 %v2306
        %2326 = vmatpush1.bf16.msra.mxu0 %v2303
        %2327 = vmatprep.subr.bf16.mxu0 0
        %2328 = vmatpush2.bf16.msra.mxu0 0
        %2329 = vmatprep.subr.bf16.mxu0 0
        %2330 = vmatpush2.bf16.msra.mxu0 0
        %2331 = vmatprep.subr.bf16.mxu0 0
        %2332 = vmatpush2.bf16.msra.mxu0 0
        %2333 = vmatprep.subr.bf16.mxu0 0
        %2334 = vmatpush2.bf16.msra.mxu0 0
        %2335 = vmatprep.subr.bf16.mxu0 0
        %2336 = vmatpush2.bf16.msra.mxu0 0
        %2337 = vmatprep.subr.bf16.mxu0 0
        %2338 = vmatpush2.bf16.msra.mxu0 0
        %2339 = vmatprep.subr.bf16.mxu0 0
        %2340 = vmatpush2.bf16.msra.mxu0 0
        %2341 = vmatprep.subr.bf16.mxu0 0
        %2342 = vmatpush2.bf16.msra.mxu0 0
        %2343 = vmatprep.mubr.bf16.mxu0 0
        %2344 = vmatmul.mubr.bf16.gmra.mxu0 %v2300
        %v2345 = vpop.f32.mrf.mxu0
        %v2346 = vadd.f32 0.0, %v2345
        %v2347 = vpop.f32.mrf.mxu0
        %v2348 = vadd.f32 0.0, %v2347
        %v2349 = vpop.f32.mrf.mxu0
        %v2350 = vpop.f32.mrf.mxu0
        %2351 = vdwg.mxu0
        %2352 = vmatprep.subr.bf16.mxu0 0
        %2353 = vmatpush1.bf16.msra.mxu0 0
        %2354 = vmatprep.subr.bf16.mxu0 0
        %2355 = vmatpush1.bf16.msra.mxu0 0
        %2356 = vmatprep.subr.bf16.mxu0 0
        %2357 = vmatpush1.bf16.msra.mxu0 0
        %2358 = vmatprep.subr.bf16.mxu0 0
        %2359 = vmatpush1.bf16.msra.mxu0 0
        %2360 = vmatprep.subr.bf16.mxu0 0
        %2361 = vmatpush1.bf16.msra.mxu0 0
        %2362 = vmatprep.subr.bf16.mxu0 0
        %2363 = vmatpush1.bf16.msra.mxu0 0
        %2364 = vmatprep.subr.bf16.mxu0 0
        %2365 = vmatpush1.bf16.msra.mxu0 0
        %2366 = vmatprep.subr.bf16.mxu0 0
        %2367 = vmatpush1.bf16.msra.mxu0 %v2309
        %2368 = vmatprep.subr.bf16.mxu0 0
        %2369 = vmatpush2.bf16.msra.mxu0 0
        %2370 = vmatprep.subr.bf16.mxu0 0
        %2371 = vmatpush2.bf16.msra.mxu0 0
        %2372 = vmatprep.subr.bf16.mxu0 0
        %2373 = vmatpush2.bf16.msra.mxu0 0
        %2374 = vmatprep.subr.bf16.mxu0 0
        %2375 = vmatpush2.bf16.msra.mxu0 0
        %2376 = vmatprep.subr.bf16.mxu0 0
        %2377 = vmatpush2.bf16.msra.mxu0 0
        %2378 = vmatprep.subr.bf16.mxu0 0
        %2379 = vmatpush2.bf16.msra.mxu0 0
        %2380 = vmatprep.subr.bf16.mxu0 0
        %2381 = vmatpush2.bf16.msra.mxu0 0
        %2382 = vmatprep.subr.bf16.mxu0 0
        %2383 = vmatpush2.bf16.msra.mxu0 0
        %2384 = vmatprep.mubr.bf16.mxu0 0
        %2385 = vmatmul.mubr.bf16.gmra.mxu0 %v2300
        %v2386 = vpop.f32.mrf.mxu0
        %v2387 = vadd.f32 0.0, %v2386
        %v2388 = vpop.f32.mrf.mxu0
        %v2389 = vpop.f32.mrf.mxu0
        %v2390 = vpop.f32.mrf.mxu0
        %2391 = vdwg.mxu0
        %v2392 = vadd.f32 %v2286, %v2346
        %v2393 = vadd.f32 %v2287, %v2348
        %v2394 = vadd.f32 %v2288, %v2387
        %s2395 = sadd.s32 %s456, 1
        %s2396 = smul.u32 %s2395, 3
        %s2397 = smul.addr %s2396, 2
        %s2398 = scalar_lea.vmem %s412, %s2397
        %v2399 = vld [vmem:[%s2398] sm:$0x3f]
        %s2400 = smul.addr %s2396, 2
        %s2401 = scalar_lea.vmem %s421, %s2400
        %v2402 = vld [vmem:[%s2401] sm:$0x3f]
        %s2403 = scalar_lea.vmem %s2, 18
        %v2404 = vld [vmem:[%s2403] sm:$0x3]
        %v2406 = vcombine.high %v2399, %v2399
        %v2408 = vunpack.c.l.s4 1983009808
        %v2409 = vunpack.c.0.s8 %v2408
        %v2410 = vlaneseq
        %v2411 = vshrl.u32 %v2410, 7
        %v2412 = vsub.s32 %v2409, %v2411
        %v2413 = vrot.slane %v2399, %v2412
        %v2415 = vunpack.c.l.s4 1983009808
        %v2416 = vunpack.c.0.s8 %v2415
        %v2417 = vlaneseq
        %v2418 = vshrl.u32 %v2417, 7
        %v2419 = vsub.s32 %v2416, %v2418
        %v2420 = vrot.slane %v2406, %v2419
        %v2421 = vcombine.high %v2413, %v2413
        %v2423 = vsel %vm487, %v2404, 0
        %v2426 = vsel %vm440, %v2413, 0
        %v2429 = vsel %vm440, %v2421, 0
        %v2432 = vsel %vm440, %v2420, 0
        %2434 = vmatprep.subr.bf16.mxu0 0
        %2435 = vmatpush1.bf16.msra.mxu0 0
        %2436 = vmatprep.subr.bf16.mxu0 0
        %2437 = vmatpush1.bf16.msra.mxu0 0
        %2438 = vmatprep.subr.bf16.mxu0 0
        %2439 = vmatpush1.bf16.msra.mxu0 0
        %2440 = vmatprep.subr.bf16.mxu0 0
        %2441 = vmatpush1.bf16.msra.mxu0 0
        %2442 = vmatprep.subr.bf16.mxu0 0
        %2443 = vmatpush1.bf16.msra.mxu0 0
        %2444 = vmatprep.subr.bf16.mxu0 0
        %2445 = vmatpush1.bf16.msra.mxu0 0
        %2446 = vmatprep.subr.bf16.mxu0 0
        %2447 = vmatpush1.bf16.msra.mxu0 0
        %2448 = vmatprep.subr.bf16.mxu0 %v2429
        %2449 = vmatpush1.bf16.msra.mxu0 %v2426
        %2450 = vmatprep.subr.bf16.mxu0 0
        %2451 = vmatpush2.bf16.msra.mxu0 0
        %2452 = vmatprep.subr.bf16.mxu0 0
        %2453 = vmatpush2.bf16.msra.mxu0 0
        %2454 = vmatprep.subr.bf16.mxu0 0
        %2455 = vmatpush2.bf16.msra.mxu0 0
        %2456 = vmatprep.subr.bf16.mxu0 0
        %2457 = vmatpush2.bf16.msra.mxu0 0
        %2458 = vmatprep.subr.bf16.mxu0 0
        %2459 = vmatpush2.bf16.msra.mxu0 0
        %2460 = vmatprep.subr.bf16.mxu0 0
        %2461 = vmatpush2.bf16.msra.mxu0 0
        %2462 = vmatprep.subr.bf16.mxu0 0
        %2463 = vmatpush2.bf16.msra.mxu0 0
        %2464 = vmatprep.subr.bf16.mxu0 0
        %2465 = vmatpush2.bf16.msra.mxu0 0
        %2466 = vmatprep.mubr.bf16.mxu0 0
        %2467 = vmatmul.mubr.bf16.gmra.mxu0 %v2423
        %v2468 = vpop.f32.mrf.mxu0
        %v2469 = vadd.f32 0.0, %v2468
        %v2470 = vpop.f32.mrf.mxu0
        %v2471 = vadd.f32 0.0, %v2470
        %v2472 = vpop.f32.mrf.mxu0
        %v2473 = vpop.f32.mrf.mxu0
        %2474 = vdwg.mxu0
        %2475 = vmatprep.subr.bf16.mxu0 0
        %2476 = vmatpush1.bf16.msra.mxu0 0
        %2477 = vmatprep.subr.bf16.mxu0 0
        %2478 = vmatpush1.bf16.msra.mxu0 0
        %2479 = vmatprep.subr.bf16.mxu0 0
        %2480 = vmatpush1.bf16.msra.mxu0 0
        %2481 = vmatprep.subr.bf16.mxu0 0
        %2482 = vmatpush1.bf16.msra.mxu0 0
        %2483 = vmatprep.subr.bf16.mxu0 0
        %2484 = vmatpush1.bf16.msra.mxu0 0
        %2485 = vmatprep.subr.bf16.mxu0 0
        %2486 = vmatpush1.bf16.msra.mxu0 0
        %2487 = vmatprep.subr.bf16.mxu0 0
        %2488 = vmatpush1.bf16.msra.mxu0 0
        %2489 = vmatprep.subr.bf16.mxu0 0
        %2490 = vmatpush1.bf16.msra.mxu0 %v2432
        %2491 = vmatprep.subr.bf16.mxu0 0
        %2492 = vmatpush2.bf16.msra.mxu0 0
        %2493 = vmatprep.subr.bf16.mxu0 0
        %2494 = vmatpush2.bf16.msra.mxu0 0
        %2495 = vmatprep.subr.bf16.mxu0 0
        %2496 = vmatpush2.bf16.msra.mxu0 0
        %2497 = vmatprep.subr.bf16.mxu0 0
        %2498 = vmatpush2.bf16.msra.mxu0 0
        %2499 = vmatprep.subr.bf16.mxu0 0
        %2500 = vmatpush2.bf16.msra.mxu0 0
        %2501 = vmatprep.subr.bf16.mxu0 0
        %2502 = vmatpush2.bf16.msra.mxu0 0
        %2503 = vmatprep.subr.bf16.mxu0 0
        %2504 = vmatpush2.bf16.msra.mxu0 0
        %2505 = vmatprep.subr.bf16.mxu0 0
        %2506 = vmatpush2.bf16.msra.mxu0 0
        %2507 = vmatprep.mubr.bf16.mxu0 0
        %2508 = vmatmul.mubr.bf16.gmra.mxu0 %v2423
        %v2509 = vpop.f32.mrf.mxu0
        %v2510 = vadd.f32 0.0, %v2509
        %v2511 = vpop.f32.mrf.mxu0
        %v2512 = vpop.f32.mrf.mxu0
        %v2513 = vpop.f32.mrf.mxu0
        %2514 = vdwg.mxu0
        %v2515 = vadd.f32 %v2392, %v2469
        %v2516 = vadd.f32 %v2393, %v2471
        %v2517 = vadd.f32 %v2394, %v2510
        %s2518 = scalar_lea.vmem %s3, 18
        %v2519 = vld [vmem:[%s2518] sm:$0x3]
        %v2521 = vcombine.high %v2402, %v2402
        %v2523 = vunpack.c.l.s4 1983009808
        %v2524 = vunpack.c.0.s8 %v2523
        %v2525 = vlaneseq
        %v2526 = vshrl.u32 %v2525, 7
        %v2527 = vsub.s32 %v2524, %v2526
        %v2528 = vrot.slane %v2402, %v2527
        %v2530 = vunpack.c.l.s4 1983009808
        %v2531 = vunpack.c.0.s8 %v2530
        %v2532 = vlaneseq
        %v2533 = vshrl.u32 %v2532, 7
        %v2534 = vsub.s32 %v2531, %v2533
        %v2535 = vrot.slane %v2521, %v2534
        %v2536 = vcombine.high %v2528, %v2528
        %v2538 = vsel %vm487, %v2519, 0
        %v2541 = vsel %vm440, %v2528, 0
        %v2544 = vsel %vm440, %v2536, 0
        %v2547 = vsel %vm440, %v2535, 0
        %2549 = vmatprep.subr.bf16.mxu0 0
        %2550 = vmatpush1.bf16.msra.mxu0 0
        %2551 = vmatprep.subr.bf16.mxu0 0
        %2552 = vmatpush1.bf16.msra.mxu0 0
        %2553 = vmatprep.subr.bf16.mxu0 0
        %2554 = vmatpush1.bf16.msra.mxu0 0
        %2555 = vmatprep.subr.bf16.mxu0 0
        %2556 = vmatpush1.bf16.msra.mxu0 0
        %2557 = vmatprep.subr.bf16.mxu0 0
        %2558 = vmatpush1.bf16.msra.mxu0 0
        %2559 = vmatprep.subr.bf16.mxu0 0
        %2560 = vmatpush1.bf16.msra.mxu0 0
        %2561 = vmatprep.subr.bf16.mxu0 0
        %2562 = vmatpush1.bf16.msra.mxu0 0
        %2563 = vmatprep.subr.bf16.mxu0 %v2544
        %2564 = vmatpush1.bf16.msra.mxu0 %v2541
        %2565 = vmatprep.subr.bf16.mxu0 0
        %2566 = vmatpush2.bf16.msra.mxu0 0
        %2567 = vmatprep.subr.bf16.mxu0 0
        %2568 = vmatpush2.bf16.msra.mxu0 0
        %2569 = vmatprep.subr.bf16.mxu0 0
        %2570 = vmatpush2.bf16.msra.mxu0 0
        %2571 = vmatprep.subr.bf16.mxu0 0
        %2572 = vmatpush2.bf16.msra.mxu0 0
        %2573 = vmatprep.subr.bf16.mxu0 0
        %2574 = vmatpush2.bf16.msra.mxu0 0
        %2575 = vmatprep.subr.bf16.mxu0 0
        %2576 = vmatpush2.bf16.msra.mxu0 0
        %2577 = vmatprep.subr.bf16.mxu0 0
        %2578 = vmatpush2.bf16.msra.mxu0 0
        %2579 = vmatprep.subr.bf16.mxu0 0
        %2580 = vmatpush2.bf16.msra.mxu0 0
        %2581 = vmatprep.mubr.bf16.mxu0 0
        %2582 = vmatmul.mubr.bf16.gmra.mxu0 %v2538
        %v2583 = vpop.f32.mrf.mxu0
        %v2584 = vadd.f32 0.0, %v2583
        %v2585 = vpop.f32.mrf.mxu0
        %v2586 = vadd.f32 0.0, %v2585
        %v2587 = vpop.f32.mrf.mxu0
        %v2588 = vpop.f32.mrf.mxu0
        %2589 = vdwg.mxu0
        %2590 = vmatprep.subr.bf16.mxu0 0
        %2591 = vmatpush1.bf16.msra.mxu0 0
        %2592 = vmatprep.subr.bf16.mxu0 0
        %2593 = vmatpush1.bf16.msra.mxu0 0
        %2594 = vmatprep.subr.bf16.mxu0 0
        %2595 = vmatpush1.bf16.msra.mxu0 0
        %2596 = vmatprep.subr.bf16.mxu0 0
        %2597 = vmatpush1.bf16.msra.mxu0 0
        %2598 = vmatprep.subr.bf16.mxu0 0
        %2599 = vmatpush1.bf16.msra.mxu0 0
        %2600 = vmatprep.subr.bf16.mxu0 0
        %2601 = vmatpush1.bf16.msra.mxu0 0
        %2602 = vmatprep.subr.bf16.mxu0 0
        %2603 = vmatpush1.bf16.msra.mxu0 0
        %2604 = vmatprep.subr.bf16.mxu0 0
        %2605 = vmatpush1.bf16.msra.mxu0 %v2547
        %2606 = vmatprep.subr.bf16.mxu0 0
        %2607 = vmatpush2.bf16.msra.mxu0 0
        %2608 = vmatprep.subr.bf16.mxu0 0
        %2609 = vmatpush2.bf16.msra.mxu0 0
        %2610 = vmatprep.subr.bf16.mxu0 0
        %2611 = vmatpush2.bf16.msra.mxu0 0
        %2612 = vmatprep.subr.bf16.mxu0 0
        %2613 = vmatpush2.bf16.msra.mxu0 0
        %2614 = vmatprep.subr.bf16.mxu0 0
        %2615 = vmatpush2.bf16.msra.mxu0 0
        %2616 = vmatprep.subr.bf16.mxu0 0
        %2617 = vmatpush2.bf16.msra.mxu0 0
        %2618 = vmatprep.subr.bf16.mxu0 0
        %2619 = vmatpush2.bf16.msra.mxu0 0
        %2620 = vmatprep.subr.bf16.mxu0 0
        %2621 = vmatpush2.bf16.msra.mxu0 0
        %2622 = vmatprep.mubr.bf16.mxu0 0
        %2623 = vmatmul.mubr.bf16.gmra.mxu0 %v2538
        %v2624 = vpop.f32.mrf.mxu0
        %v2625 = vadd.f32 0.0, %v2624
        %v2626 = vpop.f32.mrf.mxu0
        %v2627 = vpop.f32.mrf.mxu0
        %v2628 = vpop.f32.mrf.mxu0
        %2629 = vdwg.mxu0
        %v2630 = vadd.f32 %v2515, %v2584
        %v2631 = vadd.f32 %v2516, %v2586
        %v2632 = vadd.f32 %v2517, %v2625
        %s2633 = scalar_lea.vmem %s2, 20
        %v2634 = vld [vmem:[%s2633] sm:$0x3]
        %2635 = vrot.lane.b32.xlu0 %v2413, 127
        %v2636 = vpop.permute.xlu0 %2635
        %2637 = vrot.lane.b32.xlu0 %v2421, 127
        %v2638 = vpop.permute.xlu0 %2637
        %2639 = vrot.lane.b32.xlu0 %v2420, 127
        %v2640 = vpop.permute.xlu0 %2639
        %v2641 = vsel %vm699, %v2636, %v2638
        %v2642 = vsel %vm699, %v2638, %v2640
        %v2644 = vsel %vm487, %v2634, 0
        %v2647 = vsel %vm440, %v2641, 0
        %v2650 = vsel %vm440, %v2642, 0
        %v2653 = vsel %vm440, %v2640, 0
        %2655 = vmatprep.subr.bf16.mxu0 0
        %2656 = vmatpush1.bf16.msra.mxu0 0
        %2657 = vmatprep.subr.bf16.mxu0 0
        %2658 = vmatpush1.bf16.msra.mxu0 0
        %2659 = vmatprep.subr.bf16.mxu0 0
        %2660 = vmatpush1.bf16.msra.mxu0 0
        %2661 = vmatprep.subr.bf16.mxu0 0
        %2662 = vmatpush1.bf16.msra.mxu0 0
        %2663 = vmatprep.subr.bf16.mxu0 0
        %2664 = vmatpush1.bf16.msra.mxu0 0
        %2665 = vmatprep.subr.bf16.mxu0 0
        %2666 = vmatpush1.bf16.msra.mxu0 0
        %2667 = vmatprep.subr.bf16.mxu0 0
        %2668 = vmatpush1.bf16.msra.mxu0 0
        %2669 = vmatprep.subr.bf16.mxu0 %v2650
        %2670 = vmatpush1.bf16.msra.mxu0 %v2647
        %2671 = vmatprep.subr.bf16.mxu0 0
        %2672 = vmatpush2.bf16.msra.mxu0 0
        %2673 = vmatprep.subr.bf16.mxu0 0
        %2674 = vmatpush2.bf16.msra.mxu0 0
        %2675 = vmatprep.subr.bf16.mxu0 0
        %2676 = vmatpush2.bf16.msra.mxu0 0
        %2677 = vmatprep.subr.bf16.mxu0 0
        %2678 = vmatpush2.bf16.msra.mxu0 0
        %2679 = vmatprep.subr.bf16.mxu0 0
        %2680 = vmatpush2.bf16.msra.mxu0 0
        %2681 = vmatprep.subr.bf16.mxu0 0
        %2682 = vmatpush2.bf16.msra.mxu0 0
        %2683 = vmatprep.subr.bf16.mxu0 0
        %2684 = vmatpush2.bf16.msra.mxu0 0
        %2685 = vmatprep.subr.bf16.mxu0 0
        %2686 = vmatpush2.bf16.msra.mxu0 0
        %2687 = vmatprep.mubr.bf16.mxu0 0
        %2688 = vmatmul.mubr.bf16.gmra.mxu0 %v2644
        %v2689 = vpop.f32.mrf.mxu0
        %v2690 = vadd.f32 0.0, %v2689
        %v2691 = vpop.f32.mrf.mxu0
        %v2692 = vadd.f32 0.0, %v2691
        %v2693 = vpop.f32.mrf.mxu0
        %v2694 = vpop.f32.mrf.mxu0
        %2695 = vdwg.mxu0
        %2696 = vmatprep.subr.bf16.mxu0 0
        %2697 = vmatpush1.bf16.msra.mxu0 0
        %2698 = vmatprep.subr.bf16.mxu0 0
        %2699 = vmatpush1.bf16.msra.mxu0 0
        %2700 = vmatprep.subr.bf16.mxu0 0
        %2701 = vmatpush1.bf16.msra.mxu0 0
        %2702 = vmatprep.subr.bf16.mxu0 0
        %2703 = vmatpush1.bf16.msra.mxu0 0
        %2704 = vmatprep.subr.bf16.mxu0 0
        %2705 = vmatpush1.bf16.msra.mxu0 0
        %2706 = vmatprep.subr.bf16.mxu0 0
        %2707 = vmatpush1.bf16.msra.mxu0 0
        %2708 = vmatprep.subr.bf16.mxu0 0
        %2709 = vmatpush1.bf16.msra.mxu0 0
        %2710 = vmatprep.subr.bf16.mxu0 0
        %2711 = vmatpush1.bf16.msra.mxu0 %v2653
        %2712 = vmatprep.subr.bf16.mxu0 0
        %2713 = vmatpush2.bf16.msra.mxu0 0
        %2714 = vmatprep.subr.bf16.mxu0 0
        %2715 = vmatpush2.bf16.msra.mxu0 0
        %2716 = vmatprep.subr.bf16.mxu0 0
        %2717 = vmatpush2.bf16.msra.mxu0 0
        %2718 = vmatprep.subr.bf16.mxu0 0
        %2719 = vmatpush2.bf16.msra.mxu0 0
        %2720 = vmatprep.subr.bf16.mxu0 0
        %2721 = vmatpush2.bf16.msra.mxu0 0
        %2722 = vmatprep.subr.bf16.mxu0 0
        %2723 = vmatpush2.bf16.msra.mxu0 0
        %2724 = vmatprep.subr.bf16.mxu0 0
        %2725 = vmatpush2.bf16.msra.mxu0 0
        %2726 = vmatprep.subr.bf16.mxu0 0
        %2727 = vmatpush2.bf16.msra.mxu0 0
        %2728 = vmatprep.mubr.bf16.mxu0 0
        %2729 = vmatmul.mubr.bf16.gmra.mxu0 %v2644
        %v2730 = vpop.f32.mrf.mxu0
        %v2731 = vadd.f32 0.0, %v2730
        %v2732 = vpop.f32.mrf.mxu0
        %v2733 = vpop.f32.mrf.mxu0
        %v2734 = vpop.f32.mrf.mxu0
        %2735 = vdwg.mxu0
        %v2736 = vadd.f32 %v2630, %v2690
        %v2737 = vadd.f32 %v2631, %v2692
        %v2738 = vadd.f32 %v2632, %v2731
        %s2739 = scalar_lea.vmem %s3, 20
        %v2740 = vld [vmem:[%s2739] sm:$0x3]
        %2741 = vrot.lane.b32.xlu0 %v2528, 127
        %v2742 = vpop.permute.xlu0 %2741
        %2743 = vrot.lane.b32.xlu0 %v2536, 127
        %v2744 = vpop.permute.xlu0 %2743
        %2745 = vrot.lane.b32.xlu0 %v2535, 127
        %v2746 = vpop.permute.xlu0 %2745
        %v2747 = vsel %vm699, %v2742, %v2744
        %v2748 = vsel %vm699, %v2744, %v2746
        %v2750 = vsel %vm487, %v2740, 0
        %v2753 = vsel %vm440, %v2747, 0
        %v2756 = vsel %vm440, %v2748, 0
        %v2759 = vsel %vm440, %v2746, 0
        %2761 = vmatprep.subr.bf16.mxu0 0
        %2762 = vmatpush1.bf16.msra.mxu0 0
        %2763 = vmatprep.subr.bf16.mxu0 0
        %2764 = vmatpush1.bf16.msra.mxu0 0
        %2765 = vmatprep.subr.bf16.mxu0 0
        %2766 = vmatpush1.bf16.msra.mxu0 0
        %2767 = vmatprep.subr.bf16.mxu0 0
        %2768 = vmatpush1.bf16.msra.mxu0 0
        %2769 = vmatprep.subr.bf16.mxu0 0
        %2770 = vmatpush1.bf16.msra.mxu0 0
        %2771 = vmatprep.subr.bf16.mxu0 0
        %2772 = vmatpush1.bf16.msra.mxu0 0
        %2773 = vmatprep.subr.bf16.mxu0 0
        %2774 = vmatpush1.bf16.msra.mxu0 0
        %2775 = vmatprep.subr.bf16.mxu0 %v2756
        %2776 = vmatpush1.bf16.msra.mxu0 %v2753
        %2777 = vmatprep.subr.bf16.mxu0 0
        %2778 = vmatpush2.bf16.msra.mxu0 0
        %2779 = vmatprep.subr.bf16.mxu0 0
        %2780 = vmatpush2.bf16.msra.mxu0 0
        %2781 = vmatprep.subr.bf16.mxu0 0
        %2782 = vmatpush2.bf16.msra.mxu0 0
        %2783 = vmatprep.subr.bf16.mxu0 0
        %2784 = vmatpush2.bf16.msra.mxu0 0
        %2785 = vmatprep.subr.bf16.mxu0 0
        %2786 = vmatpush2.bf16.msra.mxu0 0
        %2787 = vmatprep.subr.bf16.mxu0 0
        %2788 = vmatpush2.bf16.msra.mxu0 0
        %2789 = vmatprep.subr.bf16.mxu0 0
        %2790 = vmatpush2.bf16.msra.mxu0 0
        %2791 = vmatprep.subr.bf16.mxu0 0
        %2792 = vmatpush2.bf16.msra.mxu0 0
        %2793 = vmatprep.mubr.bf16.mxu0 0
        %2794 = vmatmul.mubr.bf16.gmra.mxu0 %v2750
        %v2795 = vpop.f32.mrf.mxu0
        %v2796 = vadd.f32 0.0, %v2795
        %v2797 = vpop.f32.mrf.mxu0
        %v2798 = vadd.f32 0.0, %v2797
        %v2799 = vpop.f32.mrf.mxu0
        %v2800 = vpop.f32.mrf.mxu0
        %2801 = vdwg.mxu0
        %2802 = vmatprep.subr.bf16.mxu0 0
        %2803 = vmatpush1.bf16.msra.mxu0 0
        %2804 = vmatprep.subr.bf16.mxu0 0
        %2805 = vmatpush1.bf16.msra.mxu0 0
        %2806 = vmatprep.subr.bf16.mxu0 0
        %2807 = vmatpush1.bf16.msra.mxu0 0
        %2808 = vmatprep.subr.bf16.mxu0 0
        %2809 = vmatpush1.bf16.msra.mxu0 0
        %2810 = vmatprep.subr.bf16.mxu0 0
        %2811 = vmatpush1.bf16.msra.mxu0 0
        %2812 = vmatprep.subr.bf16.mxu0 0
        %2813 = vmatpush1.bf16.msra.mxu0 0
        %2814 = vmatprep.subr.bf16.mxu0 0
        %2815 = vmatpush1.bf16.msra.mxu0 0
        %2816 = vmatprep.subr.bf16.mxu0 0
        %2817 = vmatpush1.bf16.msra.mxu0 %v2759
        %2818 = vmatprep.subr.bf16.mxu0 0
        %2819 = vmatpush2.bf16.msra.mxu0 0
        %2820 = vmatprep.subr.bf16.mxu0 0
        %2821 = vmatpush2.bf16.msra.mxu0 0
        %2822 = vmatprep.subr.bf16.mxu0 0
        %2823 = vmatpush2.bf16.msra.mxu0 0
        %2824 = vmatprep.subr.bf16.mxu0 0
        %2825 = vmatpush2.bf16.msra.mxu0 0
        %2826 = vmatprep.subr.bf16.mxu0 0
        %2827 = vmatpush2.bf16.msra.mxu0 0
        %2828 = vmatprep.subr.bf16.mxu0 0
        %2829 = vmatpush2.bf16.msra.mxu0 0
        %2830 = vmatprep.subr.bf16.mxu0 0
        %2831 = vmatpush2.bf16.msra.mxu0 0
        %2832 = vmatprep.subr.bf16.mxu0 0
        %2833 = vmatpush2.bf16.msra.mxu0 0
        %2834 = vmatprep.mubr.bf16.mxu0 0
        %2835 = vmatmul.mubr.bf16.gmra.mxu0 %v2750
        %v2836 = vpop.f32.mrf.mxu0
        %v2837 = vadd.f32 0.0, %v2836
        %v2838 = vpop.f32.mrf.mxu0
        %v2839 = vpop.f32.mrf.mxu0
        %v2840 = vpop.f32.mrf.mxu0
        %2841 = vdwg.mxu0
        %v2842 = vadd.f32 %v2736, %v2796
        %v2843 = vadd.f32 %v2737, %v2798
        %v2844 = vadd.f32 %v2738, %v2837
        %s2845 = scalar_lea.vmem %s2, 22
        %v2846 = vld [vmem:[%s2845] sm:$0x3]
        %2847 = vrot.lane.b32.xlu0 %v2413, 126
        %v2848 = vpop.permute.xlu0 %2847
        %2849 = vrot.lane.b32.xlu0 %v2421, 126
        %v2850 = vpop.permute.xlu0 %2849
        %2851 = vrot.lane.b32.xlu0 %v2420, 126
        %v2852 = vpop.permute.xlu0 %2851
        %v2853 = vsel %vm912, %v2848, %v2850
        %v2854 = vsel %vm912, %v2850, %v2852
        %v2856 = vsel %vm487, %v2846, 0
        %v2859 = vsel %vm440, %v2853, 0
        %v2862 = vsel %vm440, %v2854, 0
        %v2865 = vsel %vm440, %v2852, 0
        %2867 = vmatprep.subr.bf16.mxu0 0
        %2868 = vmatpush1.bf16.msra.mxu0 0
        %2869 = vmatprep.subr.bf16.mxu0 0
        %2870 = vmatpush1.bf16.msra.mxu0 0
        %2871 = vmatprep.subr.bf16.mxu0 0
        %2872 = vmatpush1.bf16.msra.mxu0 0
        %2873 = vmatprep.subr.bf16.mxu0 0
        %2874 = vmatpush1.bf16.msra.mxu0 0
        %2875 = vmatprep.subr.bf16.mxu0 0
        %2876 = vmatpush1.bf16.msra.mxu0 0
        %2877 = vmatprep.subr.bf16.mxu0 0
        %2878 = vmatpush1.bf16.msra.mxu0 0
        %2879 = vmatprep.subr.bf16.mxu0 0
        %2880 = vmatpush1.bf16.msra.mxu0 0
        %2881 = vmatprep.subr.bf16.mxu0 %v2862
        %2882 = vmatpush1.bf16.msra.mxu0 %v2859
        %2883 = vmatprep.subr.bf16.mxu0 0
        %2884 = vmatpush2.bf16.msra.mxu0 0
        %2885 = vmatprep.subr.bf16.mxu0 0
        %2886 = vmatpush2.bf16.msra.mxu0 0
        %2887 = vmatprep.subr.bf16.mxu0 0
        %2888 = vmatpush2.bf16.msra.mxu0 0
        %2889 = vmatprep.subr.bf16.mxu0 0
        %2890 = vmatpush2.bf16.msra.mxu0 0
        %2891 = vmatprep.subr.bf16.mxu0 0
        %2892 = vmatpush2.bf16.msra.mxu0 0
        %2893 = vmatprep.subr.bf16.mxu0 0
        %2894 = vmatpush2.bf16.msra.mxu0 0
        %2895 = vmatprep.subr.bf16.mxu0 0
        %2896 = vmatpush2.bf16.msra.mxu0 0
        %2897 = vmatprep.subr.bf16.mxu0 0
        %2898 = vmatpush2.bf16.msra.mxu0 0
        %2899 = vmatprep.mubr.bf16.mxu0 0
        %2900 = vmatmul.mubr.bf16.gmra.mxu0 %v2856
        %v2901 = vpop.f32.mrf.mxu0
        %v2902 = vadd.f32 0.0, %v2901
        %v2903 = vpop.f32.mrf.mxu0
        %v2904 = vadd.f32 0.0, %v2903
        %v2905 = vpop.f32.mrf.mxu0
        %v2906 = vpop.f32.mrf.mxu0
        %2907 = vdwg.mxu0
        %2908 = vmatprep.subr.bf16.mxu0 0
        %2909 = vmatpush1.bf16.msra.mxu0 0
        %2910 = vmatprep.subr.bf16.mxu0 0
        %2911 = vmatpush1.bf16.msra.mxu0 0
        %2912 = vmatprep.subr.bf16.mxu0 0
        %2913 = vmatpush1.bf16.msra.mxu0 0
        %2914 = vmatprep.subr.bf16.mxu0 0
        %2915 = vmatpush1.bf16.msra.mxu0 0
        %2916 = vmatprep.subr.bf16.mxu0 0
        %2917 = vmatpush1.bf16.msra.mxu0 0
        %2918 = vmatprep.subr.bf16.mxu0 0
        %2919 = vmatpush1.bf16.msra.mxu0 0
        %2920 = vmatprep.subr.bf16.mxu0 0
        %2921 = vmatpush1.bf16.msra.mxu0 0
        %2922 = vmatprep.subr.bf16.mxu0 0
        %2923 = vmatpush1.bf16.msra.mxu0 %v2865
        %2924 = vmatprep.subr.bf16.mxu0 0
        %2925 = vmatpush2.bf16.msra.mxu0 0
        %2926 = vmatprep.subr.bf16.mxu0 0
        %2927 = vmatpush2.bf16.msra.mxu0 0
        %2928 = vmatprep.subr.bf16.mxu0 0
        %2929 = vmatpush2.bf16.msra.mxu0 0
        %2930 = vmatprep.subr.bf16.mxu0 0
        %2931 = vmatpush2.bf16.msra.mxu0 0
        %2932 = vmatprep.subr.bf16.mxu0 0
        %2933 = vmatpush2.bf16.msra.mxu0 0
        %2934 = vmatprep.subr.bf16.mxu0 0
        %2935 = vmatpush2.bf16.msra.mxu0 0
        %2936 = vmatprep.subr.bf16.mxu0 0
        %2937 = vmatpush2.bf16.msra.mxu0 0
        %2938 = vmatprep.subr.bf16.mxu0 0
        %2939 = vmatpush2.bf16.msra.mxu0 0
        %2940 = vmatprep.mubr.bf16.mxu0 0
        %2941 = vmatmul.mubr.bf16.gmra.mxu0 %v2856
        %v2942 = vpop.f32.mrf.mxu0
        %v2943 = vadd.f32 0.0, %v2942
        %v2944 = vpop.f32.mrf.mxu0
        %v2945 = vpop.f32.mrf.mxu0
        %v2946 = vpop.f32.mrf.mxu0
        %2947 = vdwg.mxu0
        %v2948 = vadd.f32 %v2842, %v2902
        %v2949 = vadd.f32 %v2843, %v2904
        %v2950 = vadd.f32 %v2844, %v2943
        %s2951 = scalar_lea.vmem %s3, 22
        %v2952 = vld [vmem:[%s2951] sm:$0x3]
        %2953 = vrot.lane.b32.xlu0 %v2528, 126
        %v2954 = vpop.permute.xlu0 %2953
        %2955 = vrot.lane.b32.xlu0 %v2536, 126
        %v2956 = vpop.permute.xlu0 %2955
        %2957 = vrot.lane.b32.xlu0 %v2535, 126
        %v2958 = vpop.permute.xlu0 %2957
        %v2959 = vsel %vm912, %v2954, %v2956
        %v2960 = vsel %vm912, %v2956, %v2958
        %v2962 = vsel %vm487, %v2952, 0
        %v2965 = vsel %vm440, %v2959, 0
        %v2968 = vsel %vm440, %v2960, 0
        %v2971 = vsel %vm440, %v2958, 0
        %2973 = vmatprep.subr.bf16.mxu0 0
        %2974 = vmatpush1.bf16.msra.mxu0 0
        %2975 = vmatprep.subr.bf16.mxu0 0
        %2976 = vmatpush1.bf16.msra.mxu0 0
        %2977 = vmatprep.subr.bf16.mxu0 0
        %2978 = vmatpush1.bf16.msra.mxu0 0
        %2979 = vmatprep.subr.bf16.mxu0 0
        %2980 = vmatpush1.bf16.msra.mxu0 0
        %2981 = vmatprep.subr.bf16.mxu0 0
        %2982 = vmatpush1.bf16.msra.mxu0 0
        %2983 = vmatprep.subr.bf16.mxu0 0
        %2984 = vmatpush1.bf16.msra.mxu0 0
        %2985 = vmatprep.subr.bf16.mxu0 0
        %2986 = vmatpush1.bf16.msra.mxu0 0
        %2987 = vmatprep.subr.bf16.mxu0 %v2968
        %2988 = vmatpush1.bf16.msra.mxu0 %v2965
        %2989 = vmatprep.subr.bf16.mxu0 0
        %2990 = vmatpush2.bf16.msra.mxu0 0
        %2991 = vmatprep.subr.bf16.mxu0 0
        %2992 = vmatpush2.bf16.msra.mxu0 0
        %2993 = vmatprep.subr.bf16.mxu0 0
        %2994 = vmatpush2.bf16.msra.mxu0 0
        %2995 = vmatprep.subr.bf16.mxu0 0
        %2996 = vmatpush2.bf16.msra.mxu0 0
        %2997 = vmatprep.subr.bf16.mxu0 0
        %2998 = vmatpush2.bf16.msra.mxu0 0
        %2999 = vmatprep.subr.bf16.mxu0 0
        %3000 = vmatpush2.bf16.msra.mxu0 0
        %3001 = vmatprep.subr.bf16.mxu0 0
        %3002 = vmatpush2.bf16.msra.mxu0 0
        %3003 = vmatprep.subr.bf16.mxu0 0
        %3004 = vmatpush2.bf16.msra.mxu0 0
        %3005 = vmatprep.mubr.bf16.mxu0 0
        %3006 = vmatmul.mubr.bf16.gmra.mxu0 %v2962
        %v3007 = vpop.f32.mrf.mxu0
        %v3008 = vadd.f32 0.0, %v3007
        %v3009 = vpop.f32.mrf.mxu0
        %v3010 = vadd.f32 0.0, %v3009
        %v3011 = vpop.f32.mrf.mxu0
        %v3012 = vpop.f32.mrf.mxu0
        %3013 = vdwg.mxu0
        %3014 = vmatprep.subr.bf16.mxu0 0
        %3015 = vmatpush1.bf16.msra.mxu0 0
        %3016 = vmatprep.subr.bf16.mxu0 0
        %3017 = vmatpush1.bf16.msra.mxu0 0
        %3018 = vmatprep.subr.bf16.mxu0 0
        %3019 = vmatpush1.bf16.msra.mxu0 0
        %3020 = vmatprep.subr.bf16.mxu0 0
        %3021 = vmatpush1.bf16.msra.mxu0 0
        %3022 = vmatprep.subr.bf16.mxu0 0
        %3023 = vmatpush1.bf16.msra.mxu0 0
        %3024 = vmatprep.subr.bf16.mxu0 0
        %3025 = vmatpush1.bf16.msra.mxu0 0
        %3026 = vmatprep.subr.bf16.mxu0 0
        %3027 = vmatpush1.bf16.msra.mxu0 0
        %3028 = vmatprep.subr.bf16.mxu0 0
        %3029 = vmatpush1.bf16.msra.mxu0 %v2971
        %3030 = vmatprep.subr.bf16.mxu0 0
        %3031 = vmatpush2.bf16.msra.mxu0 0
        %3032 = vmatprep.subr.bf16.mxu0 0
        %3033 = vmatpush2.bf16.msra.mxu0 0
        %3034 = vmatprep.subr.bf16.mxu0 0
        %3035 = vmatpush2.bf16.msra.mxu0 0
        %3036 = vmatprep.subr.bf16.mxu0 0
        %3037 = vmatpush2.bf16.msra.mxu0 0
        %3038 = vmatprep.subr.bf16.mxu0 0
        %3039 = vmatpush2.bf16.msra.mxu0 0
        %3040 = vmatprep.subr.bf16.mxu0 0
        %3041 = vmatpush2.bf16.msra.mxu0 0
        %3042 = vmatprep.subr.bf16.mxu0 0
        %3043 = vmatpush2.bf16.msra.mxu0 0
        %3044 = vmatprep.subr.bf16.mxu0 0
        %3045 = vmatpush2.bf16.msra.mxu0 0
        %3046 = vmatprep.mubr.bf16.mxu0 0
        %3047 = vmatmul.mubr.bf16.gmra.mxu0 %v2962
        %v3048 = vpop.f32.mrf.mxu0
        %v3049 = vadd.f32 0.0, %v3048
        %v3050 = vpop.f32.mrf.mxu0
        %v3051 = vpop.f32.mrf.mxu0
        %v3052 = vpop.f32.mrf.mxu0
        %3053 = vdwg.mxu0
        %v3054 = vadd.f32 %v2948, %v3008
        %v3055 = vadd.f32 %v2949, %v3010
        %v3056 = vadd.f32 %v2950, %v3049
        %s3057 = scalar_lea.vmem %s2, 24
        %v3058 = vld [vmem:[%s3057] sm:$0x3]
        %3059 = vrot.lane.b32.xlu0 %v2413, 110
        %v3060 = vpop.permute.xlu0 %3059
        %3061 = vrot.lane.b32.xlu0 %v2421, 110
        %v3062 = vpop.permute.xlu0 %3061
        %3063 = vrot.lane.b32.xlu0 %v2420, 110
        %v3064 = vpop.permute.xlu0 %3063
        %v3065 = vsel %vm1125, %v3060, %v3062
        %v3066 = vsel %vm1125, %v3062, %v3064
        %v3068 = vsel %vm487, %v3058, 0
        %v3071 = vsel %vm440, %v3065, 0
        %v3074 = vsel %vm440, %v3066, 0
        %v3077 = vsel %vm440, %v3064, 0
        %3079 = vmatprep.subr.bf16.mxu0 0
        %3080 = vmatpush1.bf16.msra.mxu0 0
        %3081 = vmatprep.subr.bf16.mxu0 0
        %3082 = vmatpush1.bf16.msra.mxu0 0
        %3083 = vmatprep.subr.bf16.mxu0 0
        %3084 = vmatpush1.bf16.msra.mxu0 0
        %3085 = vmatprep.subr.bf16.mxu0 0
        %3086 = vmatpush1.bf16.msra.mxu0 0
        %3087 = vmatprep.subr.bf16.mxu0 0
        %3088 = vmatpush1.bf16.msra.mxu0 0
        %3089 = vmatprep.subr.bf16.mxu0 0
        %3090 = vmatpush1.bf16.msra.mxu0 0
        %3091 = vmatprep.subr.bf16.mxu0 0
        %3092 = vmatpush1.bf16.msra.mxu0 0
        %3093 = vmatprep.subr.bf16.mxu0 %v3074
        %3094 = vmatpush1.bf16.msra.mxu0 %v3071
        %3095 = vmatprep.subr.bf16.mxu0 0
        %3096 = vmatpush2.bf16.msra.mxu0 0
        %3097 = vmatprep.subr.bf16.mxu0 0
        %3098 = vmatpush2.bf16.msra.mxu0 0
        %3099 = vmatprep.subr.bf16.mxu0 0
        %3100 = vmatpush2.bf16.msra.mxu0 0
        %3101 = vmatprep.subr.bf16.mxu0 0
        %3102 = vmatpush2.bf16.msra.mxu0 0
        %3103 = vmatprep.subr.bf16.mxu0 0
        %3104 = vmatpush2.bf16.msra.mxu0 0
        %3105 = vmatprep.subr.bf16.mxu0 0
        %3106 = vmatpush2.bf16.msra.mxu0 0
        %3107 = vmatprep.subr.bf16.mxu0 0
        %3108 = vmatpush2.bf16.msra.mxu0 0
        %3109 = vmatprep.subr.bf16.mxu0 0
        %3110 = vmatpush2.bf16.msra.mxu0 0
        %3111 = vmatprep.mubr.bf16.mxu0 0
        %3112 = vmatmul.mubr.bf16.gmra.mxu0 %v3068
        %v3113 = vpop.f32.mrf.mxu0
        %v3114 = vadd.f32 0.0, %v3113
        %v3115 = vpop.f32.mrf.mxu0
        %v3116 = vadd.f32 0.0, %v3115
        %v3117 = vpop.f32.mrf.mxu0
        %v3118 = vpop.f32.mrf.mxu0
        %3119 = vdwg.mxu0
        %3120 = vmatprep.subr.bf16.mxu0 0
        %3121 = vmatpush1.bf16.msra.mxu0 0
        %3122 = vmatprep.subr.bf16.mxu0 0
        %3123 = vmatpush1.bf16.msra.mxu0 0
        %3124 = vmatprep.subr.bf16.mxu0 0
        %3125 = vmatpush1.bf16.msra.mxu0 0
        %3126 = vmatprep.subr.bf16.mxu0 0
        %3127 = vmatpush1.bf16.msra.mxu0 0
        %3128 = vmatprep.subr.bf16.mxu0 0
        %3129 = vmatpush1.bf16.msra.mxu0 0
        %3130 = vmatprep.subr.bf16.mxu0 0
        %3131 = vmatpush1.bf16.msra.mxu0 0
        %3132 = vmatprep.subr.bf16.mxu0 0
        %3133 = vmatpush1.bf16.msra.mxu0 0
        %3134 = vmatprep.subr.bf16.mxu0 0
        %3135 = vmatpush1.bf16.msra.mxu0 %v3077
        %3136 = vmatprep.subr.bf16.mxu0 0
        %3137 = vmatpush2.bf16.msra.mxu0 0
        %3138 = vmatprep.subr.bf16.mxu0 0
        %3139 = vmatpush2.bf16.msra.mxu0 0
        %3140 = vmatprep.subr.bf16.mxu0 0
        %3141 = vmatpush2.bf16.msra.mxu0 0
        %3142 = vmatprep.subr.bf16.mxu0 0
        %3143 = vmatpush2.bf16.msra.mxu0 0
        %3144 = vmatprep.subr.bf16.mxu0 0
        %3145 = vmatpush2.bf16.msra.mxu0 0
        %3146 = vmatprep.subr.bf16.mxu0 0
        %3147 = vmatpush2.bf16.msra.mxu0 0
        %3148 = vmatprep.subr.bf16.mxu0 0
        %3149 = vmatpush2.bf16.msra.mxu0 0
        %3150 = vmatprep.subr.bf16.mxu0 0
        %3151 = vmatpush2.bf16.msra.mxu0 0
        %3152 = vmatprep.mubr.bf16.mxu0 0
        %3153 = vmatmul.mubr.bf16.gmra.mxu0 %v3068
        %v3154 = vpop.f32.mrf.mxu0
        %v3155 = vadd.f32 0.0, %v3154
        %v3156 = vpop.f32.mrf.mxu0
        %v3157 = vpop.f32.mrf.mxu0
        %v3158 = vpop.f32.mrf.mxu0
        %3159 = vdwg.mxu0
        %v3160 = vadd.f32 %v3054, %v3114
        %v3161 = vadd.f32 %v3055, %v3116
        %v3162 = vadd.f32 %v3056, %v3155
        %s3163 = scalar_lea.vmem %s3, 24
        %v3164 = vld [vmem:[%s3163] sm:$0x3]
        %3165 = vrot.lane.b32.xlu0 %v2528, 110
        %v3166 = vpop.permute.xlu0 %3165
        %3167 = vrot.lane.b32.xlu0 %v2536, 110
        %v3168 = vpop.permute.xlu0 %3167
        %3169 = vrot.lane.b32.xlu0 %v2535, 110
        %v3170 = vpop.permute.xlu0 %3169
        %v3171 = vsel %vm1125, %v3166, %v3168
        %v3172 = vsel %vm1125, %v3168, %v3170
        %v3174 = vsel %vm487, %v3164, 0
        %v3177 = vsel %vm440, %v3171, 0
        %v3180 = vsel %vm440, %v3172, 0
        %v3183 = vsel %vm440, %v3170, 0
        %3185 = vmatprep.subr.bf16.mxu0 0
        %3186 = vmatpush1.bf16.msra.mxu0 0
        %3187 = vmatprep.subr.bf16.mxu0 0
        %3188 = vmatpush1.bf16.msra.mxu0 0
        %3189 = vmatprep.subr.bf16.mxu0 0
        %3190 = vmatpush1.bf16.msra.mxu0 0
        %3191 = vmatprep.subr.bf16.mxu0 0
        %3192 = vmatpush1.bf16.msra.mxu0 0
        %3193 = vmatprep.subr.bf16.mxu0 0
        %3194 = vmatpush1.bf16.msra.mxu0 0
        %3195 = vmatprep.subr.bf16.mxu0 0
        %3196 = vmatpush1.bf16.msra.mxu0 0
        %3197 = vmatprep.subr.bf16.mxu0 0
        %3198 = vmatpush1.bf16.msra.mxu0 0
        %3199 = vmatprep.subr.bf16.mxu0 %v3180
        %3200 = vmatpush1.bf16.msra.mxu0 %v3177
        %3201 = vmatprep.subr.bf16.mxu0 0
        %3202 = vmatpush2.bf16.msra.mxu0 0
        %3203 = vmatprep.subr.bf16.mxu0 0
        %3204 = vmatpush2.bf16.msra.mxu0 0
        %3205 = vmatprep.subr.bf16.mxu0 0
        %3206 = vmatpush2.bf16.msra.mxu0 0
        %3207 = vmatprep.subr.bf16.mxu0 0
        %3208 = vmatpush2.bf16.msra.mxu0 0
        %3209 = vmatprep.subr.bf16.mxu0 0
        %3210 = vmatpush2.bf16.msra.mxu0 0
        %3211 = vmatprep.subr.bf16.mxu0 0
        %3212 = vmatpush2.bf16.msra.mxu0 0
        %3213 = vmatprep.subr.bf16.mxu0 0
        %3214 = vmatpush2.bf16.msra.mxu0 0
        %3215 = vmatprep.subr.bf16.mxu0 0
        %3216 = vmatpush2.bf16.msra.mxu0 0
        %3217 = vmatprep.mubr.bf16.mxu0 0
        %3218 = vmatmul.mubr.bf16.gmra.mxu0 %v3174
        %v3219 = vpop.f32.mrf.mxu0
        %v3220 = vadd.f32 0.0, %v3219
        %v3221 = vpop.f32.mrf.mxu0
        %v3222 = vadd.f32 0.0, %v3221
        %v3223 = vpop.f32.mrf.mxu0
        %v3224 = vpop.f32.mrf.mxu0
        %3225 = vdwg.mxu0
        %3226 = vmatprep.subr.bf16.mxu0 0
        %3227 = vmatpush1.bf16.msra.mxu0 0
        %3228 = vmatprep.subr.bf16.mxu0 0
        %3229 = vmatpush1.bf16.msra.mxu0 0
        %3230 = vmatprep.subr.bf16.mxu0 0
        %3231 = vmatpush1.bf16.msra.mxu0 0
        %3232 = vmatprep.subr.bf16.mxu0 0
        %3233 = vmatpush1.bf16.msra.mxu0 0
        %3234 = vmatprep.subr.bf16.mxu0 0
        %3235 = vmatpush1.bf16.msra.mxu0 0
        %3236 = vmatprep.subr.bf16.mxu0 0
        %3237 = vmatpush1.bf16.msra.mxu0 0
        %3238 = vmatprep.subr.bf16.mxu0 0
        %3239 = vmatpush1.bf16.msra.mxu0 0
        %3240 = vmatprep.subr.bf16.mxu0 0
        %3241 = vmatpush1.bf16.msra.mxu0 %v3183
        %3242 = vmatprep.subr.bf16.mxu0 0
        %3243 = vmatpush2.bf16.msra.mxu0 0
        %3244 = vmatprep.subr.bf16.mxu0 0
        %3245 = vmatpush2.bf16.msra.mxu0 0
        %3246 = vmatprep.subr.bf16.mxu0 0
        %3247 = vmatpush2.bf16.msra.mxu0 0
        %3248 = vmatprep.subr.bf16.mxu0 0
        %3249 = vmatpush2.bf16.msra.mxu0 0
        %3250 = vmatprep.subr.bf16.mxu0 0
        %3251 = vmatpush2.bf16.msra.mxu0 0
        %3252 = vmatprep.subr.bf16.mxu0 0
        %3253 = vmatpush2.bf16.msra.mxu0 0
        %3254 = vmatprep.subr.bf16.mxu0 0
        %3255 = vmatpush2.bf16.msra.mxu0 0
        %3256 = vmatprep.subr.bf16.mxu0 0
        %3257 = vmatpush2.bf16.msra.mxu0 0
        %3258 = vmatprep.mubr.bf16.mxu0 0
        %3259 = vmatmul.mubr.bf16.gmra.mxu0 %v3174
        %v3260 = vpop.f32.mrf.mxu0
        %v3261 = vadd.f32 0.0, %v3260
        %v3262 = vpop.f32.mrf.mxu0
        %v3263 = vpop.f32.mrf.mxu0
        %v3264 = vpop.f32.mrf.mxu0
        %3265 = vdwg.mxu0
        %v3266 = vadd.f32 %v3160, %v3220
        %v3267 = vadd.f32 %v3161, %v3222
        %v3268 = vadd.f32 %v3162, %v3261
        %s3269 = scalar_lea.vmem %s2, 26
        %v3270 = vld [vmem:[%s3269] sm:$0x3]
        %3271 = vrot.lane.b32.xlu0 %v2413, 109
        %v3272 = vpop.permute.xlu0 %3271
        %3273 = vrot.lane.b32.xlu0 %v2421, 109
        %v3274 = vpop.permute.xlu0 %3273
        %3275 = vrot.lane.b32.xlu0 %v2420, 109
        %v3276 = vpop.permute.xlu0 %3275
        %v3277 = vsel %vm1338, %v3272, %v3274
        %v3278 = vsel %vm1338, %v3274, %v3276
        %v3280 = vsel %vm487, %v3270, 0
        %v3283 = vsel %vm440, %v3277, 0
        %v3286 = vsel %vm440, %v3278, 0
        %v3289 = vsel %vm440, %v3276, 0
        %3291 = vmatprep.subr.bf16.mxu0 0
        %3292 = vmatpush1.bf16.msra.mxu0 0
        %3293 = vmatprep.subr.bf16.mxu0 0
        %3294 = vmatpush1.bf16.msra.mxu0 0
        %3295 = vmatprep.subr.bf16.mxu0 0
        %3296 = vmatpush1.bf16.msra.mxu0 0
        %3297 = vmatprep.subr.bf16.mxu0 0
        %3298 = vmatpush1.bf16.msra.mxu0 0
        %3299 = vmatprep.subr.bf16.mxu0 0
        %3300 = vmatpush1.bf16.msra.mxu0 0
        %3301 = vmatprep.subr.bf16.mxu0 0
        %3302 = vmatpush1.bf16.msra.mxu0 0
        %3303 = vmatprep.subr.bf16.mxu0 0
        %3304 = vmatpush1.bf16.msra.mxu0 0
        %3305 = vmatprep.subr.bf16.mxu0 %v3286
        %3306 = vmatpush1.bf16.msra.mxu0 %v3283
        %3307 = vmatprep.subr.bf16.mxu0 0
        %3308 = vmatpush2.bf16.msra.mxu0 0
        %3309 = vmatprep.subr.bf16.mxu0 0
        %3310 = vmatpush2.bf16.msra.mxu0 0
        %3311 = vmatprep.subr.bf16.mxu0 0
        %3312 = vmatpush2.bf16.msra.mxu0 0
        %3313 = vmatprep.subr.bf16.mxu0 0
        %3314 = vmatpush2.bf16.msra.mxu0 0
        %3315 = vmatprep.subr.bf16.mxu0 0
        %3316 = vmatpush2.bf16.msra.mxu0 0
        %3317 = vmatprep.subr.bf16.mxu0 0
        %3318 = vmatpush2.bf16.msra.mxu0 0
        %3319 = vmatprep.subr.bf16.mxu0 0
        %3320 = vmatpush2.bf16.msra.mxu0 0
        %3321 = vmatprep.subr.bf16.mxu0 0
        %3322 = vmatpush2.bf16.msra.mxu0 0
        %3323 = vmatprep.mubr.bf16.mxu0 0
        %3324 = vmatmul.mubr.bf16.gmra.mxu0 %v3280
        %v3325 = vpop.f32.mrf.mxu0
        %v3326 = vadd.f32 0.0, %v3325
        %v3327 = vpop.f32.mrf.mxu0
        %v3328 = vadd.f32 0.0, %v3327
        %v3329 = vpop.f32.mrf.mxu0
        %v3330 = vpop.f32.mrf.mxu0
        %3331 = vdwg.mxu0
        %3332 = vmatprep.subr.bf16.mxu0 0
        %3333 = vmatpush1.bf16.msra.mxu0 0
        %3334 = vmatprep.subr.bf16.mxu0 0
        %3335 = vmatpush1.bf16.msra.mxu0 0
        %3336 = vmatprep.subr.bf16.mxu0 0
        %3337 = vmatpush1.bf16.msra.mxu0 0
        %3338 = vmatprep.subr.bf16.mxu0 0
        %3339 = vmatpush1.bf16.msra.mxu0 0
        %3340 = vmatprep.subr.bf16.mxu0 0
        %3341 = vmatpush1.bf16.msra.mxu0 0
        %3342 = vmatprep.subr.bf16.mxu0 0
        %3343 = vmatpush1.bf16.msra.mxu0 0
        %3344 = vmatprep.subr.bf16.mxu0 0
        %3345 = vmatpush1.bf16.msra.mxu0 0
        %3346 = vmatprep.subr.bf16.mxu0 0
        %3347 = vmatpush1.bf16.msra.mxu0 %v3289
        %3348 = vmatprep.subr.bf16.mxu0 0
        %3349 = vmatpush2.bf16.msra.mxu0 0
        %3350 = vmatprep.subr.bf16.mxu0 0
        %3351 = vmatpush2.bf16.msra.mxu0 0
        %3352 = vmatprep.subr.bf16.mxu0 0
        %3353 = vmatpush2.bf16.msra.mxu0 0
        %3354 = vmatprep.subr.bf16.mxu0 0
        %3355 = vmatpush2.bf16.msra.mxu0 0
        %3356 = vmatprep.subr.bf16.mxu0 0
        %3357 = vmatpush2.bf16.msra.mxu0 0
        %3358 = vmatprep.subr.bf16.mxu0 0
        %3359 = vmatpush2.bf16.msra.mxu0 0
        %3360 = vmatprep.subr.bf16.mxu0 0
        %3361 = vmatpush2.bf16.msra.mxu0 0
        %3362 = vmatprep.subr.bf16.mxu0 0
        %3363 = vmatpush2.bf16.msra.mxu0 0
        %3364 = vmatprep.mubr.bf16.mxu0 0
        %3365 = vmatmul.mubr.bf16.gmra.mxu0 %v3280
        %v3366 = vpop.f32.mrf.mxu0
        %v3367 = vadd.f32 0.0, %v3366
        %v3368 = vpop.f32.mrf.mxu0
        %v3369 = vpop.f32.mrf.mxu0
        %v3370 = vpop.f32.mrf.mxu0
        %3371 = vdwg.mxu0
        %v3372 = vadd.f32 %v3266, %v3326
        %v3373 = vadd.f32 %v3267, %v3328
        %v3374 = vadd.f32 %v3268, %v3367
        %s3375 = scalar_lea.vmem %s3, 26
        %v3376 = vld [vmem:[%s3375] sm:$0x3]
        %3377 = vrot.lane.b32.xlu0 %v2528, 109
        %v3378 = vpop.permute.xlu0 %3377
        %3379 = vrot.lane.b32.xlu0 %v2536, 109
        %v3380 = vpop.permute.xlu0 %3379
        %3381 = vrot.lane.b32.xlu0 %v2535, 109
        %v3382 = vpop.permute.xlu0 %3381
        %v3383 = vsel %vm1338, %v3378, %v3380
        %v3384 = vsel %vm1338, %v3380, %v3382
        %v3386 = vsel %vm487, %v3376, 0
        %v3389 = vsel %vm440, %v3383, 0
        %v3392 = vsel %vm440, %v3384, 0
        %v3395 = vsel %vm440, %v3382, 0
        %3397 = vmatprep.subr.bf16.mxu0 0
        %3398 = vmatpush1.bf16.msra.mxu0 0
        %3399 = vmatprep.subr.bf16.mxu0 0
        %3400 = vmatpush1.bf16.msra.mxu0 0
        %3401 = vmatprep.subr.bf16.mxu0 0
        %3402 = vmatpush1.bf16.msra.mxu0 0
        %3403 = vmatprep.subr.bf16.mxu0 0
        %3404 = vmatpush1.bf16.msra.mxu0 0
        %3405 = vmatprep.subr.bf16.mxu0 0
        %3406 = vmatpush1.bf16.msra.mxu0 0
        %3407 = vmatprep.subr.bf16.mxu0 0
        %3408 = vmatpush1.bf16.msra.mxu0 0
        %3409 = vmatprep.subr.bf16.mxu0 0
        %3410 = vmatpush1.bf16.msra.mxu0 0
        %3411 = vmatprep.subr.bf16.mxu0 %v3392
        %3412 = vmatpush1.bf16.msra.mxu0 %v3389
        %3413 = vmatprep.subr.bf16.mxu0 0
        %3414 = vmatpush2.bf16.msra.mxu0 0
        %3415 = vmatprep.subr.bf16.mxu0 0
        %3416 = vmatpush2.bf16.msra.mxu0 0
        %3417 = vmatprep.subr.bf16.mxu0 0
        %3418 = vmatpush2.bf16.msra.mxu0 0
        %3419 = vmatprep.subr.bf16.mxu0 0
        %3420 = vmatpush2.bf16.msra.mxu0 0
        %3421 = vmatprep.subr.bf16.mxu0 0
        %3422 = vmatpush2.bf16.msra.mxu0 0
        %3423 = vmatprep.subr.bf16.mxu0 0
        %3424 = vmatpush2.bf16.msra.mxu0 0
        %3425 = vmatprep.subr.bf16.mxu0 0
        %3426 = vmatpush2.bf16.msra.mxu0 0
        %3427 = vmatprep.subr.bf16.mxu0 0
        %3428 = vmatpush2.bf16.msra.mxu0 0
        %3429 = vmatprep.mubr.bf16.mxu0 0
        %3430 = vmatmul.mubr.bf16.gmra.mxu0 %v3386
        %v3431 = vpop.f32.mrf.mxu0
        %v3432 = vadd.f32 0.0, %v3431
        %v3433 = vpop.f32.mrf.mxu0
        %v3434 = vadd.f32 0.0, %v3433
        %v3435 = vpop.f32.mrf.mxu0
        %v3436 = vpop.f32.mrf.mxu0
        %3437 = vdwg.mxu0
        %3438 = vmatprep.subr.bf16.mxu0 0
        %3439 = vmatpush1.bf16.msra.mxu0 0
        %3440 = vmatprep.subr.bf16.mxu0 0
        %3441 = vmatpush1.bf16.msra.mxu0 0
        %3442 = vmatprep.subr.bf16.mxu0 0
        %3443 = vmatpush1.bf16.msra.mxu0 0
        %3444 = vmatprep.subr.bf16.mxu0 0
        %3445 = vmatpush1.bf16.msra.mxu0 0
        %3446 = vmatprep.subr.bf16.mxu0 0
        %3447 = vmatpush1.bf16.msra.mxu0 0
        %3448 = vmatprep.subr.bf16.mxu0 0
        %3449 = vmatpush1.bf16.msra.mxu0 0
        %3450 = vmatprep.subr.bf16.mxu0 0
        %3451 = vmatpush1.bf16.msra.mxu0 0
        %3452 = vmatprep.subr.bf16.mxu0 0
        %3453 = vmatpush1.bf16.msra.mxu0 %v3395
        %3454 = vmatprep.subr.bf16.mxu0 0
        %3455 = vmatpush2.bf16.msra.mxu0 0
        %3456 = vmatprep.subr.bf16.mxu0 0
        %3457 = vmatpush2.bf16.msra.mxu0 0
        %3458 = vmatprep.subr.bf16.mxu0 0
        %3459 = vmatpush2.bf16.msra.mxu0 0
        %3460 = vmatprep.subr.bf16.mxu0 0
        %3461 = vmatpush2.bf16.msra.mxu0 0
        %3462 = vmatprep.subr.bf16.mxu0 0
        %3463 = vmatpush2.bf16.msra.mxu0 0
        %3464 = vmatprep.subr.bf16.mxu0 0
        %3465 = vmatpush2.bf16.msra.mxu0 0
        %3466 = vmatprep.subr.bf16.mxu0 0
        %3467 = vmatpush2.bf16.msra.mxu0 0
        %3468 = vmatprep.subr.bf16.mxu0 0
        %3469 = vmatpush2.bf16.msra.mxu0 0
        %3470 = vmatprep.mubr.bf16.mxu0 0
        %3471 = vmatmul.mubr.bf16.gmra.mxu0 %v3386
        %v3472 = vpop.f32.mrf.mxu0
        %v3473 = vadd.f32 0.0, %v3472
        %v3474 = vpop.f32.mrf.mxu0
        %v3475 = vpop.f32.mrf.mxu0
        %v3476 = vpop.f32.mrf.mxu0
        %3477 = vdwg.mxu0
        %v3478 = vadd.f32 %v3372, %v3432
        %v3479 = vadd.f32 %v3373, %v3434
        %v3480 = vadd.f32 %v3374, %v3473
        %s3481 = scalar_lea.vmem %s2, 28
        %v3482 = vld [vmem:[%s3481] sm:$0x3]
        %3483 = vrot.lane.b32.xlu0 %v2413, 108
        %v3484 = vpop.permute.xlu0 %3483
        %3485 = vrot.lane.b32.xlu0 %v2421, 108
        %v3486 = vpop.permute.xlu0 %3485
        %3487 = vrot.lane.b32.xlu0 %v2420, 108
        %v3488 = vpop.permute.xlu0 %3487
        %v3489 = vsel %vm1551, %v3484, %v3486
        %v3490 = vsel %vm1551, %v3486, %v3488
        %v3492 = vsel %vm487, %v3482, 0
        %v3495 = vsel %vm440, %v3489, 0
        %v3498 = vsel %vm440, %v3490, 0
        %v3501 = vsel %vm440, %v3488, 0
        %3503 = vmatprep.subr.bf16.mxu0 0
        %3504 = vmatpush1.bf16.msra.mxu0 0
        %3505 = vmatprep.subr.bf16.mxu0 0
        %3506 = vmatpush1.bf16.msra.mxu0 0
        %3507 = vmatprep.subr.bf16.mxu0 0
        %3508 = vmatpush1.bf16.msra.mxu0 0
        %3509 = vmatprep.subr.bf16.mxu0 0
        %3510 = vmatpush1.bf16.msra.mxu0 0
        %3511 = vmatprep.subr.bf16.mxu0 0
        %3512 = vmatpush1.bf16.msra.mxu0 0
        %3513 = vmatprep.subr.bf16.mxu0 0
        %3514 = vmatpush1.bf16.msra.mxu0 0
        %3515 = vmatprep.subr.bf16.mxu0 0
        %3516 = vmatpush1.bf16.msra.mxu0 0
        %3517 = vmatprep.subr.bf16.mxu0 %v3498
        %3518 = vmatpush1.bf16.msra.mxu0 %v3495
        %3519 = vmatprep.subr.bf16.mxu0 0
        %3520 = vmatpush2.bf16.msra.mxu0 0
        %3521 = vmatprep.subr.bf16.mxu0 0
        %3522 = vmatpush2.bf16.msra.mxu0 0
        %3523 = vmatprep.subr.bf16.mxu0 0
        %3524 = vmatpush2.bf16.msra.mxu0 0
        %3525 = vmatprep.subr.bf16.mxu0 0
        %3526 = vmatpush2.bf16.msra.mxu0 0
        %3527 = vmatprep.subr.bf16.mxu0 0
        %3528 = vmatpush2.bf16.msra.mxu0 0
        %3529 = vmatprep.subr.bf16.mxu0 0
        %3530 = vmatpush2.bf16.msra.mxu0 0
        %3531 = vmatprep.subr.bf16.mxu0 0
        %3532 = vmatpush2.bf16.msra.mxu0 0
        %3533 = vmatprep.subr.bf16.mxu0 0
        %3534 = vmatpush2.bf16.msra.mxu0 0
        %3535 = vmatprep.mubr.bf16.mxu0 0
        %3536 = vmatmul.mubr.bf16.gmra.mxu0 %v3492
        %v3537 = vpop.f32.mrf.mxu0
        %v3538 = vadd.f32 0.0, %v3537
        %v3539 = vpop.f32.mrf.mxu0
        %v3540 = vadd.f32 0.0, %v3539
        %v3541 = vpop.f32.mrf.mxu0
        %v3542 = vpop.f32.mrf.mxu0
        %3543 = vdwg.mxu0
        %3544 = vmatprep.subr.bf16.mxu0 0
        %3545 = vmatpush1.bf16.msra.mxu0 0
        %3546 = vmatprep.subr.bf16.mxu0 0
        %3547 = vmatpush1.bf16.msra.mxu0 0
        %3548 = vmatprep.subr.bf16.mxu0 0
        %3549 = vmatpush1.bf16.msra.mxu0 0
        %3550 = vmatprep.subr.bf16.mxu0 0
        %3551 = vmatpush1.bf16.msra.mxu0 0
        %3552 = vmatprep.subr.bf16.mxu0 0
        %3553 = vmatpush1.bf16.msra.mxu0 0
        %3554 = vmatprep.subr.bf16.mxu0 0
        %3555 = vmatpush1.bf16.msra.mxu0 0
        %3556 = vmatprep.subr.bf16.mxu0 0
        %3557 = vmatpush1.bf16.msra.mxu0 0
        %3558 = vmatprep.subr.bf16.mxu0 0
        %3559 = vmatpush1.bf16.msra.mxu0 %v3501
        %3560 = vmatprep.subr.bf16.mxu0 0
        %3561 = vmatpush2.bf16.msra.mxu0 0
        %3562 = vmatprep.subr.bf16.mxu0 0
        %3563 = vmatpush2.bf16.msra.mxu0 0
        %3564 = vmatprep.subr.bf16.mxu0 0
        %3565 = vmatpush2.bf16.msra.mxu0 0
        %3566 = vmatprep.subr.bf16.mxu0 0
        %3567 = vmatpush2.bf16.msra.mxu0 0
        %3568 = vmatprep.subr.bf16.mxu0 0
        %3569 = vmatpush2.bf16.msra.mxu0 0
        %3570 = vmatprep.subr.bf16.mxu0 0
        %3571 = vmatpush2.bf16.msra.mxu0 0
        %3572 = vmatprep.subr.bf16.mxu0 0
        %3573 = vmatpush2.bf16.msra.mxu0 0
        %3574 = vmatprep.subr.bf16.mxu0 0
        %3575 = vmatpush2.bf16.msra.mxu0 0
        %3576 = vmatprep.mubr.bf16.mxu0 0
        %3577 = vmatmul.mubr.bf16.gmra.mxu0 %v3492
        %v3578 = vpop.f32.mrf.mxu0
        %v3579 = vadd.f32 0.0, %v3578
        %v3580 = vpop.f32.mrf.mxu0
        %v3581 = vpop.f32.mrf.mxu0
        %v3582 = vpop.f32.mrf.mxu0
        %3583 = vdwg.mxu0
        %v3584 = vadd.f32 %v3478, %v3538
        %v3585 = vadd.f32 %v3479, %v3540
        %v3586 = vadd.f32 %v3480, %v3579
        %s3587 = scalar_lea.vmem %s3, 28
        %v3588 = vld [vmem:[%s3587] sm:$0x3]
        %3589 = vrot.lane.b32.xlu0 %v2528, 108
        %v3590 = vpop.permute.xlu0 %3589
        %3591 = vrot.lane.b32.xlu0 %v2536, 108
        %v3592 = vpop.permute.xlu0 %3591
        %3593 = vrot.lane.b32.xlu0 %v2535, 108
        %v3594 = vpop.permute.xlu0 %3593
        %v3595 = vsel %vm1551, %v3590, %v3592
        %v3596 = vsel %vm1551, %v3592, %v3594
        %v3598 = vsel %vm487, %v3588, 0
        %v3601 = vsel %vm440, %v3595, 0
        %v3604 = vsel %vm440, %v3596, 0
        %v3607 = vsel %vm440, %v3594, 0
        %3609 = vmatprep.subr.bf16.mxu0 0
        %3610 = vmatpush1.bf16.msra.mxu0 0
        %3611 = vmatprep.subr.bf16.mxu0 0
        %3612 = vmatpush1.bf16.msra.mxu0 0
        %3613 = vmatprep.subr.bf16.mxu0 0
        %3614 = vmatpush1.bf16.msra.mxu0 0
        %3615 = vmatprep.subr.bf16.mxu0 0
        %3616 = vmatpush1.bf16.msra.mxu0 0
        %3617 = vmatprep.subr.bf16.mxu0 0
        %3618 = vmatpush1.bf16.msra.mxu0 0
        %3619 = vmatprep.subr.bf16.mxu0 0
        %3620 = vmatpush1.bf16.msra.mxu0 0
        %3621 = vmatprep.subr.bf16.mxu0 0
        %3622 = vmatpush1.bf16.msra.mxu0 0
        %3623 = vmatprep.subr.bf16.mxu0 %v3604
        %3624 = vmatpush1.bf16.msra.mxu0 %v3601
        %3625 = vmatprep.subr.bf16.mxu0 0
        %3626 = vmatpush2.bf16.msra.mxu0 0
        %3627 = vmatprep.subr.bf16.mxu0 0
        %3628 = vmatpush2.bf16.msra.mxu0 0
        %3629 = vmatprep.subr.bf16.mxu0 0
        %3630 = vmatpush2.bf16.msra.mxu0 0
        %3631 = vmatprep.subr.bf16.mxu0 0
        %3632 = vmatpush2.bf16.msra.mxu0 0
        %3633 = vmatprep.subr.bf16.mxu0 0
        %3634 = vmatpush2.bf16.msra.mxu0 0
        %3635 = vmatprep.subr.bf16.mxu0 0
        %3636 = vmatpush2.bf16.msra.mxu0 0
        %3637 = vmatprep.subr.bf16.mxu0 0
        %3638 = vmatpush2.bf16.msra.mxu0 0
        %3639 = vmatprep.subr.bf16.mxu0 0
        %3640 = vmatpush2.bf16.msra.mxu0 0
        %3641 = vmatprep.mubr.bf16.mxu0 0
        %3642 = vmatmul.mubr.bf16.gmra.mxu0 %v3598
        %v3643 = vpop.f32.mrf.mxu0
        %v3644 = vadd.f32 0.0, %v3643
        %v3645 = vpop.f32.mrf.mxu0
        %v3646 = vadd.f32 0.0, %v3645
        %v3647 = vpop.f32.mrf.mxu0
        %v3648 = vpop.f32.mrf.mxu0
        %3649 = vdwg.mxu0
        %3650 = vmatprep.subr.bf16.mxu0 0
        %3651 = vmatpush1.bf16.msra.mxu0 0
        %3652 = vmatprep.subr.bf16.mxu0 0
        %3653 = vmatpush1.bf16.msra.mxu0 0
        %3654 = vmatprep.subr.bf16.mxu0 0
        %3655 = vmatpush1.bf16.msra.mxu0 0
        %3656 = vmatprep.subr.bf16.mxu0 0
        %3657 = vmatpush1.bf16.msra.mxu0 0
        %3658 = vmatprep.subr.bf16.mxu0 0
        %3659 = vmatpush1.bf16.msra.mxu0 0
        %3660 = vmatprep.subr.bf16.mxu0 0
        %3661 = vmatpush1.bf16.msra.mxu0 0
        %3662 = vmatprep.subr.bf16.mxu0 0
        %3663 = vmatpush1.bf16.msra.mxu0 0
        %3664 = vmatprep.subr.bf16.mxu0 0
        %3665 = vmatpush1.bf16.msra.mxu0 %v3607
        %3666 = vmatprep.subr.bf16.mxu0 0
        %3667 = vmatpush2.bf16.msra.mxu0 0
        %3668 = vmatprep.subr.bf16.mxu0 0
        %3669 = vmatpush2.bf16.msra.mxu0 0
        %3670 = vmatprep.subr.bf16.mxu0 0
        %3671 = vmatpush2.bf16.msra.mxu0 0
        %3672 = vmatprep.subr.bf16.mxu0 0
        %3673 = vmatpush2.bf16.msra.mxu0 0
        %3674 = vmatprep.subr.bf16.mxu0 0
        %3675 = vmatpush2.bf16.msra.mxu0 0
        %3676 = vmatprep.subr.bf16.mxu0 0
        %3677 = vmatpush2.bf16.msra.mxu0 0
        %3678 = vmatprep.subr.bf16.mxu0 0
        %3679 = vmatpush2.bf16.msra.mxu0 0
        %3680 = vmatprep.subr.bf16.mxu0 0
        %3681 = vmatpush2.bf16.msra.mxu0 0
        %3682 = vmatprep.mubr.bf16.mxu0 0
        %3683 = vmatmul.mubr.bf16.gmra.mxu0 %v3598
        %v3684 = vpop.f32.mrf.mxu0
        %v3685 = vadd.f32 0.0, %v3684
        %v3686 = vpop.f32.mrf.mxu0
        %v3687 = vpop.f32.mrf.mxu0
        %v3688 = vpop.f32.mrf.mxu0
        %3689 = vdwg.mxu0
        %v3690 = vadd.f32 %v3584, %v3644
        %v3691 = vadd.f32 %v3585, %v3646
        %v3692 = vadd.f32 %v3586, %v3685
        %s3693 = scalar_lea.vmem %s2, 30
        %v3694 = vld [vmem:[%s3693] sm:$0x3]
        %3695 = vrot.lane.b32.xlu0 %v2413, 92
        %v3696 = vpop.permute.xlu0 %3695
        %3697 = vrot.lane.b32.xlu0 %v2421, 92
        %v3698 = vpop.permute.xlu0 %3697
        %3699 = vrot.lane.b32.xlu0 %v2420, 92
        %v3700 = vpop.permute.xlu0 %3699
        %v3701 = vsel %vm1764, %v3696, %v3698
        %v3702 = vsel %vm1764, %v3698, %v3700
        %v3704 = vsel %vm487, %v3694, 0
        %v3707 = vsel %vm440, %v3701, 0
        %v3710 = vsel %vm440, %v3702, 0
        %v3713 = vsel %vm440, %v3700, 0
        %3715 = vmatprep.subr.bf16.mxu0 0
        %3716 = vmatpush1.bf16.msra.mxu0 0
        %3717 = vmatprep.subr.bf16.mxu0 0
        %3718 = vmatpush1.bf16.msra.mxu0 0
        %3719 = vmatprep.subr.bf16.mxu0 0
        %3720 = vmatpush1.bf16.msra.mxu0 0
        %3721 = vmatprep.subr.bf16.mxu0 0
        %3722 = vmatpush1.bf16.msra.mxu0 0
        %3723 = vmatprep.subr.bf16.mxu0 0
        %3724 = vmatpush1.bf16.msra.mxu0 0
        %3725 = vmatprep.subr.bf16.mxu0 0
        %3726 = vmatpush1.bf16.msra.mxu0 0
        %3727 = vmatprep.subr.bf16.mxu0 0
        %3728 = vmatpush1.bf16.msra.mxu0 0
        %3729 = vmatprep.subr.bf16.mxu0 %v3710
        %3730 = vmatpush1.bf16.msra.mxu0 %v3707
        %3731 = vmatprep.subr.bf16.mxu0 0
        %3732 = vmatpush2.bf16.msra.mxu0 0
        %3733 = vmatprep.subr.bf16.mxu0 0
        %3734 = vmatpush2.bf16.msra.mxu0 0
        %3735 = vmatprep.subr.bf16.mxu0 0
        %3736 = vmatpush2.bf16.msra.mxu0 0
        %3737 = vmatprep.subr.bf16.mxu0 0
        %3738 = vmatpush2.bf16.msra.mxu0 0
        %3739 = vmatprep.subr.bf16.mxu0 0
        %3740 = vmatpush2.bf16.msra.mxu0 0
        %3741 = vmatprep.subr.bf16.mxu0 0
        %3742 = vmatpush2.bf16.msra.mxu0 0
        %3743 = vmatprep.subr.bf16.mxu0 0
        %3744 = vmatpush2.bf16.msra.mxu0 0
        %3745 = vmatprep.subr.bf16.mxu0 0
        %3746 = vmatpush2.bf16.msra.mxu0 0
        %3747 = vmatprep.mubr.bf16.mxu0 0
        %3748 = vmatmul.mubr.bf16.gmra.mxu0 %v3704
        %v3749 = vpop.f32.mrf.mxu0
        %v3750 = vadd.f32 0.0, %v3749
        %v3751 = vpop.f32.mrf.mxu0
        %v3752 = vadd.f32 0.0, %v3751
        %v3753 = vpop.f32.mrf.mxu0
        %v3754 = vpop.f32.mrf.mxu0
        %3755 = vdwg.mxu0
        %3756 = vmatprep.subr.bf16.mxu0 0
        %3757 = vmatpush1.bf16.msra.mxu0 0
        %3758 = vmatprep.subr.bf16.mxu0 0
        %3759 = vmatpush1.bf16.msra.mxu0 0
        %3760 = vmatprep.subr.bf16.mxu0 0
        %3761 = vmatpush1.bf16.msra.mxu0 0
        %3762 = vmatprep.subr.bf16.mxu0 0
        %3763 = vmatpush1.bf16.msra.mxu0 0
        %3764 = vmatprep.subr.bf16.mxu0 0
        %3765 = vmatpush1.bf16.msra.mxu0 0
        %3766 = vmatprep.subr.bf16.mxu0 0
        %3767 = vmatpush1.bf16.msra.mxu0 0
        %3768 = vmatprep.subr.bf16.mxu0 0
        %3769 = vmatpush1.bf16.msra.mxu0 0
        %3770 = vmatprep.subr.bf16.mxu0 0
        %3771 = vmatpush1.bf16.msra.mxu0 %v3713
        %3772 = vmatprep.subr.bf16.mxu0 0
        %3773 = vmatpush2.bf16.msra.mxu0 0
        %3774 = vmatprep.subr.bf16.mxu0 0
        %3775 = vmatpush2.bf16.msra.mxu0 0
        %3776 = vmatprep.subr.bf16.mxu0 0
        %3777 = vmatpush2.bf16.msra.mxu0 0
        %3778 = vmatprep.subr.bf16.mxu0 0
        %3779 = vmatpush2.bf16.msra.mxu0 0
        %3780 = vmatprep.subr.bf16.mxu0 0
        %3781 = vmatpush2.bf16.msra.mxu0 0
        %3782 = vmatprep.subr.bf16.mxu0 0
        %3783 = vmatpush2.bf16.msra.mxu0 0
        %3784 = vmatprep.subr.bf16.mxu0 0
        %3785 = vmatpush2.bf16.msra.mxu0 0
        %3786 = vmatprep.subr.bf16.mxu0 0
        %3787 = vmatpush2.bf16.msra.mxu0 0
        %3788 = vmatprep.mubr.bf16.mxu0 0
        %3789 = vmatmul.mubr.bf16.gmra.mxu0 %v3704
        %v3790 = vpop.f32.mrf.mxu0
        %v3791 = vadd.f32 0.0, %v3790
        %v3792 = vpop.f32.mrf.mxu0
        %v3793 = vpop.f32.mrf.mxu0
        %v3794 = vpop.f32.mrf.mxu0
        %3795 = vdwg.mxu0
        %v3796 = vadd.f32 %v3690, %v3750
        %v3797 = vadd.f32 %v3691, %v3752
        %v3798 = vadd.f32 %v3692, %v3791
        %s3799 = scalar_lea.vmem %s3, 30
        %v3800 = vld [vmem:[%s3799] sm:$0x3]
        %3801 = vrot.lane.b32.xlu0 %v2528, 92
        %v3802 = vpop.permute.xlu0 %3801
        %3803 = vrot.lane.b32.xlu0 %v2536, 92
        %v3804 = vpop.permute.xlu0 %3803
        %3805 = vrot.lane.b32.xlu0 %v2535, 92
        %v3806 = vpop.permute.xlu0 %3805
        %v3807 = vsel %vm1764, %v3802, %v3804
        %v3808 = vsel %vm1764, %v3804, %v3806
        %v3810 = vsel %vm487, %v3800, 0
        %v3813 = vsel %vm440, %v3807, 0
        %v3816 = vsel %vm440, %v3808, 0
        %v3819 = vsel %vm440, %v3806, 0
        %3821 = vmatprep.subr.bf16.mxu0 0
        %3822 = vmatpush1.bf16.msra.mxu0 0
        %3823 = vmatprep.subr.bf16.mxu0 0
        %3824 = vmatpush1.bf16.msra.mxu0 0
        %3825 = vmatprep.subr.bf16.mxu0 0
        %3826 = vmatpush1.bf16.msra.mxu0 0
        %3827 = vmatprep.subr.bf16.mxu0 0
        %3828 = vmatpush1.bf16.msra.mxu0 0
        %3829 = vmatprep.subr.bf16.mxu0 0
        %3830 = vmatpush1.bf16.msra.mxu0 0
        %3831 = vmatprep.subr.bf16.mxu0 0
        %3832 = vmatpush1.bf16.msra.mxu0 0
        %3833 = vmatprep.subr.bf16.mxu0 0
        %3834 = vmatpush1.bf16.msra.mxu0 0
        %3835 = vmatprep.subr.bf16.mxu0 %v3816
        %3836 = vmatpush1.bf16.msra.mxu0 %v3813
        %3837 = vmatprep.subr.bf16.mxu0 0
        %3838 = vmatpush2.bf16.msra.mxu0 0
        %3839 = vmatprep.subr.bf16.mxu0 0
        %3840 = vmatpush2.bf16.msra.mxu0 0
        %3841 = vmatprep.subr.bf16.mxu0 0
        %3842 = vmatpush2.bf16.msra.mxu0 0
        %3843 = vmatprep.subr.bf16.mxu0 0
        %3844 = vmatpush2.bf16.msra.mxu0 0
        %3845 = vmatprep.subr.bf16.mxu0 0
        %3846 = vmatpush2.bf16.msra.mxu0 0
        %3847 = vmatprep.subr.bf16.mxu0 0
        %3848 = vmatpush2.bf16.msra.mxu0 0
        %3849 = vmatprep.subr.bf16.mxu0 0
        %3850 = vmatpush2.bf16.msra.mxu0 0
        %3851 = vmatprep.subr.bf16.mxu0 0
        %3852 = vmatpush2.bf16.msra.mxu0 0
        %3853 = vmatprep.mubr.bf16.mxu0 0
        %3854 = vmatmul.mubr.bf16.gmra.mxu0 %v3810
        %v3855 = vpop.f32.mrf.mxu0
        %v3856 = vadd.f32 0.0, %v3855
        %v3857 = vpop.f32.mrf.mxu0
        %v3858 = vadd.f32 0.0, %v3857
        %v3859 = vpop.f32.mrf.mxu0
        %v3860 = vpop.f32.mrf.mxu0
        %3861 = vdwg.mxu0
        %3862 = vmatprep.subr.bf16.mxu0 0
        %3863 = vmatpush1.bf16.msra.mxu0 0
        %3864 = vmatprep.subr.bf16.mxu0 0
        %3865 = vmatpush1.bf16.msra.mxu0 0
        %3866 = vmatprep.subr.bf16.mxu0 0
        %3867 = vmatpush1.bf16.msra.mxu0 0
        %3868 = vmatprep.subr.bf16.mxu0 0
        %3869 = vmatpush1.bf16.msra.mxu0 0
        %3870 = vmatprep.subr.bf16.mxu0 0
        %3871 = vmatpush1.bf16.msra.mxu0 0
        %3872 = vmatprep.subr.bf16.mxu0 0
        %3873 = vmatpush1.bf16.msra.mxu0 0
        %3874 = vmatprep.subr.bf16.mxu0 0
        %3875 = vmatpush1.bf16.msra.mxu0 0
        %3876 = vmatprep.subr.bf16.mxu0 0
        %3877 = vmatpush1.bf16.msra.mxu0 %v3819
        %3878 = vmatprep.subr.bf16.mxu0 0
        %3879 = vmatpush2.bf16.msra.mxu0 0
        %3880 = vmatprep.subr.bf16.mxu0 0
        %3881 = vmatpush2.bf16.msra.mxu0 0
        %3882 = vmatprep.subr.bf16.mxu0 0
        %3883 = vmatpush2.bf16.msra.mxu0 0
        %3884 = vmatprep.subr.bf16.mxu0 0
        %3885 = vmatpush2.bf16.msra.mxu0 0
        %3886 = vmatprep.subr.bf16.mxu0 0
        %3887 = vmatpush2.bf16.msra.mxu0 0
        %3888 = vmatprep.subr.bf16.mxu0 0
        %3889 = vmatpush2.bf16.msra.mxu0 0
        %3890 = vmatprep.subr.bf16.mxu0 0
        %3891 = vmatpush2.bf16.msra.mxu0 0
        %3892 = vmatprep.subr.bf16.mxu0 0
        %3893 = vmatpush2.bf16.msra.mxu0 0
        %3894 = vmatprep.mubr.bf16.mxu0 0
        %3895 = vmatmul.mubr.bf16.gmra.mxu0 %v3810
        %v3896 = vpop.f32.mrf.mxu0
        %v3897 = vadd.f32 0.0, %v3896
        %v3898 = vpop.f32.mrf.mxu0
        %v3899 = vpop.f32.mrf.mxu0
        %v3900 = vpop.f32.mrf.mxu0
        %3901 = vdwg.mxu0
        %v3902 = vadd.f32 %v3796, %v3856
        %v3903 = vadd.f32 %v3797, %v3858
        %v3904 = vadd.f32 %v3798, %v3897
        %s3905 = scalar_lea.vmem %s2, 32
        %v3906 = vld [vmem:[%s3905] sm:$0x3]
        %3907 = vrot.lane.b32.xlu0 %v2413, 91
        %v3908 = vpop.permute.xlu0 %3907
        %3909 = vrot.lane.b32.xlu0 %v2421, 91
        %v3910 = vpop.permute.xlu0 %3909
        %3911 = vrot.lane.b32.xlu0 %v2420, 91
        %v3912 = vpop.permute.xlu0 %3911
        %v3913 = vsel %vm1977, %v3908, %v3910
        %v3914 = vsel %vm1977, %v3910, %v3912
        %v3916 = vsel %vm487, %v3906, 0
        %v3919 = vsel %vm440, %v3913, 0
        %v3922 = vsel %vm440, %v3914, 0
        %v3925 = vsel %vm440, %v3912, 0
        %3927 = vmatprep.subr.bf16.mxu0 0
        %3928 = vmatpush1.bf16.msra.mxu0 0
        %3929 = vmatprep.subr.bf16.mxu0 0
        %3930 = vmatpush1.bf16.msra.mxu0 0
        %3931 = vmatprep.subr.bf16.mxu0 0
        %3932 = vmatpush1.bf16.msra.mxu0 0
        %3933 = vmatprep.subr.bf16.mxu0 0
        %3934 = vmatpush1.bf16.msra.mxu0 0
        %3935 = vmatprep.subr.bf16.mxu0 0
        %3936 = vmatpush1.bf16.msra.mxu0 0
        %3937 = vmatprep.subr.bf16.mxu0 0
        %3938 = vmatpush1.bf16.msra.mxu0 0
        %3939 = vmatprep.subr.bf16.mxu0 0
        %3940 = vmatpush1.bf16.msra.mxu0 0
        %3941 = vmatprep.subr.bf16.mxu0 %v3922
        %3942 = vmatpush1.bf16.msra.mxu0 %v3919
        %3943 = vmatprep.subr.bf16.mxu0 0
        %3944 = vmatpush2.bf16.msra.mxu0 0
        %3945 = vmatprep.subr.bf16.mxu0 0
        %3946 = vmatpush2.bf16.msra.mxu0 0
        %3947 = vmatprep.subr.bf16.mxu0 0
        %3948 = vmatpush2.bf16.msra.mxu0 0
        %3949 = vmatprep.subr.bf16.mxu0 0
        %3950 = vmatpush2.bf16.msra.mxu0 0
        %3951 = vmatprep.subr.bf16.mxu0 0
        %3952 = vmatpush2.bf16.msra.mxu0 0
        %3953 = vmatprep.subr.bf16.mxu0 0
        %3954 = vmatpush2.bf16.msra.mxu0 0
        %3955 = vmatprep.subr.bf16.mxu0 0
        %3956 = vmatpush2.bf16.msra.mxu0 0
        %3957 = vmatprep.subr.bf16.mxu0 0
        %3958 = vmatpush2.bf16.msra.mxu0 0
        %3959 = vmatprep.mubr.bf16.mxu0 0
        %3960 = vmatmul.mubr.bf16.gmra.mxu0 %v3916
        %v3961 = vpop.f32.mrf.mxu0
        %v3962 = vadd.f32 0.0, %v3961
        %v3963 = vpop.f32.mrf.mxu0
        %v3964 = vadd.f32 0.0, %v3963
        %v3965 = vpop.f32.mrf.mxu0
        %v3966 = vpop.f32.mrf.mxu0
        %3967 = vdwg.mxu0
        %3968 = vmatprep.subr.bf16.mxu0 0
        %3969 = vmatpush1.bf16.msra.mxu0 0
        %3970 = vmatprep.subr.bf16.mxu0 0
        %3971 = vmatpush1.bf16.msra.mxu0 0
        %3972 = vmatprep.subr.bf16.mxu0 0
        %3973 = vmatpush1.bf16.msra.mxu0 0
        %3974 = vmatprep.subr.bf16.mxu0 0
        %3975 = vmatpush1.bf16.msra.mxu0 0
        %3976 = vmatprep.subr.bf16.mxu0 0
        %3977 = vmatpush1.bf16.msra.mxu0 0
        %3978 = vmatprep.subr.bf16.mxu0 0
        %3979 = vmatpush1.bf16.msra.mxu0 0
        %3980 = vmatprep.subr.bf16.mxu0 0
        %3981 = vmatpush1.bf16.msra.mxu0 0
        %3982 = vmatprep.subr.bf16.mxu0 0
        %3983 = vmatpush1.bf16.msra.mxu0 %v3925
        %3984 = vmatprep.subr.bf16.mxu0 0
        %3985 = vmatpush2.bf16.msra.mxu0 0
        %3986 = vmatprep.subr.bf16.mxu0 0
        %3987 = vmatpush2.bf16.msra.mxu0 0
        %3988 = vmatprep.subr.bf16.mxu0 0
        %3989 = vmatpush2.bf16.msra.mxu0 0
        %3990 = vmatprep.subr.bf16.mxu0 0
        %3991 = vmatpush2.bf16.msra.mxu0 0
        %3992 = vmatprep.subr.bf16.mxu0 0
        %3993 = vmatpush2.bf16.msra.mxu0 0
        %3994 = vmatprep.subr.bf16.mxu0 0
        %3995 = vmatpush2.bf16.msra.mxu0 0
        %3996 = vmatprep.subr.bf16.mxu0 0
        %3997 = vmatpush2.bf16.msra.mxu0 0
        %3998 = vmatprep.subr.bf16.mxu0 0
        %3999 = vmatpush2.bf16.msra.mxu0 0
        %4000 = vmatprep.mubr.bf16.mxu0 0
        %4001 = vmatmul.mubr.bf16.gmra.mxu0 %v3916
        %v4002 = vpop.f32.mrf.mxu0
        %v4003 = vadd.f32 0.0, %v4002
        %v4004 = vpop.f32.mrf.mxu0
        %v4005 = vpop.f32.mrf.mxu0
        %v4006 = vpop.f32.mrf.mxu0
        %4007 = vdwg.mxu0
        %v4008 = vadd.f32 %v3902, %v3962
        %v4009 = vadd.f32 %v3903, %v3964
        %v4010 = vadd.f32 %v3904, %v4003
        %s4011 = scalar_lea.vmem %s3, 32
        %v4012 = vld [vmem:[%s4011] sm:$0x3]
        %4013 = vrot.lane.b32.xlu0 %v2528, 91
        %v4014 = vpop.permute.xlu0 %4013
        %4015 = vrot.lane.b32.xlu0 %v2536, 91
        %v4016 = vpop.permute.xlu0 %4015
        %4017 = vrot.lane.b32.xlu0 %v2535, 91
        %v4018 = vpop.permute.xlu0 %4017
        %v4019 = vsel %vm1977, %v4014, %v4016
        %v4020 = vsel %vm1977, %v4016, %v4018
        %v4022 = vsel %vm487, %v4012, 0
        %v4025 = vsel %vm440, %v4019, 0
        %v4028 = vsel %vm440, %v4020, 0
        %v4031 = vsel %vm440, %v4018, 0
        %4033 = vmatprep.subr.bf16.mxu0 0
        %4034 = vmatpush1.bf16.msra.mxu0 0
        %4035 = vmatprep.subr.bf16.mxu0 0
        %4036 = vmatpush1.bf16.msra.mxu0 0
        %4037 = vmatprep.subr.bf16.mxu0 0
        %4038 = vmatpush1.bf16.msra.mxu0 0
        %4039 = vmatprep.subr.bf16.mxu0 0
        %4040 = vmatpush1.bf16.msra.mxu0 0
        %4041 = vmatprep.subr.bf16.mxu0 0
        %4042 = vmatpush1.bf16.msra.mxu0 0
        %4043 = vmatprep.subr.bf16.mxu0 0
        %4044 = vmatpush1.bf16.msra.mxu0 0
        %4045 = vmatprep.subr.bf16.mxu0 0
        %4046 = vmatpush1.bf16.msra.mxu0 0
        %4047 = vmatprep.subr.bf16.mxu0 %v4028
        %4048 = vmatpush1.bf16.msra.mxu0 %v4025
        %4049 = vmatprep.subr.bf16.mxu0 0
        %4050 = vmatpush2.bf16.msra.mxu0 0
        %4051 = vmatprep.subr.bf16.mxu0 0
        %4052 = vmatpush2.bf16.msra.mxu0 0
        %4053 = vmatprep.subr.bf16.mxu0 0
        %4054 = vmatpush2.bf16.msra.mxu0 0
        %4055 = vmatprep.subr.bf16.mxu0 0
        %4056 = vmatpush2.bf16.msra.mxu0 0
        %4057 = vmatprep.subr.bf16.mxu0 0
        %4058 = vmatpush2.bf16.msra.mxu0 0
        %4059 = vmatprep.subr.bf16.mxu0 0
        %4060 = vmatpush2.bf16.msra.mxu0 0
        %4061 = vmatprep.subr.bf16.mxu0 0
        %4062 = vmatpush2.bf16.msra.mxu0 0
        %4063 = vmatprep.subr.bf16.mxu0 0
        %4064 = vmatpush2.bf16.msra.mxu0 0
        %4065 = vmatprep.mubr.bf16.mxu0 0
        %4066 = vmatmul.mubr.bf16.gmra.mxu0 %v4022
        %v4067 = vpop.f32.mrf.mxu0
        %v4068 = vadd.f32 0.0, %v4067
        %v4069 = vpop.f32.mrf.mxu0
        %v4070 = vadd.f32 0.0, %v4069
        %v4071 = vpop.f32.mrf.mxu0
        %v4072 = vpop.f32.mrf.mxu0
        %4073 = vdwg.mxu0
        %4074 = vmatprep.subr.bf16.mxu0 0
        %4075 = vmatpush1.bf16.msra.mxu0 0
        %4076 = vmatprep.subr.bf16.mxu0 0
        %4077 = vmatpush1.bf16.msra.mxu0 0
        %4078 = vmatprep.subr.bf16.mxu0 0
        %4079 = vmatpush1.bf16.msra.mxu0 0
        %4080 = vmatprep.subr.bf16.mxu0 0
        %4081 = vmatpush1.bf16.msra.mxu0 0
        %4082 = vmatprep.subr.bf16.mxu0 0
        %4083 = vmatpush1.bf16.msra.mxu0 0
        %4084 = vmatprep.subr.bf16.mxu0 0
        %4085 = vmatpush1.bf16.msra.mxu0 0
        %4086 = vmatprep.subr.bf16.mxu0 0
        %4087 = vmatpush1.bf16.msra.mxu0 0
        %4088 = vmatprep.subr.bf16.mxu0 0
        %4089 = vmatpush1.bf16.msra.mxu0 %v4031
        %4090 = vmatprep.subr.bf16.mxu0 0
        %4091 = vmatpush2.bf16.msra.mxu0 0
        %4092 = vmatprep.subr.bf16.mxu0 0
        %4093 = vmatpush2.bf16.msra.mxu0 0
        %4094 = vmatprep.subr.bf16.mxu0 0
        %4095 = vmatpush2.bf16.msra.mxu0 0
        %4096 = vmatprep.subr.bf16.mxu0 0
        %4097 = vmatpush2.bf16.msra.mxu0 0
        %4098 = vmatprep.subr.bf16.mxu0 0
        %4099 = vmatpush2.bf16.msra.mxu0 0
        %4100 = vmatprep.subr.bf16.mxu0 0
        %4101 = vmatpush2.bf16.msra.mxu0 0
        %4102 = vmatprep.subr.bf16.mxu0 0
        %4103 = vmatpush2.bf16.msra.mxu0 0
        %4104 = vmatprep.subr.bf16.mxu0 0
        %4105 = vmatpush2.bf16.msra.mxu0 0
        %4106 = vmatprep.mubr.bf16.mxu0 0
        %4107 = vmatmul.mubr.bf16.gmra.mxu0 %v4022
        %v4108 = vpop.f32.mrf.mxu0
        %v4109 = vadd.f32 0.0, %v4108
        %v4110 = vpop.f32.mrf.mxu0
        %v4111 = vpop.f32.mrf.mxu0
        %v4112 = vpop.f32.mrf.mxu0
        %4113 = vdwg.mxu0
        %v4114 = vadd.f32 %v4008, %v4068
        %v4115 = vadd.f32 %v4009, %v4070
        %v4116 = vadd.f32 %v4010, %v4109
        %s4117 = scalar_lea.vmem %s2, 34
        %v4118 = vld [vmem:[%s4117] sm:$0x3]
        %4119 = vrot.lane.b32.xlu0 %v2413, 90
        %v4120 = vpop.permute.xlu0 %4119
        %4121 = vrot.lane.b32.xlu0 %v2421, 90
        %v4122 = vpop.permute.xlu0 %4121
        %4123 = vrot.lane.b32.xlu0 %v2420, 90
        %v4124 = vpop.permute.xlu0 %4123
        %v4125 = vsel %vm2190, %v4120, %v4122
        %v4126 = vsel %vm2190, %v4122, %v4124
        %v4128 = vsel %vm487, %v4118, 0
        %v4131 = vsel %vm440, %v4125, 0
        %v4134 = vsel %vm440, %v4126, 0
        %v4137 = vsel %vm440, %v4124, 0
        %4139 = vmatprep.subr.bf16.mxu0 0
        %4140 = vmatpush1.bf16.msra.mxu0 0
        %4141 = vmatprep.subr.bf16.mxu0 0
        %4142 = vmatpush1.bf16.msra.mxu0 0
        %4143 = vmatprep.subr.bf16.mxu0 0
        %4144 = vmatpush1.bf16.msra.mxu0 0
        %4145 = vmatprep.subr.bf16.mxu0 0
        %4146 = vmatpush1.bf16.msra.mxu0 0
        %4147 = vmatprep.subr.bf16.mxu0 0
        %4148 = vmatpush1.bf16.msra.mxu0 0
        %4149 = vmatprep.subr.bf16.mxu0 0
        %4150 = vmatpush1.bf16.msra.mxu0 0
        %4151 = vmatprep.subr.bf16.mxu0 0
        %4152 = vmatpush1.bf16.msra.mxu0 0
        %4153 = vmatprep.subr.bf16.mxu0 %v4134
        %4154 = vmatpush1.bf16.msra.mxu0 %v4131
        %4155 = vmatprep.subr.bf16.mxu0 0
        %4156 = vmatpush2.bf16.msra.mxu0 0
        %4157 = vmatprep.subr.bf16.mxu0 0
        %4158 = vmatpush2.bf16.msra.mxu0 0
        %4159 = vmatprep.subr.bf16.mxu0 0
        %4160 = vmatpush2.bf16.msra.mxu0 0
        %4161 = vmatprep.subr.bf16.mxu0 0
        %4162 = vmatpush2.bf16.msra.mxu0 0
        %4163 = vmatprep.subr.bf16.mxu0 0
        %4164 = vmatpush2.bf16.msra.mxu0 0
        %4165 = vmatprep.subr.bf16.mxu0 0
        %4166 = vmatpush2.bf16.msra.mxu0 0
        %4167 = vmatprep.subr.bf16.mxu0 0
        %4168 = vmatpush2.bf16.msra.mxu0 0
        %4169 = vmatprep.subr.bf16.mxu0 0
        %4170 = vmatpush2.bf16.msra.mxu0 0
        %4171 = vmatprep.mubr.bf16.mxu0 0
        %4172 = vmatmul.mubr.bf16.gmra.mxu0 %v4128
        %v4173 = vpop.f32.mrf.mxu0
        %v4174 = vadd.f32 0.0, %v4173
        %v4175 = vpop.f32.mrf.mxu0
        %v4176 = vadd.f32 0.0, %v4175
        %v4177 = vpop.f32.mrf.mxu0
        %v4178 = vpop.f32.mrf.mxu0
        %4179 = vdwg.mxu0
        %4180 = vmatprep.subr.bf16.mxu0 0
        %4181 = vmatpush1.bf16.msra.mxu0 0
        %4182 = vmatprep.subr.bf16.mxu0 0
        %4183 = vmatpush1.bf16.msra.mxu0 0
        %4184 = vmatprep.subr.bf16.mxu0 0
        %4185 = vmatpush1.bf16.msra.mxu0 0
        %4186 = vmatprep.subr.bf16.mxu0 0
        %4187 = vmatpush1.bf16.msra.mxu0 0
        %4188 = vmatprep.subr.bf16.mxu0 0
        %4189 = vmatpush1.bf16.msra.mxu0 0
        %4190 = vmatprep.subr.bf16.mxu0 0
        %4191 = vmatpush1.bf16.msra.mxu0 0
        %4192 = vmatprep.subr.bf16.mxu0 0
        %4193 = vmatpush1.bf16.msra.mxu0 0
        %4194 = vmatprep.subr.bf16.mxu0 0
        %4195 = vmatpush1.bf16.msra.mxu0 %v4137
        %4196 = vmatprep.subr.bf16.mxu0 0
        %4197 = vmatpush2.bf16.msra.mxu0 0
        %4198 = vmatprep.subr.bf16.mxu0 0
        %4199 = vmatpush2.bf16.msra.mxu0 0
        %4200 = vmatprep.subr.bf16.mxu0 0
        %4201 = vmatpush2.bf16.msra.mxu0 0
        %4202 = vmatprep.subr.bf16.mxu0 0
        %4203 = vmatpush2.bf16.msra.mxu0 0
        %4204 = vmatprep.subr.bf16.mxu0 0
        %4205 = vmatpush2.bf16.msra.mxu0 0
        %4206 = vmatprep.subr.bf16.mxu0 0
        %4207 = vmatpush2.bf16.msra.mxu0 0
        %4208 = vmatprep.subr.bf16.mxu0 0
        %4209 = vmatpush2.bf16.msra.mxu0 0
        %4210 = vmatprep.subr.bf16.mxu0 0
        %4211 = vmatpush2.bf16.msra.mxu0 0
        %4212 = vmatprep.mubr.bf16.mxu0 0
        %4213 = vmatmul.mubr.bf16.gmra.mxu0 %v4128
        %v4214 = vpop.f32.mrf.mxu0
        %v4215 = vadd.f32 0.0, %v4214
        %v4216 = vpop.f32.mrf.mxu0
        %v4217 = vpop.f32.mrf.mxu0
        %v4218 = vpop.f32.mrf.mxu0
        %4219 = vdwg.mxu0
        %v4220 = vadd.f32 %v4114, %v4174
        %v4221 = vadd.f32 %v4115, %v4176
        %v4222 = vadd.f32 %v4116, %v4215
        %s4223 = scalar_lea.vmem %s3, 34
        %v4224 = vld [vmem:[%s4223] sm:$0x3]
        %4225 = vrot.lane.b32.xlu0 %v2528, 90
        %v4226 = vpop.permute.xlu0 %4225
        %4227 = vrot.lane.b32.xlu0 %v2536, 90
        %v4228 = vpop.permute.xlu0 %4227
        %4229 = vrot.lane.b32.xlu0 %v2535, 90
        %v4230 = vpop.permute.xlu0 %4229
        %v4231 = vsel %vm2190, %v4226, %v4228
        %v4232 = vsel %vm2190, %v4228, %v4230
        %v4234 = vsel %vm487, %v4224, 0
        %v4237 = vsel %vm440, %v4231, 0
        %v4240 = vsel %vm440, %v4232, 0
        %v4243 = vsel %vm440, %v4230, 0
        %4245 = vmatprep.subr.bf16.mxu0 0
        %4246 = vmatpush1.bf16.msra.mxu0 0
        %4247 = vmatprep.subr.bf16.mxu0 0
        %4248 = vmatpush1.bf16.msra.mxu0 0
        %4249 = vmatprep.subr.bf16.mxu0 0
        %4250 = vmatpush1.bf16.msra.mxu0 0
        %4251 = vmatprep.subr.bf16.mxu0 0
        %4252 = vmatpush1.bf16.msra.mxu0 0
        %4253 = vmatprep.subr.bf16.mxu0 0
        %4254 = vmatpush1.bf16.msra.mxu0 0
        %4255 = vmatprep.subr.bf16.mxu0 0
        %4256 = vmatpush1.bf16.msra.mxu0 0
        %4257 = vmatprep.subr.bf16.mxu0 0
        %4258 = vmatpush1.bf16.msra.mxu0 0
        %4259 = vmatprep.subr.bf16.mxu0 %v4240
        %4260 = vmatpush1.bf16.msra.mxu0 %v4237
        %4261 = vmatprep.subr.bf16.mxu0 0
        %4262 = vmatpush2.bf16.msra.mxu0 0
        %4263 = vmatprep.subr.bf16.mxu0 0
        %4264 = vmatpush2.bf16.msra.mxu0 0
        %4265 = vmatprep.subr.bf16.mxu0 0
        %4266 = vmatpush2.bf16.msra.mxu0 0
        %4267 = vmatprep.subr.bf16.mxu0 0
        %4268 = vmatpush2.bf16.msra.mxu0 0
        %4269 = vmatprep.subr.bf16.mxu0 0
        %4270 = vmatpush2.bf16.msra.mxu0 0
        %4271 = vmatprep.subr.bf16.mxu0 0
        %4272 = vmatpush2.bf16.msra.mxu0 0
        %4273 = vmatprep.subr.bf16.mxu0 0
        %4274 = vmatpush2.bf16.msra.mxu0 0
        %4275 = vmatprep.subr.bf16.mxu0 0
        %4276 = vmatpush2.bf16.msra.mxu0 0
        %4277 = vmatprep.mubr.bf16.mxu0 0
        %4278 = vmatmul.mubr.bf16.gmra.mxu0 %v4234
        %v4279 = vpop.f32.mrf.mxu0
        %v4280 = vadd.f32 0.0, %v4279
        %v4281 = vpop.f32.mrf.mxu0
        %v4282 = vadd.f32 0.0, %v4281
        %v4283 = vpop.f32.mrf.mxu0
        %v4284 = vpop.f32.mrf.mxu0
        %4285 = vdwg.mxu0
        %4286 = vmatprep.subr.bf16.mxu0 0
        %4287 = vmatpush1.bf16.msra.mxu0 0
        %4288 = vmatprep.subr.bf16.mxu0 0
        %4289 = vmatpush1.bf16.msra.mxu0 0
        %4290 = vmatprep.subr.bf16.mxu0 0
        %4291 = vmatpush1.bf16.msra.mxu0 0
        %4292 = vmatprep.subr.bf16.mxu0 0
        %4293 = vmatpush1.bf16.msra.mxu0 0
        %4294 = vmatprep.subr.bf16.mxu0 0
        %4295 = vmatpush1.bf16.msra.mxu0 0
        %4296 = vmatprep.subr.bf16.mxu0 0
        %4297 = vmatpush1.bf16.msra.mxu0 0
        %4298 = vmatprep.subr.bf16.mxu0 0
        %4299 = vmatpush1.bf16.msra.mxu0 0
        %4300 = vmatprep.subr.bf16.mxu0 0
        %4301 = vmatpush1.bf16.msra.mxu0 %v4243
        %4302 = vmatprep.subr.bf16.mxu0 0
        %4303 = vmatpush2.bf16.msra.mxu0 0
        %4304 = vmatprep.subr.bf16.mxu0 0
        %4305 = vmatpush2.bf16.msra.mxu0 0
        %4306 = vmatprep.subr.bf16.mxu0 0
        %4307 = vmatpush2.bf16.msra.mxu0 0
        %4308 = vmatprep.subr.bf16.mxu0 0
        %4309 = vmatpush2.bf16.msra.mxu0 0
        %4310 = vmatprep.subr.bf16.mxu0 0
        %4311 = vmatpush2.bf16.msra.mxu0 0
        %4312 = vmatprep.subr.bf16.mxu0 0
        %4313 = vmatpush2.bf16.msra.mxu0 0
        %4314 = vmatprep.subr.bf16.mxu0 0
        %4315 = vmatpush2.bf16.msra.mxu0 0
        %4316 = vmatprep.subr.bf16.mxu0 0
        %4317 = vmatpush2.bf16.msra.mxu0 0
        %4318 = vmatprep.mubr.bf16.mxu0 0
        %4319 = vmatmul.mubr.bf16.gmra.mxu0 %v4234
        %v4320 = vpop.f32.mrf.mxu0
        %v4321 = vadd.f32 0.0, %v4320
        %v4322 = vpop.f32.mrf.mxu0
        %v4323 = vpop.f32.mrf.mxu0
        %v4324 = vpop.f32.mrf.mxu0
        %4325 = vdwg.mxu0
        %v4326 = vadd.f32 %v4220, %v4280
        %v4327 = vadd.f32 %v4221, %v4282
        %v4328 = vadd.f32 %v4222, %v4321
        %s4329 = sadd.s32 %s456, 2
        %s4330 = smul.u32 %s4329, 3
        %s4331 = smul.addr %s4330, 2
        %s4332 = scalar_lea.vmem %s412, %s4331
        %v4333 = vld [vmem:[%s4332] sm:$0x3f]
        %s4334 = smul.addr %s4330, 2
        %s4335 = scalar_lea.vmem %s421, %s4334
        %v4336 = vld [vmem:[%s4335] sm:$0x3f]
        %s4337 = scalar_lea.vmem %s2, 36
        %v4338 = vld [vmem:[%s4337] sm:$0x3]
        %v4340 = vcombine.high %v4333, %v4333
        %v4342 = vunpack.c.l.s4 1983009808
        %v4343 = vunpack.c.0.s8 %v4342
        %v4344 = vlaneseq
        %v4345 = vshrl.u32 %v4344, 7
        %v4346 = vsub.s32 %v4343, %v4345
        %v4347 = vrot.slane %v4333, %v4346
        %v4349 = vunpack.c.l.s4 1983009808
        %v4350 = vunpack.c.0.s8 %v4349
        %v4351 = vlaneseq
        %v4352 = vshrl.u32 %v4351, 7
        %v4353 = vsub.s32 %v4350, %v4352
        %v4354 = vrot.slane %v4340, %v4353
        %v4355 = vcombine.high %v4347, %v4347
        %v4357 = vsel %vm487, %v4338, 0
        %v4360 = vsel %vm440, %v4347, 0
        %v4363 = vsel %vm440, %v4355, 0
        %v4366 = vsel %vm440, %v4354, 0
        %4368 = vmatprep.subr.bf16.mxu0 0
        %4369 = vmatpush1.bf16.msra.mxu0 0
        %4370 = vmatprep.subr.bf16.mxu0 0
        %4371 = vmatpush1.bf16.msra.mxu0 0
        %4372 = vmatprep.subr.bf16.mxu0 0
        %4373 = vmatpush1.bf16.msra.mxu0 0
        %4374 = vmatprep.subr.bf16.mxu0 0
        %4375 = vmatpush1.bf16.msra.mxu0 0
        %4376 = vmatprep.subr.bf16.mxu0 0
        %4377 = vmatpush1.bf16.msra.mxu0 0
        %4378 = vmatprep.subr.bf16.mxu0 0
        %4379 = vmatpush1.bf16.msra.mxu0 0
        %4380 = vmatprep.subr.bf16.mxu0 0
        %4381 = vmatpush1.bf16.msra.mxu0 0
        %4382 = vmatprep.subr.bf16.mxu0 %v4363
        %4383 = vmatpush1.bf16.msra.mxu0 %v4360
        %4384 = vmatprep.subr.bf16.mxu0 0
        %4385 = vmatpush2.bf16.msra.mxu0 0
        %4386 = vmatprep.subr.bf16.mxu0 0
        %4387 = vmatpush2.bf16.msra.mxu0 0
        %4388 = vmatprep.subr.bf16.mxu0 0
        %4389 = vmatpush2.bf16.msra.mxu0 0
        %4390 = vmatprep.subr.bf16.mxu0 0
        %4391 = vmatpush2.bf16.msra.mxu0 0
        %4392 = vmatprep.subr.bf16.mxu0 0
        %4393 = vmatpush2.bf16.msra.mxu0 0
        %4394 = vmatprep.subr.bf16.mxu0 0
        %4395 = vmatpush2.bf16.msra.mxu0 0
        %4396 = vmatprep.subr.bf16.mxu0 0
        %4397 = vmatpush2.bf16.msra.mxu0 0
        %4398 = vmatprep.subr.bf16.mxu0 0
        %4399 = vmatpush2.bf16.msra.mxu0 0
        %4400 = vmatprep.mubr.bf16.mxu0 0
        %4401 = vmatmul.mubr.bf16.gmra.mxu0 %v4357
        %v4402 = vpop.f32.mrf.mxu0
        %v4403 = vadd.f32 0.0, %v4402
        %v4404 = vpop.f32.mrf.mxu0
        %v4405 = vadd.f32 0.0, %v4404
        %v4406 = vpop.f32.mrf.mxu0
        %v4407 = vpop.f32.mrf.mxu0
        %4408 = vdwg.mxu0
        %4409 = vmatprep.subr.bf16.mxu0 0
        %4410 = vmatpush1.bf16.msra.mxu0 0
        %4411 = vmatprep.subr.bf16.mxu0 0
        %4412 = vmatpush1.bf16.msra.mxu0 0
        %4413 = vmatprep.subr.bf16.mxu0 0
        %4414 = vmatpush1.bf16.msra.mxu0 0
        %4415 = vmatprep.subr.bf16.mxu0 0
        %4416 = vmatpush1.bf16.msra.mxu0 0
        %4417 = vmatprep.subr.bf16.mxu0 0
        %4418 = vmatpush1.bf16.msra.mxu0 0
        %4419 = vmatprep.subr.bf16.mxu0 0
        %4420 = vmatpush1.bf16.msra.mxu0 0
        %4421 = vmatprep.subr.bf16.mxu0 0
        %4422 = vmatpush1.bf16.msra.mxu0 0
        %4423 = vmatprep.subr.bf16.mxu0 0
        %4424 = vmatpush1.bf16.msra.mxu0 %v4366
        %4425 = vmatprep.subr.bf16.mxu0 0
        %4426 = vmatpush2.bf16.msra.mxu0 0
        %4427 = vmatprep.subr.bf16.mxu0 0
        %4428 = vmatpush2.bf16.msra.mxu0 0
        %4429 = vmatprep.subr.bf16.mxu0 0
        %4430 = vmatpush2.bf16.msra.mxu0 0
        %4431 = vmatprep.subr.bf16.mxu0 0
        %4432 = vmatpush2.bf16.msra.mxu0 0
        %4433 = vmatprep.subr.bf16.mxu0 0
        %4434 = vmatpush2.bf16.msra.mxu0 0
        %4435 = vmatprep.subr.bf16.mxu0 0
        %4436 = vmatpush2.bf16.msra.mxu0 0
        %4437 = vmatprep.subr.bf16.mxu0 0
        %4438 = vmatpush2.bf16.msra.mxu0 0
        %4439 = vmatprep.subr.bf16.mxu0 0
        %4440 = vmatpush2.bf16.msra.mxu0 0
        %4441 = vmatprep.mubr.bf16.mxu0 0
        %4442 = vmatmul.mubr.bf16.gmra.mxu0 %v4357
        %v4443 = vpop.f32.mrf.mxu0
        %v4444 = vadd.f32 0.0, %v4443
        %v4445 = vpop.f32.mrf.mxu0
        %v4446 = vpop.f32.mrf.mxu0
        %v4447 = vpop.f32.mrf.mxu0
        %4448 = vdwg.mxu0
        %v4449 = vadd.f32 %v4326, %v4403
        %v4450 = vadd.f32 %v4327, %v4405
        %v4451 = vadd.f32 %v4328, %v4444
        %s4452 = scalar_lea.vmem %s3, 36
        %v4453 = vld [vmem:[%s4452] sm:$0x3]
        %v4455 = vcombine.high %v4336, %v4336
        %v4457 = vunpack.c.l.s4 1983009808
        %v4458 = vunpack.c.0.s8 %v4457
        %v4459 = vlaneseq
        %v4460 = vshrl.u32 %v4459, 7
        %v4461 = vsub.s32 %v4458, %v4460
        %v4462 = vrot.slane %v4336, %v4461
        %v4464 = vunpack.c.l.s4 1983009808
        %v4465 = vunpack.c.0.s8 %v4464
        %v4466 = vlaneseq
        %v4467 = vshrl.u32 %v4466, 7
        %v4468 = vsub.s32 %v4465, %v4467
        %v4469 = vrot.slane %v4455, %v4468
        %v4470 = vcombine.high %v4462, %v4462
        %v4472 = vsel %vm487, %v4453, 0
        %v4475 = vsel %vm440, %v4462, 0
        %v4478 = vsel %vm440, %v4470, 0
        %v4481 = vsel %vm440, %v4469, 0
        %4483 = vmatprep.subr.bf16.mxu0 0
        %4484 = vmatpush1.bf16.msra.mxu0 0
        %4485 = vmatprep.subr.bf16.mxu0 0
        %4486 = vmatpush1.bf16.msra.mxu0 0
        %4487 = vmatprep.subr.bf16.mxu0 0
        %4488 = vmatpush1.bf16.msra.mxu0 0
        %4489 = vmatprep.subr.bf16.mxu0 0
        %4490 = vmatpush1.bf16.msra.mxu0 0
        %4491 = vmatprep.subr.bf16.mxu0 0
        %4492 = vmatpush1.bf16.msra.mxu0 0
        %4493 = vmatprep.subr.bf16.mxu0 0
        %4494 = vmatpush1.bf16.msra.mxu0 0
        %4495 = vmatprep.subr.bf16.mxu0 0
        %4496 = vmatpush1.bf16.msra.mxu0 0
        %4497 = vmatprep.subr.bf16.mxu0 %v4478
        %4498 = vmatpush1.bf16.msra.mxu0 %v4475
        %4499 = vmatprep.subr.bf16.mxu0 0
        %4500 = vmatpush2.bf16.msra.mxu0 0
        %4501 = vmatprep.subr.bf16.mxu0 0
        %4502 = vmatpush2.bf16.msra.mxu0 0
        %4503 = vmatprep.subr.bf16.mxu0 0
        %4504 = vmatpush2.bf16.msra.mxu0 0
        %4505 = vmatprep.subr.bf16.mxu0 0
        %4506 = vmatpush2.bf16.msra.mxu0 0
        %4507 = vmatprep.subr.bf16.mxu0 0
        %4508 = vmatpush2.bf16.msra.mxu0 0
        %4509 = vmatprep.subr.bf16.mxu0 0
        %4510 = vmatpush2.bf16.msra.mxu0 0
        %4511 = vmatprep.subr.bf16.mxu0 0
        %4512 = vmatpush2.bf16.msra.mxu0 0
        %4513 = vmatprep.subr.bf16.mxu0 0
        %4514 = vmatpush2.bf16.msra.mxu0 0
        %4515 = vmatprep.mubr.bf16.mxu0 0
        %4516 = vmatmul.mubr.bf16.gmra.mxu0 %v4472
        %v4517 = vpop.f32.mrf.mxu0
        %v4518 = vadd.f32 0.0, %v4517
        %v4519 = vpop.f32.mrf.mxu0
        %v4520 = vadd.f32 0.0, %v4519
        %v4521 = vpop.f32.mrf.mxu0
        %v4522 = vpop.f32.mrf.mxu0
        %4523 = vdwg.mxu0
        %4524 = vmatprep.subr.bf16.mxu0 0
        %4525 = vmatpush1.bf16.msra.mxu0 0
        %4526 = vmatprep.subr.bf16.mxu0 0
        %4527 = vmatpush1.bf16.msra.mxu0 0
        %4528 = vmatprep.subr.bf16.mxu0 0
        %4529 = vmatpush1.bf16.msra.mxu0 0
        %4530 = vmatprep.subr.bf16.mxu0 0
        %4531 = vmatpush1.bf16.msra.mxu0 0
        %4532 = vmatprep.subr.bf16.mxu0 0
        %4533 = vmatpush1.bf16.msra.mxu0 0
        %4534 = vmatprep.subr.bf16.mxu0 0
        %4535 = vmatpush1.bf16.msra.mxu0 0
        %4536 = vmatprep.subr.bf16.mxu0 0
        %4537 = vmatpush1.bf16.msra.mxu0 0
        %4538 = vmatprep.subr.bf16.mxu0 0
        %4539 = vmatpush1.bf16.msra.mxu0 %v4481
        %4540 = vmatprep.subr.bf16.mxu0 0
        %4541 = vmatpush2.bf16.msra.mxu0 0
        %4542 = vmatprep.subr.bf16.mxu0 0
        %4543 = vmatpush2.bf16.msra.mxu0 0
        %4544 = vmatprep.subr.bf16.mxu0 0
        %4545 = vmatpush2.bf16.msra.mxu0 0
        %4546 = vmatprep.subr.bf16.mxu0 0
        %4547 = vmatpush2.bf16.msra.mxu0 0
        %4548 = vmatprep.subr.bf16.mxu0 0
        %4549 = vmatpush2.bf16.msra.mxu0 0
        %4550 = vmatprep.subr.bf16.mxu0 0
        %4551 = vmatpush2.bf16.msra.mxu0 0
        %4552 = vmatprep.subr.bf16.mxu0 0
        %4553 = vmatpush2.bf16.msra.mxu0 0
        %4554 = vmatprep.subr.bf16.mxu0 0
        %4555 = vmatpush2.bf16.msra.mxu0 0
        %4556 = vmatprep.mubr.bf16.mxu0 0
        %4557 = vmatmul.mubr.bf16.gmra.mxu0 %v4472
        %v4558 = vpop.f32.mrf.mxu0
        %v4559 = vadd.f32 0.0, %v4558
        %v4560 = vpop.f32.mrf.mxu0
        %v4561 = vpop.f32.mrf.mxu0
        %v4562 = vpop.f32.mrf.mxu0
        %4563 = vdwg.mxu0
        %v4564 = vadd.f32 %v4449, %v4518
        %v4565 = vadd.f32 %v4450, %v4520
        %v4566 = vadd.f32 %v4451, %v4559
        %s4567 = scalar_lea.vmem %s2, 38
        %v4568 = vld [vmem:[%s4567] sm:$0x3]
        %4569 = vrot.lane.b32.xlu0 %v4347, 127
        %v4570 = vpop.permute.xlu0 %4569
        %4571 = vrot.lane.b32.xlu0 %v4355, 127
        %v4572 = vpop.permute.xlu0 %4571
        %4573 = vrot.lane.b32.xlu0 %v4354, 127
        %v4574 = vpop.permute.xlu0 %4573
        %v4575 = vsel %vm699, %v4570, %v4572
        %v4576 = vsel %vm699, %v4572, %v4574
        %v4578 = vsel %vm487, %v4568, 0
        %v4581 = vsel %vm440, %v4575, 0
        %v4584 = vsel %vm440, %v4576, 0
        %v4587 = vsel %vm440, %v4574, 0
        %4589 = vmatprep.subr.bf16.mxu0 0
        %4590 = vmatpush1.bf16.msra.mxu0 0
        %4591 = vmatprep.subr.bf16.mxu0 0
        %4592 = vmatpush1.bf16.msra.mxu0 0
        %4593 = vmatprep.subr.bf16.mxu0 0
        %4594 = vmatpush1.bf16.msra.mxu0 0
        %4595 = vmatprep.subr.bf16.mxu0 0
        %4596 = vmatpush1.bf16.msra.mxu0 0
        %4597 = vmatprep.subr.bf16.mxu0 0
        %4598 = vmatpush1.bf16.msra.mxu0 0
        %4599 = vmatprep.subr.bf16.mxu0 0
        %4600 = vmatpush1.bf16.msra.mxu0 0
        %4601 = vmatprep.subr.bf16.mxu0 0
        %4602 = vmatpush1.bf16.msra.mxu0 0
        %4603 = vmatprep.subr.bf16.mxu0 %v4584
        %4604 = vmatpush1.bf16.msra.mxu0 %v4581
        %4605 = vmatprep.subr.bf16.mxu0 0
        %4606 = vmatpush2.bf16.msra.mxu0 0
        %4607 = vmatprep.subr.bf16.mxu0 0
        %4608 = vmatpush2.bf16.msra.mxu0 0
        %4609 = vmatprep.subr.bf16.mxu0 0
        %4610 = vmatpush2.bf16.msra.mxu0 0
        %4611 = vmatprep.subr.bf16.mxu0 0
        %4612 = vmatpush2.bf16.msra.mxu0 0
        %4613 = vmatprep.subr.bf16.mxu0 0
        %4614 = vmatpush2.bf16.msra.mxu0 0
        %4615 = vmatprep.subr.bf16.mxu0 0
        %4616 = vmatpush2.bf16.msra.mxu0 0
        %4617 = vmatprep.subr.bf16.mxu0 0
        %4618 = vmatpush2.bf16.msra.mxu0 0
        %4619 = vmatprep.subr.bf16.mxu0 0
        %4620 = vmatpush2.bf16.msra.mxu0 0
        %4621 = vmatprep.mubr.bf16.mxu0 0
        %4622 = vmatmul.mubr.bf16.gmra.mxu0 %v4578
        %v4623 = vpop.f32.mrf.mxu0
        %v4624 = vadd.f32 0.0, %v4623
        %v4625 = vpop.f32.mrf.mxu0
        %v4626 = vadd.f32 0.0, %v4625
        %v4627 = vpop.f32.mrf.mxu0
        %v4628 = vpop.f32.mrf.mxu0
        %4629 = vdwg.mxu0
        %4630 = vmatprep.subr.bf16.mxu0 0
        %4631 = vmatpush1.bf16.msra.mxu0 0
        %4632 = vmatprep.subr.bf16.mxu0 0
        %4633 = vmatpush1.bf16.msra.mxu0 0
        %4634 = vmatprep.subr.bf16.mxu0 0
        %4635 = vmatpush1.bf16.msra.mxu0 0
        %4636 = vmatprep.subr.bf16.mxu0 0
        %4637 = vmatpush1.bf16.msra.mxu0 0
        %4638 = vmatprep.subr.bf16.mxu0 0
        %4639 = vmatpush1.bf16.msra.mxu0 0
        %4640 = vmatprep.subr.bf16.mxu0 0
        %4641 = vmatpush1.bf16.msra.mxu0 0
        %4642 = vmatprep.subr.bf16.mxu0 0
        %4643 = vmatpush1.bf16.msra.mxu0 0
        %4644 = vmatprep.subr.bf16.mxu0 0
        %4645 = vmatpush1.bf16.msra.mxu0 %v4587
        %4646 = vmatprep.subr.bf16.mxu0 0
        %4647 = vmatpush2.bf16.msra.mxu0 0
        %4648 = vmatprep.subr.bf16.mxu0 0
        %4649 = vmatpush2.bf16.msra.mxu0 0
        %4650 = vmatprep.subr.bf16.mxu0 0
        %4651 = vmatpush2.bf16.msra.mxu0 0
        %4652 = vmatprep.subr.bf16.mxu0 0
        %4653 = vmatpush2.bf16.msra.mxu0 0
        %4654 = vmatprep.subr.bf16.mxu0 0
        %4655 = vmatpush2.bf16.msra.mxu0 0
        %4656 = vmatprep.subr.bf16.mxu0 0
        %4657 = vmatpush2.bf16.msra.mxu0 0
        %4658 = vmatprep.subr.bf16.mxu0 0
        %4659 = vmatpush2.bf16.msra.mxu0 0
        %4660 = vmatprep.subr.bf16.mxu0 0
        %4661 = vmatpush2.bf16.msra.mxu0 0
        %4662 = vmatprep.mubr.bf16.mxu0 0
        %4663 = vmatmul.mubr.bf16.gmra.mxu0 %v4578
        %v4664 = vpop.f32.mrf.mxu0
        %v4665 = vadd.f32 0.0, %v4664
        %v4666 = vpop.f32.mrf.mxu0
        %v4667 = vpop.f32.mrf.mxu0
        %v4668 = vpop.f32.mrf.mxu0
        %4669 = vdwg.mxu0
        %v4670 = vadd.f32 %v4564, %v4624
        %v4671 = vadd.f32 %v4565, %v4626
        %v4672 = vadd.f32 %v4566, %v4665
        %s4673 = scalar_lea.vmem %s3, 38
        %v4674 = vld [vmem:[%s4673] sm:$0x3]
        %4675 = vrot.lane.b32.xlu0 %v4462, 127
        %v4676 = vpop.permute.xlu0 %4675
        %4677 = vrot.lane.b32.xlu0 %v4470, 127
        %v4678 = vpop.permute.xlu0 %4677
        %4679 = vrot.lane.b32.xlu0 %v4469, 127
        %v4680 = vpop.permute.xlu0 %4679
        %v4681 = vsel %vm699, %v4676, %v4678
        %v4682 = vsel %vm699, %v4678, %v4680
        %v4684 = vsel %vm487, %v4674, 0
        %v4687 = vsel %vm440, %v4681, 0
        %v4690 = vsel %vm440, %v4682, 0
        %v4693 = vsel %vm440, %v4680, 0
        %4695 = vmatprep.subr.bf16.mxu0 0
        %4696 = vmatpush1.bf16.msra.mxu0 0
        %4697 = vmatprep.subr.bf16.mxu0 0
        %4698 = vmatpush1.bf16.msra.mxu0 0
        %4699 = vmatprep.subr.bf16.mxu0 0
        %4700 = vmatpush1.bf16.msra.mxu0 0
        %4701 = vmatprep.subr.bf16.mxu0 0
        %4702 = vmatpush1.bf16.msra.mxu0 0
        %4703 = vmatprep.subr.bf16.mxu0 0
        %4704 = vmatpush1.bf16.msra.mxu0 0
        %4705 = vmatprep.subr.bf16.mxu0 0
        %4706 = vmatpush1.bf16.msra.mxu0 0
        %4707 = vmatprep.subr.bf16.mxu0 0
        %4708 = vmatpush1.bf16.msra.mxu0 0
        %4709 = vmatprep.subr.bf16.mxu0 %v4690
        %4710 = vmatpush1.bf16.msra.mxu0 %v4687
        %4711 = vmatprep.subr.bf16.mxu0 0
        %4712 = vmatpush2.bf16.msra.mxu0 0
        %4713 = vmatprep.subr.bf16.mxu0 0
        %4714 = vmatpush2.bf16.msra.mxu0 0
        %4715 = vmatprep.subr.bf16.mxu0 0
        %4716 = vmatpush2.bf16.msra.mxu0 0
        %4717 = vmatprep.subr.bf16.mxu0 0
        %4718 = vmatpush2.bf16.msra.mxu0 0
        %4719 = vmatprep.subr.bf16.mxu0 0
        %4720 = vmatpush2.bf16.msra.mxu0 0
        %4721 = vmatprep.subr.bf16.mxu0 0
        %4722 = vmatpush2.bf16.msra.mxu0 0
        %4723 = vmatprep.subr.bf16.mxu0 0
        %4724 = vmatpush2.bf16.msra.mxu0 0
        %4725 = vmatprep.subr.bf16.mxu0 0
        %4726 = vmatpush2.bf16.msra.mxu0 0
        %4727 = vmatprep.mubr.bf16.mxu0 0
        %4728 = vmatmul.mubr.bf16.gmra.mxu0 %v4684
        %v4729 = vpop.f32.mrf.mxu0
        %v4730 = vadd.f32 0.0, %v4729
        %v4731 = vpop.f32.mrf.mxu0
        %v4732 = vadd.f32 0.0, %v4731
        %v4733 = vpop.f32.mrf.mxu0
        %v4734 = vpop.f32.mrf.mxu0
        %4735 = vdwg.mxu0
        %4736 = vmatprep.subr.bf16.mxu0 0
        %4737 = vmatpush1.bf16.msra.mxu0 0
        %4738 = vmatprep.subr.bf16.mxu0 0
        %4739 = vmatpush1.bf16.msra.mxu0 0
        %4740 = vmatprep.subr.bf16.mxu0 0
        %4741 = vmatpush1.bf16.msra.mxu0 0
        %4742 = vmatprep.subr.bf16.mxu0 0
        %4743 = vmatpush1.bf16.msra.mxu0 0
        %4744 = vmatprep.subr.bf16.mxu0 0
        %4745 = vmatpush1.bf16.msra.mxu0 0
        %4746 = vmatprep.subr.bf16.mxu0 0
        %4747 = vmatpush1.bf16.msra.mxu0 0
        %4748 = vmatprep.subr.bf16.mxu0 0
        %4749 = vmatpush1.bf16.msra.mxu0 0
        %4750 = vmatprep.subr.bf16.mxu0 0
        %4751 = vmatpush1.bf16.msra.mxu0 %v4693
        %4752 = vmatprep.subr.bf16.mxu0 0
        %4753 = vmatpush2.bf16.msra.mxu0 0
        %4754 = vmatprep.subr.bf16.mxu0 0
        %4755 = vmatpush2.bf16.msra.mxu0 0
        %4756 = vmatprep.subr.bf16.mxu0 0
        %4757 = vmatpush2.bf16.msra.mxu0 0
        %4758 = vmatprep.subr.bf16.mxu0 0
        %4759 = vmatpush2.bf16.msra.mxu0 0
        %4760 = vmatprep.subr.bf16.mxu0 0
        %4761 = vmatpush2.bf16.msra.mxu0 0
        %4762 = vmatprep.subr.bf16.mxu0 0
        %4763 = vmatpush2.bf16.msra.mxu0 0
        %4764 = vmatprep.subr.bf16.mxu0 0
        %4765 = vmatpush2.bf16.msra.mxu0 0
        %4766 = vmatprep.subr.bf16.mxu0 0
        %4767 = vmatpush2.bf16.msra.mxu0 0
        %4768 = vmatprep.mubr.bf16.mxu0 0
        %4769 = vmatmul.mubr.bf16.gmra.mxu0 %v4684
        %v4770 = vpop.f32.mrf.mxu0
        %v4771 = vadd.f32 0.0, %v4770
        %v4772 = vpop.f32.mrf.mxu0
        %v4773 = vpop.f32.mrf.mxu0
        %v4774 = vpop.f32.mrf.mxu0
        %4775 = vdwg.mxu0
        %v4776 = vadd.f32 %v4670, %v4730
        %v4777 = vadd.f32 %v4671, %v4732
        %v4778 = vadd.f32 %v4672, %v4771
        %s4779 = scalar_lea.vmem %s2, 40
        %v4780 = vld [vmem:[%s4779] sm:$0x3]
        %4781 = vrot.lane.b32.xlu0 %v4347, 126
        %v4782 = vpop.permute.xlu0 %4781
        %4783 = vrot.lane.b32.xlu0 %v4355, 126
        %v4784 = vpop.permute.xlu0 %4783
        %4785 = vrot.lane.b32.xlu0 %v4354, 126
        %v4786 = vpop.permute.xlu0 %4785
        %v4787 = vsel %vm912, %v4782, %v4784
        %v4788 = vsel %vm912, %v4784, %v4786
        %v4790 = vsel %vm487, %v4780, 0
        %v4793 = vsel %vm440, %v4787, 0
        %v4796 = vsel %vm440, %v4788, 0
        %v4799 = vsel %vm440, %v4786, 0
        %4801 = vmatprep.subr.bf16.mxu0 0
        %4802 = vmatpush1.bf16.msra.mxu0 0
        %4803 = vmatprep.subr.bf16.mxu0 0
        %4804 = vmatpush1.bf16.msra.mxu0 0
        %4805 = vmatprep.subr.bf16.mxu0 0
        %4806 = vmatpush1.bf16.msra.mxu0 0
        %4807 = vmatprep.subr.bf16.mxu0 0
        %4808 = vmatpush1.bf16.msra.mxu0 0
        %4809 = vmatprep.subr.bf16.mxu0 0
        %4810 = vmatpush1.bf16.msra.mxu0 0
        %4811 = vmatprep.subr.bf16.mxu0 0
        %4812 = vmatpush1.bf16.msra.mxu0 0
        %4813 = vmatprep.subr.bf16.mxu0 0
        %4814 = vmatpush1.bf16.msra.mxu0 0
        %4815 = vmatprep.subr.bf16.mxu0 %v4796
        %4816 = vmatpush1.bf16.msra.mxu0 %v4793
        %4817 = vmatprep.subr.bf16.mxu0 0
        %4818 = vmatpush2.bf16.msra.mxu0 0
        %4819 = vmatprep.subr.bf16.mxu0 0
        %4820 = vmatpush2.bf16.msra.mxu0 0
        %4821 = vmatprep.subr.bf16.mxu0 0
        %4822 = vmatpush2.bf16.msra.mxu0 0
        %4823 = vmatprep.subr.bf16.mxu0 0
        %4824 = vmatpush2.bf16.msra.mxu0 0
        %4825 = vmatprep.subr.bf16.mxu0 0
        %4826 = vmatpush2.bf16.msra.mxu0 0
        %4827 = vmatprep.subr.bf16.mxu0 0
        %4828 = vmatpush2.bf16.msra.mxu0 0
        %4829 = vmatprep.subr.bf16.mxu0 0
        %4830 = vmatpush2.bf16.msra.mxu0 0
        %4831 = vmatprep.subr.bf16.mxu0 0
        %4832 = vmatpush2.bf16.msra.mxu0 0
        %4833 = vmatprep.mubr.bf16.mxu0 0
        %4834 = vmatmul.mubr.bf16.gmra.mxu0 %v4790
        %v4835 = vpop.f32.mrf.mxu0
        %v4836 = vadd.f32 0.0, %v4835
        %v4837 = vpop.f32.mrf.mxu0
        %v4838 = vadd.f32 0.0, %v4837
        %v4839 = vpop.f32.mrf.mxu0
        %v4840 = vpop.f32.mrf.mxu0
        %4841 = vdwg.mxu0
        %4842 = vmatprep.subr.bf16.mxu0 0
        %4843 = vmatpush1.bf16.msra.mxu0 0
        %4844 = vmatprep.subr.bf16.mxu0 0
        %4845 = vmatpush1.bf16.msra.mxu0 0
        %4846 = vmatprep.subr.bf16.mxu0 0
        %4847 = vmatpush1.bf16.msra.mxu0 0
        %4848 = vmatprep.subr.bf16.mxu0 0
        %4849 = vmatpush1.bf16.msra.mxu0 0
        %4850 = vmatprep.subr.bf16.mxu0 0
        %4851 = vmatpush1.bf16.msra.mxu0 0
        %4852 = vmatprep.subr.bf16.mxu0 0
        %4853 = vmatpush1.bf16.msra.mxu0 0
        %4854 = vmatprep.subr.bf16.mxu0 0
        %4855 = vmatpush1.bf16.msra.mxu0 0
        %4856 = vmatprep.subr.bf16.mxu0 0
        %4857 = vmatpush1.bf16.msra.mxu0 %v4799
        %4858 = vmatprep.subr.bf16.mxu0 0
        %4859 = vmatpush2.bf16.msra.mxu0 0
        %4860 = vmatprep.subr.bf16.mxu0 0
        %4861 = vmatpush2.bf16.msra.mxu0 0
        %4862 = vmatprep.subr.bf16.mxu0 0
        %4863 = vmatpush2.bf16.msra.mxu0 0
        %4864 = vmatprep.subr.bf16.mxu0 0
        %4865 = vmatpush2.bf16.msra.mxu0 0
        %4866 = vmatprep.subr.bf16.mxu0 0
        %4867 = vmatpush2.bf16.msra.mxu0 0
        %4868 = vmatprep.subr.bf16.mxu0 0
        %4869 = vmatpush2.bf16.msra.mxu0 0
        %4870 = vmatprep.subr.bf16.mxu0 0
        %4871 = vmatpush2.bf16.msra.mxu0 0
        %4872 = vmatprep.subr.bf16.mxu0 0
        %4873 = vmatpush2.bf16.msra.mxu0 0
        %4874 = vmatprep.mubr.bf16.mxu0 0
        %4875 = vmatmul.mubr.bf16.gmra.mxu0 %v4790
        %v4876 = vpop.f32.mrf.mxu0
        %v4877 = vadd.f32 0.0, %v4876
        %v4878 = vpop.f32.mrf.mxu0
        %v4879 = vpop.f32.mrf.mxu0
        %v4880 = vpop.f32.mrf.mxu0
        %4881 = vdwg.mxu0
        %v4882 = vadd.f32 %v4776, %v4836
        %v4883 = vadd.f32 %v4777, %v4838
        %v4884 = vadd.f32 %v4778, %v4877
        %s4885 = scalar_lea.vmem %s3, 40
        %v4886 = vld [vmem:[%s4885] sm:$0x3]
        %4887 = vrot.lane.b32.xlu0 %v4462, 126
        %v4888 = vpop.permute.xlu0 %4887
        %4889 = vrot.lane.b32.xlu0 %v4470, 126
        %v4890 = vpop.permute.xlu0 %4889
        %4891 = vrot.lane.b32.xlu0 %v4469, 126
        %v4892 = vpop.permute.xlu0 %4891
        %v4893 = vsel %vm912, %v4888, %v4890
        %v4894 = vsel %vm912, %v4890, %v4892
        %v4896 = vsel %vm487, %v4886, 0
        %v4899 = vsel %vm440, %v4893, 0
        %v4902 = vsel %vm440, %v4894, 0
        %v4905 = vsel %vm440, %v4892, 0
        %4907 = vmatprep.subr.bf16.mxu0 0
        %4908 = vmatpush1.bf16.msra.mxu0 0
        %4909 = vmatprep.subr.bf16.mxu0 0
        %4910 = vmatpush1.bf16.msra.mxu0 0
        %4911 = vmatprep.subr.bf16.mxu0 0
        %4912 = vmatpush1.bf16.msra.mxu0 0
        %4913 = vmatprep.subr.bf16.mxu0 0
        %4914 = vmatpush1.bf16.msra.mxu0 0
        %4915 = vmatprep.subr.bf16.mxu0 0
        %4916 = vmatpush1.bf16.msra.mxu0 0
        %4917 = vmatprep.subr.bf16.mxu0 0
        %4918 = vmatpush1.bf16.msra.mxu0 0
        %4919 = vmatprep.subr.bf16.mxu0 0
        %4920 = vmatpush1.bf16.msra.mxu0 0
        %4921 = vmatprep.subr.bf16.mxu0 %v4902
        %4922 = vmatpush1.bf16.msra.mxu0 %v4899
        %4923 = vmatprep.subr.bf16.mxu0 0
        %4924 = vmatpush2.bf16.msra.mxu0 0
        %4925 = vmatprep.subr.bf16.mxu0 0
        %4926 = vmatpush2.bf16.msra.mxu0 0
        %4927 = vmatprep.subr.bf16.mxu0 0
        %4928 = vmatpush2.bf16.msra.mxu0 0
        %4929 = vmatprep.subr.bf16.mxu0 0
        %4930 = vmatpush2.bf16.msra.mxu0 0
        %4931 = vmatprep.subr.bf16.mxu0 0
        %4932 = vmatpush2.bf16.msra.mxu0 0
        %4933 = vmatprep.subr.bf16.mxu0 0
        %4934 = vmatpush2.bf16.msra.mxu0 0
        %4935 = vmatprep.subr.bf16.mxu0 0
        %4936 = vmatpush2.bf16.msra.mxu0 0
        %4937 = vmatprep.subr.bf16.mxu0 0
        %4938 = vmatpush2.bf16.msra.mxu0 0
        %4939 = vmatprep.mubr.bf16.mxu0 0
        %4940 = vmatmul.mubr.bf16.gmra.mxu0 %v4896
        %v4941 = vpop.f32.mrf.mxu0
        %v4942 = vadd.f32 0.0, %v4941
        %v4943 = vpop.f32.mrf.mxu0
        %v4944 = vadd.f32 0.0, %v4943
        %v4945 = vpop.f32.mrf.mxu0
        %v4946 = vpop.f32.mrf.mxu0
        %4947 = vdwg.mxu0
        %4948 = vmatprep.subr.bf16.mxu0 0
        %4949 = vmatpush1.bf16.msra.mxu0 0
        %4950 = vmatprep.subr.bf16.mxu0 0
        %4951 = vmatpush1.bf16.msra.mxu0 0
        %4952 = vmatprep.subr.bf16.mxu0 0
        %4953 = vmatpush1.bf16.msra.mxu0 0
        %4954 = vmatprep.subr.bf16.mxu0 0
        %4955 = vmatpush1.bf16.msra.mxu0 0
        %4956 = vmatprep.subr.bf16.mxu0 0
        %4957 = vmatpush1.bf16.msra.mxu0 0
        %4958 = vmatprep.subr.bf16.mxu0 0
        %4959 = vmatpush1.bf16.msra.mxu0 0
        %4960 = vmatprep.subr.bf16.mxu0 0
        %4961 = vmatpush1.bf16.msra.mxu0 0
        %4962 = vmatprep.subr.bf16.mxu0 0
        %4963 = vmatpush1.bf16.msra.mxu0 %v4905
        %4964 = vmatprep.subr.bf16.mxu0 0
        %4965 = vmatpush2.bf16.msra.mxu0 0
        %4966 = vmatprep.subr.bf16.mxu0 0
        %4967 = vmatpush2.bf16.msra.mxu0 0
        %4968 = vmatprep.subr.bf16.mxu0 0
        %4969 = vmatpush2.bf16.msra.mxu0 0
        %4970 = vmatprep.subr.bf16.mxu0 0
        %4971 = vmatpush2.bf16.msra.mxu0 0
        %4972 = vmatprep.subr.bf16.mxu0 0
        %4973 = vmatpush2.bf16.msra.mxu0 0
        %4974 = vmatprep.subr.bf16.mxu0 0
        %4975 = vmatpush2.bf16.msra.mxu0 0
        %4976 = vmatprep.subr.bf16.mxu0 0
        %4977 = vmatpush2.bf16.msra.mxu0 0
        %4978 = vmatprep.subr.bf16.mxu0 0
        %4979 = vmatpush2.bf16.msra.mxu0 0
        %4980 = vmatprep.mubr.bf16.mxu0 0
        %4981 = vmatmul.mubr.bf16.gmra.mxu0 %v4896
        %v4982 = vpop.f32.mrf.mxu0
        %v4983 = vadd.f32 0.0, %v4982
        %v4984 = vpop.f32.mrf.mxu0
        %v4985 = vpop.f32.mrf.mxu0
        %v4986 = vpop.f32.mrf.mxu0
        %4987 = vdwg.mxu0
        %v4988 = vadd.f32 %v4882, %v4942
        %v4989 = vadd.f32 %v4883, %v4944
        %v4990 = vadd.f32 %v4884, %v4983
        %s4991 = scalar_lea.vmem %s2, 42
        %v4992 = vld [vmem:[%s4991] sm:$0x3]
        %4993 = vrot.lane.b32.xlu0 %v4347, 110
        %v4994 = vpop.permute.xlu0 %4993
        %4995 = vrot.lane.b32.xlu0 %v4355, 110
        %v4996 = vpop.permute.xlu0 %4995
        %4997 = vrot.lane.b32.xlu0 %v4354, 110
        %v4998 = vpop.permute.xlu0 %4997
        %v4999 = vsel %vm1125, %v4994, %v4996
        %v5000 = vsel %vm1125, %v4996, %v4998
        %v5002 = vsel %vm487, %v4992, 0
        %v5005 = vsel %vm440, %v4999, 0
        %v5008 = vsel %vm440, %v5000, 0
        %v5011 = vsel %vm440, %v4998, 0
        %5013 = vmatprep.subr.bf16.mxu0 0
        %5014 = vmatpush1.bf16.msra.mxu0 0
        %5015 = vmatprep.subr.bf16.mxu0 0
        %5016 = vmatpush1.bf16.msra.mxu0 0
        %5017 = vmatprep.subr.bf16.mxu0 0
        %5018 = vmatpush1.bf16.msra.mxu0 0
        %5019 = vmatprep.subr.bf16.mxu0 0
        %5020 = vmatpush1.bf16.msra.mxu0 0
        %5021 = vmatprep.subr.bf16.mxu0 0
        %5022 = vmatpush1.bf16.msra.mxu0 0
        %5023 = vmatprep.subr.bf16.mxu0 0
        %5024 = vmatpush1.bf16.msra.mxu0 0
        %5025 = vmatprep.subr.bf16.mxu0 0
        %5026 = vmatpush1.bf16.msra.mxu0 0
        %5027 = vmatprep.subr.bf16.mxu0 %v5008
        %5028 = vmatpush1.bf16.msra.mxu0 %v5005
        %5029 = vmatprep.subr.bf16.mxu0 0
        %5030 = vmatpush2.bf16.msra.mxu0 0
        %5031 = vmatprep.subr.bf16.mxu0 0
        %5032 = vmatpush2.bf16.msra.mxu0 0
        %5033 = vmatprep.subr.bf16.mxu0 0
        %5034 = vmatpush2.bf16.msra.mxu0 0
        %5035 = vmatprep.subr.bf16.mxu0 0
        %5036 = vmatpush2.bf16.msra.mxu0 0
        %5037 = vmatprep.subr.bf16.mxu0 0
        %5038 = vmatpush2.bf16.msra.mxu0 0
        %5039 = vmatprep.subr.bf16.mxu0 0
        %5040 = vmatpush2.bf16.msra.mxu0 0
        %5041 = vmatprep.subr.bf16.mxu0 0
        %5042 = vmatpush2.bf16.msra.mxu0 0
        %5043 = vmatprep.subr.bf16.mxu0 0
        %5044 = vmatpush2.bf16.msra.mxu0 0
        %5045 = vmatprep.mubr.bf16.mxu0 0
        %5046 = vmatmul.mubr.bf16.gmra.mxu0 %v5002
        %v5047 = vpop.f32.mrf.mxu0
        %v5048 = vadd.f32 0.0, %v5047
        %v5049 = vpop.f32.mrf.mxu0
        %v5050 = vadd.f32 0.0, %v5049
        %v5051 = vpop.f32.mrf.mxu0
        %v5052 = vpop.f32.mrf.mxu0
        %5053 = vdwg.mxu0
        %5054 = vmatprep.subr.bf16.mxu0 0
        %5055 = vmatpush1.bf16.msra.mxu0 0
        %5056 = vmatprep.subr.bf16.mxu0 0
        %5057 = vmatpush1.bf16.msra.mxu0 0
        %5058 = vmatprep.subr.bf16.mxu0 0
        %5059 = vmatpush1.bf16.msra.mxu0 0
        %5060 = vmatprep.subr.bf16.mxu0 0
        %5061 = vmatpush1.bf16.msra.mxu0 0
        %5062 = vmatprep.subr.bf16.mxu0 0
        %5063 = vmatpush1.bf16.msra.mxu0 0
        %5064 = vmatprep.subr.bf16.mxu0 0
        %5065 = vmatpush1.bf16.msra.mxu0 0
        %5066 = vmatprep.subr.bf16.mxu0 0
        %5067 = vmatpush1.bf16.msra.mxu0 0
        %5068 = vmatprep.subr.bf16.mxu0 0
        %5069 = vmatpush1.bf16.msra.mxu0 %v5011
        %5070 = vmatprep.subr.bf16.mxu0 0
        %5071 = vmatpush2.bf16.msra.mxu0 0
        %5072 = vmatprep.subr.bf16.mxu0 0
        %5073 = vmatpush2.bf16.msra.mxu0 0
        %5074 = vmatprep.subr.bf16.mxu0 0
        %5075 = vmatpush2.bf16.msra.mxu0 0
        %5076 = vmatprep.subr.bf16.mxu0 0
        %5077 = vmatpush2.bf16.msra.mxu0 0
        %5078 = vmatprep.subr.bf16.mxu0 0
        %5079 = vmatpush2.bf16.msra.mxu0 0
        %5080 = vmatprep.subr.bf16.mxu0 0
        %5081 = vmatpush2.bf16.msra.mxu0 0
        %5082 = vmatprep.subr.bf16.mxu0 0
        %5083 = vmatpush2.bf16.msra.mxu0 0
        %5084 = vmatprep.subr.bf16.mxu0 0
        %5085 = vmatpush2.bf16.msra.mxu0 0
        %5086 = vmatprep.mubr.bf16.mxu0 0
        %5087 = vmatmul.mubr.bf16.gmra.mxu0 %v5002
        %v5088 = vpop.f32.mrf.mxu0
        %v5089 = vadd.f32 0.0, %v5088
        %v5090 = vpop.f32.mrf.mxu0
        %v5091 = vpop.f32.mrf.mxu0
        %v5092 = vpop.f32.mrf.mxu0
        %5093 = vdwg.mxu0
        %v5094 = vadd.f32 %v4988, %v5048
        %v5095 = vadd.f32 %v4989, %v5050
        %v5096 = vadd.f32 %v4990, %v5089
        %s5097 = scalar_lea.vmem %s3, 42
        %v5098 = vld [vmem:[%s5097] sm:$0x3]
        %5099 = vrot.lane.b32.xlu0 %v4462, 110
        %v5100 = vpop.permute.xlu0 %5099
        %5101 = vrot.lane.b32.xlu0 %v4470, 110
        %v5102 = vpop.permute.xlu0 %5101
        %5103 = vrot.lane.b32.xlu0 %v4469, 110
        %v5104 = vpop.permute.xlu0 %5103
        %v5105 = vsel %vm1125, %v5100, %v5102
        %v5106 = vsel %vm1125, %v5102, %v5104
        %v5108 = vsel %vm487, %v5098, 0
        %v5111 = vsel %vm440, %v5105, 0
        %v5114 = vsel %vm440, %v5106, 0
        %v5117 = vsel %vm440, %v5104, 0
        %5119 = vmatprep.subr.bf16.mxu0 0
        %5120 = vmatpush1.bf16.msra.mxu0 0
        %5121 = vmatprep.subr.bf16.mxu0 0
        %5122 = vmatpush1.bf16.msra.mxu0 0
        %5123 = vmatprep.subr.bf16.mxu0 0
        %5124 = vmatpush1.bf16.msra.mxu0 0
        %5125 = vmatprep.subr.bf16.mxu0 0
        %5126 = vmatpush1.bf16.msra.mxu0 0
        %5127 = vmatprep.subr.bf16.mxu0 0
        %5128 = vmatpush1.bf16.msra.mxu0 0
        %5129 = vmatprep.subr.bf16.mxu0 0
        %5130 = vmatpush1.bf16.msra.mxu0 0
        %5131 = vmatprep.subr.bf16.mxu0 0
        %5132 = vmatpush1.bf16.msra.mxu0 0
        %5133 = vmatprep.subr.bf16.mxu0 %v5114
        %5134 = vmatpush1.bf16.msra.mxu0 %v5111
        %5135 = vmatprep.subr.bf16.mxu0 0
        %5136 = vmatpush2.bf16.msra.mxu0 0
        %5137 = vmatprep.subr.bf16.mxu0 0
        %5138 = vmatpush2.bf16.msra.mxu0 0
        %5139 = vmatprep.subr.bf16.mxu0 0
        %5140 = vmatpush2.bf16.msra.mxu0 0
        %5141 = vmatprep.subr.bf16.mxu0 0
        %5142 = vmatpush2.bf16.msra.mxu0 0
        %5143 = vmatprep.subr.bf16.mxu0 0
        %5144 = vmatpush2.bf16.msra.mxu0 0
        %5145 = vmatprep.subr.bf16.mxu0 0
        %5146 = vmatpush2.bf16.msra.mxu0 0
        %5147 = vmatprep.subr.bf16.mxu0 0
        %5148 = vmatpush2.bf16.msra.mxu0 0
        %5149 = vmatprep.subr.bf16.mxu0 0
        %5150 = vmatpush2.bf16.msra.mxu0 0
        %5151 = vmatprep.mubr.bf16.mxu0 0
        %5152 = vmatmul.mubr.bf16.gmra.mxu0 %v5108
        %v5153 = vpop.f32.mrf.mxu0
        %v5154 = vadd.f32 0.0, %v5153
        %v5155 = vpop.f32.mrf.mxu0
        %v5156 = vadd.f32 0.0, %v5155
        %v5157 = vpop.f32.mrf.mxu0
        %v5158 = vpop.f32.mrf.mxu0
        %5159 = vdwg.mxu0
        %5160 = vmatprep.subr.bf16.mxu0 0
        %5161 = vmatpush1.bf16.msra.mxu0 0
        %5162 = vmatprep.subr.bf16.mxu0 0
        %5163 = vmatpush1.bf16.msra.mxu0 0
        %5164 = vmatprep.subr.bf16.mxu0 0
        %5165 = vmatpush1.bf16.msra.mxu0 0
        %5166 = vmatprep.subr.bf16.mxu0 0
        %5167 = vmatpush1.bf16.msra.mxu0 0
        %5168 = vmatprep.subr.bf16.mxu0 0
        %5169 = vmatpush1.bf16.msra.mxu0 0
        %5170 = vmatprep.subr.bf16.mxu0 0
        %5171 = vmatpush1.bf16.msra.mxu0 0
        %5172 = vmatprep.subr.bf16.mxu0 0
        %5173 = vmatpush1.bf16.msra.mxu0 0
        %5174 = vmatprep.subr.bf16.mxu0 0
        %5175 = vmatpush1.bf16.msra.mxu0 %v5117
        %5176 = vmatprep.subr.bf16.mxu0 0
        %5177 = vmatpush2.bf16.msra.mxu0 0
        %5178 = vmatprep.subr.bf16.mxu0 0
        %5179 = vmatpush2.bf16.msra.mxu0 0
        %5180 = vmatprep.subr.bf16.mxu0 0
        %5181 = vmatpush2.bf16.msra.mxu0 0
        %5182 = vmatprep.subr.bf16.mxu0 0
        %5183 = vmatpush2.bf16.msra.mxu0 0
        %5184 = vmatprep.subr.bf16.mxu0 0
        %5185 = vmatpush2.bf16.msra.mxu0 0
        %5186 = vmatprep.subr.bf16.mxu0 0
        %5187 = vmatpush2.bf16.msra.mxu0 0
        %5188 = vmatprep.subr.bf16.mxu0 0
        %5189 = vmatpush2.bf16.msra.mxu0 0
        %5190 = vmatprep.subr.bf16.mxu0 0
        %5191 = vmatpush2.bf16.msra.mxu0 0
        %5192 = vmatprep.mubr.bf16.mxu0 0
        %5193 = vmatmul.mubr.bf16.gmra.mxu0 %v5108
        %v5194 = vpop.f32.mrf.mxu0
        %v5195 = vadd.f32 0.0, %v5194
        %v5196 = vpop.f32.mrf.mxu0
        %v5197 = vpop.f32.mrf.mxu0
        %v5198 = vpop.f32.mrf.mxu0
        %5199 = vdwg.mxu0
        %v5200 = vadd.f32 %v5094, %v5154
        %v5201 = vadd.f32 %v5095, %v5156
        %v5202 = vadd.f32 %v5096, %v5195
        %s5203 = scalar_lea.vmem %s2, 44
        %v5204 = vld [vmem:[%s5203] sm:$0x3]
        %5205 = vrot.lane.b32.xlu0 %v4347, 109
        %v5206 = vpop.permute.xlu0 %5205
        %5207 = vrot.lane.b32.xlu0 %v4355, 109
        %v5208 = vpop.permute.xlu0 %5207
        %5209 = vrot.lane.b32.xlu0 %v4354, 109
        %v5210 = vpop.permute.xlu0 %5209
        %v5211 = vsel %vm1338, %v5206, %v5208
        %v5212 = vsel %vm1338, %v5208, %v5210
        %v5214 = vsel %vm487, %v5204, 0
        %v5217 = vsel %vm440, %v5211, 0
        %v5220 = vsel %vm440, %v5212, 0
        %v5223 = vsel %vm440, %v5210, 0
        %5225 = vmatprep.subr.bf16.mxu0 0
        %5226 = vmatpush1.bf16.msra.mxu0 0
        %5227 = vmatprep.subr.bf16.mxu0 0
        %5228 = vmatpush1.bf16.msra.mxu0 0
        %5229 = vmatprep.subr.bf16.mxu0 0
        %5230 = vmatpush1.bf16.msra.mxu0 0
        %5231 = vmatprep.subr.bf16.mxu0 0
        %5232 = vmatpush1.bf16.msra.mxu0 0
        %5233 = vmatprep.subr.bf16.mxu0 0
        %5234 = vmatpush1.bf16.msra.mxu0 0
        %5235 = vmatprep.subr.bf16.mxu0 0
        %5236 = vmatpush1.bf16.msra.mxu0 0
        %5237 = vmatprep.subr.bf16.mxu0 0
        %5238 = vmatpush1.bf16.msra.mxu0 0
        %5239 = vmatprep.subr.bf16.mxu0 %v5220
        %5240 = vmatpush1.bf16.msra.mxu0 %v5217
        %5241 = vmatprep.subr.bf16.mxu0 0
        %5242 = vmatpush2.bf16.msra.mxu0 0
        %5243 = vmatprep.subr.bf16.mxu0 0
        %5244 = vmatpush2.bf16.msra.mxu0 0
        %5245 = vmatprep.subr.bf16.mxu0 0
        %5246 = vmatpush2.bf16.msra.mxu0 0
        %5247 = vmatprep.subr.bf16.mxu0 0
        %5248 = vmatpush2.bf16.msra.mxu0 0
        %5249 = vmatprep.subr.bf16.mxu0 0
        %5250 = vmatpush2.bf16.msra.mxu0 0
        %5251 = vmatprep.subr.bf16.mxu0 0
        %5252 = vmatpush2.bf16.msra.mxu0 0
        %5253 = vmatprep.subr.bf16.mxu0 0
        %5254 = vmatpush2.bf16.msra.mxu0 0
        %5255 = vmatprep.subr.bf16.mxu0 0
        %5256 = vmatpush2.bf16.msra.mxu0 0
        %5257 = vmatprep.mubr.bf16.mxu0 0
        %5258 = vmatmul.mubr.bf16.gmra.mxu0 %v5214
        %v5259 = vpop.f32.mrf.mxu0
        %v5260 = vadd.f32 0.0, %v5259
        %v5261 = vpop.f32.mrf.mxu0
        %v5262 = vadd.f32 0.0, %v5261
        %v5263 = vpop.f32.mrf.mxu0
        %v5264 = vpop.f32.mrf.mxu0
        %5265 = vdwg.mxu0
        %5266 = vmatprep.subr.bf16.mxu0 0
        %5267 = vmatpush1.bf16.msra.mxu0 0
        %5268 = vmatprep.subr.bf16.mxu0 0
        %5269 = vmatpush1.bf16.msra.mxu0 0
        %5270 = vmatprep.subr.bf16.mxu0 0
        %5271 = vmatpush1.bf16.msra.mxu0 0
        %5272 = vmatprep.subr.bf16.mxu0 0
        %5273 = vmatpush1.bf16.msra.mxu0 0
        %5274 = vmatprep.subr.bf16.mxu0 0
        %5275 = vmatpush1.bf16.msra.mxu0 0
        %5276 = vmatprep.subr.bf16.mxu0 0
        %5277 = vmatpush1.bf16.msra.mxu0 0
        %5278 = vmatprep.subr.bf16.mxu0 0
        %5279 = vmatpush1.bf16.msra.mxu0 0
        %5280 = vmatprep.subr.bf16.mxu0 0
        %5281 = vmatpush1.bf16.msra.mxu0 %v5223
        %5282 = vmatprep.subr.bf16.mxu0 0
        %5283 = vmatpush2.bf16.msra.mxu0 0
        %5284 = vmatprep.subr.bf16.mxu0 0
        %5285 = vmatpush2.bf16.msra.mxu0 0
        %5286 = vmatprep.subr.bf16.mxu0 0
        %5287 = vmatpush2.bf16.msra.mxu0 0
        %5288 = vmatprep.subr.bf16.mxu0 0
        %5289 = vmatpush2.bf16.msra.mxu0 0
        %5290 = vmatprep.subr.bf16.mxu0 0
        %5291 = vmatpush2.bf16.msra.mxu0 0
        %5292 = vmatprep.subr.bf16.mxu0 0
        %5293 = vmatpush2.bf16.msra.mxu0 0
        %5294 = vmatprep.subr.bf16.mxu0 0
        %5295 = vmatpush2.bf16.msra.mxu0 0
        %5296 = vmatprep.subr.bf16.mxu0 0
        %5297 = vmatpush2.bf16.msra.mxu0 0
        %5298 = vmatprep.mubr.bf16.mxu0 0
        %5299 = vmatmul.mubr.bf16.gmra.mxu0 %v5214
        %v5300 = vpop.f32.mrf.mxu0
        %v5301 = vadd.f32 0.0, %v5300
        %v5302 = vpop.f32.mrf.mxu0
        %v5303 = vpop.f32.mrf.mxu0
        %v5304 = vpop.f32.mrf.mxu0
        %5305 = vdwg.mxu0
        %v5306 = vadd.f32 %v5200, %v5260
        %v5307 = vadd.f32 %v5201, %v5262
        %v5308 = vadd.f32 %v5202, %v5301
        %s5309 = scalar_lea.vmem %s3, 44
        %v5310 = vld [vmem:[%s5309] sm:$0x3]
        %5311 = vrot.lane.b32.xlu0 %v4462, 109
        %v5312 = vpop.permute.xlu0 %5311
        %5313 = vrot.lane.b32.xlu0 %v4470, 109
        %v5314 = vpop.permute.xlu0 %5313
        %5315 = vrot.lane.b32.xlu0 %v4469, 109
        %v5316 = vpop.permute.xlu0 %5315
        %v5317 = vsel %vm1338, %v5312, %v5314
        %v5318 = vsel %vm1338, %v5314, %v5316
        %v5320 = vsel %vm487, %v5310, 0
        %v5323 = vsel %vm440, %v5317, 0
        %v5326 = vsel %vm440, %v5318, 0
        %v5329 = vsel %vm440, %v5316, 0
        %5331 = vmatprep.subr.bf16.mxu0 0
        %5332 = vmatpush1.bf16.msra.mxu0 0
        %5333 = vmatprep.subr.bf16.mxu0 0
        %5334 = vmatpush1.bf16.msra.mxu0 0
        %5335 = vmatprep.subr.bf16.mxu0 0
        %5336 = vmatpush1.bf16.msra.mxu0 0
        %5337 = vmatprep.subr.bf16.mxu0 0
        %5338 = vmatpush1.bf16.msra.mxu0 0
        %5339 = vmatprep.subr.bf16.mxu0 0
        %5340 = vmatpush1.bf16.msra.mxu0 0
        %5341 = vmatprep.subr.bf16.mxu0 0
        %5342 = vmatpush1.bf16.msra.mxu0 0
        %5343 = vmatprep.subr.bf16.mxu0 0
        %5344 = vmatpush1.bf16.msra.mxu0 0
        %5345 = vmatprep.subr.bf16.mxu0 %v5326
        %5346 = vmatpush1.bf16.msra.mxu0 %v5323
        %5347 = vmatprep.subr.bf16.mxu0 0
        %5348 = vmatpush2.bf16.msra.mxu0 0
        %5349 = vmatprep.subr.bf16.mxu0 0
        %5350 = vmatpush2.bf16.msra.mxu0 0
        %5351 = vmatprep.subr.bf16.mxu0 0
        %5352 = vmatpush2.bf16.msra.mxu0 0
        %5353 = vmatprep.subr.bf16.mxu0 0
        %5354 = vmatpush2.bf16.msra.mxu0 0
        %5355 = vmatprep.subr.bf16.mxu0 0
        %5356 = vmatpush2.bf16.msra.mxu0 0
        %5357 = vmatprep.subr.bf16.mxu0 0
        %5358 = vmatpush2.bf16.msra.mxu0 0
        %5359 = vmatprep.subr.bf16.mxu0 0
        %5360 = vmatpush2.bf16.msra.mxu0 0
        %5361 = vmatprep.subr.bf16.mxu0 0
        %5362 = vmatpush2.bf16.msra.mxu0 0
        %5363 = vmatprep.mubr.bf16.mxu0 0
        %5364 = vmatmul.mubr.bf16.gmra.mxu0 %v5320
        %v5365 = vpop.f32.mrf.mxu0
        %v5366 = vadd.f32 0.0, %v5365
        %v5367 = vpop.f32.mrf.mxu0
        %v5368 = vadd.f32 0.0, %v5367
        %v5369 = vpop.f32.mrf.mxu0
        %v5370 = vpop.f32.mrf.mxu0
        %5371 = vdwg.mxu0
        %5372 = vmatprep.subr.bf16.mxu0 0
        %5373 = vmatpush1.bf16.msra.mxu0 0
        %5374 = vmatprep.subr.bf16.mxu0 0
        %5375 = vmatpush1.bf16.msra.mxu0 0
        %5376 = vmatprep.subr.bf16.mxu0 0
        %5377 = vmatpush1.bf16.msra.mxu0 0
        %5378 = vmatprep.subr.bf16.mxu0 0
        %5379 = vmatpush1.bf16.msra.mxu0 0
        %5380 = vmatprep.subr.bf16.mxu0 0
        %5381 = vmatpush1.bf16.msra.mxu0 0
        %5382 = vmatprep.subr.bf16.mxu0 0
        %5383 = vmatpush1.bf16.msra.mxu0 0
        %5384 = vmatprep.subr.bf16.mxu0 0
        %5385 = vmatpush1.bf16.msra.mxu0 0
        %5386 = vmatprep.subr.bf16.mxu0 0
        %5387 = vmatpush1.bf16.msra.mxu0 %v5329
        %5388 = vmatprep.subr.bf16.mxu0 0
        %5389 = vmatpush2.bf16.msra.mxu0 0
        %5390 = vmatprep.subr.bf16.mxu0 0
        %5391 = vmatpush2.bf16.msra.mxu0 0
        %5392 = vmatprep.subr.bf16.mxu0 0
        %5393 = vmatpush2.bf16.msra.mxu0 0
        %5394 = vmatprep.subr.bf16.mxu0 0
        %5395 = vmatpush2.bf16.msra.mxu0 0
        %5396 = vmatprep.subr.bf16.mxu0 0
        %5397 = vmatpush2.bf16.msra.mxu0 0
        %5398 = vmatprep.subr.bf16.mxu0 0
        %5399 = vmatpush2.bf16.msra.mxu0 0
        %5400 = vmatprep.subr.bf16.mxu0 0
        %5401 = vmatpush2.bf16.msra.mxu0 0
        %5402 = vmatprep.subr.bf16.mxu0 0
        %5403 = vmatpush2.bf16.msra.mxu0 0
        %5404 = vmatprep.mubr.bf16.mxu0 0
        %5405 = vmatmul.mubr.bf16.gmra.mxu0 %v5320
        %v5406 = vpop.f32.mrf.mxu0
        %v5407 = vadd.f32 0.0, %v5406
        %v5408 = vpop.f32.mrf.mxu0
        %v5409 = vpop.f32.mrf.mxu0
        %v5410 = vpop.f32.mrf.mxu0
        %5411 = vdwg.mxu0
        %v5412 = vadd.f32 %v5306, %v5366
        %v5413 = vadd.f32 %v5307, %v5368
        %v5414 = vadd.f32 %v5308, %v5407
        %s5415 = scalar_lea.vmem %s2, 46
        %v5416 = vld [vmem:[%s5415] sm:$0x3]
        %5417 = vrot.lane.b32.xlu0 %v4347, 108
        %v5418 = vpop.permute.xlu0 %5417
        %5419 = vrot.lane.b32.xlu0 %v4355, 108
        %v5420 = vpop.permute.xlu0 %5419
        %5421 = vrot.lane.b32.xlu0 %v4354, 108
        %v5422 = vpop.permute.xlu0 %5421
        %v5423 = vsel %vm1551, %v5418, %v5420
        %v5424 = vsel %vm1551, %v5420, %v5422
        %v5426 = vsel %vm487, %v5416, 0
        %v5429 = vsel %vm440, %v5423, 0
        %v5432 = vsel %vm440, %v5424, 0
        %v5435 = vsel %vm440, %v5422, 0
        %5437 = vmatprep.subr.bf16.mxu0 0
        %5438 = vmatpush1.bf16.msra.mxu0 0
        %5439 = vmatprep.subr.bf16.mxu0 0
        %5440 = vmatpush1.bf16.msra.mxu0 0
        %5441 = vmatprep.subr.bf16.mxu0 0
        %5442 = vmatpush1.bf16.msra.mxu0 0
        %5443 = vmatprep.subr.bf16.mxu0 0
        %5444 = vmatpush1.bf16.msra.mxu0 0
        %5445 = vmatprep.subr.bf16.mxu0 0
        %5446 = vmatpush1.bf16.msra.mxu0 0
        %5447 = vmatprep.subr.bf16.mxu0 0
        %5448 = vmatpush1.bf16.msra.mxu0 0
        %5449 = vmatprep.subr.bf16.mxu0 0
        %5450 = vmatpush1.bf16.msra.mxu0 0
        %5451 = vmatprep.subr.bf16.mxu0 %v5432
        %5452 = vmatpush1.bf16.msra.mxu0 %v5429
        %5453 = vmatprep.subr.bf16.mxu0 0
        %5454 = vmatpush2.bf16.msra.mxu0 0
        %5455 = vmatprep.subr.bf16.mxu0 0
        %5456 = vmatpush2.bf16.msra.mxu0 0
        %5457 = vmatprep.subr.bf16.mxu0 0
        %5458 = vmatpush2.bf16.msra.mxu0 0
        %5459 = vmatprep.subr.bf16.mxu0 0
        %5460 = vmatpush2.bf16.msra.mxu0 0
        %5461 = vmatprep.subr.bf16.mxu0 0
        %5462 = vmatpush2.bf16.msra.mxu0 0
        %5463 = vmatprep.subr.bf16.mxu0 0
        %5464 = vmatpush2.bf16.msra.mxu0 0
        %5465 = vmatprep.subr.bf16.mxu0 0
        %5466 = vmatpush2.bf16.msra.mxu0 0
        %5467 = vmatprep.subr.bf16.mxu0 0
        %5468 = vmatpush2.bf16.msra.mxu0 0
        %5469 = vmatprep.mubr.bf16.mxu0 0
        %5470 = vmatmul.mubr.bf16.gmra.mxu0 %v5426
        %v5471 = vpop.f32.mrf.mxu0
        %v5472 = vadd.f32 0.0, %v5471
        %v5473 = vpop.f32.mrf.mxu0
        %v5474 = vadd.f32 0.0, %v5473
        %v5475 = vpop.f32.mrf.mxu0
        %v5476 = vpop.f32.mrf.mxu0
        %5477 = vdwg.mxu0
        %5478 = vmatprep.subr.bf16.mxu0 0
        %5479 = vmatpush1.bf16.msra.mxu0 0
        %5480 = vmatprep.subr.bf16.mxu0 0
        %5481 = vmatpush1.bf16.msra.mxu0 0
        %5482 = vmatprep.subr.bf16.mxu0 0
        %5483 = vmatpush1.bf16.msra.mxu0 0
        %5484 = vmatprep.subr.bf16.mxu0 0
        %5485 = vmatpush1.bf16.msra.mxu0 0
        %5486 = vmatprep.subr.bf16.mxu0 0
        %5487 = vmatpush1.bf16.msra.mxu0 0
        %5488 = vmatprep.subr.bf16.mxu0 0
        %5489 = vmatpush1.bf16.msra.mxu0 0
        %5490 = vmatprep.subr.bf16.mxu0 0
        %5491 = vmatpush1.bf16.msra.mxu0 0
        %5492 = vmatprep.subr.bf16.mxu0 0
        %5493 = vmatpush1.bf16.msra.mxu0 %v5435
        %5494 = vmatprep.subr.bf16.mxu0 0
        %5495 = vmatpush2.bf16.msra.mxu0 0
        %5496 = vmatprep.subr.bf16.mxu0 0
        %5497 = vmatpush2.bf16.msra.mxu0 0
        %5498 = vmatprep.subr.bf16.mxu0 0
        %5499 = vmatpush2.bf16.msra.mxu0 0
        %5500 = vmatprep.subr.bf16.mxu0 0
        %5501 = vmatpush2.bf16.msra.mxu0 0
        %5502 = vmatprep.subr.bf16.mxu0 0
        %5503 = vmatpush2.bf16.msra.mxu0 0
        %5504 = vmatprep.subr.bf16.mxu0 0
        %5505 = vmatpush2.bf16.msra.mxu0 0
        %5506 = vmatprep.subr.bf16.mxu0 0
        %5507 = vmatpush2.bf16.msra.mxu0 0
        %5508 = vmatprep.subr.bf16.mxu0 0
        %5509 = vmatpush2.bf16.msra.mxu0 0
        %5510 = vmatprep.mubr.bf16.mxu0 0
        %5511 = vmatmul.mubr.bf16.gmra.mxu0 %v5426
        %v5512 = vpop.f32.mrf.mxu0
        %v5513 = vadd.f32 0.0, %v5512
        %v5514 = vpop.f32.mrf.mxu0
        %v5515 = vpop.f32.mrf.mxu0
        %v5516 = vpop.f32.mrf.mxu0
        %5517 = vdwg.mxu0
        %v5518 = vadd.f32 %v5412, %v5472
        %v5519 = vadd.f32 %v5413, %v5474
        %v5520 = vadd.f32 %v5414, %v5513
        %s5521 = scalar_lea.vmem %s3, 46
        %v5522 = vld [vmem:[%s5521] sm:$0x3]
        %5523 = vrot.lane.b32.xlu0 %v4462, 108
        %v5524 = vpop.permute.xlu0 %5523
        %5525 = vrot.lane.b32.xlu0 %v4470, 108
        %v5526 = vpop.permute.xlu0 %5525
        %5527 = vrot.lane.b32.xlu0 %v4469, 108
        %v5528 = vpop.permute.xlu0 %5527
        %v5529 = vsel %vm1551, %v5524, %v5526
        %v5530 = vsel %vm1551, %v5526, %v5528
        %v5532 = vsel %vm487, %v5522, 0
        %v5535 = vsel %vm440, %v5529, 0
        %v5538 = vsel %vm440, %v5530, 0
        %v5541 = vsel %vm440, %v5528, 0
        %5543 = vmatprep.subr.bf16.mxu0 0
        %5544 = vmatpush1.bf16.msra.mxu0 0
        %5545 = vmatprep.subr.bf16.mxu0 0
        %5546 = vmatpush1.bf16.msra.mxu0 0
        %5547 = vmatprep.subr.bf16.mxu0 0
        %5548 = vmatpush1.bf16.msra.mxu0 0
        %5549 = vmatprep.subr.bf16.mxu0 0
        %5550 = vmatpush1.bf16.msra.mxu0 0
        %5551 = vmatprep.subr.bf16.mxu0 0
        %5552 = vmatpush1.bf16.msra.mxu0 0
        %5553 = vmatprep.subr.bf16.mxu0 0
        %5554 = vmatpush1.bf16.msra.mxu0 0
        %5555 = vmatprep.subr.bf16.mxu0 0
        %5556 = vmatpush1.bf16.msra.mxu0 0
        %5557 = vmatprep.subr.bf16.mxu0 %v5538
        %5558 = vmatpush1.bf16.msra.mxu0 %v5535
        %5559 = vmatprep.subr.bf16.mxu0 0
        %5560 = vmatpush2.bf16.msra.mxu0 0
        %5561 = vmatprep.subr.bf16.mxu0 0
        %5562 = vmatpush2.bf16.msra.mxu0 0
        %5563 = vmatprep.subr.bf16.mxu0 0
        %5564 = vmatpush2.bf16.msra.mxu0 0
        %5565 = vmatprep.subr.bf16.mxu0 0
        %5566 = vmatpush2.bf16.msra.mxu0 0
        %5567 = vmatprep.subr.bf16.mxu0 0
        %5568 = vmatpush2.bf16.msra.mxu0 0
        %5569 = vmatprep.subr.bf16.mxu0 0
        %5570 = vmatpush2.bf16.msra.mxu0 0
        %5571 = vmatprep.subr.bf16.mxu0 0
        %5572 = vmatpush2.bf16.msra.mxu0 0
        %5573 = vmatprep.subr.bf16.mxu0 0
        %5574 = vmatpush2.bf16.msra.mxu0 0
        %5575 = vmatprep.mubr.bf16.mxu0 0
        %5576 = vmatmul.mubr.bf16.gmra.mxu0 %v5532
        %v5577 = vpop.f32.mrf.mxu0
        %v5578 = vadd.f32 0.0, %v5577
        %v5579 = vpop.f32.mrf.mxu0
        %v5580 = vadd.f32 0.0, %v5579
        %v5581 = vpop.f32.mrf.mxu0
        %v5582 = vpop.f32.mrf.mxu0
        %5583 = vdwg.mxu0
        %5584 = vmatprep.subr.bf16.mxu0 0
        %5585 = vmatpush1.bf16.msra.mxu0 0
        %5586 = vmatprep.subr.bf16.mxu0 0
        %5587 = vmatpush1.bf16.msra.mxu0 0
        %5588 = vmatprep.subr.bf16.mxu0 0
        %5589 = vmatpush1.bf16.msra.mxu0 0
        %5590 = vmatprep.subr.bf16.mxu0 0
        %5591 = vmatpush1.bf16.msra.mxu0 0
        %5592 = vmatprep.subr.bf16.mxu0 0
        %5593 = vmatpush1.bf16.msra.mxu0 0
        %5594 = vmatprep.subr.bf16.mxu0 0
        %5595 = vmatpush1.bf16.msra.mxu0 0
        %5596 = vmatprep.subr.bf16.mxu0 0
        %5597 = vmatpush1.bf16.msra.mxu0 0
        %5598 = vmatprep.subr.bf16.mxu0 0
        %5599 = vmatpush1.bf16.msra.mxu0 %v5541
        %5600 = vmatprep.subr.bf16.mxu0 0
        %5601 = vmatpush2.bf16.msra.mxu0 0
        %5602 = vmatprep.subr.bf16.mxu0 0
        %5603 = vmatpush2.bf16.msra.mxu0 0
        %5604 = vmatprep.subr.bf16.mxu0 0
        %5605 = vmatpush2.bf16.msra.mxu0 0
        %5606 = vmatprep.subr.bf16.mxu0 0
        %5607 = vmatpush2.bf16.msra.mxu0 0
        %5608 = vmatprep.subr.bf16.mxu0 0
        %5609 = vmatpush2.bf16.msra.mxu0 0
        %5610 = vmatprep.subr.bf16.mxu0 0
        %5611 = vmatpush2.bf16.msra.mxu0 0
        %5612 = vmatprep.subr.bf16.mxu0 0
        %5613 = vmatpush2.bf16.msra.mxu0 0
        %5614 = vmatprep.subr.bf16.mxu0 0
        %5615 = vmatpush2.bf16.msra.mxu0 0
        %5616 = vmatprep.mubr.bf16.mxu0 0
        %5617 = vmatmul.mubr.bf16.gmra.mxu0 %v5532
        %v5618 = vpop.f32.mrf.mxu0
        %v5619 = vadd.f32 0.0, %v5618
        %v5620 = vpop.f32.mrf.mxu0
        %v5621 = vpop.f32.mrf.mxu0
        %v5622 = vpop.f32.mrf.mxu0
        %5623 = vdwg.mxu0
        %v5624 = vadd.f32 %v5518, %v5578
        %v5625 = vadd.f32 %v5519, %v5580
        %v5626 = vadd.f32 %v5520, %v5619
        %s5627 = scalar_lea.vmem %s2, 48
        %v5628 = vld [vmem:[%s5627] sm:$0x3]
        %5629 = vrot.lane.b32.xlu0 %v4347, 92
        %v5630 = vpop.permute.xlu0 %5629
        %5631 = vrot.lane.b32.xlu0 %v4355, 92
        %v5632 = vpop.permute.xlu0 %5631
        %5633 = vrot.lane.b32.xlu0 %v4354, 92
        %v5634 = vpop.permute.xlu0 %5633
        %v5635 = vsel %vm1764, %v5630, %v5632
        %v5636 = vsel %vm1764, %v5632, %v5634
        %v5638 = vsel %vm487, %v5628, 0
        %v5641 = vsel %vm440, %v5635, 0
        %v5644 = vsel %vm440, %v5636, 0
        %v5647 = vsel %vm440, %v5634, 0
        %5649 = vmatprep.subr.bf16.mxu0 0
        %5650 = vmatpush1.bf16.msra.mxu0 0
        %5651 = vmatprep.subr.bf16.mxu0 0
        %5652 = vmatpush1.bf16.msra.mxu0 0
        %5653 = vmatprep.subr.bf16.mxu0 0
        %5654 = vmatpush1.bf16.msra.mxu0 0
        %5655 = vmatprep.subr.bf16.mxu0 0
        %5656 = vmatpush1.bf16.msra.mxu0 0
        %5657 = vmatprep.subr.bf16.mxu0 0
        %5658 = vmatpush1.bf16.msra.mxu0 0
        %5659 = vmatprep.subr.bf16.mxu0 0
        %5660 = vmatpush1.bf16.msra.mxu0 0
        %5661 = vmatprep.subr.bf16.mxu0 0
        %5662 = vmatpush1.bf16.msra.mxu0 0
        %5663 = vmatprep.subr.bf16.mxu0 %v5644
        %5664 = vmatpush1.bf16.msra.mxu0 %v5641
        %5665 = vmatprep.subr.bf16.mxu0 0
        %5666 = vmatpush2.bf16.msra.mxu0 0
        %5667 = vmatprep.subr.bf16.mxu0 0
        %5668 = vmatpush2.bf16.msra.mxu0 0
        %5669 = vmatprep.subr.bf16.mxu0 0
        %5670 = vmatpush2.bf16.msra.mxu0 0
        %5671 = vmatprep.subr.bf16.mxu0 0
        %5672 = vmatpush2.bf16.msra.mxu0 0
        %5673 = vmatprep.subr.bf16.mxu0 0
        %5674 = vmatpush2.bf16.msra.mxu0 0
        %5675 = vmatprep.subr.bf16.mxu0 0
        %5676 = vmatpush2.bf16.msra.mxu0 0
        %5677 = vmatprep.subr.bf16.mxu0 0
        %5678 = vmatpush2.bf16.msra.mxu0 0
        %5679 = vmatprep.subr.bf16.mxu0 0
        %5680 = vmatpush2.bf16.msra.mxu0 0
        %5681 = vmatprep.mubr.bf16.mxu0 0
        %5682 = vmatmul.mubr.bf16.gmra.mxu0 %v5638
        %v5683 = vpop.f32.mrf.mxu0
        %v5684 = vadd.f32 0.0, %v5683
        %v5685 = vpop.f32.mrf.mxu0
        %v5686 = vadd.f32 0.0, %v5685
        %v5687 = vpop.f32.mrf.mxu0
        %v5688 = vpop.f32.mrf.mxu0
        %5689 = vdwg.mxu0
        %5690 = vmatprep.subr.bf16.mxu0 0
        %5691 = vmatpush1.bf16.msra.mxu0 0
        %5692 = vmatprep.subr.bf16.mxu0 0
        %5693 = vmatpush1.bf16.msra.mxu0 0
        %5694 = vmatprep.subr.bf16.mxu0 0
        %5695 = vmatpush1.bf16.msra.mxu0 0
        %5696 = vmatprep.subr.bf16.mxu0 0
        %5697 = vmatpush1.bf16.msra.mxu0 0
        %5698 = vmatprep.subr.bf16.mxu0 0
        %5699 = vmatpush1.bf16.msra.mxu0 0
        %5700 = vmatprep.subr.bf16.mxu0 0
        %5701 = vmatpush1.bf16.msra.mxu0 0
        %5702 = vmatprep.subr.bf16.mxu0 0
        %5703 = vmatpush1.bf16.msra.mxu0 0
        %5704 = vmatprep.subr.bf16.mxu0 0
        %5705 = vmatpush1.bf16.msra.mxu0 %v5647
        %5706 = vmatprep.subr.bf16.mxu0 0
        %5707 = vmatpush2.bf16.msra.mxu0 0
        %5708 = vmatprep.subr.bf16.mxu0 0
        %5709 = vmatpush2.bf16.msra.mxu0 0
        %5710 = vmatprep.subr.bf16.mxu0 0
        %5711 = vmatpush2.bf16.msra.mxu0 0
        %5712 = vmatprep.subr.bf16.mxu0 0
        %5713 = vmatpush2.bf16.msra.mxu0 0
        %5714 = vmatprep.subr.bf16.mxu0 0
        %5715 = vmatpush2.bf16.msra.mxu0 0
        %5716 = vmatprep.subr.bf16.mxu0 0
        %5717 = vmatpush2.bf16.msra.mxu0 0
        %5718 = vmatprep.subr.bf16.mxu0 0
        %5719 = vmatpush2.bf16.msra.mxu0 0
        %5720 = vmatprep.subr.bf16.mxu0 0
        %5721 = vmatpush2.bf16.msra.mxu0 0
        %5722 = vmatprep.mubr.bf16.mxu0 0
        %5723 = vmatmul.mubr.bf16.gmra.mxu0 %v5638
        %v5724 = vpop.f32.mrf.mxu0
        %v5725 = vadd.f32 0.0, %v5724
        %v5726 = vpop.f32.mrf.mxu0
        %v5727 = vpop.f32.mrf.mxu0
        %v5728 = vpop.f32.mrf.mxu0
        %5729 = vdwg.mxu0
        %v5730 = vadd.f32 %v5624, %v5684
        %v5731 = vadd.f32 %v5625, %v5686
        %v5732 = vadd.f32 %v5626, %v5725
        %s5733 = scalar_lea.vmem %s3, 48
        %v5734 = vld [vmem:[%s5733] sm:$0x3]
        %5735 = vrot.lane.b32.xlu0 %v4462, 92
        %v5736 = vpop.permute.xlu0 %5735
        %5737 = vrot.lane.b32.xlu0 %v4470, 92
        %v5738 = vpop.permute.xlu0 %5737
        %5739 = vrot.lane.b32.xlu0 %v4469, 92
        %v5740 = vpop.permute.xlu0 %5739
        %v5741 = vsel %vm1764, %v5736, %v5738
        %v5742 = vsel %vm1764, %v5738, %v5740
        %v5744 = vsel %vm487, %v5734, 0
        %v5747 = vsel %vm440, %v5741, 0
        %v5750 = vsel %vm440, %v5742, 0
        %v5753 = vsel %vm440, %v5740, 0
        %5755 = vmatprep.subr.bf16.mxu0 0
        %5756 = vmatpush1.bf16.msra.mxu0 0
        %5757 = vmatprep.subr.bf16.mxu0 0
        %5758 = vmatpush1.bf16.msra.mxu0 0
        %5759 = vmatprep.subr.bf16.mxu0 0
        %5760 = vmatpush1.bf16.msra.mxu0 0
        %5761 = vmatprep.subr.bf16.mxu0 0
        %5762 = vmatpush1.bf16.msra.mxu0 0
        %5763 = vmatprep.subr.bf16.mxu0 0
        %5764 = vmatpush1.bf16.msra.mxu0 0
        %5765 = vmatprep.subr.bf16.mxu0 0
        %5766 = vmatpush1.bf16.msra.mxu0 0
        %5767 = vmatprep.subr.bf16.mxu0 0
        %5768 = vmatpush1.bf16.msra.mxu0 0
        %5769 = vmatprep.subr.bf16.mxu0 %v5750
        %5770 = vmatpush1.bf16.msra.mxu0 %v5747
        %5771 = vmatprep.subr.bf16.mxu0 0
        %5772 = vmatpush2.bf16.msra.mxu0 0
        %5773 = vmatprep.subr.bf16.mxu0 0
        %5774 = vmatpush2.bf16.msra.mxu0 0
        %5775 = vmatprep.subr.bf16.mxu0 0
        %5776 = vmatpush2.bf16.msra.mxu0 0
        %5777 = vmatprep.subr.bf16.mxu0 0
        %5778 = vmatpush2.bf16.msra.mxu0 0
        %5779 = vmatprep.subr.bf16.mxu0 0
        %5780 = vmatpush2.bf16.msra.mxu0 0
        %5781 = vmatprep.subr.bf16.mxu0 0
        %5782 = vmatpush2.bf16.msra.mxu0 0
        %5783 = vmatprep.subr.bf16.mxu0 0
        %5784 = vmatpush2.bf16.msra.mxu0 0
        %5785 = vmatprep.subr.bf16.mxu0 0
        %5786 = vmatpush2.bf16.msra.mxu0 0
        %5787 = vmatprep.mubr.bf16.mxu0 0
        %5788 = vmatmul.mubr.bf16.gmra.mxu0 %v5744
        %v5789 = vpop.f32.mrf.mxu0
        %v5790 = vadd.f32 0.0, %v5789
        %v5791 = vpop.f32.mrf.mxu0
        %v5792 = vadd.f32 0.0, %v5791
        %v5793 = vpop.f32.mrf.mxu0
        %v5794 = vpop.f32.mrf.mxu0
        %5795 = vdwg.mxu0
        %5796 = vmatprep.subr.bf16.mxu0 0
        %5797 = vmatpush1.bf16.msra.mxu0 0
        %5798 = vmatprep.subr.bf16.mxu0 0
        %5799 = vmatpush1.bf16.msra.mxu0 0
        %5800 = vmatprep.subr.bf16.mxu0 0
        %5801 = vmatpush1.bf16.msra.mxu0 0
        %5802 = vmatprep.subr.bf16.mxu0 0
        %5803 = vmatpush1.bf16.msra.mxu0 0
        %5804 = vmatprep.subr.bf16.mxu0 0
        %5805 = vmatpush1.bf16.msra.mxu0 0
        %5806 = vmatprep.subr.bf16.mxu0 0
        %5807 = vmatpush1.bf16.msra.mxu0 0
        %5808 = vmatprep.subr.bf16.mxu0 0
        %5809 = vmatpush1.bf16.msra.mxu0 0
        %5810 = vmatprep.subr.bf16.mxu0 0
        %5811 = vmatpush1.bf16.msra.mxu0 %v5753
        %5812 = vmatprep.subr.bf16.mxu0 0
        %5813 = vmatpush2.bf16.msra.mxu0 0
        %5814 = vmatprep.subr.bf16.mxu0 0
        %5815 = vmatpush2.bf16.msra.mxu0 0
        %5816 = vmatprep.subr.bf16.mxu0 0
        %5817 = vmatpush2.bf16.msra.mxu0 0
        %5818 = vmatprep.subr.bf16.mxu0 0
        %5819 = vmatpush2.bf16.msra.mxu0 0
        %5820 = vmatprep.subr.bf16.mxu0 0
        %5821 = vmatpush2.bf16.msra.mxu0 0
        %5822 = vmatprep.subr.bf16.mxu0 0
        %5823 = vmatpush2.bf16.msra.mxu0 0
        %5824 = vmatprep.subr.bf16.mxu0 0
        %5825 = vmatpush2.bf16.msra.mxu0 0
        %5826 = vmatprep.subr.bf16.mxu0 0
        %5827 = vmatpush2.bf16.msra.mxu0 0
        %5828 = vmatprep.mubr.bf16.mxu0 0
        %5829 = vmatmul.mubr.bf16.gmra.mxu0 %v5744
        %v5830 = vpop.f32.mrf.mxu0
        %v5831 = vadd.f32 0.0, %v5830
        %v5832 = vpop.f32.mrf.mxu0
        %v5833 = vpop.f32.mrf.mxu0
        %v5834 = vpop.f32.mrf.mxu0
        %5835 = vdwg.mxu0
        %v5836 = vadd.f32 %v5730, %v5790
        %v5837 = vadd.f32 %v5731, %v5792
        %v5838 = vadd.f32 %v5732, %v5831
        %s5839 = scalar_lea.vmem %s2, 50
        %v5840 = vld [vmem:[%s5839] sm:$0x3]
        %5841 = vrot.lane.b32.xlu0 %v4347, 91
        %v5842 = vpop.permute.xlu0 %5841
        %5843 = vrot.lane.b32.xlu0 %v4355, 91
        %v5844 = vpop.permute.xlu0 %5843
        %5845 = vrot.lane.b32.xlu0 %v4354, 91
        %v5846 = vpop.permute.xlu0 %5845
        %v5847 = vsel %vm1977, %v5842, %v5844
        %v5848 = vsel %vm1977, %v5844, %v5846
        %v5850 = vsel %vm487, %v5840, 0
        %v5853 = vsel %vm440, %v5847, 0
        %v5856 = vsel %vm440, %v5848, 0
        %v5859 = vsel %vm440, %v5846, 0
        %5861 = vmatprep.subr.bf16.mxu0 0
        %5862 = vmatpush1.bf16.msra.mxu0 0
        %5863 = vmatprep.subr.bf16.mxu0 0
        %5864 = vmatpush1.bf16.msra.mxu0 0
        %5865 = vmatprep.subr.bf16.mxu0 0
        %5866 = vmatpush1.bf16.msra.mxu0 0
        %5867 = vmatprep.subr.bf16.mxu0 0
        %5868 = vmatpush1.bf16.msra.mxu0 0
        %5869 = vmatprep.subr.bf16.mxu0 0
        %5870 = vmatpush1.bf16.msra.mxu0 0
        %5871 = vmatprep.subr.bf16.mxu0 0
        %5872 = vmatpush1.bf16.msra.mxu0 0
        %5873 = vmatprep.subr.bf16.mxu0 0
        %5874 = vmatpush1.bf16.msra.mxu0 0
        %5875 = vmatprep.subr.bf16.mxu0 %v5856
        %5876 = vmatpush1.bf16.msra.mxu0 %v5853
        %5877 = vmatprep.subr.bf16.mxu0 0
        %5878 = vmatpush2.bf16.msra.mxu0 0
        %5879 = vmatprep.subr.bf16.mxu0 0
        %5880 = vmatpush2.bf16.msra.mxu0 0
        %5881 = vmatprep.subr.bf16.mxu0 0
        %5882 = vmatpush2.bf16.msra.mxu0 0
        %5883 = vmatprep.subr.bf16.mxu0 0
        %5884 = vmatpush2.bf16.msra.mxu0 0
        %5885 = vmatprep.subr.bf16.mxu0 0
        %5886 = vmatpush2.bf16.msra.mxu0 0
        %5887 = vmatprep.subr.bf16.mxu0 0
        %5888 = vmatpush2.bf16.msra.mxu0 0
        %5889 = vmatprep.subr.bf16.mxu0 0
        %5890 = vmatpush2.bf16.msra.mxu0 0
        %5891 = vmatprep.subr.bf16.mxu0 0
        %5892 = vmatpush2.bf16.msra.mxu0 0
        %5893 = vmatprep.mubr.bf16.mxu0 0
        %5894 = vmatmul.mubr.bf16.gmra.mxu0 %v5850
        %v5895 = vpop.f32.mrf.mxu0
        %v5896 = vadd.f32 0.0, %v5895
        %v5897 = vpop.f32.mrf.mxu0
        %v5898 = vadd.f32 0.0, %v5897
        %v5899 = vpop.f32.mrf.mxu0
        %v5900 = vpop.f32.mrf.mxu0
        %5901 = vdwg.mxu0
        %5902 = vmatprep.subr.bf16.mxu0 0
        %5903 = vmatpush1.bf16.msra.mxu0 0
        %5904 = vmatprep.subr.bf16.mxu0 0
        %5905 = vmatpush1.bf16.msra.mxu0 0
        %5906 = vmatprep.subr.bf16.mxu0 0
        %5907 = vmatpush1.bf16.msra.mxu0 0
        %5908 = vmatprep.subr.bf16.mxu0 0
        %5909 = vmatpush1.bf16.msra.mxu0 0
        %5910 = vmatprep.subr.bf16.mxu0 0
        %5911 = vmatpush1.bf16.msra.mxu0 0
        %5912 = vmatprep.subr.bf16.mxu0 0
        %5913 = vmatpush1.bf16.msra.mxu0 0
        %5914 = vmatprep.subr.bf16.mxu0 0
        %5915 = vmatpush1.bf16.msra.mxu0 0
        %5916 = vmatprep.subr.bf16.mxu0 0
        %5917 = vmatpush1.bf16.msra.mxu0 %v5859
        %5918 = vmatprep.subr.bf16.mxu0 0
        %5919 = vmatpush2.bf16.msra.mxu0 0
        %5920 = vmatprep.subr.bf16.mxu0 0
        %5921 = vmatpush2.bf16.msra.mxu0 0
        %5922 = vmatprep.subr.bf16.mxu0 0
        %5923 = vmatpush2.bf16.msra.mxu0 0
        %5924 = vmatprep.subr.bf16.mxu0 0
        %5925 = vmatpush2.bf16.msra.mxu0 0
        %5926 = vmatprep.subr.bf16.mxu0 0
        %5927 = vmatpush2.bf16.msra.mxu0 0
        %5928 = vmatprep.subr.bf16.mxu0 0
        %5929 = vmatpush2.bf16.msra.mxu0 0
        %5930 = vmatprep.subr.bf16.mxu0 0
        %5931 = vmatpush2.bf16.msra.mxu0 0
        %5932 = vmatprep.subr.bf16.mxu0 0
        %5933 = vmatpush2.bf16.msra.mxu0 0
        %5934 = vmatprep.mubr.bf16.mxu0 0
        %5935 = vmatmul.mubr.bf16.gmra.mxu0 %v5850
        %v5936 = vpop.f32.mrf.mxu0
        %v5937 = vadd.f32 0.0, %v5936
        %v5938 = vpop.f32.mrf.mxu0
        %v5939 = vpop.f32.mrf.mxu0
        %v5940 = vpop.f32.mrf.mxu0
        %5941 = vdwg.mxu0
        %v5942 = vadd.f32 %v5836, %v5896
        %v5943 = vadd.f32 %v5837, %v5898
        %v5944 = vadd.f32 %v5838, %v5937
        %s5945 = scalar_lea.vmem %s3, 50
        %v5946 = vld [vmem:[%s5945] sm:$0x3]
        %5947 = vrot.lane.b32.xlu0 %v4462, 91
        %v5948 = vpop.permute.xlu0 %5947
        %5949 = vrot.lane.b32.xlu0 %v4470, 91
        %v5950 = vpop.permute.xlu0 %5949
        %5951 = vrot.lane.b32.xlu0 %v4469, 91
        %v5952 = vpop.permute.xlu0 %5951
        %v5953 = vsel %vm1977, %v5948, %v5950
        %v5954 = vsel %vm1977, %v5950, %v5952
        %v5956 = vsel %vm487, %v5946, 0
        %v5959 = vsel %vm440, %v5953, 0
        %v5962 = vsel %vm440, %v5954, 0
        %v5965 = vsel %vm440, %v5952, 0
        %5967 = vmatprep.subr.bf16.mxu0 0
        %5968 = vmatpush1.bf16.msra.mxu0 0
        %5969 = vmatprep.subr.bf16.mxu0 0
        %5970 = vmatpush1.bf16.msra.mxu0 0
        %5971 = vmatprep.subr.bf16.mxu0 0
        %5972 = vmatpush1.bf16.msra.mxu0 0
        %5973 = vmatprep.subr.bf16.mxu0 0
        %5974 = vmatpush1.bf16.msra.mxu0 0
        %5975 = vmatprep.subr.bf16.mxu0 0
        %5976 = vmatpush1.bf16.msra.mxu0 0
        %5977 = vmatprep.subr.bf16.mxu0 0
        %5978 = vmatpush1.bf16.msra.mxu0 0
        %5979 = vmatprep.subr.bf16.mxu0 0
        %5980 = vmatpush1.bf16.msra.mxu0 0
        %5981 = vmatprep.subr.bf16.mxu0 %v5962
        %5982 = vmatpush1.bf16.msra.mxu0 %v5959
        %5983 = vmatprep.subr.bf16.mxu0 0
        %5984 = vmatpush2.bf16.msra.mxu0 0
        %5985 = vmatprep.subr.bf16.mxu0 0
        %5986 = vmatpush2.bf16.msra.mxu0 0
        %5987 = vmatprep.subr.bf16.mxu0 0
        %5988 = vmatpush2.bf16.msra.mxu0 0
        %5989 = vmatprep.subr.bf16.mxu0 0
        %5990 = vmatpush2.bf16.msra.mxu0 0
        %5991 = vmatprep.subr.bf16.mxu0 0
        %5992 = vmatpush2.bf16.msra.mxu0 0
        %5993 = vmatprep.subr.bf16.mxu0 0
        %5994 = vmatpush2.bf16.msra.mxu0 0
        %5995 = vmatprep.subr.bf16.mxu0 0
        %5996 = vmatpush2.bf16.msra.mxu0 0
        %5997 = vmatprep.subr.bf16.mxu0 0
        %5998 = vmatpush2.bf16.msra.mxu0 0
        %5999 = vmatprep.mubr.bf16.mxu0 0
        %6000 = vmatmul.mubr.bf16.gmra.mxu0 %v5956
        %v6001 = vpop.f32.mrf.mxu0
        %v6002 = vadd.f32 0.0, %v6001
        %v6003 = vpop.f32.mrf.mxu0
        %v6004 = vadd.f32 0.0, %v6003
        %v6005 = vpop.f32.mrf.mxu0
        %v6006 = vpop.f32.mrf.mxu0
        %6007 = vdwg.mxu0
        %6008 = vmatprep.subr.bf16.mxu0 0
        %6009 = vmatpush1.bf16.msra.mxu0 0
        %6010 = vmatprep.subr.bf16.mxu0 0
        %6011 = vmatpush1.bf16.msra.mxu0 0
        %6012 = vmatprep.subr.bf16.mxu0 0
        %6013 = vmatpush1.bf16.msra.mxu0 0
        %6014 = vmatprep.subr.bf16.mxu0 0
        %6015 = vmatpush1.bf16.msra.mxu0 0
        %6016 = vmatprep.subr.bf16.mxu0 0
        %6017 = vmatpush1.bf16.msra.mxu0 0
        %6018 = vmatprep.subr.bf16.mxu0 0
        %6019 = vmatpush1.bf16.msra.mxu0 0
        %6020 = vmatprep.subr.bf16.mxu0 0
        %6021 = vmatpush1.bf16.msra.mxu0 0
        %6022 = vmatprep.subr.bf16.mxu0 0
        %6023 = vmatpush1.bf16.msra.mxu0 %v5965
        %6024 = vmatprep.subr.bf16.mxu0 0
        %6025 = vmatpush2.bf16.msra.mxu0 0
        %6026 = vmatprep.subr.bf16.mxu0 0
        %6027 = vmatpush2.bf16.msra.mxu0 0
        %6028 = vmatprep.subr.bf16.mxu0 0
        %6029 = vmatpush2.bf16.msra.mxu0 0
        %6030 = vmatprep.subr.bf16.mxu0 0
        %6031 = vmatpush2.bf16.msra.mxu0 0
        %6032 = vmatprep.subr.bf16.mxu0 0
        %6033 = vmatpush2.bf16.msra.mxu0 0
        %6034 = vmatprep.subr.bf16.mxu0 0
        %6035 = vmatpush2.bf16.msra.mxu0 0
        %6036 = vmatprep.subr.bf16.mxu0 0
        %6037 = vmatpush2.bf16.msra.mxu0 0
        %6038 = vmatprep.subr.bf16.mxu0 0
        %6039 = vmatpush2.bf16.msra.mxu0 0
        %6040 = vmatprep.mubr.bf16.mxu0 0
        %6041 = vmatmul.mubr.bf16.gmra.mxu0 %v5956
        %v6042 = vpop.f32.mrf.mxu0
        %v6043 = vadd.f32 0.0, %v6042
        %v6044 = vpop.f32.mrf.mxu0
        %v6045 = vpop.f32.mrf.mxu0
        %v6046 = vpop.f32.mrf.mxu0
        %6047 = vdwg.mxu0
        %v6048 = vadd.f32 %v5942, %v6002
        %v6049 = vadd.f32 %v5943, %v6004
        %v6050 = vadd.f32 %v5944, %v6043
        %s6051 = scalar_lea.vmem %s2, 52
        %v6052 = vld [vmem:[%s6051] sm:$0x3]
        %6053 = vrot.lane.b32.xlu0 %v4347, 90
        %v6054 = vpop.permute.xlu0 %6053
        %6055 = vrot.lane.b32.xlu0 %v4355, 90
        %v6056 = vpop.permute.xlu0 %6055
        %6057 = vrot.lane.b32.xlu0 %v4354, 90
        %v6058 = vpop.permute.xlu0 %6057
        %v6059 = vsel %vm2190, %v6054, %v6056
        %v6060 = vsel %vm2190, %v6056, %v6058
        %v6062 = vsel %vm487, %v6052, 0
        %v6065 = vsel %vm440, %v6059, 0
        %v6068 = vsel %vm440, %v6060, 0
        %v6071 = vsel %vm440, %v6058, 0
        %6073 = vmatprep.subr.bf16.mxu0 0
        %6074 = vmatpush1.bf16.msra.mxu0 0
        %6075 = vmatprep.subr.bf16.mxu0 0
        %6076 = vmatpush1.bf16.msra.mxu0 0
        %6077 = vmatprep.subr.bf16.mxu0 0
        %6078 = vmatpush1.bf16.msra.mxu0 0
        %6079 = vmatprep.subr.bf16.mxu0 0
        %6080 = vmatpush1.bf16.msra.mxu0 0
        %6081 = vmatprep.subr.bf16.mxu0 0
        %6082 = vmatpush1.bf16.msra.mxu0 0
        %6083 = vmatprep.subr.bf16.mxu0 0
        %6084 = vmatpush1.bf16.msra.mxu0 0
        %6085 = vmatprep.subr.bf16.mxu0 0
        %6086 = vmatpush1.bf16.msra.mxu0 0
        %6087 = vmatprep.subr.bf16.mxu0 %v6068
        %6088 = vmatpush1.bf16.msra.mxu0 %v6065
        %6089 = vmatprep.subr.bf16.mxu0 0
        %6090 = vmatpush2.bf16.msra.mxu0 0
        %6091 = vmatprep.subr.bf16.mxu0 0
        %6092 = vmatpush2.bf16.msra.mxu0 0
        %6093 = vmatprep.subr.bf16.mxu0 0
        %6094 = vmatpush2.bf16.msra.mxu0 0
        %6095 = vmatprep.subr.bf16.mxu0 0
        %6096 = vmatpush2.bf16.msra.mxu0 0
        %6097 = vmatprep.subr.bf16.mxu0 0
        %6098 = vmatpush2.bf16.msra.mxu0 0
        %6099 = vmatprep.subr.bf16.mxu0 0
        %6100 = vmatpush2.bf16.msra.mxu0 0
        %6101 = vmatprep.subr.bf16.mxu0 0
        %6102 = vmatpush2.bf16.msra.mxu0 0
        %6103 = vmatprep.subr.bf16.mxu0 0
        %6104 = vmatpush2.bf16.msra.mxu0 0
        %6105 = vmatprep.mubr.bf16.mxu0 0
        %6106 = vmatmul.mubr.bf16.gmra.mxu0 %v6062
        %v6107 = vpop.f32.mrf.mxu0
        %v6108 = vadd.f32 0.0, %v6107
        %v6109 = vpop.f32.mrf.mxu0
        %v6110 = vadd.f32 0.0, %v6109
        %v6111 = vpop.f32.mrf.mxu0
        %v6112 = vpop.f32.mrf.mxu0
        %6113 = vdwg.mxu0
        %6114 = vmatprep.subr.bf16.mxu0 0
        %6115 = vmatpush1.bf16.msra.mxu0 0
        %6116 = vmatprep.subr.bf16.mxu0 0
        %6117 = vmatpush1.bf16.msra.mxu0 0
        %6118 = vmatprep.subr.bf16.mxu0 0
        %6119 = vmatpush1.bf16.msra.mxu0 0
        %6120 = vmatprep.subr.bf16.mxu0 0
        %6121 = vmatpush1.bf16.msra.mxu0 0
        %6122 = vmatprep.subr.bf16.mxu0 0
        %6123 = vmatpush1.bf16.msra.mxu0 0
        %6124 = vmatprep.subr.bf16.mxu0 0
        %6125 = vmatpush1.bf16.msra.mxu0 0
        %6126 = vmatprep.subr.bf16.mxu0 0
        %6127 = vmatpush1.bf16.msra.mxu0 0
        %6128 = vmatprep.subr.bf16.mxu0 0
        %6129 = vmatpush1.bf16.msra.mxu0 %v6071
        %6130 = vmatprep.subr.bf16.mxu0 0
        %6131 = vmatpush2.bf16.msra.mxu0 0
        %6132 = vmatprep.subr.bf16.mxu0 0
        %6133 = vmatpush2.bf16.msra.mxu0 0
        %6134 = vmatprep.subr.bf16.mxu0 0
        %6135 = vmatpush2.bf16.msra.mxu0 0
        %6136 = vmatprep.subr.bf16.mxu0 0
        %6137 = vmatpush2.bf16.msra.mxu0 0
        %6138 = vmatprep.subr.bf16.mxu0 0
        %6139 = vmatpush2.bf16.msra.mxu0 0
        %6140 = vmatprep.subr.bf16.mxu0 0
        %6141 = vmatpush2.bf16.msra.mxu0 0
        %6142 = vmatprep.subr.bf16.mxu0 0
        %6143 = vmatpush2.bf16.msra.mxu0 0
        %6144 = vmatprep.subr.bf16.mxu0 0
        %6145 = vmatpush2.bf16.msra.mxu0 0
        %6146 = vmatprep.mubr.bf16.mxu0 0
        %6147 = vmatmul.mubr.bf16.gmra.mxu0 %v6062
        %v6148 = vpop.f32.mrf.mxu0
        %v6149 = vadd.f32 0.0, %v6148
        %v6150 = vpop.f32.mrf.mxu0
        %v6151 = vpop.f32.mrf.mxu0
        %v6152 = vpop.f32.mrf.mxu0
        %6153 = vdwg.mxu0
        %v6154 = vadd.f32 %v6048, %v6108
        %v6155 = vadd.f32 %v6049, %v6110
        %v6156 = vadd.f32 %v6050, %v6149
        %s6157 = scalar_lea.vmem %s3, 52
        %v6158 = vld [vmem:[%s6157] sm:$0x3]
        %6159 = vrot.lane.b32.xlu0 %v4462, 90
        %v6160 = vpop.permute.xlu0 %6159
        %6161 = vrot.lane.b32.xlu0 %v4470, 90
        %v6162 = vpop.permute.xlu0 %6161
        %6163 = vrot.lane.b32.xlu0 %v4469, 90
        %v6164 = vpop.permute.xlu0 %6163
        %v6165 = vsel %vm2190, %v6160, %v6162
        %v6166 = vsel %vm2190, %v6162, %v6164
        %v6168 = vsel %vm487, %v6158, 0
        %v6171 = vsel %vm440, %v6165, 0
        %v6174 = vsel %vm440, %v6166, 0
        %v6177 = vsel %vm440, %v6164, 0
        %6179 = vmatprep.subr.bf16.mxu0 0
        %6180 = vmatpush1.bf16.msra.mxu0 0
        %6181 = vmatprep.subr.bf16.mxu0 0
        %6182 = vmatpush1.bf16.msra.mxu0 0
        %6183 = vmatprep.subr.bf16.mxu0 0
        %6184 = vmatpush1.bf16.msra.mxu0 0
        %6185 = vmatprep.subr.bf16.mxu0 0
        %6186 = vmatpush1.bf16.msra.mxu0 0
        %6187 = vmatprep.subr.bf16.mxu0 0
        %6188 = vmatpush1.bf16.msra.mxu0 0
        %6189 = vmatprep.subr.bf16.mxu0 0
        %6190 = vmatpush1.bf16.msra.mxu0 0
        %6191 = vmatprep.subr.bf16.mxu0 0
        %6192 = vmatpush1.bf16.msra.mxu0 0
        %6193 = vmatprep.subr.bf16.mxu0 %v6174
        %6194 = vmatpush1.bf16.msra.mxu0 %v6171
        %6195 = vmatprep.subr.bf16.mxu0 0
        %6196 = vmatpush2.bf16.msra.mxu0 0
        %6197 = vmatprep.subr.bf16.mxu0 0
        %6198 = vmatpush2.bf16.msra.mxu0 0
        %6199 = vmatprep.subr.bf16.mxu0 0
        %6200 = vmatpush2.bf16.msra.mxu0 0
        %6201 = vmatprep.subr.bf16.mxu0 0
        %6202 = vmatpush2.bf16.msra.mxu0 0
        %6203 = vmatprep.subr.bf16.mxu0 0
        %6204 = vmatpush2.bf16.msra.mxu0 0
        %6205 = vmatprep.subr.bf16.mxu0 0
        %6206 = vmatpush2.bf16.msra.mxu0 0
        %6207 = vmatprep.subr.bf16.mxu0 0
        %6208 = vmatpush2.bf16.msra.mxu0 0
        %6209 = vmatprep.subr.bf16.mxu0 0
        %6210 = vmatpush2.bf16.msra.mxu0 0
        %6211 = vmatprep.mubr.bf16.mxu0 0
        %6212 = vmatmul.mubr.bf16.gmra.mxu0 %v6168
        %v6213 = vpop.f32.mrf.mxu0
        %v6214 = vadd.f32 0.0, %v6213
        %v6215 = vpop.f32.mrf.mxu0
        %v6216 = vadd.f32 0.0, %v6215
        %v6217 = vpop.f32.mrf.mxu0
        %v6218 = vpop.f32.mrf.mxu0
        %6219 = vdwg.mxu0
        %6220 = vmatprep.subr.bf16.mxu0 0
        %6221 = vmatpush1.bf16.msra.mxu0 0
        %6222 = vmatprep.subr.bf16.mxu0 0
        %6223 = vmatpush1.bf16.msra.mxu0 0
        %6224 = vmatprep.subr.bf16.mxu0 0
        %6225 = vmatpush1.bf16.msra.mxu0 0
        %6226 = vmatprep.subr.bf16.mxu0 0
        %6227 = vmatpush1.bf16.msra.mxu0 0
        %6228 = vmatprep.subr.bf16.mxu0 0
        %6229 = vmatpush1.bf16.msra.mxu0 0
        %6230 = vmatprep.subr.bf16.mxu0 0
        %6231 = vmatpush1.bf16.msra.mxu0 0
        %6232 = vmatprep.subr.bf16.mxu0 0
        %6233 = vmatpush1.bf16.msra.mxu0 0
        %6234 = vmatprep.subr.bf16.mxu0 0
        %6235 = vmatpush1.bf16.msra.mxu0 %v6177
        %6236 = vmatprep.subr.bf16.mxu0 0
        %6237 = vmatpush2.bf16.msra.mxu0 0
        %6238 = vmatprep.subr.bf16.mxu0 0
        %6239 = vmatpush2.bf16.msra.mxu0 0
        %6240 = vmatprep.subr.bf16.mxu0 0
        %6241 = vmatpush2.bf16.msra.mxu0 0
        %6242 = vmatprep.subr.bf16.mxu0 0
        %6243 = vmatpush2.bf16.msra.mxu0 0
        %6244 = vmatprep.subr.bf16.mxu0 0
        %6245 = vmatpush2.bf16.msra.mxu0 0
        %6246 = vmatprep.subr.bf16.mxu0 0
        %6247 = vmatpush2.bf16.msra.mxu0 0
        %6248 = vmatprep.subr.bf16.mxu0 0
        %6249 = vmatpush2.bf16.msra.mxu0 0
        %6250 = vmatprep.subr.bf16.mxu0 0
        %6251 = vmatpush2.bf16.msra.mxu0 0
        %6252 = vmatprep.mubr.bf16.mxu0 0
        %6253 = vmatmul.mubr.bf16.gmra.mxu0 %v6168
        %v6254 = vpop.f32.mrf.mxu0
        %v6255 = vadd.f32 0.0, %v6254
        %v6256 = vpop.f32.mrf.mxu0
        %v6257 = vpop.f32.mrf.mxu0
        %v6258 = vpop.f32.mrf.mxu0
        %6259 = vdwg.mxu0
        %v6260 = vadd.f32 %v6154, %v6214
        %v6261 = vadd.f32 %v6155, %v6216
        %v6262 = vadd.f32 %v6156, %v6255
        %6264 = vset.pattern.permute.xlu0 0
        %6265 = vperm.xlu0 %6264, %v435
        %v6266 = vpop.permute.xlu0 %6265
        %v6268 = vmul.f32 %v6260, %v6266
        %v6269 = vmul.f32 %v6261, %v6266
        %v6270 = vmul.f32 %v6262, %v6266
        %6272 = vset.pattern.permute.xlu0 0
        %6273 = vperm.xlu0 %6272, %v436
        %v6274 = vpop.permute.xlu0 %6273
        %v6276 = vadd.f32 %v6268, %v6274
        %v6277 = vadd.f32 %v6269, %v6274
        %v6278 = vadd.f32 %v6270, %v6274
        %v6279 = vmax.f32 %v6276, 0.0
        %v6280 = vmax.f32 %v6277, 0.0
        %v6281 = vmax.f32 %v6278, 0.0
        %s6282 = sadd.s32 %s434, %s456
        %s6283 = ssub.s32 %s6282, 1
        %p6284 = scmp.ge.s32.totalorder %s6283, 0
        %p6285 = scmp.lt.s32.totalorder %s6283, 8
        %p6286 = pnand %p6284, %p6285
        %p6287 = pneg %p6286
        %v6289 = vlaneseq
        %v6290 = vshrl.u32 %v6289, 7
        %v6291 = vsub.s32 0, %v6290
        %v6292 = vrot.slane %v439, %v6291
        %v6293 = vlaneseq
        %v6294 = vshrl.u32 %v6293, 7
        %v6295 = vsub.s32 1, %v6294
        %v6296 = vrot.slane %v439, %v6295
        %v6297 = vlaneseq
        %v6298 = vshrl.u32 %v6297, 7
        %v6299 = vsub.s32 2, %v6298
        %v6300 = vrot.slane %v439, %v6299
        %v6304 = vmul.f32 %v6279, %v6292
        %v6305 = vmul.f32 %v6280, %v6296
        %v6306 = vmul.f32 %v6281, %v6300
        %s6307 = scalar_select %p6287, 1, 0
        %v6308 = vstv %s6307
        %vm6309 = vcmp.eq.s32.totalorder %v6308, 1
        %v6310 = vsel %vm6309, %v6304, 0.0
        %v6311 = vsel %vm6309, %v6305, 0.0
        %v6312 = vsel %vm6309, %v6306, 0.0
        %v6313 = vpack.c.bf16 %v6310, %v6310
        %v6314 = vpack.c.bf16 %v6311, %v6311
        %v6315 = vpack.c.bf16 %v6312, %v6312
        %v6319 = vcombine.low %v6313, %v6314
        %v6321 = vunpack.c.l.s4 1983009808
        %v6322 = vunpack.c.0.s8 %v6321
        %v6323 = vlaneseq
        %v6324 = vshrl.u32 %v6323, 7
        %v6325 = vsub.s32 %v6322, %v6324
        %v6326 = vrot.slane %v6319, %v6325
        %v6328 = vunpack.c.l.s4 1983009808
        %v6329 = vunpack.c.0.s8 %v6328
        %v6330 = vlaneseq
        %v6331 = vshrl.u32 %v6330, 7
        %v6332 = vsub.s32 %v6329, %v6331
        %v6333 = vrot.slane %v6315, %v6332
        %v6334 = vcombine.low %v6326, %v6333
        %s6336 = smul.addr %s461, 2
        %s6337 = scalar_lea.vmem [#allocation2], %s6336
        %vm6338 = vcmask 553988
        %vm6339 = vmor %vm6338, %vm442
        %6340 = vst.msk [vmem:[%s6337] sm:$0x3f] %vm6339, %v6334
      $region65: #{upsample_block_forward.1} parent=59 // loop_footer
        %s460 = sadd.s32 1, %s456
      $region66: #{upsample_block_forward.1} parent=59 // loop_footer_branch
        %455 = sbr.rel target = $region62
      $region67: #{upsample_block_forward.1} parent=59 // loop_exit
        _
      loop: start=0, step=1, limit=8
      $region68: #{upsample_block_forward.1} parent=59 // loop_pre_header
        _
      $region69: #{upsample_block_forward.1} parent=59 // loop_header
        %s6342 = sphi 0, %s6346
        %p6343 = scmp.ge.s32.totalorder %s6342, 8
      $region70: #{upsample_block_forward.1} parent=59 // loop_header_branch
        %6345 = sbr.rel (%p6343) target = $region74
      $region71: #{upsample_block_forward.1} parent=59 // loop_body
        %s6347 = smul.u32 %s6342, 3
        %s6348 = smul.addr %s6347, 2
        %s6349 = scalar_lea.vmem [#allocation2], %s6348
        %v6350 = vld [vmem:[%s6349] sm:$0x3f]
        %v6351 = vld [vmem:[%s4] sm:$0x3]
        %s6352 = scalar_lea.vmem %s4, 2
        %v6353 = vld [vmem:[%s6352] sm:$0x3]
        %v6355 = vcombine.high %v6350, %v6350
        %v6357 = vunpack.c.l.s4 1983009808
        %v6358 = vunpack.c.0.s8 %v6357
        %v6359 = vlaneseq
        %v6360 = vshrl.u32 %v6359, 7
        %v6361 = vsub.s32 %v6358, %v6360
        %v6362 = vrot.slane %v6350, %v6361
        %v6364 = vunpack.c.l.s4 1983009808
        %v6365 = vunpack.c.0.s8 %v6364
        %v6366 = vlaneseq
        %v6367 = vshrl.u32 %v6366, 7
        %v6368 = vsub.s32 %v6365, %v6367
        %v6369 = vrot.slane %v6355, %v6368
        %v6370 = vcombine.high %v6362, %v6362
        %6371 = vrot.lane.b32.xlu0 %v6362, 127
        %v6372 = vpop.permute.xlu0 %6371
        %6373 = vrot.lane.b32.xlu0 %v6370, 127
        %v6374 = vpop.permute.xlu0 %6373
        %6375 = vrot.lane.b32.xlu0 %v6369, 127
        %v6376 = vpop.permute.xlu0 %6375
        %vm6377 = vcmask 1039360
        %v6378 = vsel %vm6377, %v6372, %v6374
        %v6379 = vsel %vm6377, %v6374, %v6376
        %vm6380 = vcmask 31744
        %v6382 = vsel %vm6380, %v6353, 0
        %v6385 = vsel %vm440, %v6378, 0
        %v6388 = vsel %vm440, %v6379, 0
        %v6391 = vsel %vm440, %v6376, 0
        %6393 = vmatprep.subr.bf16.mxu0 0
        %6394 = vmatpush1.bf16.msra.mxu0 0
        %6395 = vmatprep.subr.bf16.mxu0 0
        %6396 = vmatpush1.bf16.msra.mxu0 0
        %6397 = vmatprep.subr.bf16.mxu0 0
        %6398 = vmatpush1.bf16.msra.mxu0 0
        %6399 = vmatprep.subr.bf16.mxu0 0
        %6400 = vmatpush1.bf16.msra.mxu0 0
        %6401 = vmatprep.subr.bf16.mxu0 0
        %6402 = vmatpush1.bf16.msra.mxu0 0
        %6403 = vmatprep.subr.bf16.mxu0 0
        %6404 = vmatpush1.bf16.msra.mxu0 0
        %6405 = vmatprep.subr.bf16.mxu0 0
        %6406 = vmatpush1.bf16.msra.mxu0 0
        %6407 = vmatprep.subr.bf16.mxu0 %v6388
        %6408 = vmatpush1.bf16.msra.mxu0 %v6385
        %6409 = vmatprep.subr.bf16.mxu0 0
        %6410 = vmatpush2.bf16.msra.mxu0 0
        %6411 = vmatprep.subr.bf16.mxu0 0
        %6412 = vmatpush2.bf16.msra.mxu0 0
        %6413 = vmatprep.subr.bf16.mxu0 0
        %6414 = vmatpush2.bf16.msra.mxu0 0
        %6415 = vmatprep.subr.bf16.mxu0 0
        %6416 = vmatpush2.bf16.msra.mxu0 0
        %6417 = vmatprep.subr.bf16.mxu0 0
        %6418 = vmatpush2.bf16.msra.mxu0 0
        %6419 = vmatprep.subr.bf16.mxu0 0
        %6420 = vmatpush2.bf16.msra.mxu0 0
        %6421 = vmatprep.subr.bf16.mxu0 0
        %6422 = vmatpush2.bf16.msra.mxu0 0
        %6423 = vmatprep.subr.bf16.mxu0 0
        %6424 = vmatpush2.bf16.msra.mxu0 0
        %6425 = vmatprep.mubr.bf16.mxu0 0
        %6426 = vmatmul.mubr.bf16.gmra.mxu0 %v6382
        %v6427 = vpop.f32.mrf.mxu0
        %v6428 = vadd.f32 0.0, %v6427
        %v6429 = vpop.f32.mrf.mxu0
        %v6430 = vadd.f32 0.0, %v6429
        %v6431 = vpop.f32.mrf.mxu0
        %v6432 = vpop.f32.mrf.mxu0
        %6433 = vdwg.mxu0
        %6434 = vmatprep.subr.bf16.mxu0 0
        %6435 = vmatpush1.bf16.msra.mxu0 0
        %6436 = vmatprep.subr.bf16.mxu0 0
        %6437 = vmatpush1.bf16.msra.mxu0 0
        %6438 = vmatprep.subr.bf16.mxu0 0
        %6439 = vmatpush1.bf16.msra.mxu0 0
        %6440 = vmatprep.subr.bf16.mxu0 0
        %6441 = vmatpush1.bf16.msra.mxu0 0
        %6442 = vmatprep.subr.bf16.mxu0 0
        %6443 = vmatpush1.bf16.msra.mxu0 0
        %6444 = vmatprep.subr.bf16.mxu0 0
        %6445 = vmatpush1.bf16.msra.mxu0 0
        %6446 = vmatprep.subr.bf16.mxu0 0
        %6447 = vmatpush1.bf16.msra.mxu0 0
        %6448 = vmatprep.subr.bf16.mxu0 0
        %6449 = vmatpush1.bf16.msra.mxu0 %v6391
        %6450 = vmatprep.subr.bf16.mxu0 0
        %6451 = vmatpush2.bf16.msra.mxu0 0
        %6452 = vmatprep.subr.bf16.mxu0 0
        %6453 = vmatpush2.bf16.msra.mxu0 0
        %6454 = vmatprep.subr.bf16.mxu0 0
        %6455 = vmatpush2.bf16.msra.mxu0 0
        %6456 = vmatprep.subr.bf16.mxu0 0
        %6457 = vmatpush2.bf16.msra.mxu0 0
        %6458 = vmatprep.subr.bf16.mxu0 0
        %6459 = vmatpush2.bf16.msra.mxu0 0
        %6460 = vmatprep.subr.bf16.mxu0 0
        %6461 = vmatpush2.bf16.msra.mxu0 0
        %6462 = vmatprep.subr.bf16.mxu0 0
        %6463 = vmatpush2.bf16.msra.mxu0 0
        %6464 = vmatprep.subr.bf16.mxu0 0
        %6465 = vmatpush2.bf16.msra.mxu0 0
        %6466 = vmatprep.mubr.bf16.mxu0 0
        %6467 = vmatmul.mubr.bf16.gmra.mxu0 %v6382
        %v6468 = vpop.f32.mrf.mxu0
        %v6469 = vadd.f32 0.0, %v6468
        %v6470 = vpop.f32.mrf.mxu0
        %v6471 = vpop.f32.mrf.mxu0
        %v6472 = vpop.f32.mrf.mxu0
        %6473 = vdwg.mxu0
        %v6475 = vsel %vm6380, %v6351, 0
        %v6478 = vsel %vm440, %v6362, 0
        %v6481 = vsel %vm440, %v6370, 0
        %v6484 = vsel %vm440, %v6369, 0
        %6486 = vmatprep.subr.bf16.mxu0 0
        %6487 = vmatpush1.bf16.msra.mxu0 0
        %6488 = vmatprep.subr.bf16.mxu0 0
        %6489 = vmatpush1.bf16.msra.mxu0 0
        %6490 = vmatprep.subr.bf16.mxu0 0
        %6491 = vmatpush1.bf16.msra.mxu0 0
        %6492 = vmatprep.subr.bf16.mxu0 0
        %6493 = vmatpush1.bf16.msra.mxu0 0
        %6494 = vmatprep.subr.bf16.mxu0 0
        %6495 = vmatpush1.bf16.msra.mxu0 0
        %6496 = vmatprep.subr.bf16.mxu0 0
        %6497 = vmatpush1.bf16.msra.mxu0 0
        %6498 = vmatprep.subr.bf16.mxu0 0
        %6499 = vmatpush1.bf16.msra.mxu0 0
        %6500 = vmatprep.subr.bf16.mxu0 %v6481
        %6501 = vmatpush1.bf16.msra.mxu0 %v6478
        %6502 = vmatprep.subr.bf16.mxu0 0
        %6503 = vmatpush2.bf16.msra.mxu0 0
        %6504 = vmatprep.subr.bf16.mxu0 0
        %6505 = vmatpush2.bf16.msra.mxu0 0
        %6506 = vmatprep.subr.bf16.mxu0 0
        %6507 = vmatpush2.bf16.msra.mxu0 0
        %6508 = vmatprep.subr.bf16.mxu0 0
        %6509 = vmatpush2.bf16.msra.mxu0 0
        %6510 = vmatprep.subr.bf16.mxu0 0
        %6511 = vmatpush2.bf16.msra.mxu0 0
        %6512 = vmatprep.subr.bf16.mxu0 0
        %6513 = vmatpush2.bf16.msra.mxu0 0
        %6514 = vmatprep.subr.bf16.mxu0 0
        %6515 = vmatpush2.bf16.msra.mxu0 0
        %6516 = vmatprep.subr.bf16.mxu0 0
        %6517 = vmatpush2.bf16.msra.mxu0 0
        %6518 = vmatprep.mubr.bf16.mxu0 0
        %6519 = vmatmul.mubr.bf16.gmra.mxu0 %v6475
        %v6520 = vpop.f32.mrf.mxu0
        %v6521 = vadd.f32 %v6428, %v6520
        %v6522 = vpop.f32.mrf.mxu0
        %v6523 = vadd.f32 %v6430, %v6522
        %v6524 = vpop.f32.mrf.mxu0
        %v6525 = vpop.f32.mrf.mxu0
        %6526 = vdwg.mxu0
        %6527 = vmatprep.subr.bf16.mxu0 0
        %6528 = vmatpush1.bf16.msra.mxu0 0
        %6529 = vmatprep.subr.bf16.mxu0 0
        %6530 = vmatpush1.bf16.msra.mxu0 0
        %6531 = vmatprep.subr.bf16.mxu0 0
        %6532 = vmatpush1.bf16.msra.mxu0 0
        %6533 = vmatprep.subr.bf16.mxu0 0
        %6534 = vmatpush1.bf16.msra.mxu0 0
        %6535 = vmatprep.subr.bf16.mxu0 0
        %6536 = vmatpush1.bf16.msra.mxu0 0
        %6537 = vmatprep.subr.bf16.mxu0 0
        %6538 = vmatpush1.bf16.msra.mxu0 0
        %6539 = vmatprep.subr.bf16.mxu0 0
        %6540 = vmatpush1.bf16.msra.mxu0 0
        %6541 = vmatprep.subr.bf16.mxu0 0
        %6542 = vmatpush1.bf16.msra.mxu0 %v6484
        %6543 = vmatprep.subr.bf16.mxu0 0
        %6544 = vmatpush2.bf16.msra.mxu0 0
        %6545 = vmatprep.subr.bf16.mxu0 0
        %6546 = vmatpush2.bf16.msra.mxu0 0
        %6547 = vmatprep.subr.bf16.mxu0 0
        %6548 = vmatpush2.bf16.msra.mxu0 0
        %6549 = vmatprep.subr.bf16.mxu0 0
        %6550 = vmatpush2.bf16.msra.mxu0 0
        %6551 = vmatprep.subr.bf16.mxu0 0
        %6552 = vmatpush2.bf16.msra.mxu0 0
        %6553 = vmatprep.subr.bf16.mxu0 0
        %6554 = vmatpush2.bf16.msra.mxu0 0
        %6555 = vmatprep.subr.bf16.mxu0 0
        %6556 = vmatpush2.bf16.msra.mxu0 0
        %6557 = vmatprep.subr.bf16.mxu0 0
        %6558 = vmatpush2.bf16.msra.mxu0 0
        %6559 = vmatprep.mubr.bf16.mxu0 0
        %6560 = vmatmul.mubr.bf16.gmra.mxu0 %v6475
        %v6561 = vpop.f32.mrf.mxu0
        %v6562 = vadd.f32 %v6469, %v6561
        %v6563 = vpop.f32.mrf.mxu0
        %v6564 = vpop.f32.mrf.mxu0
        %v6565 = vpop.f32.mrf.mxu0
        %6566 = vdwg.mxu0
        %s6567 = scalar_lea.vmem %s4, 4
        %v6568 = vld [vmem:[%s6567] sm:$0x3]
        %6569 = vrot.lane.b32.xlu0 %v6362, 126
        %v6570 = vpop.permute.xlu0 %6569
        %6571 = vrot.lane.b32.xlu0 %v6370, 126
        %v6572 = vpop.permute.xlu0 %6571
        %6573 = vrot.lane.b32.xlu0 %v6369, 126
        %v6574 = vpop.permute.xlu0 %6573
        %vm6575 = vcmask 1031168
        %v6576 = vsel %vm6575, %v6570, %v6572
        %v6577 = vsel %vm6575, %v6572, %v6574
        %v6579 = vsel %vm6380, %v6568, 0
        %v6582 = vsel %vm440, %v6576, 0
        %v6585 = vsel %vm440, %v6577, 0
        %v6588 = vsel %vm440, %v6574, 0
        %6590 = vmatprep.subr.bf16.mxu0 0
        %6591 = vmatpush1.bf16.msra.mxu0 0
        %6592 = vmatprep.subr.bf16.mxu0 0
        %6593 = vmatpush1.bf16.msra.mxu0 0
        %6594 = vmatprep.subr.bf16.mxu0 0
        %6595 = vmatpush1.bf16.msra.mxu0 0
        %6596 = vmatprep.subr.bf16.mxu0 0
        %6597 = vmatpush1.bf16.msra.mxu0 0
        %6598 = vmatprep.subr.bf16.mxu0 0
        %6599 = vmatpush1.bf16.msra.mxu0 0
        %6600 = vmatprep.subr.bf16.mxu0 0
        %6601 = vmatpush1.bf16.msra.mxu0 0
        %6602 = vmatprep.subr.bf16.mxu0 0
        %6603 = vmatpush1.bf16.msra.mxu0 0
        %6604 = vmatprep.subr.bf16.mxu0 %v6585
        %6605 = vmatpush1.bf16.msra.mxu0 %v6582
        %6606 = vmatprep.subr.bf16.mxu0 0
        %6607 = vmatpush2.bf16.msra.mxu0 0
        %6608 = vmatprep.subr.bf16.mxu0 0
        %6609 = vmatpush2.bf16.msra.mxu0 0
        %6610 = vmatprep.subr.bf16.mxu0 0
        %6611 = vmatpush2.bf16.msra.mxu0 0
        %6612 = vmatprep.subr.bf16.mxu0 0
        %6613 = vmatpush2.bf16.msra.mxu0 0
        %6614 = vmatprep.subr.bf16.mxu0 0
        %6615 = vmatpush2.bf16.msra.mxu0 0
        %6616 = vmatprep.subr.bf16.mxu0 0
        %6617 = vmatpush2.bf16.msra.mxu0 0
        %6618 = vmatprep.subr.bf16.mxu0 0
        %6619 = vmatpush2.bf16.msra.mxu0 0
        %6620 = vmatprep.subr.bf16.mxu0 0
        %6621 = vmatpush2.bf16.msra.mxu0 0
        %6622 = vmatprep.mubr.bf16.mxu0 0
        %6623 = vmatmul.mubr.bf16.gmra.mxu0 %v6579
        %v6624 = vpop.f32.mrf.mxu0
        %v6625 = vadd.f32 0.0, %v6624
        %v6626 = vpop.f32.mrf.mxu0
        %v6627 = vadd.f32 0.0, %v6626
        %v6628 = vpop.f32.mrf.mxu0
        %v6629 = vpop.f32.mrf.mxu0
        %6630 = vdwg.mxu0
        %6631 = vmatprep.subr.bf16.mxu0 0
        %6632 = vmatpush1.bf16.msra.mxu0 0
        %6633 = vmatprep.subr.bf16.mxu0 0
        %6634 = vmatpush1.bf16.msra.mxu0 0
        %6635 = vmatprep.subr.bf16.mxu0 0
        %6636 = vmatpush1.bf16.msra.mxu0 0
        %6637 = vmatprep.subr.bf16.mxu0 0
        %6638 = vmatpush1.bf16.msra.mxu0 0
        %6639 = vmatprep.subr.bf16.mxu0 0
        %6640 = vmatpush1.bf16.msra.mxu0 0
        %6641 = vmatprep.subr.bf16.mxu0 0
        %6642 = vmatpush1.bf16.msra.mxu0 0
        %6643 = vmatprep.subr.bf16.mxu0 0
        %6644 = vmatpush1.bf16.msra.mxu0 0
        %6645 = vmatprep.subr.bf16.mxu0 0
        %6646 = vmatpush1.bf16.msra.mxu0 %v6588
        %6647 = vmatprep.subr.bf16.mxu0 0
        %6648 = vmatpush2.bf16.msra.mxu0 0
        %6649 = vmatprep.subr.bf16.mxu0 0
        %6650 = vmatpush2.bf16.msra.mxu0 0
        %6651 = vmatprep.subr.bf16.mxu0 0
        %6652 = vmatpush2.bf16.msra.mxu0 0
        %6653 = vmatprep.subr.bf16.mxu0 0
        %6654 = vmatpush2.bf16.msra.mxu0 0
        %6655 = vmatprep.subr.bf16.mxu0 0
        %6656 = vmatpush2.bf16.msra.mxu0 0
        %6657 = vmatprep.subr.bf16.mxu0 0
        %6658 = vmatpush2.bf16.msra.mxu0 0
        %6659 = vmatprep.subr.bf16.mxu0 0
        %6660 = vmatpush2.bf16.msra.mxu0 0
        %6661 = vmatprep.subr.bf16.mxu0 0
        %6662 = vmatpush2.bf16.msra.mxu0 0
        %6663 = vmatprep.mubr.bf16.mxu0 0
        %6664 = vmatmul.mubr.bf16.gmra.mxu0 %v6579
        %v6665 = vpop.f32.mrf.mxu0
        %v6666 = vadd.f32 0.0, %v6665
        %v6667 = vpop.f32.mrf.mxu0
        %v6668 = vpop.f32.mrf.mxu0
        %v6669 = vpop.f32.mrf.mxu0
        %6670 = vdwg.mxu0
        %v6671 = vadd.f32 %v6521, %v6625
        %v6672 = vadd.f32 %v6523, %v6627
        %v6673 = vadd.f32 %v6562, %v6666
        %s6674 = scalar_lea.vmem %s4, 6
        %v6675 = vld [vmem:[%s6674] sm:$0x3]
        %6676 = vrot.lane.b32.xlu0 %v6362, 110
        %v6677 = vpop.permute.xlu0 %6676
        %6678 = vrot.lane.b32.xlu0 %v6370, 110
        %v6679 = vpop.permute.xlu0 %6678
        %6680 = vrot.lane.b32.xlu0 %v6369, 110
        %v6681 = vpop.permute.xlu0 %6680
        %vm6682 = vcmask 900096
        %v6683 = vsel %vm6682, %v6677, %v6679
        %v6684 = vsel %vm6682, %v6679, %v6681
        %v6686 = vsel %vm6380, %v6675, 0
        %v6689 = vsel %vm440, %v6683, 0
        %v6692 = vsel %vm440, %v6684, 0
        %v6695 = vsel %vm440, %v6681, 0
        %6697 = vmatprep.subr.bf16.mxu0 0
        %6698 = vmatpush1.bf16.msra.mxu0 0
        %6699 = vmatprep.subr.bf16.mxu0 0
        %6700 = vmatpush1.bf16.msra.mxu0 0
        %6701 = vmatprep.subr.bf16.mxu0 0
        %6702 = vmatpush1.bf16.msra.mxu0 0
        %6703 = vmatprep.subr.bf16.mxu0 0
        %6704 = vmatpush1.bf16.msra.mxu0 0
        %6705 = vmatprep.subr.bf16.mxu0 0
        %6706 = vmatpush1.bf16.msra.mxu0 0
        %6707 = vmatprep.subr.bf16.mxu0 0
        %6708 = vmatpush1.bf16.msra.mxu0 0
        %6709 = vmatprep.subr.bf16.mxu0 0
        %6710 = vmatpush1.bf16.msra.mxu0 0
        %6711 = vmatprep.subr.bf16.mxu0 %v6692
        %6712 = vmatpush1.bf16.msra.mxu0 %v6689
        %6713 = vmatprep.subr.bf16.mxu0 0
        %6714 = vmatpush2.bf16.msra.mxu0 0
        %6715 = vmatprep.subr.bf16.mxu0 0
        %6716 = vmatpush2.bf16.msra.mxu0 0
        %6717 = vmatprep.subr.bf16.mxu0 0
        %6718 = vmatpush2.bf16.msra.mxu0 0
        %6719 = vmatprep.subr.bf16.mxu0 0
        %6720 = vmatpush2.bf16.msra.mxu0 0
        %6721 = vmatprep.subr.bf16.mxu0 0
        %6722 = vmatpush2.bf16.msra.mxu0 0
        %6723 = vmatprep.subr.bf16.mxu0 0
        %6724 = vmatpush2.bf16.msra.mxu0 0
        %6725 = vmatprep.subr.bf16.mxu0 0
        %6726 = vmatpush2.bf16.msra.mxu0 0
        %6727 = vmatprep.subr.bf16.mxu0 0
        %6728 = vmatpush2.bf16.msra.mxu0 0
        %6729 = vmatprep.mubr.bf16.mxu0 0
        %6730 = vmatmul.mubr.bf16.gmra.mxu0 %v6686
        %v6731 = vpop.f32.mrf.mxu0
        %v6732 = vadd.f32 0.0, %v6731
        %v6733 = vpop.f32.mrf.mxu0
        %v6734 = vadd.f32 0.0, %v6733
        %v6735 = vpop.f32.mrf.mxu0
        %v6736 = vpop.f32.mrf.mxu0
        %6737 = vdwg.mxu0
        %6738 = vmatprep.subr.bf16.mxu0 0
        %6739 = vmatpush1.bf16.msra.mxu0 0
        %6740 = vmatprep.subr.bf16.mxu0 0
        %6741 = vmatpush1.bf16.msra.mxu0 0
        %6742 = vmatprep.subr.bf16.mxu0 0
        %6743 = vmatpush1.bf16.msra.mxu0 0
        %6744 = vmatprep.subr.bf16.mxu0 0
        %6745 = vmatpush1.bf16.msra.mxu0 0
        %6746 = vmatprep.subr.bf16.mxu0 0
        %6747 = vmatpush1.bf16.msra.mxu0 0
        %6748 = vmatprep.subr.bf16.mxu0 0
        %6749 = vmatpush1.bf16.msra.mxu0 0
        %6750 = vmatprep.subr.bf16.mxu0 0
        %6751 = vmatpush1.bf16.msra.mxu0 0
        %6752 = vmatprep.subr.bf16.mxu0 0
        %6753 = vmatpush1.bf16.msra.mxu0 %v6695
        %6754 = vmatprep.subr.bf16.mxu0 0
        %6755 = vmatpush2.bf16.msra.mxu0 0
        %6756 = vmatprep.subr.bf16.mxu0 0
        %6757 = vmatpush2.bf16.msra.mxu0 0
        %6758 = vmatprep.subr.bf16.mxu0 0
        %6759 = vmatpush2.bf16.msra.mxu0 0
        %6760 = vmatprep.subr.bf16.mxu0 0
        %6761 = vmatpush2.bf16.msra.mxu0 0
        %6762 = vmatprep.subr.bf16.mxu0 0
        %6763 = vmatpush2.bf16.msra.mxu0 0
        %6764 = vmatprep.subr.bf16.mxu0 0
        %6765 = vmatpush2.bf16.msra.mxu0 0
        %6766 = vmatprep.subr.bf16.mxu0 0
        %6767 = vmatpush2.bf16.msra.mxu0 0
        %6768 = vmatprep.subr.bf16.mxu0 0
        %6769 = vmatpush2.bf16.msra.mxu0 0
        %6770 = vmatprep.mubr.bf16.mxu0 0
        %6771 = vmatmul.mubr.bf16.gmra.mxu0 %v6686
        %v6772 = vpop.f32.mrf.mxu0
        %v6773 = vadd.f32 0.0, %v6772
        %v6774 = vpop.f32.mrf.mxu0
        %v6775 = vpop.f32.mrf.mxu0
        %v6776 = vpop.f32.mrf.mxu0
        %6777 = vdwg.mxu0
        %v6778 = vadd.f32 %v6671, %v6732
        %v6779 = vadd.f32 %v6672, %v6734
        %v6780 = vadd.f32 %v6673, %v6773
        %s6781 = scalar_lea.vmem %s4, 8
        %v6782 = vld [vmem:[%s6781] sm:$0x3]
        %6783 = vrot.lane.b32.xlu0 %v6362, 109
        %v6784 = vpop.permute.xlu0 %6783
        %6785 = vrot.lane.b32.xlu0 %v6370, 109
        %v6786 = vpop.permute.xlu0 %6785
        %6787 = vrot.lane.b32.xlu0 %v6369, 109
        %v6788 = vpop.permute.xlu0 %6787
        %vm6789 = vcmask 891904
        %v6790 = vsel %vm6789, %v6784, %v6786
        %v6791 = vsel %vm6789, %v6786, %v6788
        %v6793 = vsel %vm6380, %v6782, 0
        %v6796 = vsel %vm440, %v6790, 0
        %v6799 = vsel %vm440, %v6791, 0
        %v6802 = vsel %vm440, %v6788, 0
        %6804 = vmatprep.subr.bf16.mxu0 0
        %6805 = vmatpush1.bf16.msra.mxu0 0
        %6806 = vmatprep.subr.bf16.mxu0 0
        %6807 = vmatpush1.bf16.msra.mxu0 0
        %6808 = vmatprep.subr.bf16.mxu0 0
        %6809 = vmatpush1.bf16.msra.mxu0 0
        %6810 = vmatprep.subr.bf16.mxu0 0
        %6811 = vmatpush1.bf16.msra.mxu0 0
        %6812 = vmatprep.subr.bf16.mxu0 0
        %6813 = vmatpush1.bf16.msra.mxu0 0
        %6814 = vmatprep.subr.bf16.mxu0 0
        %6815 = vmatpush1.bf16.msra.mxu0 0
        %6816 = vmatprep.subr.bf16.mxu0 0
        %6817 = vmatpush1.bf16.msra.mxu0 0
        %6818 = vmatprep.subr.bf16.mxu0 %v6799
        %6819 = vmatpush1.bf16.msra.mxu0 %v6796
        %6820 = vmatprep.subr.bf16.mxu0 0
        %6821 = vmatpush2.bf16.msra.mxu0 0
        %6822 = vmatprep.subr.bf16.mxu0 0
        %6823 = vmatpush2.bf16.msra.mxu0 0
        %6824 = vmatprep.subr.bf16.mxu0 0
        %6825 = vmatpush2.bf16.msra.mxu0 0
        %6826 = vmatprep.subr.bf16.mxu0 0
        %6827 = vmatpush2.bf16.msra.mxu0 0
        %6828 = vmatprep.subr.bf16.mxu0 0
        %6829 = vmatpush2.bf16.msra.mxu0 0
        %6830 = vmatprep.subr.bf16.mxu0 0
        %6831 = vmatpush2.bf16.msra.mxu0 0
        %6832 = vmatprep.subr.bf16.mxu0 0
        %6833 = vmatpush2.bf16.msra.mxu0 0
        %6834 = vmatprep.subr.bf16.mxu0 0
        %6835 = vmatpush2.bf16.msra.mxu0 0
        %6836 = vmatprep.mubr.bf16.mxu0 0
        %6837 = vmatmul.mubr.bf16.gmra.mxu0 %v6793
        %v6838 = vpop.f32.mrf.mxu0
        %v6839 = vadd.f32 0.0, %v6838
        %v6840 = vpop.f32.mrf.mxu0
        %v6841 = vadd.f32 0.0, %v6840
        %v6842 = vpop.f32.mrf.mxu0
        %v6843 = vpop.f32.mrf.mxu0
        %6844 = vdwg.mxu0
        %6845 = vmatprep.subr.bf16.mxu0 0
        %6846 = vmatpush1.bf16.msra.mxu0 0
        %6847 = vmatprep.subr.bf16.mxu0 0
        %6848 = vmatpush1.bf16.msra.mxu0 0
        %6849 = vmatprep.subr.bf16.mxu0 0
        %6850 = vmatpush1.bf16.msra.mxu0 0
        %6851 = vmatprep.subr.bf16.mxu0 0
        %6852 = vmatpush1.bf16.msra.mxu0 0
        %6853 = vmatprep.subr.bf16.mxu0 0
        %6854 = vmatpush1.bf16.msra.mxu0 0
        %6855 = vmatprep.subr.bf16.mxu0 0
        %6856 = vmatpush1.bf16.msra.mxu0 0
        %6857 = vmatprep.subr.bf16.mxu0 0
        %6858 = vmatpush1.bf16.msra.mxu0 0
        %6859 = vmatprep.subr.bf16.mxu0 0
        %6860 = vmatpush1.bf16.msra.mxu0 %v6802
        %6861 = vmatprep.subr.bf16.mxu0 0
        %6862 = vmatpush2.bf16.msra.mxu0 0
        %6863 = vmatprep.subr.bf16.mxu0 0
        %6864 = vmatpush2.bf16.msra.mxu0 0
        %6865 = vmatprep.subr.bf16.mxu0 0
        %6866 = vmatpush2.bf16.msra.mxu0 0
        %6867 = vmatprep.subr.bf16.mxu0 0
        %6868 = vmatpush2.bf16.msra.mxu0 0
        %6869 = vmatprep.subr.bf16.mxu0 0
        %6870 = vmatpush2.bf16.msra.mxu0 0
        %6871 = vmatprep.subr.bf16.mxu0 0
        %6872 = vmatpush2.bf16.msra.mxu0 0
        %6873 = vmatprep.subr.bf16.mxu0 0
        %6874 = vmatpush2.bf16.msra.mxu0 0
        %6875 = vmatprep.subr.bf16.mxu0 0
        %6876 = vmatpush2.bf16.msra.mxu0 0
        %6877 = vmatprep.mubr.bf16.mxu0 0
        %6878 = vmatmul.mubr.bf16.gmra.mxu0 %v6793
        %v6879 = vpop.f32.mrf.mxu0
        %v6880 = vadd.f32 0.0, %v6879
        %v6881 = vpop.f32.mrf.mxu0
        %v6882 = vpop.f32.mrf.mxu0
        %v6883 = vpop.f32.mrf.mxu0
        %6884 = vdwg.mxu0
        %v6885 = vadd.f32 %v6778, %v6839
        %v6886 = vadd.f32 %v6779, %v6841
        %v6887 = vadd.f32 %v6780, %v6880
        %s6888 = scalar_lea.vmem %s4, 10
        %v6889 = vld [vmem:[%s6888] sm:$0x3]
        %6890 = vrot.lane.b32.xlu0 %v6362, 108
        %v6891 = vpop.permute.xlu0 %6890
        %6892 = vrot.lane.b32.xlu0 %v6370, 108
        %v6893 = vpop.permute.xlu0 %6892
        %6894 = vrot.lane.b32.xlu0 %v6369, 108
        %v6895 = vpop.permute.xlu0 %6894
        %vm6896 = vcmask 883712
        %v6897 = vsel %vm6896, %v6891, %v6893
        %v6898 = vsel %vm6896, %v6893, %v6895
        %v6900 = vsel %vm6380, %v6889, 0
        %v6903 = vsel %vm440, %v6897, 0
        %v6906 = vsel %vm440, %v6898, 0
        %v6909 = vsel %vm440, %v6895, 0
        %6911 = vmatprep.subr.bf16.mxu0 0
        %6912 = vmatpush1.bf16.msra.mxu0 0
        %6913 = vmatprep.subr.bf16.mxu0 0
        %6914 = vmatpush1.bf16.msra.mxu0 0
        %6915 = vmatprep.subr.bf16.mxu0 0
        %6916 = vmatpush1.bf16.msra.mxu0 0
        %6917 = vmatprep.subr.bf16.mxu0 0
        %6918 = vmatpush1.bf16.msra.mxu0 0
        %6919 = vmatprep.subr.bf16.mxu0 0
        %6920 = vmatpush1.bf16.msra.mxu0 0
        %6921 = vmatprep.subr.bf16.mxu0 0
        %6922 = vmatpush1.bf16.msra.mxu0 0
        %6923 = vmatprep.subr.bf16.mxu0 0
        %6924 = vmatpush1.bf16.msra.mxu0 0
        %6925 = vmatprep.subr.bf16.mxu0 %v6906
        %6926 = vmatpush1.bf16.msra.mxu0 %v6903
        %6927 = vmatprep.subr.bf16.mxu0 0
        %6928 = vmatpush2.bf16.msra.mxu0 0
        %6929 = vmatprep.subr.bf16.mxu0 0
        %6930 = vmatpush2.bf16.msra.mxu0 0
        %6931 = vmatprep.subr.bf16.mxu0 0
        %6932 = vmatpush2.bf16.msra.mxu0 0
        %6933 = vmatprep.subr.bf16.mxu0 0
        %6934 = vmatpush2.bf16.msra.mxu0 0
        %6935 = vmatprep.subr.bf16.mxu0 0
        %6936 = vmatpush2.bf16.msra.mxu0 0
        %6937 = vmatprep.subr.bf16.mxu0 0
        %6938 = vmatpush2.bf16.msra.mxu0 0
        %6939 = vmatprep.subr.bf16.mxu0 0
        %6940 = vmatpush2.bf16.msra.mxu0 0
        %6941 = vmatprep.subr.bf16.mxu0 0
        %6942 = vmatpush2.bf16.msra.mxu0 0
        %6943 = vmatprep.mubr.bf16.mxu0 0
        %6944 = vmatmul.mubr.bf16.gmra.mxu0 %v6900
        %v6945 = vpop.f32.mrf.mxu0
        %v6946 = vadd.f32 0.0, %v6945
        %v6947 = vpop.f32.mrf.mxu0
        %v6948 = vadd.f32 0.0, %v6947
        %v6949 = vpop.f32.mrf.mxu0
        %v6950 = vpop.f32.mrf.mxu0
        %6951 = vdwg.mxu0
        %6952 = vmatprep.subr.bf16.mxu0 0
        %6953 = vmatpush1.bf16.msra.mxu0 0
        %6954 = vmatprep.subr.bf16.mxu0 0
        %6955 = vmatpush1.bf16.msra.mxu0 0
        %6956 = vmatprep.subr.bf16.mxu0 0
        %6957 = vmatpush1.bf16.msra.mxu0 0
        %6958 = vmatprep.subr.bf16.mxu0 0
        %6959 = vmatpush1.bf16.msra.mxu0 0
        %6960 = vmatprep.subr.bf16.mxu0 0
        %6961 = vmatpush1.bf16.msra.mxu0 0
        %6962 = vmatprep.subr.bf16.mxu0 0
        %6963 = vmatpush1.bf16.msra.mxu0 0
        %6964 = vmatprep.subr.bf16.mxu0 0
        %6965 = vmatpush1.bf16.msra.mxu0 0
        %6966 = vmatprep.subr.bf16.mxu0 0
        %6967 = vmatpush1.bf16.msra.mxu0 %v6909
        %6968 = vmatprep.subr.bf16.mxu0 0
        %6969 = vmatpush2.bf16.msra.mxu0 0
        %6970 = vmatprep.subr.bf16.mxu0 0
        %6971 = vmatpush2.bf16.msra.mxu0 0
        %6972 = vmatprep.subr.bf16.mxu0 0
        %6973 = vmatpush2.bf16.msra.mxu0 0
        %6974 = vmatprep.subr.bf16.mxu0 0
        %6975 = vmatpush2.bf16.msra.mxu0 0
        %6976 = vmatprep.subr.bf16.mxu0 0
        %6977 = vmatpush2.bf16.msra.mxu0 0
        %6978 = vmatprep.subr.bf16.mxu0 0
        %6979 = vmatpush2.bf16.msra.mxu0 0
        %6980 = vmatprep.subr.bf16.mxu0 0
        %6981 = vmatpush2.bf16.msra.mxu0 0
        %6982 = vmatprep.subr.bf16.mxu0 0
        %6983 = vmatpush2.bf16.msra.mxu0 0
        %6984 = vmatprep.mubr.bf16.mxu0 0
        %6985 = vmatmul.mubr.bf16.gmra.mxu0 %v6900
        %v6986 = vpop.f32.mrf.mxu0
        %v6987 = vadd.f32 0.0, %v6986
        %v6988 = vpop.f32.mrf.mxu0
        %v6989 = vpop.f32.mrf.mxu0
        %v6990 = vpop.f32.mrf.mxu0
        %6991 = vdwg.mxu0
        %v6992 = vadd.f32 %v6885, %v6946
        %v6993 = vadd.f32 %v6886, %v6948
        %v6994 = vadd.f32 %v6887, %v6987
        %s6995 = scalar_lea.vmem %s4, 12
        %v6996 = vld [vmem:[%s6995] sm:$0x3]
        %6997 = vrot.lane.b32.xlu0 %v6362, 92
        %v6998 = vpop.permute.xlu0 %6997
        %6999 = vrot.lane.b32.xlu0 %v6370, 92
        %v7000 = vpop.permute.xlu0 %6999
        %7001 = vrot.lane.b32.xlu0 %v6369, 92
        %v7002 = vpop.permute.xlu0 %7001
        %vm7003 = vcmask 752640
        %v7004 = vsel %vm7003, %v6998, %v7000
        %v7005 = vsel %vm7003, %v7000, %v7002
        %v7007 = vsel %vm6380, %v6996, 0
        %v7010 = vsel %vm440, %v7004, 0
        %v7013 = vsel %vm440, %v7005, 0
        %v7016 = vsel %vm440, %v7002, 0
        %7018 = vmatprep.subr.bf16.mxu0 0
        %7019 = vmatpush1.bf16.msra.mxu0 0
        %7020 = vmatprep.subr.bf16.mxu0 0
        %7021 = vmatpush1.bf16.msra.mxu0 0
        %7022 = vmatprep.subr.bf16.mxu0 0
        %7023 = vmatpush1.bf16.msra.mxu0 0
        %7024 = vmatprep.subr.bf16.mxu0 0
        %7025 = vmatpush1.bf16.msra.mxu0 0
        %7026 = vmatprep.subr.bf16.mxu0 0
        %7027 = vmatpush1.bf16.msra.mxu0 0
        %7028 = vmatprep.subr.bf16.mxu0 0
        %7029 = vmatpush1.bf16.msra.mxu0 0
        %7030 = vmatprep.subr.bf16.mxu0 0
        %7031 = vmatpush1.bf16.msra.mxu0 0
        %7032 = vmatprep.subr.bf16.mxu0 %v7013
        %7033 = vmatpush1.bf16.msra.mxu0 %v7010
        %7034 = vmatprep.subr.bf16.mxu0 0
        %7035 = vmatpush2.bf16.msra.mxu0 0
        %7036 = vmatprep.subr.bf16.mxu0 0
        %7037 = vmatpush2.bf16.msra.mxu0 0
        %7038 = vmatprep.subr.bf16.mxu0 0
        %7039 = vmatpush2.bf16.msra.mxu0 0
        %7040 = vmatprep.subr.bf16.mxu0 0
        %7041 = vmatpush2.bf16.msra.mxu0 0
        %7042 = vmatprep.subr.bf16.mxu0 0
        %7043 = vmatpush2.bf16.msra.mxu0 0
        %7044 = vmatprep.subr.bf16.mxu0 0
        %7045 = vmatpush2.bf16.msra.mxu0 0
        %7046 = vmatprep.subr.bf16.mxu0 0
        %7047 = vmatpush2.bf16.msra.mxu0 0
        %7048 = vmatprep.subr.bf16.mxu0 0
        %7049 = vmatpush2.bf16.msra.mxu0 0
        %7050 = vmatprep.mubr.bf16.mxu0 0
        %7051 = vmatmul.mubr.bf16.gmra.mxu0 %v7007
        %v7052 = vpop.f32.mrf.mxu0
        %v7053 = vadd.f32 0.0, %v7052
        %v7054 = vpop.f32.mrf.mxu0
        %v7055 = vadd.f32 0.0, %v7054
        %v7056 = vpop.f32.mrf.mxu0
        %v7057 = vpop.f32.mrf.mxu0
        %7058 = vdwg.mxu0
        %7059 = vmatprep.subr.bf16.mxu0 0
        %7060 = vmatpush1.bf16.msra.mxu0 0
        %7061 = vmatprep.subr.bf16.mxu0 0
        %7062 = vmatpush1.bf16.msra.mxu0 0
        %7063 = vmatprep.subr.bf16.mxu0 0
        %7064 = vmatpush1.bf16.msra.mxu0 0
        %7065 = vmatprep.subr.bf16.mxu0 0
        %7066 = vmatpush1.bf16.msra.mxu0 0
        %7067 = vmatprep.subr.bf16.mxu0 0
        %7068 = vmatpush1.bf16.msra.mxu0 0
        %7069 = vmatprep.subr.bf16.mxu0 0
        %7070 = vmatpush1.bf16.msra.mxu0 0
        %7071 = vmatprep.subr.bf16.mxu0 0
        %7072 = vmatpush1.bf16.msra.mxu0 0
        %7073 = vmatprep.subr.bf16.mxu0 0
        %7074 = vmatpush1.bf16.msra.mxu0 %v7016
        %7075 = vmatprep.subr.bf16.mxu0 0
        %7076 = vmatpush2.bf16.msra.mxu0 0
        %7077 = vmatprep.subr.bf16.mxu0 0
        %7078 = vmatpush2.bf16.msra.mxu0 0
        %7079 = vmatprep.subr.bf16.mxu0 0
        %7080 = vmatpush2.bf16.msra.mxu0 0
        %7081 = vmatprep.subr.bf16.mxu0 0
        %7082 = vmatpush2.bf16.msra.mxu0 0
        %7083 = vmatprep.subr.bf16.mxu0 0
        %7084 = vmatpush2.bf16.msra.mxu0 0
        %7085 = vmatprep.subr.bf16.mxu0 0
        %7086 = vmatpush2.bf16.msra.mxu0 0
        %7087 = vmatprep.subr.bf16.mxu0 0
        %7088 = vmatpush2.bf16.msra.mxu0 0
        %7089 = vmatprep.subr.bf16.mxu0 0
        %7090 = vmatpush2.bf16.msra.mxu0 0
        %7091 = vmatprep.mubr.bf16.mxu0 0
        %7092 = vmatmul.mubr.bf16.gmra.mxu0 %v7007
        %v7093 = vpop.f32.mrf.mxu0
        %v7094 = vadd.f32 0.0, %v7093
        %v7095 = vpop.f32.mrf.mxu0
        %v7096 = vpop.f32.mrf.mxu0
        %v7097 = vpop.f32.mrf.mxu0
        %7098 = vdwg.mxu0
        %v7099 = vadd.f32 %v6992, %v7053
        %v7100 = vadd.f32 %v6993, %v7055
        %v7101 = vadd.f32 %v6994, %v7094
        %s7102 = scalar_lea.vmem %s4, 14
        %v7103 = vld [vmem:[%s7102] sm:$0x3]
        %7104 = vrot.lane.b32.xlu0 %v6362, 91
        %v7105 = vpop.permute.xlu0 %7104
        %7106 = vrot.lane.b32.xlu0 %v6370, 91
        %v7107 = vpop.permute.xlu0 %7106
        %7108 = vrot.lane.b32.xlu0 %v6369, 91
        %v7109 = vpop.permute.xlu0 %7108
        %vm7110 = vcmask 744448
        %v7111 = vsel %vm7110, %v7105, %v7107
        %v7112 = vsel %vm7110, %v7107, %v7109
        %v7114 = vsel %vm6380, %v7103, 0
        %v7117 = vsel %vm440, %v7111, 0
        %v7120 = vsel %vm440, %v7112, 0
        %v7123 = vsel %vm440, %v7109, 0
        %7125 = vmatprep.subr.bf16.mxu0 0
        %7126 = vmatpush1.bf16.msra.mxu0 0
        %7127 = vmatprep.subr.bf16.mxu0 0
        %7128 = vmatpush1.bf16.msra.mxu0 0
        %7129 = vmatprep.subr.bf16.mxu0 0
        %7130 = vmatpush1.bf16.msra.mxu0 0
        %7131 = vmatprep.subr.bf16.mxu0 0
        %7132 = vmatpush1.bf16.msra.mxu0 0
        %7133 = vmatprep.subr.bf16.mxu0 0
        %7134 = vmatpush1.bf16.msra.mxu0 0
        %7135 = vmatprep.subr.bf16.mxu0 0
        %7136 = vmatpush1.bf16.msra.mxu0 0
        %7137 = vmatprep.subr.bf16.mxu0 0
        %7138 = vmatpush1.bf16.msra.mxu0 0
        %7139 = vmatprep.subr.bf16.mxu0 %v7120
        %7140 = vmatpush1.bf16.msra.mxu0 %v7117
        %7141 = vmatprep.subr.bf16.mxu0 0
        %7142 = vmatpush2.bf16.msra.mxu0 0
        %7143 = vmatprep.subr.bf16.mxu0 0
        %7144 = vmatpush2.bf16.msra.mxu0 0
        %7145 = vmatprep.subr.bf16.mxu0 0
        %7146 = vmatpush2.bf16.msra.mxu0 0
        %7147 = vmatprep.subr.bf16.mxu0 0
        %7148 = vmatpush2.bf16.msra.mxu0 0
        %7149 = vmatprep.subr.bf16.mxu0 0
        %7150 = vmatpush2.bf16.msra.mxu0 0
        %7151 = vmatprep.subr.bf16.mxu0 0
        %7152 = vmatpush2.bf16.msra.mxu0 0
        %7153 = vmatprep.subr.bf16.mxu0 0
        %7154 = vmatpush2.bf16.msra.mxu0 0
        %7155 = vmatprep.subr.bf16.mxu0 0
        %7156 = vmatpush2.bf16.msra.mxu0 0
        %7157 = vmatprep.mubr.bf16.mxu0 0
        %7158 = vmatmul.mubr.bf16.gmra.mxu0 %v7114
        %v7159 = vpop.f32.mrf.mxu0
        %v7160 = vadd.f32 0.0, %v7159
        %v7161 = vpop.f32.mrf.mxu0
        %v7162 = vadd.f32 0.0, %v7161
        %v7163 = vpop.f32.mrf.mxu0
        %v7164 = vpop.f32.mrf.mxu0
        %7165 = vdwg.mxu0
        %7166 = vmatprep.subr.bf16.mxu0 0
        %7167 = vmatpush1.bf16.msra.mxu0 0
        %7168 = vmatprep.subr.bf16.mxu0 0
        %7169 = vmatpush1.bf16.msra.mxu0 0
        %7170 = vmatprep.subr.bf16.mxu0 0
        %7171 = vmatpush1.bf16.msra.mxu0 0
        %7172 = vmatprep.subr.bf16.mxu0 0
        %7173 = vmatpush1.bf16.msra.mxu0 0
        %7174 = vmatprep.subr.bf16.mxu0 0
        %7175 = vmatpush1.bf16.msra.mxu0 0
        %7176 = vmatprep.subr.bf16.mxu0 0
        %7177 = vmatpush1.bf16.msra.mxu0 0
        %7178 = vmatprep.subr.bf16.mxu0 0
        %7179 = vmatpush1.bf16.msra.mxu0 0
        %7180 = vmatprep.subr.bf16.mxu0 0
        %7181 = vmatpush1.bf16.msra.mxu0 %v7123
        %7182 = vmatprep.subr.bf16.mxu0 0
        %7183 = vmatpush2.bf16.msra.mxu0 0
        %7184 = vmatprep.subr.bf16.mxu0 0
        %7185 = vmatpush2.bf16.msra.mxu0 0
        %7186 = vmatprep.subr.bf16.mxu0 0
        %7187 = vmatpush2.bf16.msra.mxu0 0
        %7188 = vmatprep.subr.bf16.mxu0 0
        %7189 = vmatpush2.bf16.msra.mxu0 0
        %7190 = vmatprep.subr.bf16.mxu0 0
        %7191 = vmatpush2.bf16.msra.mxu0 0
        %7192 = vmatprep.subr.bf16.mxu0 0
        %7193 = vmatpush2.bf16.msra.mxu0 0
        %7194 = vmatprep.subr.bf16.mxu0 0
        %7195 = vmatpush2.bf16.msra.mxu0 0
        %7196 = vmatprep.subr.bf16.mxu0 0
        %7197 = vmatpush2.bf16.msra.mxu0 0
        %7198 = vmatprep.mubr.bf16.mxu0 0
        %7199 = vmatmul.mubr.bf16.gmra.mxu0 %v7114
        %v7200 = vpop.f32.mrf.mxu0
        %v7201 = vadd.f32 0.0, %v7200
        %v7202 = vpop.f32.mrf.mxu0
        %v7203 = vpop.f32.mrf.mxu0
        %v7204 = vpop.f32.mrf.mxu0
        %7205 = vdwg.mxu0
        %v7206 = vadd.f32 %v7099, %v7160
        %v7207 = vadd.f32 %v7100, %v7162
        %v7208 = vadd.f32 %v7101, %v7201
        %s7209 = scalar_lea.vmem %s4, 16
        %v7210 = vld [vmem:[%s7209] sm:$0x3]
        %7211 = vrot.lane.b32.xlu0 %v6362, 90
        %v7212 = vpop.permute.xlu0 %7211
        %7213 = vrot.lane.b32.xlu0 %v6370, 90
        %v7214 = vpop.permute.xlu0 %7213
        %7215 = vrot.lane.b32.xlu0 %v6369, 90
        %v7216 = vpop.permute.xlu0 %7215
        %vm7217 = vcmask 736256
        %v7218 = vsel %vm7217, %v7212, %v7214
        %v7219 = vsel %vm7217, %v7214, %v7216
        %v7221 = vsel %vm6380, %v7210, 0
        %v7224 = vsel %vm440, %v7218, 0
        %v7227 = vsel %vm440, %v7219, 0
        %v7230 = vsel %vm440, %v7216, 0
        %7232 = vmatprep.subr.bf16.mxu0 0
        %7233 = vmatpush1.bf16.msra.mxu0 0
        %7234 = vmatprep.subr.bf16.mxu0 0
        %7235 = vmatpush1.bf16.msra.mxu0 0
        %7236 = vmatprep.subr.bf16.mxu0 0
        %7237 = vmatpush1.bf16.msra.mxu0 0
        %7238 = vmatprep.subr.bf16.mxu0 0
        %7239 = vmatpush1.bf16.msra.mxu0 0
        %7240 = vmatprep.subr.bf16.mxu0 0
        %7241 = vmatpush1.bf16.msra.mxu0 0
        %7242 = vmatprep.subr.bf16.mxu0 0
        %7243 = vmatpush1.bf16.msra.mxu0 0
        %7244 = vmatprep.subr.bf16.mxu0 0
        %7245 = vmatpush1.bf16.msra.mxu0 0
        %7246 = vmatprep.subr.bf16.mxu0 %v7227
        %7247 = vmatpush1.bf16.msra.mxu0 %v7224
        %7248 = vmatprep.subr.bf16.mxu0 0
        %7249 = vmatpush2.bf16.msra.mxu0 0
        %7250 = vmatprep.subr.bf16.mxu0 0
        %7251 = vmatpush2.bf16.msra.mxu0 0
        %7252 = vmatprep.subr.bf16.mxu0 0
        %7253 = vmatpush2.bf16.msra.mxu0 0
        %7254 = vmatprep.subr.bf16.mxu0 0
        %7255 = vmatpush2.bf16.msra.mxu0 0
        %7256 = vmatprep.subr.bf16.mxu0 0
        %7257 = vmatpush2.bf16.msra.mxu0 0
        %7258 = vmatprep.subr.bf16.mxu0 0
        %7259 = vmatpush2.bf16.msra.mxu0 0
        %7260 = vmatprep.subr.bf16.mxu0 0
        %7261 = vmatpush2.bf16.msra.mxu0 0
        %7262 = vmatprep.subr.bf16.mxu0 0
        %7263 = vmatpush2.bf16.msra.mxu0 0
        %7264 = vmatprep.mubr.bf16.mxu0 0
        %7265 = vmatmul.mubr.bf16.gmra.mxu0 %v7221
        %v7266 = vpop.f32.mrf.mxu0
        %v7267 = vadd.f32 0.0, %v7266
        %v7268 = vpop.f32.mrf.mxu0
        %v7269 = vadd.f32 0.0, %v7268
        %v7270 = vpop.f32.mrf.mxu0
        %v7271 = vpop.f32.mrf.mxu0
        %7272 = vdwg.mxu0
        %7273 = vmatprep.subr.bf16.mxu0 0
        %7274 = vmatpush1.bf16.msra.mxu0 0
        %7275 = vmatprep.subr.bf16.mxu0 0
        %7276 = vmatpush1.bf16.msra.mxu0 0
        %7277 = vmatprep.subr.bf16.mxu0 0
        %7278 = vmatpush1.bf16.msra.mxu0 0
        %7279 = vmatprep.subr.bf16.mxu0 0
        %7280 = vmatpush1.bf16.msra.mxu0 0
        %7281 = vmatprep.subr.bf16.mxu0 0
        %7282 = vmatpush1.bf16.msra.mxu0 0
        %7283 = vmatprep.subr.bf16.mxu0 0
        %7284 = vmatpush1.bf16.msra.mxu0 0
        %7285 = vmatprep.subr.bf16.mxu0 0
        %7286 = vmatpush1.bf16.msra.mxu0 0
        %7287 = vmatprep.subr.bf16.mxu0 0
        %7288 = vmatpush1.bf16.msra.mxu0 %v7230
        %7289 = vmatprep.subr.bf16.mxu0 0
        %7290 = vmatpush2.bf16.msra.mxu0 0
        %7291 = vmatprep.subr.bf16.mxu0 0
        %7292 = vmatpush2.bf16.msra.mxu0 0
        %7293 = vmatprep.subr.bf16.mxu0 0
        %7294 = vmatpush2.bf16.msra.mxu0 0
        %7295 = vmatprep.subr.bf16.mxu0 0
        %7296 = vmatpush2.bf16.msra.mxu0 0
        %7297 = vmatprep.subr.bf16.mxu0 0
        %7298 = vmatpush2.bf16.msra.mxu0 0
        %7299 = vmatprep.subr.bf16.mxu0 0
        %7300 = vmatpush2.bf16.msra.mxu0 0
        %7301 = vmatprep.subr.bf16.mxu0 0
        %7302 = vmatpush2.bf16.msra.mxu0 0
        %7303 = vmatprep.subr.bf16.mxu0 0
        %7304 = vmatpush2.bf16.msra.mxu0 0
        %7305 = vmatprep.mubr.bf16.mxu0 0
        %7306 = vmatmul.mubr.bf16.gmra.mxu0 %v7221
        %v7307 = vpop.f32.mrf.mxu0
        %v7308 = vadd.f32 0.0, %v7307
        %v7309 = vpop.f32.mrf.mxu0
        %v7310 = vpop.f32.mrf.mxu0
        %v7311 = vpop.f32.mrf.mxu0
        %7312 = vdwg.mxu0
        %v7313 = vadd.f32 %v7206, %v7267
        %v7314 = vadd.f32 %v7207, %v7269
        %v7315 = vadd.f32 %v7208, %v7308
        %s7316 = sadd.s32 %s6342, 1
        %s7317 = smul.u32 %s7316, 3
        %s7318 = smul.addr %s7317, 2
        %s7319 = scalar_lea.vmem [#allocation2], %s7318
        %v7320 = vld [vmem:[%s7319] sm:$0x3f]
        %s7321 = scalar_lea.vmem %s4, 18
        %v7322 = vld [vmem:[%s7321] sm:$0x3]
        %v7324 = vcombine.high %v7320, %v7320
        %v7326 = vunpack.c.l.s4 1983009808
        %v7327 = vunpack.c.0.s8 %v7326
        %v7328 = vlaneseq
        %v7329 = vshrl.u32 %v7328, 7
        %v7330 = vsub.s32 %v7327, %v7329
        %v7331 = vrot.slane %v7320, %v7330
        %v7333 = vunpack.c.l.s4 1983009808
        %v7334 = vunpack.c.0.s8 %v7333
        %v7335 = vlaneseq
        %v7336 = vshrl.u32 %v7335, 7
        %v7337 = vsub.s32 %v7334, %v7336
        %v7338 = vrot.slane %v7324, %v7337
        %v7339 = vcombine.high %v7331, %v7331
        %v7341 = vsel %vm6380, %v7322, 0
        %v7344 = vsel %vm440, %v7331, 0
        %v7347 = vsel %vm440, %v7339, 0
        %v7350 = vsel %vm440, %v7338, 0
        %7352 = vmatprep.subr.bf16.mxu0 0
        %7353 = vmatpush1.bf16.msra.mxu0 0
        %7354 = vmatprep.subr.bf16.mxu0 0
        %7355 = vmatpush1.bf16.msra.mxu0 0
        %7356 = vmatprep.subr.bf16.mxu0 0
        %7357 = vmatpush1.bf16.msra.mxu0 0
        %7358 = vmatprep.subr.bf16.mxu0 0
        %7359 = vmatpush1.bf16.msra.mxu0 0
        %7360 = vmatprep.subr.bf16.mxu0 0
        %7361 = vmatpush1.bf16.msra.mxu0 0
        %7362 = vmatprep.subr.bf16.mxu0 0
        %7363 = vmatpush1.bf16.msra.mxu0 0
        %7364 = vmatprep.subr.bf16.mxu0 0
        %7365 = vmatpush1.bf16.msra.mxu0 0
        %7366 = vmatprep.subr.bf16.mxu0 %v7347
        %7367 = vmatpush1.bf16.msra.mxu0 %v7344
        %7368 = vmatprep.subr.bf16.mxu0 0
        %7369 = vmatpush2.bf16.msra.mxu0 0
        %7370 = vmatprep.subr.bf16.mxu0 0
        %7371 = vmatpush2.bf16.msra.mxu0 0
        %7372 = vmatprep.subr.bf16.mxu0 0
        %7373 = vmatpush2.bf16.msra.mxu0 0
        %7374 = vmatprep.subr.bf16.mxu0 0
        %7375 = vmatpush2.bf16.msra.mxu0 0
        %7376 = vmatprep.subr.bf16.mxu0 0
        %7377 = vmatpush2.bf16.msra.mxu0 0
        %7378 = vmatprep.subr.bf16.mxu0 0
        %7379 = vmatpush2.bf16.msra.mxu0 0
        %7380 = vmatprep.subr.bf16.mxu0 0
        %7381 = vmatpush2.bf16.msra.mxu0 0
        %7382 = vmatprep.subr.bf16.mxu0 0
        %7383 = vmatpush2.bf16.msra.mxu0 0
        %7384 = vmatprep.mubr.bf16.mxu0 0
        %7385 = vmatmul.mubr.bf16.gmra.mxu0 %v7341
        %v7386 = vpop.f32.mrf.mxu0
        %v7387 = vadd.f32 0.0, %v7386
        %v7388 = vpop.f32.mrf.mxu0
        %v7389 = vadd.f32 0.0, %v7388
        %v7390 = vpop.f32.mrf.mxu0
        %v7391 = vpop.f32.mrf.mxu0
        %7392 = vdwg.mxu0
        %7393 = vmatprep.subr.bf16.mxu0 0
        %7394 = vmatpush1.bf16.msra.mxu0 0
        %7395 = vmatprep.subr.bf16.mxu0 0
        %7396 = vmatpush1.bf16.msra.mxu0 0
        %7397 = vmatprep.subr.bf16.mxu0 0
        %7398 = vmatpush1.bf16.msra.mxu0 0
        %7399 = vmatprep.subr.bf16.mxu0 0
        %7400 = vmatpush1.bf16.msra.mxu0 0
        %7401 = vmatprep.subr.bf16.mxu0 0
        %7402 = vmatpush1.bf16.msra.mxu0 0
        %7403 = vmatprep.subr.bf16.mxu0 0
        %7404 = vmatpush1.bf16.msra.mxu0 0
        %7405 = vmatprep.subr.bf16.mxu0 0
        %7406 = vmatpush1.bf16.msra.mxu0 0
        %7407 = vmatprep.subr.bf16.mxu0 0
        %7408 = vmatpush1.bf16.msra.mxu0 %v7350
        %7409 = vmatprep.subr.bf16.mxu0 0
        %7410 = vmatpush2.bf16.msra.mxu0 0
        %7411 = vmatprep.subr.bf16.mxu0 0
        %7412 = vmatpush2.bf16.msra.mxu0 0
        %7413 = vmatprep.subr.bf16.mxu0 0
        %7414 = vmatpush2.bf16.msra.mxu0 0
        %7415 = vmatprep.subr.bf16.mxu0 0
        %7416 = vmatpush2.bf16.msra.mxu0 0
        %7417 = vmatprep.subr.bf16.mxu0 0
        %7418 = vmatpush2.bf16.msra.mxu0 0
        %7419 = vmatprep.subr.bf16.mxu0 0
        %7420 = vmatpush2.bf16.msra.mxu0 0
        %7421 = vmatprep.subr.bf16.mxu0 0
        %7422 = vmatpush2.bf16.msra.mxu0 0
        %7423 = vmatprep.subr.bf16.mxu0 0
        %7424 = vmatpush2.bf16.msra.mxu0 0
        %7425 = vmatprep.mubr.bf16.mxu0 0
        %7426 = vmatmul.mubr.bf16.gmra.mxu0 %v7341
        %v7427 = vpop.f32.mrf.mxu0
        %v7428 = vadd.f32 0.0, %v7427
        %v7429 = vpop.f32.mrf.mxu0
        %v7430 = vpop.f32.mrf.mxu0
        %v7431 = vpop.f32.mrf.mxu0
        %7432 = vdwg.mxu0
        %v7433 = vadd.f32 %v7313, %v7387
        %v7434 = vadd.f32 %v7314, %v7389
        %v7435 = vadd.f32 %v7315, %v7428
        %s7436 = scalar_lea.vmem %s4, 20
        %v7437 = vld [vmem:[%s7436] sm:$0x3]
        %7438 = vrot.lane.b32.xlu0 %v7331, 127
        %v7439 = vpop.permute.xlu0 %7438
        %7440 = vrot.lane.b32.xlu0 %v7339, 127
        %v7441 = vpop.permute.xlu0 %7440
        %7442 = vrot.lane.b32.xlu0 %v7338, 127
        %v7443 = vpop.permute.xlu0 %7442
        %v7444 = vsel %vm6377, %v7439, %v7441
        %v7445 = vsel %vm6377, %v7441, %v7443
        %v7447 = vsel %vm6380, %v7437, 0
        %v7450 = vsel %vm440, %v7444, 0
        %v7453 = vsel %vm440, %v7445, 0
        %v7456 = vsel %vm440, %v7443, 0
        %7458 = vmatprep.subr.bf16.mxu0 0
        %7459 = vmatpush1.bf16.msra.mxu0 0
        %7460 = vmatprep.subr.bf16.mxu0 0
        %7461 = vmatpush1.bf16.msra.mxu0 0
        %7462 = vmatprep.subr.bf16.mxu0 0
        %7463 = vmatpush1.bf16.msra.mxu0 0
        %7464 = vmatprep.subr.bf16.mxu0 0
        %7465 = vmatpush1.bf16.msra.mxu0 0
        %7466 = vmatprep.subr.bf16.mxu0 0
        %7467 = vmatpush1.bf16.msra.mxu0 0
        %7468 = vmatprep.subr.bf16.mxu0 0
        %7469 = vmatpush1.bf16.msra.mxu0 0
        %7470 = vmatprep.subr.bf16.mxu0 0
        %7471 = vmatpush1.bf16.msra.mxu0 0
        %7472 = vmatprep.subr.bf16.mxu0 %v7453
        %7473 = vmatpush1.bf16.msra.mxu0 %v7450
        %7474 = vmatprep.subr.bf16.mxu0 0
        %7475 = vmatpush2.bf16.msra.mxu0 0
        %7476 = vmatprep.subr.bf16.mxu0 0
        %7477 = vmatpush2.bf16.msra.mxu0 0
        %7478 = vmatprep.subr.bf16.mxu0 0
        %7479 = vmatpush2.bf16.msra.mxu0 0
        %7480 = vmatprep.subr.bf16.mxu0 0
        %7481 = vmatpush2.bf16.msra.mxu0 0
        %7482 = vmatprep.subr.bf16.mxu0 0
        %7483 = vmatpush2.bf16.msra.mxu0 0
        %7484 = vmatprep.subr.bf16.mxu0 0
        %7485 = vmatpush2.bf16.msra.mxu0 0
        %7486 = vmatprep.subr.bf16.mxu0 0
        %7487 = vmatpush2.bf16.msra.mxu0 0
        %7488 = vmatprep.subr.bf16.mxu0 0
        %7489 = vmatpush2.bf16.msra.mxu0 0
        %7490 = vmatprep.mubr.bf16.mxu0 0
        %7491 = vmatmul.mubr.bf16.gmra.mxu0 %v7447
        %v7492 = vpop.f32.mrf.mxu0
        %v7493 = vadd.f32 0.0, %v7492
        %v7494 = vpop.f32.mrf.mxu0
        %v7495 = vadd.f32 0.0, %v7494
        %v7496 = vpop.f32.mrf.mxu0
        %v7497 = vpop.f32.mrf.mxu0
        %7498 = vdwg.mxu0
        %7499 = vmatprep.subr.bf16.mxu0 0
        %7500 = vmatpush1.bf16.msra.mxu0 0
        %7501 = vmatprep.subr.bf16.mxu0 0
        %7502 = vmatpush1.bf16.msra.mxu0 0
        %7503 = vmatprep.subr.bf16.mxu0 0
        %7504 = vmatpush1.bf16.msra.mxu0 0
        %7505 = vmatprep.subr.bf16.mxu0 0
        %7506 = vmatpush1.bf16.msra.mxu0 0
        %7507 = vmatprep.subr.bf16.mxu0 0
        %7508 = vmatpush1.bf16.msra.mxu0 0
        %7509 = vmatprep.subr.bf16.mxu0 0
        %7510 = vmatpush1.bf16.msra.mxu0 0
        %7511 = vmatprep.subr.bf16.mxu0 0
        %7512 = vmatpush1.bf16.msra.mxu0 0
        %7513 = vmatprep.subr.bf16.mxu0 0
        %7514 = vmatpush1.bf16.msra.mxu0 %v7456
        %7515 = vmatprep.subr.bf16.mxu0 0
        %7516 = vmatpush2.bf16.msra.mxu0 0
        %7517 = vmatprep.subr.bf16.mxu0 0
        %7518 = vmatpush2.bf16.msra.mxu0 0
        %7519 = vmatprep.subr.bf16.mxu0 0
        %7520 = vmatpush2.bf16.msra.mxu0 0
        %7521 = vmatprep.subr.bf16.mxu0 0
        %7522 = vmatpush2.bf16.msra.mxu0 0
        %7523 = vmatprep.subr.bf16.mxu0 0
        %7524 = vmatpush2.bf16.msra.mxu0 0
        %7525 = vmatprep.subr.bf16.mxu0 0
        %7526 = vmatpush2.bf16.msra.mxu0 0
        %7527 = vmatprep.subr.bf16.mxu0 0
        %7528 = vmatpush2.bf16.msra.mxu0 0
        %7529 = vmatprep.subr.bf16.mxu0 0
        %7530 = vmatpush2.bf16.msra.mxu0 0
        %7531 = vmatprep.mubr.bf16.mxu0 0
        %7532 = vmatmul.mubr.bf16.gmra.mxu0 %v7447
        %v7533 = vpop.f32.mrf.mxu0
        %v7534 = vadd.f32 0.0, %v7533
        %v7535 = vpop.f32.mrf.mxu0
        %v7536 = vpop.f32.mrf.mxu0
        %v7537 = vpop.f32.mrf.mxu0
        %7538 = vdwg.mxu0
        %v7539 = vadd.f32 %v7433, %v7493
        %v7540 = vadd.f32 %v7434, %v7495
        %v7541 = vadd.f32 %v7435, %v7534
        %s7542 = scalar_lea.vmem %s4, 22
        %v7543 = vld [vmem:[%s7542] sm:$0x3]
        %7544 = vrot.lane.b32.xlu0 %v7331, 126
        %v7545 = vpop.permute.xlu0 %7544
        %7546 = vrot.lane.b32.xlu0 %v7339, 126
        %v7547 = vpop.permute.xlu0 %7546
        %7548 = vrot.lane.b32.xlu0 %v7338, 126
        %v7549 = vpop.permute.xlu0 %7548
        %v7550 = vsel %vm6575, %v7545, %v7547
        %v7551 = vsel %vm6575, %v7547, %v7549
        %v7553 = vsel %vm6380, %v7543, 0
        %v7556 = vsel %vm440, %v7550, 0
        %v7559 = vsel %vm440, %v7551, 0
        %v7562 = vsel %vm440, %v7549, 0
        %7564 = vmatprep.subr.bf16.mxu0 0
        %7565 = vmatpush1.bf16.msra.mxu0 0
        %7566 = vmatprep.subr.bf16.mxu0 0
        %7567 = vmatpush1.bf16.msra.mxu0 0
        %7568 = vmatprep.subr.bf16.mxu0 0
        %7569 = vmatpush1.bf16.msra.mxu0 0
        %7570 = vmatprep.subr.bf16.mxu0 0
        %7571 = vmatpush1.bf16.msra.mxu0 0
        %7572 = vmatprep.subr.bf16.mxu0 0
        %7573 = vmatpush1.bf16.msra.mxu0 0
        %7574 = vmatprep.subr.bf16.mxu0 0
        %7575 = vmatpush1.bf16.msra.mxu0 0
        %7576 = vmatprep.subr.bf16.mxu0 0
        %7577 = vmatpush1.bf16.msra.mxu0 0
        %7578 = vmatprep.subr.bf16.mxu0 %v7559
        %7579 = vmatpush1.bf16.msra.mxu0 %v7556
        %7580 = vmatprep.subr.bf16.mxu0 0
        %7581 = vmatpush2.bf16.msra.mxu0 0
        %7582 = vmatprep.subr.bf16.mxu0 0
        %7583 = vmatpush2.bf16.msra.mxu0 0
        %7584 = vmatprep.subr.bf16.mxu0 0
        %7585 = vmatpush2.bf16.msra.mxu0 0
        %7586 = vmatprep.subr.bf16.mxu0 0
        %7587 = vmatpush2.bf16.msra.mxu0 0
        %7588 = vmatprep.subr.bf16.mxu0 0
        %7589 = vmatpush2.bf16.msra.mxu0 0
        %7590 = vmatprep.subr.bf16.mxu0 0
        %7591 = vmatpush2.bf16.msra.mxu0 0
        %7592 = vmatprep.subr.bf16.mxu0 0
        %7593 = vmatpush2.bf16.msra.mxu0 0
        %7594 = vmatprep.subr.bf16.mxu0 0
        %7595 = vmatpush2.bf16.msra.mxu0 0
        %7596 = vmatprep.mubr.bf16.mxu0 0
        %7597 = vmatmul.mubr.bf16.gmra.mxu0 %v7553
        %v7598 = vpop.f32.mrf.mxu0
        %v7599 = vadd.f32 0.0, %v7598
        %v7600 = vpop.f32.mrf.mxu0
        %v7601 = vadd.f32 0.0, %v7600
        %v7602 = vpop.f32.mrf.mxu0
        %v7603 = vpop.f32.mrf.mxu0
        %7604 = vdwg.mxu0
        %7605 = vmatprep.subr.bf16.mxu0 0
        %7606 = vmatpush1.bf16.msra.mxu0 0
        %7607 = vmatprep.subr.bf16.mxu0 0
        %7608 = vmatpush1.bf16.msra.mxu0 0
        %7609 = vmatprep.subr.bf16.mxu0 0
        %7610 = vmatpush1.bf16.msra.mxu0 0
        %7611 = vmatprep.subr.bf16.mxu0 0
        %7612 = vmatpush1.bf16.msra.mxu0 0
        %7613 = vmatprep.subr.bf16.mxu0 0
        %7614 = vmatpush1.bf16.msra.mxu0 0
        %7615 = vmatprep.subr.bf16.mxu0 0
        %7616 = vmatpush1.bf16.msra.mxu0 0
        %7617 = vmatprep.subr.bf16.mxu0 0
        %7618 = vmatpush1.bf16.msra.mxu0 0
        %7619 = vmatprep.subr.bf16.mxu0 0
        %7620 = vmatpush1.bf16.msra.mxu0 %v7562
        %7621 = vmatprep.subr.bf16.mxu0 0
        %7622 = vmatpush2.bf16.msra.mxu0 0
        %7623 = vmatprep.subr.bf16.mxu0 0
        %7624 = vmatpush2.bf16.msra.mxu0 0
        %7625 = vmatprep.subr.bf16.mxu0 0
        %7626 = vmatpush2.bf16.msra.mxu0 0
        %7627 = vmatprep.subr.bf16.mxu0 0
        %7628 = vmatpush2.bf16.msra.mxu0 0
        %7629 = vmatprep.subr.bf16.mxu0 0
        %7630 = vmatpush2.bf16.msra.mxu0 0
        %7631 = vmatprep.subr.bf16.mxu0 0
        %7632 = vmatpush2.bf16.msra.mxu0 0
        %7633 = vmatprep.subr.bf16.mxu0 0
        %7634 = vmatpush2.bf16.msra.mxu0 0
        %7635 = vmatprep.subr.bf16.mxu0 0
        %7636 = vmatpush2.bf16.msra.mxu0 0
        %7637 = vmatprep.mubr.bf16.mxu0 0
        %7638 = vmatmul.mubr.bf16.gmra.mxu0 %v7553
        %v7639 = vpop.f32.mrf.mxu0
        %v7640 = vadd.f32 0.0, %v7639
        %v7641 = vpop.f32.mrf.mxu0
        %v7642 = vpop.f32.mrf.mxu0
        %v7643 = vpop.f32.mrf.mxu0
        %7644 = vdwg.mxu0
        %v7645 = vadd.f32 %v7539, %v7599
        %v7646 = vadd.f32 %v7540, %v7601
        %v7647 = vadd.f32 %v7541, %v7640
        %s7648 = scalar_lea.vmem %s4, 24
        %v7649 = vld [vmem:[%s7648] sm:$0x3]
        %7650 = vrot.lane.b32.xlu0 %v7331, 110
        %v7651 = vpop.permute.xlu0 %7650
        %7652 = vrot.lane.b32.xlu0 %v7339, 110
        %v7653 = vpop.permute.xlu0 %7652
        %7654 = vrot.lane.b32.xlu0 %v7338, 110
        %v7655 = vpop.permute.xlu0 %7654
        %v7656 = vsel %vm6682, %v7651, %v7653
        %v7657 = vsel %vm6682, %v7653, %v7655
        %v7659 = vsel %vm6380, %v7649, 0
        %v7662 = vsel %vm440, %v7656, 0
        %v7665 = vsel %vm440, %v7657, 0
        %v7668 = vsel %vm440, %v7655, 0
        %7670 = vmatprep.subr.bf16.mxu0 0
        %7671 = vmatpush1.bf16.msra.mxu0 0
        %7672 = vmatprep.subr.bf16.mxu0 0
        %7673 = vmatpush1.bf16.msra.mxu0 0
        %7674 = vmatprep.subr.bf16.mxu0 0
        %7675 = vmatpush1.bf16.msra.mxu0 0
        %7676 = vmatprep.subr.bf16.mxu0 0
        %7677 = vmatpush1.bf16.msra.mxu0 0
        %7678 = vmatprep.subr.bf16.mxu0 0
        %7679 = vmatpush1.bf16.msra.mxu0 0
        %7680 = vmatprep.subr.bf16.mxu0 0
        %7681 = vmatpush1.bf16.msra.mxu0 0
        %7682 = vmatprep.subr.bf16.mxu0 0
        %7683 = vmatpush1.bf16.msra.mxu0 0
        %7684 = vmatprep.subr.bf16.mxu0 %v7665
        %7685 = vmatpush1.bf16.msra.mxu0 %v7662
        %7686 = vmatprep.subr.bf16.mxu0 0
        %7687 = vmatpush2.bf16.msra.mxu0 0
        %7688 = vmatprep.subr.bf16.mxu0 0
        %7689 = vmatpush2.bf16.msra.mxu0 0
        %7690 = vmatprep.subr.bf16.mxu0 0
        %7691 = vmatpush2.bf16.msra.mxu0 0
        %7692 = vmatprep.subr.bf16.mxu0 0
        %7693 = vmatpush2.bf16.msra.mxu0 0
        %7694 = vmatprep.subr.bf16.mxu0 0
        %7695 = vmatpush2.bf16.msra.mxu0 0
        %7696 = vmatprep.subr.bf16.mxu0 0
        %7697 = vmatpush2.bf16.msra.mxu0 0
        %7698 = vmatprep.subr.bf16.mxu0 0
        %7699 = vmatpush2.bf16.msra.mxu0 0
        %7700 = vmatprep.subr.bf16.mxu0 0
        %7701 = vmatpush2.bf16.msra.mxu0 0
        %7702 = vmatprep.mubr.bf16.mxu0 0
        %7703 = vmatmul.mubr.bf16.gmra.mxu0 %v7659
        %v7704 = vpop.f32.mrf.mxu0
        %v7705 = vadd.f32 0.0, %v7704
        %v7706 = vpop.f32.mrf.mxu0
        %v7707 = vadd.f32 0.0, %v7706
        %v7708 = vpop.f32.mrf.mxu0
        %v7709 = vpop.f32.mrf.mxu0
        %7710 = vdwg.mxu0
        %7711 = vmatprep.subr.bf16.mxu0 0
        %7712 = vmatpush1.bf16.msra.mxu0 0
        %7713 = vmatprep.subr.bf16.mxu0 0
        %7714 = vmatpush1.bf16.msra.mxu0 0
        %7715 = vmatprep.subr.bf16.mxu0 0
        %7716 = vmatpush1.bf16.msra.mxu0 0
        %7717 = vmatprep.subr.bf16.mxu0 0
        %7718 = vmatpush1.bf16.msra.mxu0 0
        %7719 = vmatprep.subr.bf16.mxu0 0
        %7720 = vmatpush1.bf16.msra.mxu0 0
        %7721 = vmatprep.subr.bf16.mxu0 0
        %7722 = vmatpush1.bf16.msra.mxu0 0
        %7723 = vmatprep.subr.bf16.mxu0 0
        %7724 = vmatpush1.bf16.msra.mxu0 0
        %7725 = vmatprep.subr.bf16.mxu0 0
        %7726 = vmatpush1.bf16.msra.mxu0 %v7668
        %7727 = vmatprep.subr.bf16.mxu0 0
        %7728 = vmatpush2.bf16.msra.mxu0 0
        %7729 = vmatprep.subr.bf16.mxu0 0
        %7730 = vmatpush2.bf16.msra.mxu0 0
        %7731 = vmatprep.subr.bf16.mxu0 0
        %7732 = vmatpush2.bf16.msra.mxu0 0
        %7733 = vmatprep.subr.bf16.mxu0 0
        %7734 = vmatpush2.bf16.msra.mxu0 0
        %7735 = vmatprep.subr.bf16.mxu0 0
        %7736 = vmatpush2.bf16.msra.mxu0 0
        %7737 = vmatprep.subr.bf16.mxu0 0
        %7738 = vmatpush2.bf16.msra.mxu0 0
        %7739 = vmatprep.subr.bf16.mxu0 0
        %7740 = vmatpush2.bf16.msra.mxu0 0
        %7741 = vmatprep.subr.bf16.mxu0 0
        %7742 = vmatpush2.bf16.msra.mxu0 0
        %7743 = vmatprep.mubr.bf16.mxu0 0
        %7744 = vmatmul.mubr.bf16.gmra.mxu0 %v7659
        %v7745 = vpop.f32.mrf.mxu0
        %v7746 = vadd.f32 0.0, %v7745
        %v7747 = vpop.f32.mrf.mxu0
        %v7748 = vpop.f32.mrf.mxu0
        %v7749 = vpop.f32.mrf.mxu0
        %7750 = vdwg.mxu0
        %v7751 = vadd.f32 %v7645, %v7705
        %v7752 = vadd.f32 %v7646, %v7707
        %v7753 = vadd.f32 %v7647, %v7746
        %s7754 = scalar_lea.vmem %s4, 26
        %v7755 = vld [vmem:[%s7754] sm:$0x3]
        %7756 = vrot.lane.b32.xlu0 %v7331, 109
        %v7757 = vpop.permute.xlu0 %7756
        %7758 = vrot.lane.b32.xlu0 %v7339, 109
        %v7759 = vpop.permute.xlu0 %7758
        %7760 = vrot.lane.b32.xlu0 %v7338, 109
        %v7761 = vpop.permute.xlu0 %7760
        %v7762 = vsel %vm6789, %v7757, %v7759
        %v7763 = vsel %vm6789, %v7759, %v7761
        %v7765 = vsel %vm6380, %v7755, 0
        %v7768 = vsel %vm440, %v7762, 0
        %v7771 = vsel %vm440, %v7763, 0
        %v7774 = vsel %vm440, %v7761, 0
        %7776 = vmatprep.subr.bf16.mxu0 0
        %7777 = vmatpush1.bf16.msra.mxu0 0
        %7778 = vmatprep.subr.bf16.mxu0 0
        %7779 = vmatpush1.bf16.msra.mxu0 0
        %7780 = vmatprep.subr.bf16.mxu0 0
        %7781 = vmatpush1.bf16.msra.mxu0 0
        %7782 = vmatprep.subr.bf16.mxu0 0
        %7783 = vmatpush1.bf16.msra.mxu0 0
        %7784 = vmatprep.subr.bf16.mxu0 0
        %7785 = vmatpush1.bf16.msra.mxu0 0
        %7786 = vmatprep.subr.bf16.mxu0 0
        %7787 = vmatpush1.bf16.msra.mxu0 0
        %7788 = vmatprep.subr.bf16.mxu0 0
        %7789 = vmatpush1.bf16.msra.mxu0 0
        %7790 = vmatprep.subr.bf16.mxu0 %v7771
        %7791 = vmatpush1.bf16.msra.mxu0 %v7768
        %7792 = vmatprep.subr.bf16.mxu0 0
        %7793 = vmatpush2.bf16.msra.mxu0 0
        %7794 = vmatprep.subr.bf16.mxu0 0
        %7795 = vmatpush2.bf16.msra.mxu0 0
        %7796 = vmatprep.subr.bf16.mxu0 0
        %7797 = vmatpush2.bf16.msra.mxu0 0
        %7798 = vmatprep.subr.bf16.mxu0 0
        %7799 = vmatpush2.bf16.msra.mxu0 0
        %7800 = vmatprep.subr.bf16.mxu0 0
        %7801 = vmatpush2.bf16.msra.mxu0 0
        %7802 = vmatprep.subr.bf16.mxu0 0
        %7803 = vmatpush2.bf16.msra.mxu0 0
        %7804 = vmatprep.subr.bf16.mxu0 0
        %7805 = vmatpush2.bf16.msra.mxu0 0
        %7806 = vmatprep.subr.bf16.mxu0 0
        %7807 = vmatpush2.bf16.msra.mxu0 0
        %7808 = vmatprep.mubr.bf16.mxu0 0
        %7809 = vmatmul.mubr.bf16.gmra.mxu0 %v7765
        %v7810 = vpop.f32.mrf.mxu0
        %v7811 = vadd.f32 0.0, %v7810
        %v7812 = vpop.f32.mrf.mxu0
        %v7813 = vadd.f32 0.0, %v7812
        %v7814 = vpop.f32.mrf.mxu0
        %v7815 = vpop.f32.mrf.mxu0
        %7816 = vdwg.mxu0
        %7817 = vmatprep.subr.bf16.mxu0 0
        %7818 = vmatpush1.bf16.msra.mxu0 0
        %7819 = vmatprep.subr.bf16.mxu0 0
        %7820 = vmatpush1.bf16.msra.mxu0 0
        %7821 = vmatprep.subr.bf16.mxu0 0
        %7822 = vmatpush1.bf16.msra.mxu0 0
        %7823 = vmatprep.subr.bf16.mxu0 0
        %7824 = vmatpush1.bf16.msra.mxu0 0
        %7825 = vmatprep.subr.bf16.mxu0 0
        %7826 = vmatpush1.bf16.msra.mxu0 0
        %7827 = vmatprep.subr.bf16.mxu0 0
        %7828 = vmatpush1.bf16.msra.mxu0 0
        %7829 = vmatprep.subr.bf16.mxu0 0
        %7830 = vmatpush1.bf16.msra.mxu0 0
        %7831 = vmatprep.subr.bf16.mxu0 0
        %7832 = vmatpush1.bf16.msra.mxu0 %v7774
        %7833 = vmatprep.subr.bf16.mxu0 0
        %7834 = vmatpush2.bf16.msra.mxu0 0
        %7835 = vmatprep.subr.bf16.mxu0 0
        %7836 = vmatpush2.bf16.msra.mxu0 0
        %7837 = vmatprep.subr.bf16.mxu0 0
        %7838 = vmatpush2.bf16.msra.mxu0 0
        %7839 = vmatprep.subr.bf16.mxu0 0
        %7840 = vmatpush2.bf16.msra.mxu0 0
        %7841 = vmatprep.subr.bf16.mxu0 0
        %7842 = vmatpush2.bf16.msra.mxu0 0
        %7843 = vmatprep.subr.bf16.mxu0 0
        %7844 = vmatpush2.bf16.msra.mxu0 0
        %7845 = vmatprep.subr.bf16.mxu0 0
        %7846 = vmatpush2.bf16.msra.mxu0 0
        %7847 = vmatprep.subr.bf16.mxu0 0
        %7848 = vmatpush2.bf16.msra.mxu0 0
        %7849 = vmatprep.mubr.bf16.mxu0 0
        %7850 = vmatmul.mubr.bf16.gmra.mxu0 %v7765
        %v7851 = vpop.f32.mrf.mxu0
        %v7852 = vadd.f32 0.0, %v7851
        %v7853 = vpop.f32.mrf.mxu0
        %v7854 = vpop.f32.mrf.mxu0
        %v7855 = vpop.f32.mrf.mxu0
        %7856 = vdwg.mxu0
        %v7857 = vadd.f32 %v7751, %v7811
        %v7858 = vadd.f32 %v7752, %v7813
        %v7859 = vadd.f32 %v7753, %v7852
        %s7860 = scalar_lea.vmem %s4, 28
        %v7861 = vld [vmem:[%s7860] sm:$0x3]
        %7862 = vrot.lane.b32.xlu0 %v7331, 108
        %v7863 = vpop.permute.xlu0 %7862
        %7864 = vrot.lane.b32.xlu0 %v7339, 108
        %v7865 = vpop.permute.xlu0 %7864
        %7866 = vrot.lane.b32.xlu0 %v7338, 108
        %v7867 = vpop.permute.xlu0 %7866
        %v7868 = vsel %vm6896, %v7863, %v7865
        %v7869 = vsel %vm6896, %v7865, %v7867
        %v7871 = vsel %vm6380, %v7861, 0
        %v7874 = vsel %vm440, %v7868, 0
        %v7877 = vsel %vm440, %v7869, 0
        %v7880 = vsel %vm440, %v7867, 0
        %7882 = vmatprep.subr.bf16.mxu0 0
        %7883 = vmatpush1.bf16.msra.mxu0 0
        %7884 = vmatprep.subr.bf16.mxu0 0
        %7885 = vmatpush1.bf16.msra.mxu0 0
        %7886 = vmatprep.subr.bf16.mxu0 0
        %7887 = vmatpush1.bf16.msra.mxu0 0
        %7888 = vmatprep.subr.bf16.mxu0 0
        %7889 = vmatpush1.bf16.msra.mxu0 0
        %7890 = vmatprep.subr.bf16.mxu0 0
        %7891 = vmatpush1.bf16.msra.mxu0 0
        %7892 = vmatprep.subr.bf16.mxu0 0
        %7893 = vmatpush1.bf16.msra.mxu0 0
        %7894 = vmatprep.subr.bf16.mxu0 0
        %7895 = vmatpush1.bf16.msra.mxu0 0
        %7896 = vmatprep.subr.bf16.mxu0 %v7877
        %7897 = vmatpush1.bf16.msra.mxu0 %v7874
        %7898 = vmatprep.subr.bf16.mxu0 0
        %7899 = vmatpush2.bf16.msra.mxu0 0
        %7900 = vmatprep.subr.bf16.mxu0 0
        %7901 = vmatpush2.bf16.msra.mxu0 0
        %7902 = vmatprep.subr.bf16.mxu0 0
        %7903 = vmatpush2.bf16.msra.mxu0 0
        %7904 = vmatprep.subr.bf16.mxu0 0
        %7905 = vmatpush2.bf16.msra.mxu0 0
        %7906 = vmatprep.subr.bf16.mxu0 0
        %7907 = vmatpush2.bf16.msra.mxu0 0
        %7908 = vmatprep.subr.bf16.mxu0 0
        %7909 = vmatpush2.bf16.msra.mxu0 0
        %7910 = vmatprep.subr.bf16.mxu0 0
        %7911 = vmatpush2.bf16.msra.mxu0 0
        %7912 = vmatprep.subr.bf16.mxu0 0
        %7913 = vmatpush2.bf16.msra.mxu0 0
        %7914 = vmatprep.mubr.bf16.mxu0 0
        %7915 = vmatmul.mubr.bf16.gmra.mxu0 %v7871
        %v7916 = vpop.f32.mrf.mxu0
        %v7917 = vadd.f32 0.0, %v7916
        %v7918 = vpop.f32.mrf.mxu0
        %v7919 = vadd.f32 0.0, %v7918
        %v7920 = vpop.f32.mrf.mxu0
        %v7921 = vpop.f32.mrf.mxu0
        %7922 = vdwg.mxu0
        %7923 = vmatprep.subr.bf16.mxu0 0
        %7924 = vmatpush1.bf16.msra.mxu0 0
        %7925 = vmatprep.subr.bf16.mxu0 0
        %7926 = vmatpush1.bf16.msra.mxu0 0
        %7927 = vmatprep.subr.bf16.mxu0 0
        %7928 = vmatpush1.bf16.msra.mxu0 0
        %7929 = vmatprep.subr.bf16.mxu0 0
        %7930 = vmatpush1.bf16.msra.mxu0 0
        %7931 = vmatprep.subr.bf16.mxu0 0
        %7932 = vmatpush1.bf16.msra.mxu0 0
        %7933 = vmatprep.subr.bf16.mxu0 0
        %7934 = vmatpush1.bf16.msra.mxu0 0
        %7935 = vmatprep.subr.bf16.mxu0 0
        %7936 = vmatpush1.bf16.msra.mxu0 0
        %7937 = vmatprep.subr.bf16.mxu0 0
        %7938 = vmatpush1.bf16.msra.mxu0 %v7880
        %7939 = vmatprep.subr.bf16.mxu0 0
        %7940 = vmatpush2.bf16.msra.mxu0 0
        %7941 = vmatprep.subr.bf16.mxu0 0
        %7942 = vmatpush2.bf16.msra.mxu0 0
        %7943 = vmatprep.subr.bf16.mxu0 0
        %7944 = vmatpush2.bf16.msra.mxu0 0
        %7945 = vmatprep.subr.bf16.mxu0 0
        %7946 = vmatpush2.bf16.msra.mxu0 0
        %7947 = vmatprep.subr.bf16.mxu0 0
        %7948 = vmatpush2.bf16.msra.mxu0 0
        %7949 = vmatprep.subr.bf16.mxu0 0
        %7950 = vmatpush2.bf16.msra.mxu0 0
        %7951 = vmatprep.subr.bf16.mxu0 0
        %7952 = vmatpush2.bf16.msra.mxu0 0
        %7953 = vmatprep.subr.bf16.mxu0 0
        %7954 = vmatpush2.bf16.msra.mxu0 0
        %7955 = vmatprep.mubr.bf16.mxu0 0
        %7956 = vmatmul.mubr.bf16.gmra.mxu0 %v7871
        %v7957 = vpop.f32.mrf.mxu0
        %v7958 = vadd.f32 0.0, %v7957
        %v7959 = vpop.f32.mrf.mxu0
        %v7960 = vpop.f32.mrf.mxu0
        %v7961 = vpop.f32.mrf.mxu0
        %7962 = vdwg.mxu0
        %v7963 = vadd.f32 %v7857, %v7917
        %v7964 = vadd.f32 %v7858, %v7919
        %v7965 = vadd.f32 %v7859, %v7958
        %s7966 = scalar_lea.vmem %s4, 30
        %v7967 = vld [vmem:[%s7966] sm:$0x3]
        %7968 = vrot.lane.b32.xlu0 %v7331, 92
        %v7969 = vpop.permute.xlu0 %7968
        %7970 = vrot.lane.b32.xlu0 %v7339, 92
        %v7971 = vpop.permute.xlu0 %7970
        %7972 = vrot.lane.b32.xlu0 %v7338, 92
        %v7973 = vpop.permute.xlu0 %7972
        %v7974 = vsel %vm7003, %v7969, %v7971
        %v7975 = vsel %vm7003, %v7971, %v7973
        %v7977 = vsel %vm6380, %v7967, 0
        %v7980 = vsel %vm440, %v7974, 0
        %v7983 = vsel %vm440, %v7975, 0
        %v7986 = vsel %vm440, %v7973, 0
        %7988 = vmatprep.subr.bf16.mxu0 0
        %7989 = vmatpush1.bf16.msra.mxu0 0
        %7990 = vmatprep.subr.bf16.mxu0 0
        %7991 = vmatpush1.bf16.msra.mxu0 0
        %7992 = vmatprep.subr.bf16.mxu0 0
        %7993 = vmatpush1.bf16.msra.mxu0 0
        %7994 = vmatprep.subr.bf16.mxu0 0
        %7995 = vmatpush1.bf16.msra.mxu0 0
        %7996 = vmatprep.subr.bf16.mxu0 0
        %7997 = vmatpush1.bf16.msra.mxu0 0
        %7998 = vmatprep.subr.bf16.mxu0 0
        %7999 = vmatpush1.bf16.msra.mxu0 0
        %8000 = vmatprep.subr.bf16.mxu0 0
        %8001 = vmatpush1.bf16.msra.mxu0 0
        %8002 = vmatprep.subr.bf16.mxu0 %v7983
        %8003 = vmatpush1.bf16.msra.mxu0 %v7980
        %8004 = vmatprep.subr.bf16.mxu0 0
        %8005 = vmatpush2.bf16.msra.mxu0 0
        %8006 = vmatprep.subr.bf16.mxu0 0
        %8007 = vmatpush2.bf16.msra.mxu0 0
        %8008 = vmatprep.subr.bf16.mxu0 0
        %8009 = vmatpush2.bf16.msra.mxu0 0
        %8010 = vmatprep.subr.bf16.mxu0 0
        %8011 = vmatpush2.bf16.msra.mxu0 0
        %8012 = vmatprep.subr.bf16.mxu0 0
        %8013 = vmatpush2.bf16.msra.mxu0 0
        %8014 = vmatprep.subr.bf16.mxu0 0
        %8015 = vmatpush2.bf16.msra.mxu0 0
        %8016 = vmatprep.subr.bf16.mxu0 0
        %8017 = vmatpush2.bf16.msra.mxu0 0
        %8018 = vmatprep.subr.bf16.mxu0 0
        %8019 = vmatpush2.bf16.msra.mxu0 0
        %8020 = vmatprep.mubr.bf16.mxu0 0
        %8021 = vmatmul.mubr.bf16.gmra.mxu0 %v7977
        %v8022 = vpop.f32.mrf.mxu0
        %v8023 = vadd.f32 0.0, %v8022
        %v8024 = vpop.f32.mrf.mxu0
        %v8025 = vadd.f32 0.0, %v8024
        %v8026 = vpop.f32.mrf.mxu0
        %v8027 = vpop.f32.mrf.mxu0
        %8028 = vdwg.mxu0
        %8029 = vmatprep.subr.bf16.mxu0 0
        %8030 = vmatpush1.bf16.msra.mxu0 0
        %8031 = vmatprep.subr.bf16.mxu0 0
        %8032 = vmatpush1.bf16.msra.mxu0 0
        %8033 = vmatprep.subr.bf16.mxu0 0
        %8034 = vmatpush1.bf16.msra.mxu0 0
        %8035 = vmatprep.subr.bf16.mxu0 0
        %8036 = vmatpush1.bf16.msra.mxu0 0
        %8037 = vmatprep.subr.bf16.mxu0 0
        %8038 = vmatpush1.bf16.msra.mxu0 0
        %8039 = vmatprep.subr.bf16.mxu0 0
        %8040 = vmatpush1.bf16.msra.mxu0 0
        %8041 = vmatprep.subr.bf16.mxu0 0
        %8042 = vmatpush1.bf16.msra.mxu0 0
        %8043 = vmatprep.subr.bf16.mxu0 0
        %8044 = vmatpush1.bf16.msra.mxu0 %v7986
        %8045 = vmatprep.subr.bf16.mxu0 0
        %8046 = vmatpush2.bf16.msra.mxu0 0
        %8047 = vmatprep.subr.bf16.mxu0 0
        %8048 = vmatpush2.bf16.msra.mxu0 0
        %8049 = vmatprep.subr.bf16.mxu0 0
        %8050 = vmatpush2.bf16.msra.mxu0 0
        %8051 = vmatprep.subr.bf16.mxu0 0
        %8052 = vmatpush2.bf16.msra.mxu0 0
        %8053 = vmatprep.subr.bf16.mxu0 0
        %8054 = vmatpush2.bf16.msra.mxu0 0
        %8055 = vmatprep.subr.bf16.mxu0 0
        %8056 = vmatpush2.bf16.msra.mxu0 0
        %8057 = vmatprep.subr.bf16.mxu0 0
        %8058 = vmatpush2.bf16.msra.mxu0 0
        %8059 = vmatprep.subr.bf16.mxu0 0
        %8060 = vmatpush2.bf16.msra.mxu0 0
        %8061 = vmatprep.mubr.bf16.mxu0 0
        %8062 = vmatmul.mubr.bf16.gmra.mxu0 %v7977
        %v8063 = vpop.f32.mrf.mxu0
        %v8064 = vadd.f32 0.0, %v8063
        %v8065 = vpop.f32.mrf.mxu0
        %v8066 = vpop.f32.mrf.mxu0
        %v8067 = vpop.f32.mrf.mxu0
        %8068 = vdwg.mxu0
        %v8069 = vadd.f32 %v7963, %v8023
        %v8070 = vadd.f32 %v7964, %v8025
        %v8071 = vadd.f32 %v7965, %v8064
        %s8072 = scalar_lea.vmem %s4, 32
        %v8073 = vld [vmem:[%s8072] sm:$0x3]
        %8074 = vrot.lane.b32.xlu0 %v7331, 91
        %v8075 = vpop.permute.xlu0 %8074
        %8076 = vrot.lane.b32.xlu0 %v7339, 91
        %v8077 = vpop.permute.xlu0 %8076
        %8078 = vrot.lane.b32.xlu0 %v7338, 91
        %v8079 = vpop.permute.xlu0 %8078
        %v8080 = vsel %vm7110, %v8075, %v8077
        %v8081 = vsel %vm7110, %v8077, %v8079
        %v8083 = vsel %vm6380, %v8073, 0
        %v8086 = vsel %vm440, %v8080, 0
        %v8089 = vsel %vm440, %v8081, 0
        %v8092 = vsel %vm440, %v8079, 0
        %8094 = vmatprep.subr.bf16.mxu0 0
        %8095 = vmatpush1.bf16.msra.mxu0 0
        %8096 = vmatprep.subr.bf16.mxu0 0
        %8097 = vmatpush1.bf16.msra.mxu0 0
        %8098 = vmatprep.subr.bf16.mxu0 0
        %8099 = vmatpush1.bf16.msra.mxu0 0
        %8100 = vmatprep.subr.bf16.mxu0 0
        %8101 = vmatpush1.bf16.msra.mxu0 0
        %8102 = vmatprep.subr.bf16.mxu0 0
        %8103 = vmatpush1.bf16.msra.mxu0 0
        %8104 = vmatprep.subr.bf16.mxu0 0
        %8105 = vmatpush1.bf16.msra.mxu0 0
        %8106 = vmatprep.subr.bf16.mxu0 0
        %8107 = vmatpush1.bf16.msra.mxu0 0
        %8108 = vmatprep.subr.bf16.mxu0 %v8089
        %8109 = vmatpush1.bf16.msra.mxu0 %v8086
        %8110 = vmatprep.subr.bf16.mxu0 0
        %8111 = vmatpush2.bf16.msra.mxu0 0
        %8112 = vmatprep.subr.bf16.mxu0 0
        %8113 = vmatpush2.bf16.msra.mxu0 0
        %8114 = vmatprep.subr.bf16.mxu0 0
        %8115 = vmatpush2.bf16.msra.mxu0 0
        %8116 = vmatprep.subr.bf16.mxu0 0
        %8117 = vmatpush2.bf16.msra.mxu0 0
        %8118 = vmatprep.subr.bf16.mxu0 0
        %8119 = vmatpush2.bf16.msra.mxu0 0
        %8120 = vmatprep.subr.bf16.mxu0 0
        %8121 = vmatpush2.bf16.msra.mxu0 0
        %8122 = vmatprep.subr.bf16.mxu0 0
        %8123 = vmatpush2.bf16.msra.mxu0 0
        %8124 = vmatprep.subr.bf16.mxu0 0
        %8125 = vmatpush2.bf16.msra.mxu0 0
        %8126 = vmatprep.mubr.bf16.mxu0 0
        %8127 = vmatmul.mubr.bf16.gmra.mxu0 %v8083
        %v8128 = vpop.f32.mrf.mxu0
        %v8129 = vadd.f32 0.0, %v8128
        %v8130 = vpop.f32.mrf.mxu0
        %v8131 = vadd.f32 0.0, %v8130
        %v8132 = vpop.f32.mrf.mxu0
        %v8133 = vpop.f32.mrf.mxu0
        %8134 = vdwg.mxu0
        %8135 = vmatprep.subr.bf16.mxu0 0
        %8136 = vmatpush1.bf16.msra.mxu0 0
        %8137 = vmatprep.subr.bf16.mxu0 0
        %8138 = vmatpush1.bf16.msra.mxu0 0
        %8139 = vmatprep.subr.bf16.mxu0 0
        %8140 = vmatpush1.bf16.msra.mxu0 0
        %8141 = vmatprep.subr.bf16.mxu0 0
        %8142 = vmatpush1.bf16.msra.mxu0 0
        %8143 = vmatprep.subr.bf16.mxu0 0
        %8144 = vmatpush1.bf16.msra.mxu0 0
        %8145 = vmatprep.subr.bf16.mxu0 0
        %8146 = vmatpush1.bf16.msra.mxu0 0
        %8147 = vmatprep.subr.bf16.mxu0 0
        %8148 = vmatpush1.bf16.msra.mxu0 0
        %8149 = vmatprep.subr.bf16.mxu0 0
        %8150 = vmatpush1.bf16.msra.mxu0 %v8092
        %8151 = vmatprep.subr.bf16.mxu0 0
        %8152 = vmatpush2.bf16.msra.mxu0 0
        %8153 = vmatprep.subr.bf16.mxu0 0
        %8154 = vmatpush2.bf16.msra.mxu0 0
        %8155 = vmatprep.subr.bf16.mxu0 0
        %8156 = vmatpush2.bf16.msra.mxu0 0
        %8157 = vmatprep.subr.bf16.mxu0 0
        %8158 = vmatpush2.bf16.msra.mxu0 0
        %8159 = vmatprep.subr.bf16.mxu0 0
        %8160 = vmatpush2.bf16.msra.mxu0 0
        %8161 = vmatprep.subr.bf16.mxu0 0
        %8162 = vmatpush2.bf16.msra.mxu0 0
        %8163 = vmatprep.subr.bf16.mxu0 0
        %8164 = vmatpush2.bf16.msra.mxu0 0
        %8165 = vmatprep.subr.bf16.mxu0 0
        %8166 = vmatpush2.bf16.msra.mxu0 0
        %8167 = vmatprep.mubr.bf16.mxu0 0
        %8168 = vmatmul.mubr.bf16.gmra.mxu0 %v8083
        %v8169 = vpop.f32.mrf.mxu0
        %v8170 = vadd.f32 0.0, %v8169
        %v8171 = vpop.f32.mrf.mxu0
        %v8172 = vpop.f32.mrf.mxu0
        %v8173 = vpop.f32.mrf.mxu0
        %8174 = vdwg.mxu0
        %v8175 = vadd.f32 %v8069, %v8129
        %v8176 = vadd.f32 %v8070, %v8131
        %v8177 = vadd.f32 %v8071, %v8170
        %s8178 = scalar_lea.vmem %s4, 34
        %v8179 = vld [vmem:[%s8178] sm:$0x3]
        %8180 = vrot.lane.b32.xlu0 %v7331, 90
        %v8181 = vpop.permute.xlu0 %8180
        %8182 = vrot.lane.b32.xlu0 %v7339, 90
        %v8183 = vpop.permute.xlu0 %8182
        %8184 = vrot.lane.b32.xlu0 %v7338, 90
        %v8185 = vpop.permute.xlu0 %8184
        %v8186 = vsel %vm7217, %v8181, %v8183
        %v8187 = vsel %vm7217, %v8183, %v8185
        %v8189 = vsel %vm6380, %v8179, 0
        %v8192 = vsel %vm440, %v8186, 0
        %v8195 = vsel %vm440, %v8187, 0
        %v8198 = vsel %vm440, %v8185, 0
        %8200 = vmatprep.subr.bf16.mxu0 0
        %8201 = vmatpush1.bf16.msra.mxu0 0
        %8202 = vmatprep.subr.bf16.mxu0 0
        %8203 = vmatpush1.bf16.msra.mxu0 0
        %8204 = vmatprep.subr.bf16.mxu0 0
        %8205 = vmatpush1.bf16.msra.mxu0 0
        %8206 = vmatprep.subr.bf16.mxu0 0
        %8207 = vmatpush1.bf16.msra.mxu0 0
        %8208 = vmatprep.subr.bf16.mxu0 0
        %8209 = vmatpush1.bf16.msra.mxu0 0
        %8210 = vmatprep.subr.bf16.mxu0 0
        %8211 = vmatpush1.bf16.msra.mxu0 0
        %8212 = vmatprep.subr.bf16.mxu0 0
        %8213 = vmatpush1.bf16.msra.mxu0 0
        %8214 = vmatprep.subr.bf16.mxu0 %v8195
        %8215 = vmatpush1.bf16.msra.mxu0 %v8192
        %8216 = vmatprep.subr.bf16.mxu0 0
        %8217 = vmatpush2.bf16.msra.mxu0 0
        %8218 = vmatprep.subr.bf16.mxu0 0
        %8219 = vmatpush2.bf16.msra.mxu0 0
        %8220 = vmatprep.subr.bf16.mxu0 0
        %8221 = vmatpush2.bf16.msra.mxu0 0
        %8222 = vmatprep.subr.bf16.mxu0 0
        %8223 = vmatpush2.bf16.msra.mxu0 0
        %8224 = vmatprep.subr.bf16.mxu0 0
        %8225 = vmatpush2.bf16.msra.mxu0 0
        %8226 = vmatprep.subr.bf16.mxu0 0
        %8227 = vmatpush2.bf16.msra.mxu0 0
        %8228 = vmatprep.subr.bf16.mxu0 0
        %8229 = vmatpush2.bf16.msra.mxu0 0
        %8230 = vmatprep.subr.bf16.mxu0 0
        %8231 = vmatpush2.bf16.msra.mxu0 0
        %8232 = vmatprep.mubr.bf16.mxu0 0
        %8233 = vmatmul.mubr.bf16.gmra.mxu0 %v8189
        %v8234 = vpop.f32.mrf.mxu0
        %v8235 = vadd.f32 0.0, %v8234
        %v8236 = vpop.f32.mrf.mxu0
        %v8237 = vadd.f32 0.0, %v8236
        %v8238 = vpop.f32.mrf.mxu0
        %v8239 = vpop.f32.mrf.mxu0
        %8240 = vdwg.mxu0
        %8241 = vmatprep.subr.bf16.mxu0 0
        %8242 = vmatpush1.bf16.msra.mxu0 0
        %8243 = vmatprep.subr.bf16.mxu0 0
        %8244 = vmatpush1.bf16.msra.mxu0 0
        %8245 = vmatprep.subr.bf16.mxu0 0
        %8246 = vmatpush1.bf16.msra.mxu0 0
        %8247 = vmatprep.subr.bf16.mxu0 0
        %8248 = vmatpush1.bf16.msra.mxu0 0
        %8249 = vmatprep.subr.bf16.mxu0 0
        %8250 = vmatpush1.bf16.msra.mxu0 0
        %8251 = vmatprep.subr.bf16.mxu0 0
        %8252 = vmatpush1.bf16.msra.mxu0 0
        %8253 = vmatprep.subr.bf16.mxu0 0
        %8254 = vmatpush1.bf16.msra.mxu0 0
        %8255 = vmatprep.subr.bf16.mxu0 0
        %8256 = vmatpush1.bf16.msra.mxu0 %v8198
        %8257 = vmatprep.subr.bf16.mxu0 0
        %8258 = vmatpush2.bf16.msra.mxu0 0
        %8259 = vmatprep.subr.bf16.mxu0 0
        %8260 = vmatpush2.bf16.msra.mxu0 0
        %8261 = vmatprep.subr.bf16.mxu0 0
        %8262 = vmatpush2.bf16.msra.mxu0 0
        %8263 = vmatprep.subr.bf16.mxu0 0
        %8264 = vmatpush2.bf16.msra.mxu0 0
        %8265 = vmatprep.subr.bf16.mxu0 0
        %8266 = vmatpush2.bf16.msra.mxu0 0
        %8267 = vmatprep.subr.bf16.mxu0 0
        %8268 = vmatpush2.bf16.msra.mxu0 0
        %8269 = vmatprep.subr.bf16.mxu0 0
        %8270 = vmatpush2.bf16.msra.mxu0 0
        %8271 = vmatprep.subr.bf16.mxu0 0
        %8272 = vmatpush2.bf16.msra.mxu0 0
        %8273 = vmatprep.mubr.bf16.mxu0 0
        %8274 = vmatmul.mubr.bf16.gmra.mxu0 %v8189
        %v8275 = vpop.f32.mrf.mxu0
        %v8276 = vadd.f32 0.0, %v8275
        %v8277 = vpop.f32.mrf.mxu0
        %v8278 = vpop.f32.mrf.mxu0
        %v8279 = vpop.f32.mrf.mxu0
        %8280 = vdwg.mxu0
        %v8281 = vadd.f32 %v8175, %v8235
        %v8282 = vadd.f32 %v8176, %v8237
        %v8283 = vadd.f32 %v8177, %v8276
        %s8284 = sadd.s32 %s6342, 2
        %s8285 = smul.u32 %s8284, 3
        %s8286 = smul.addr %s8285, 2
        %s8287 = scalar_lea.vmem [#allocation2], %s8286
        %v8288 = vld [vmem:[%s8287] sm:$0x3f]
        %s8289 = scalar_lea.vmem %s4, 36
        %v8290 = vld [vmem:[%s8289] sm:$0x3]
        %v8292 = vcombine.high %v8288, %v8288
        %v8294 = vunpack.c.l.s4 1983009808
        %v8295 = vunpack.c.0.s8 %v8294
        %v8296 = vlaneseq
        %v8297 = vshrl.u32 %v8296, 7
        %v8298 = vsub.s32 %v8295, %v8297
        %v8299 = vrot.slane %v8288, %v8298
        %v8301 = vunpack.c.l.s4 1983009808
        %v8302 = vunpack.c.0.s8 %v8301
        %v8303 = vlaneseq
        %v8304 = vshrl.u32 %v8303, 7
        %v8305 = vsub.s32 %v8302, %v8304
        %v8306 = vrot.slane %v8292, %v8305
        %v8307 = vcombine.high %v8299, %v8299
        %v8309 = vsel %vm6380, %v8290, 0
        %v8312 = vsel %vm440, %v8299, 0
        %v8315 = vsel %vm440, %v8307, 0
        %v8318 = vsel %vm440, %v8306, 0
        %8320 = vmatprep.subr.bf16.mxu0 0
        %8321 = vmatpush1.bf16.msra.mxu0 0
        %8322 = vmatprep.subr.bf16.mxu0 0
        %8323 = vmatpush1.bf16.msra.mxu0 0
        %8324 = vmatprep.subr.bf16.mxu0 0
        %8325 = vmatpush1.bf16.msra.mxu0 0
        %8326 = vmatprep.subr.bf16.mxu0 0
        %8327 = vmatpush1.bf16.msra.mxu0 0
        %8328 = vmatprep.subr.bf16.mxu0 0
        %8329 = vmatpush1.bf16.msra.mxu0 0
        %8330 = vmatprep.subr.bf16.mxu0 0
        %8331 = vmatpush1.bf16.msra.mxu0 0
        %8332 = vmatprep.subr.bf16.mxu0 0
        %8333 = vmatpush1.bf16.msra.mxu0 0
        %8334 = vmatprep.subr.bf16.mxu0 %v8315
        %8335 = vmatpush1.bf16.msra.mxu0 %v8312
        %8336 = vmatprep.subr.bf16.mxu0 0
        %8337 = vmatpush2.bf16.msra.mxu0 0
        %8338 = vmatprep.subr.bf16.mxu0 0
        %8339 = vmatpush2.bf16.msra.mxu0 0
        %8340 = vmatprep.subr.bf16.mxu0 0
        %8341 = vmatpush2.bf16.msra.mxu0 0
        %8342 = vmatprep.subr.bf16.mxu0 0
        %8343 = vmatpush2.bf16.msra.mxu0 0
        %8344 = vmatprep.subr.bf16.mxu0 0
        %8345 = vmatpush2.bf16.msra.mxu0 0
        %8346 = vmatprep.subr.bf16.mxu0 0
        %8347 = vmatpush2.bf16.msra.mxu0 0
        %8348 = vmatprep.subr.bf16.mxu0 0
        %8349 = vmatpush2.bf16.msra.mxu0 0
        %8350 = vmatprep.subr.bf16.mxu0 0
        %8351 = vmatpush2.bf16.msra.mxu0 0
        %8352 = vmatprep.mubr.bf16.mxu0 0
        %8353 = vmatmul.mubr.bf16.gmra.mxu0 %v8309
        %v8354 = vpop.f32.mrf.mxu0
        %v8355 = vadd.f32 0.0, %v8354
        %v8356 = vpop.f32.mrf.mxu0
        %v8357 = vadd.f32 0.0, %v8356
        %v8358 = vpop.f32.mrf.mxu0
        %v8359 = vpop.f32.mrf.mxu0
        %8360 = vdwg.mxu0
        %8361 = vmatprep.subr.bf16.mxu0 0
        %8362 = vmatpush1.bf16.msra.mxu0 0
        %8363 = vmatprep.subr.bf16.mxu0 0
        %8364 = vmatpush1.bf16.msra.mxu0 0
        %8365 = vmatprep.subr.bf16.mxu0 0
        %8366 = vmatpush1.bf16.msra.mxu0 0
        %8367 = vmatprep.subr.bf16.mxu0 0
        %8368 = vmatpush1.bf16.msra.mxu0 0
        %8369 = vmatprep.subr.bf16.mxu0 0
        %8370 = vmatpush1.bf16.msra.mxu0 0
        %8371 = vmatprep.subr.bf16.mxu0 0
        %8372 = vmatpush1.bf16.msra.mxu0 0
        %8373 = vmatprep.subr.bf16.mxu0 0
        %8374 = vmatpush1.bf16.msra.mxu0 0
        %8375 = vmatprep.subr.bf16.mxu0 0
        %8376 = vmatpush1.bf16.msra.mxu0 %v8318
        %8377 = vmatprep.subr.bf16.mxu0 0
        %8378 = vmatpush2.bf16.msra.mxu0 0
        %8379 = vmatprep.subr.bf16.mxu0 0
        %8380 = vmatpush2.bf16.msra.mxu0 0
        %8381 = vmatprep.subr.bf16.mxu0 0
        %8382 = vmatpush2.bf16.msra.mxu0 0
        %8383 = vmatprep.subr.bf16.mxu0 0
        %8384 = vmatpush2.bf16.msra.mxu0 0
        %8385 = vmatprep.subr.bf16.mxu0 0
        %8386 = vmatpush2.bf16.msra.mxu0 0
        %8387 = vmatprep.subr.bf16.mxu0 0
        %8388 = vmatpush2.bf16.msra.mxu0 0
        %8389 = vmatprep.subr.bf16.mxu0 0
        %8390 = vmatpush2.bf16.msra.mxu0 0
        %8391 = vmatprep.subr.bf16.mxu0 0
        %8392 = vmatpush2.bf16.msra.mxu0 0
        %8393 = vmatprep.mubr.bf16.mxu0 0
        %8394 = vmatmul.mubr.bf16.gmra.mxu0 %v8309
        %v8395 = vpop.f32.mrf.mxu0
        %v8396 = vadd.f32 0.0, %v8395
        %v8397 = vpop.f32.mrf.mxu0
        %v8398 = vpop.f32.mrf.mxu0
        %v8399 = vpop.f32.mrf.mxu0
        %8400 = vdwg.mxu0
        %v8401 = vadd.f32 %v8281, %v8355
        %v8402 = vadd.f32 %v8282, %v8357
        %v8403 = vadd.f32 %v8283, %v8396
        %s8404 = scalar_lea.vmem %s4, 38
        %v8405 = vld [vmem:[%s8404] sm:$0x3]
        %8406 = vrot.lane.b32.xlu0 %v8299, 127
        %v8407 = vpop.permute.xlu0 %8406
        %8408 = vrot.lane.b32.xlu0 %v8307, 127
        %v8409 = vpop.permute.xlu0 %8408
        %8410 = vrot.lane.b32.xlu0 %v8306, 127
        %v8411 = vpop.permute.xlu0 %8410
        %v8412 = vsel %vm6377, %v8407, %v8409
        %v8413 = vsel %vm6377, %v8409, %v8411
        %v8415 = vsel %vm6380, %v8405, 0
        %v8418 = vsel %vm440, %v8412, 0
        %v8421 = vsel %vm440, %v8413, 0
        %v8424 = vsel %vm440, %v8411, 0
        %8426 = vmatprep.subr.bf16.mxu0 0
        %8427 = vmatpush1.bf16.msra.mxu0 0
        %8428 = vmatprep.subr.bf16.mxu0 0
        %8429 = vmatpush1.bf16.msra.mxu0 0
        %8430 = vmatprep.subr.bf16.mxu0 0
        %8431 = vmatpush1.bf16.msra.mxu0 0
        %8432 = vmatprep.subr.bf16.mxu0 0
        %8433 = vmatpush1.bf16.msra.mxu0 0
        %8434 = vmatprep.subr.bf16.mxu0 0
        %8435 = vmatpush1.bf16.msra.mxu0 0
        %8436 = vmatprep.subr.bf16.mxu0 0
        %8437 = vmatpush1.bf16.msra.mxu0 0
        %8438 = vmatprep.subr.bf16.mxu0 0
        %8439 = vmatpush1.bf16.msra.mxu0 0
        %8440 = vmatprep.subr.bf16.mxu0 %v8421
        %8441 = vmatpush1.bf16.msra.mxu0 %v8418
        %8442 = vmatprep.subr.bf16.mxu0 0
        %8443 = vmatpush2.bf16.msra.mxu0 0
        %8444 = vmatprep.subr.bf16.mxu0 0
        %8445 = vmatpush2.bf16.msra.mxu0 0
        %8446 = vmatprep.subr.bf16.mxu0 0
        %8447 = vmatpush2.bf16.msra.mxu0 0
        %8448 = vmatprep.subr.bf16.mxu0 0
        %8449 = vmatpush2.bf16.msra.mxu0 0
        %8450 = vmatprep.subr.bf16.mxu0 0
        %8451 = vmatpush2.bf16.msra.mxu0 0
        %8452 = vmatprep.subr.bf16.mxu0 0
        %8453 = vmatpush2.bf16.msra.mxu0 0
        %8454 = vmatprep.subr.bf16.mxu0 0
        %8455 = vmatpush2.bf16.msra.mxu0 0
        %8456 = vmatprep.subr.bf16.mxu0 0
        %8457 = vmatpush2.bf16.msra.mxu0 0
        %8458 = vmatprep.mubr.bf16.mxu0 0
        %8459 = vmatmul.mubr.bf16.gmra.mxu0 %v8415
        %v8460 = vpop.f32.mrf.mxu0
        %v8461 = vadd.f32 0.0, %v8460
        %v8462 = vpop.f32.mrf.mxu0
        %v8463 = vadd.f32 0.0, %v8462
        %v8464 = vpop.f32.mrf.mxu0
        %v8465 = vpop.f32.mrf.mxu0
        %8466 = vdwg.mxu0
        %8467 = vmatprep.subr.bf16.mxu0 0
        %8468 = vmatpush1.bf16.msra.mxu0 0
        %8469 = vmatprep.subr.bf16.mxu0 0
        %8470 = vmatpush1.bf16.msra.mxu0 0
        %8471 = vmatprep.subr.bf16.mxu0 0
        %8472 = vmatpush1.bf16.msra.mxu0 0
        %8473 = vmatprep.subr.bf16.mxu0 0
        %8474 = vmatpush1.bf16.msra.mxu0 0
        %8475 = vmatprep.subr.bf16.mxu0 0
        %8476 = vmatpush1.bf16.msra.mxu0 0
        %8477 = vmatprep.subr.bf16.mxu0 0
        %8478 = vmatpush1.bf16.msra.mxu0 0
        %8479 = vmatprep.subr.bf16.mxu0 0
        %8480 = vmatpush1.bf16.msra.mxu0 0
        %8481 = vmatprep.subr.bf16.mxu0 0
        %8482 = vmatpush1.bf16.msra.mxu0 %v8424
        %8483 = vmatprep.subr.bf16.mxu0 0
        %8484 = vmatpush2.bf16.msra.mxu0 0
        %8485 = vmatprep.subr.bf16.mxu0 0
        %8486 = vmatpush2.bf16.msra.mxu0 0
        %8487 = vmatprep.subr.bf16.mxu0 0
        %8488 = vmatpush2.bf16.msra.mxu0 0
        %8489 = vmatprep.subr.bf16.mxu0 0
        %8490 = vmatpush2.bf16.msra.mxu0 0
        %8491 = vmatprep.subr.bf16.mxu0 0
        %8492 = vmatpush2.bf16.msra.mxu0 0
        %8493 = vmatprep.subr.bf16.mxu0 0
        %8494 = vmatpush2.bf16.msra.mxu0 0
        %8495 = vmatprep.subr.bf16.mxu0 0
        %8496 = vmatpush2.bf16.msra.mxu0 0
        %8497 = vmatprep.subr.bf16.mxu0 0
        %8498 = vmatpush2.bf16.msra.mxu0 0
        %8499 = vmatprep.mubr.bf16.mxu0 0
        %8500 = vmatmul.mubr.bf16.gmra.mxu0 %v8415
        %v8501 = vpop.f32.mrf.mxu0
        %v8502 = vadd.f32 0.0, %v8501
        %v8503 = vpop.f32.mrf.mxu0
        %v8504 = vpop.f32.mrf.mxu0
        %v8505 = vpop.f32.mrf.mxu0
        %8506 = vdwg.mxu0
        %v8507 = vadd.f32 %v8401, %v8461
        %v8508 = vadd.f32 %v8402, %v8463
        %v8509 = vadd.f32 %v8403, %v8502
        %s8510 = scalar_lea.vmem %s4, 40
        %v8511 = vld [vmem:[%s8510] sm:$0x3]
        %8512 = vrot.lane.b32.xlu0 %v8299, 126
        %v8513 = vpop.permute.xlu0 %8512
        %8514 = vrot.lane.b32.xlu0 %v8307, 126
        %v8515 = vpop.permute.xlu0 %8514
        %8516 = vrot.lane.b32.xlu0 %v8306, 126
        %v8517 = vpop.permute.xlu0 %8516
        %v8518 = vsel %vm6575, %v8513, %v8515
        %v8519 = vsel %vm6575, %v8515, %v8517
        %v8521 = vsel %vm6380, %v8511, 0
        %v8524 = vsel %vm440, %v8518, 0
        %v8527 = vsel %vm440, %v8519, 0
        %v8530 = vsel %vm440, %v8517, 0
        %8532 = vmatprep.subr.bf16.mxu0 0
        %8533 = vmatpush1.bf16.msra.mxu0 0
        %8534 = vmatprep.subr.bf16.mxu0 0
        %8535 = vmatpush1.bf16.msra.mxu0 0
        %8536 = vmatprep.subr.bf16.mxu0 0
        %8537 = vmatpush1.bf16.msra.mxu0 0
        %8538 = vmatprep.subr.bf16.mxu0 0
        %8539 = vmatpush1.bf16.msra.mxu0 0
        %8540 = vmatprep.subr.bf16.mxu0 0
        %8541 = vmatpush1.bf16.msra.mxu0 0
        %8542 = vmatprep.subr.bf16.mxu0 0
        %8543 = vmatpush1.bf16.msra.mxu0 0
        %8544 = vmatprep.subr.bf16.mxu0 0
        %8545 = vmatpush1.bf16.msra.mxu0 0
        %8546 = vmatprep.subr.bf16.mxu0 %v8527
        %8547 = vmatpush1.bf16.msra.mxu0 %v8524
        %8548 = vmatprep.subr.bf16.mxu0 0
        %8549 = vmatpush2.bf16.msra.mxu0 0
        %8550 = vmatprep.subr.bf16.mxu0 0
        %8551 = vmatpush2.bf16.msra.mxu0 0
        %8552 = vmatprep.subr.bf16.mxu0 0
        %8553 = vmatpush2.bf16.msra.mxu0 0
        %8554 = vmatprep.subr.bf16.mxu0 0
        %8555 = vmatpush2.bf16.msra.mxu0 0
        %8556 = vmatprep.subr.bf16.mxu0 0
        %8557 = vmatpush2.bf16.msra.mxu0 0
        %8558 = vmatprep.subr.bf16.mxu0 0
        %8559 = vmatpush2.bf16.msra.mxu0 0
        %8560 = vmatprep.subr.bf16.mxu0 0
        %8561 = vmatpush2.bf16.msra.mxu0 0
        %8562 = vmatprep.subr.bf16.mxu0 0
        %8563 = vmatpush2.bf16.msra.mxu0 0
        %8564 = vmatprep.mubr.bf16.mxu0 0
        %8565 = vmatmul.mubr.bf16.gmra.mxu0 %v8521
        %v8566 = vpop.f32.mrf.mxu0
        %v8567 = vadd.f32 0.0, %v8566
        %v8568 = vpop.f32.mrf.mxu0
        %v8569 = vadd.f32 0.0, %v8568
        %v8570 = vpop.f32.mrf.mxu0
        %v8571 = vpop.f32.mrf.mxu0
        %8572 = vdwg.mxu0
        %8573 = vmatprep.subr.bf16.mxu0 0
        %8574 = vmatpush1.bf16.msra.mxu0 0
        %8575 = vmatprep.subr.bf16.mxu0 0
        %8576 = vmatpush1.bf16.msra.mxu0 0
        %8577 = vmatprep.subr.bf16.mxu0 0
        %8578 = vmatpush1.bf16.msra.mxu0 0
        %8579 = vmatprep.subr.bf16.mxu0 0
        %8580 = vmatpush1.bf16.msra.mxu0 0
        %8581 = vmatprep.subr.bf16.mxu0 0
        %8582 = vmatpush1.bf16.msra.mxu0 0
        %8583 = vmatprep.subr.bf16.mxu0 0
        %8584 = vmatpush1.bf16.msra.mxu0 0
        %8585 = vmatprep.subr.bf16.mxu0 0
        %8586 = vmatpush1.bf16.msra.mxu0 0
        %8587 = vmatprep.subr.bf16.mxu0 0
        %8588 = vmatpush1.bf16.msra.mxu0 %v8530
        %8589 = vmatprep.subr.bf16.mxu0 0
        %8590 = vmatpush2.bf16.msra.mxu0 0
        %8591 = vmatprep.subr.bf16.mxu0 0
        %8592 = vmatpush2.bf16.msra.mxu0 0
        %8593 = vmatprep.subr.bf16.mxu0 0
        %8594 = vmatpush2.bf16.msra.mxu0 0
        %8595 = vmatprep.subr.bf16.mxu0 0
        %8596 = vmatpush2.bf16.msra.mxu0 0
        %8597 = vmatprep.subr.bf16.mxu0 0
        %8598 = vmatpush2.bf16.msra.mxu0 0
        %8599 = vmatprep.subr.bf16.mxu0 0
        %8600 = vmatpush2.bf16.msra.mxu0 0
        %8601 = vmatprep.subr.bf16.mxu0 0
        %8602 = vmatpush2.bf16.msra.mxu0 0
        %8603 = vmatprep.subr.bf16.mxu0 0
        %8604 = vmatpush2.bf16.msra.mxu0 0
        %8605 = vmatprep.mubr.bf16.mxu0 0
        %8606 = vmatmul.mubr.bf16.gmra.mxu0 %v8521
        %v8607 = vpop.f32.mrf.mxu0
        %v8608 = vadd.f32 0.0, %v8607
        %v8609 = vpop.f32.mrf.mxu0
        %v8610 = vpop.f32.mrf.mxu0
        %v8611 = vpop.f32.mrf.mxu0
        %8612 = vdwg.mxu0
        %v8613 = vadd.f32 %v8507, %v8567
        %v8614 = vadd.f32 %v8508, %v8569
        %v8615 = vadd.f32 %v8509, %v8608
        %s8616 = scalar_lea.vmem %s4, 42
        %v8617 = vld [vmem:[%s8616] sm:$0x3]
        %8618 = vrot.lane.b32.xlu0 %v8299, 110
        %v8619 = vpop.permute.xlu0 %8618
        %8620 = vrot.lane.b32.xlu0 %v8307, 110
        %v8621 = vpop.permute.xlu0 %8620
        %8622 = vrot.lane.b32.xlu0 %v8306, 110
        %v8623 = vpop.permute.xlu0 %8622
        %v8624 = vsel %vm6682, %v8619, %v8621
        %v8625 = vsel %vm6682, %v8621, %v8623
        %v8627 = vsel %vm6380, %v8617, 0
        %v8630 = vsel %vm440, %v8624, 0
        %v8633 = vsel %vm440, %v8625, 0
        %v8636 = vsel %vm440, %v8623, 0
        %8638 = vmatprep.subr.bf16.mxu0 0
        %8639 = vmatpush1.bf16.msra.mxu0 0
        %8640 = vmatprep.subr.bf16.mxu0 0
        %8641 = vmatpush1.bf16.msra.mxu0 0
        %8642 = vmatprep.subr.bf16.mxu0 0
        %8643 = vmatpush1.bf16.msra.mxu0 0
        %8644 = vmatprep.subr.bf16.mxu0 0
        %8645 = vmatpush1.bf16.msra.mxu0 0
        %8646 = vmatprep.subr.bf16.mxu0 0
        %8647 = vmatpush1.bf16.msra.mxu0 0
        %8648 = vmatprep.subr.bf16.mxu0 0
        %8649 = vmatpush1.bf16.msra.mxu0 0
        %8650 = vmatprep.subr.bf16.mxu0 0
        %8651 = vmatpush1.bf16.msra.mxu0 0
        %8652 = vmatprep.subr.bf16.mxu0 %v8633
        %8653 = vmatpush1.bf16.msra.mxu0 %v8630
        %8654 = vmatprep.subr.bf16.mxu0 0
        %8655 = vmatpush2.bf16.msra.mxu0 0
        %8656 = vmatprep.subr.bf16.mxu0 0
        %8657 = vmatpush2.bf16.msra.mxu0 0
        %8658 = vmatprep.subr.bf16.mxu0 0
        %8659 = vmatpush2.bf16.msra.mxu0 0
        %8660 = vmatprep.subr.bf16.mxu0 0
        %8661 = vmatpush2.bf16.msra.mxu0 0
        %8662 = vmatprep.subr.bf16.mxu0 0
        %8663 = vmatpush2.bf16.msra.mxu0 0
        %8664 = vmatprep.subr.bf16.mxu0 0
        %8665 = vmatpush2.bf16.msra.mxu0 0
        %8666 = vmatprep.subr.bf16.mxu0 0
        %8667 = vmatpush2.bf16.msra.mxu0 0
        %8668 = vmatprep.subr.bf16.mxu0 0
        %8669 = vmatpush2.bf16.msra.mxu0 0
        %8670 = vmatprep.mubr.bf16.mxu0 0
        %8671 = vmatmul.mubr.bf16.gmra.mxu0 %v8627
        %v8672 = vpop.f32.mrf.mxu0
        %v8673 = vadd.f32 0.0, %v8672
        %v8674 = vpop.f32.mrf.mxu0
        %v8675 = vadd.f32 0.0, %v8674
        %v8676 = vpop.f32.mrf.mxu0
        %v8677 = vpop.f32.mrf.mxu0
        %8678 = vdwg.mxu0
        %8679 = vmatprep.subr.bf16.mxu0 0
        %8680 = vmatpush1.bf16.msra.mxu0 0
        %8681 = vmatprep.subr.bf16.mxu0 0
        %8682 = vmatpush1.bf16.msra.mxu0 0
        %8683 = vmatprep.subr.bf16.mxu0 0
        %8684 = vmatpush1.bf16.msra.mxu0 0
        %8685 = vmatprep.subr.bf16.mxu0 0
        %8686 = vmatpush1.bf16.msra.mxu0 0
        %8687 = vmatprep.subr.bf16.mxu0 0
        %8688 = vmatpush1.bf16.msra.mxu0 0
        %8689 = vmatprep.subr.bf16.mxu0 0
        %8690 = vmatpush1.bf16.msra.mxu0 0
        %8691 = vmatprep.subr.bf16.mxu0 0
        %8692 = vmatpush1.bf16.msra.mxu0 0
        %8693 = vmatprep.subr.bf16.mxu0 0
        %8694 = vmatpush1.bf16.msra.mxu0 %v8636
        %8695 = vmatprep.subr.bf16.mxu0 0
        %8696 = vmatpush2.bf16.msra.mxu0 0
        %8697 = vmatprep.subr.bf16.mxu0 0
        %8698 = vmatpush2.bf16.msra.mxu0 0
        %8699 = vmatprep.subr.bf16.mxu0 0
        %8700 = vmatpush2.bf16.msra.mxu0 0
        %8701 = vmatprep.subr.bf16.mxu0 0
        %8702 = vmatpush2.bf16.msra.mxu0 0
        %8703 = vmatprep.subr.bf16.mxu0 0
        %8704 = vmatpush2.bf16.msra.mxu0 0
        %8705 = vmatprep.subr.bf16.mxu0 0
        %8706 = vmatpush2.bf16.msra.mxu0 0
        %8707 = vmatprep.subr.bf16.mxu0 0
        %8708 = vmatpush2.bf16.msra.mxu0 0
        %8709 = vmatprep.subr.bf16.mxu0 0
        %8710 = vmatpush2.bf16.msra.mxu0 0
        %8711 = vmatprep.mubr.bf16.mxu0 0
        %8712 = vmatmul.mubr.bf16.gmra.mxu0 %v8627
        %v8713 = vpop.f32.mrf.mxu0
        %v8714 = vadd.f32 0.0, %v8713
        %v8715 = vpop.f32.mrf.mxu0
        %v8716 = vpop.f32.mrf.mxu0
        %v8717 = vpop.f32.mrf.mxu0
        %8718 = vdwg.mxu0
        %v8719 = vadd.f32 %v8613, %v8673
        %v8720 = vadd.f32 %v8614, %v8675
        %v8721 = vadd.f32 %v8615, %v8714
        %s8722 = scalar_lea.vmem %s4, 44
        %v8723 = vld [vmem:[%s8722] sm:$0x3]
        %8724 = vrot.lane.b32.xlu0 %v8299, 109
        %v8725 = vpop.permute.xlu0 %8724
        %8726 = vrot.lane.b32.xlu0 %v8307, 109
        %v8727 = vpop.permute.xlu0 %8726
        %8728 = vrot.lane.b32.xlu0 %v8306, 109
        %v8729 = vpop.permute.xlu0 %8728
        %v8730 = vsel %vm6789, %v8725, %v8727
        %v8731 = vsel %vm6789, %v8727, %v8729
        %v8733 = vsel %vm6380, %v8723, 0
        %v8736 = vsel %vm440, %v8730, 0
        %v8739 = vsel %vm440, %v8731, 0
        %v8742 = vsel %vm440, %v8729, 0
        %8744 = vmatprep.subr.bf16.mxu0 0
        %8745 = vmatpush1.bf16.msra.mxu0 0
        %8746 = vmatprep.subr.bf16.mxu0 0
        %8747 = vmatpush1.bf16.msra.mxu0 0
        %8748 = vmatprep.subr.bf16.mxu0 0
        %8749 = vmatpush1.bf16.msra.mxu0 0
        %8750 = vmatprep.subr.bf16.mxu0 0
        %8751 = vmatpush1.bf16.msra.mxu0 0
        %8752 = vmatprep.subr.bf16.mxu0 0
        %8753 = vmatpush1.bf16.msra.mxu0 0
        %8754 = vmatprep.subr.bf16.mxu0 0
        %8755 = vmatpush1.bf16.msra.mxu0 0
        %8756 = vmatprep.subr.bf16.mxu0 0
        %8757 = vmatpush1.bf16.msra.mxu0 0
        %8758 = vmatprep.subr.bf16.mxu0 %v8739
        %8759 = vmatpush1.bf16.msra.mxu0 %v8736
        %8760 = vmatprep.subr.bf16.mxu0 0
        %8761 = vmatpush2.bf16.msra.mxu0 0
        %8762 = vmatprep.subr.bf16.mxu0 0
        %8763 = vmatpush2.bf16.msra.mxu0 0
        %8764 = vmatprep.subr.bf16.mxu0 0
        %8765 = vmatpush2.bf16.msra.mxu0 0
        %8766 = vmatprep.subr.bf16.mxu0 0
        %8767 = vmatpush2.bf16.msra.mxu0 0
        %8768 = vmatprep.subr.bf16.mxu0 0
        %8769 = vmatpush2.bf16.msra.mxu0 0
        %8770 = vmatprep.subr.bf16.mxu0 0
        %8771 = vmatpush2.bf16.msra.mxu0 0
        %8772 = vmatprep.subr.bf16.mxu0 0
        %8773 = vmatpush2.bf16.msra.mxu0 0
        %8774 = vmatprep.subr.bf16.mxu0 0
        %8775 = vmatpush2.bf16.msra.mxu0 0
        %8776 = vmatprep.mubr.bf16.mxu0 0
        %8777 = vmatmul.mubr.bf16.gmra.mxu0 %v8733
        %v8778 = vpop.f32.mrf.mxu0
        %v8779 = vadd.f32 0.0, %v8778
        %v8780 = vpop.f32.mrf.mxu0
        %v8781 = vadd.f32 0.0, %v8780
        %v8782 = vpop.f32.mrf.mxu0
        %v8783 = vpop.f32.mrf.mxu0
        %8784 = vdwg.mxu0
        %8785 = vmatprep.subr.bf16.mxu0 0
        %8786 = vmatpush1.bf16.msra.mxu0 0
        %8787 = vmatprep.subr.bf16.mxu0 0
        %8788 = vmatpush1.bf16.msra.mxu0 0
        %8789 = vmatprep.subr.bf16.mxu0 0
        %8790 = vmatpush1.bf16.msra.mxu0 0
        %8791 = vmatprep.subr.bf16.mxu0 0
        %8792 = vmatpush1.bf16.msra.mxu0 0
        %8793 = vmatprep.subr.bf16.mxu0 0
        %8794 = vmatpush1.bf16.msra.mxu0 0
        %8795 = vmatprep.subr.bf16.mxu0 0
        %8796 = vmatpush1.bf16.msra.mxu0 0
        %8797 = vmatprep.subr.bf16.mxu0 0
        %8798 = vmatpush1.bf16.msra.mxu0 0
        %8799 = vmatprep.subr.bf16.mxu0 0
        %8800 = vmatpush1.bf16.msra.mxu0 %v8742
        %8801 = vmatprep.subr.bf16.mxu0 0
        %8802 = vmatpush2.bf16.msra.mxu0 0
        %8803 = vmatprep.subr.bf16.mxu0 0
        %8804 = vmatpush2.bf16.msra.mxu0 0
        %8805 = vmatprep.subr.bf16.mxu0 0
        %8806 = vmatpush2.bf16.msra.mxu0 0
        %8807 = vmatprep.subr.bf16.mxu0 0
        %8808 = vmatpush2.bf16.msra.mxu0 0
        %8809 = vmatprep.subr.bf16.mxu0 0
        %8810 = vmatpush2.bf16.msra.mxu0 0
        %8811 = vmatprep.subr.bf16.mxu0 0
        %8812 = vmatpush2.bf16.msra.mxu0 0
        %8813 = vmatprep.subr.bf16.mxu0 0
        %8814 = vmatpush2.bf16.msra.mxu0 0
        %8815 = vmatprep.subr.bf16.mxu0 0
        %8816 = vmatpush2.bf16.msra.mxu0 0
        %8817 = vmatprep.mubr.bf16.mxu0 0
        %8818 = vmatmul.mubr.bf16.gmra.mxu0 %v8733
        %v8819 = vpop.f32.mrf.mxu0
        %v8820 = vadd.f32 0.0, %v8819
        %v8821 = vpop.f32.mrf.mxu0
        %v8822 = vpop.f32.mrf.mxu0
        %v8823 = vpop.f32.mrf.mxu0
        %8824 = vdwg.mxu0
        %v8825 = vadd.f32 %v8719, %v8779
        %v8826 = vadd.f32 %v8720, %v8781
        %v8827 = vadd.f32 %v8721, %v8820
        %s8828 = scalar_lea.vmem %s4, 46
        %v8829 = vld [vmem:[%s8828] sm:$0x3]
        %8830 = vrot.lane.b32.xlu0 %v8299, 108
        %v8831 = vpop.permute.xlu0 %8830
        %8832 = vrot.lane.b32.xlu0 %v8307, 108
        %v8833 = vpop.permute.xlu0 %8832
        %8834 = vrot.lane.b32.xlu0 %v8306, 108
        %v8835 = vpop.permute.xlu0 %8834
        %v8836 = vsel %vm6896, %v8831, %v8833
        %v8837 = vsel %vm6896, %v8833, %v8835
        %v8839 = vsel %vm6380, %v8829, 0
        %v8842 = vsel %vm440, %v8836, 0
        %v8845 = vsel %vm440, %v8837, 0
        %v8848 = vsel %vm440, %v8835, 0
        %8850 = vmatprep.subr.bf16.mxu0 0
        %8851 = vmatpush1.bf16.msra.mxu0 0
        %8852 = vmatprep.subr.bf16.mxu0 0
        %8853 = vmatpush1.bf16.msra.mxu0 0
        %8854 = vmatprep.subr.bf16.mxu0 0
        %8855 = vmatpush1.bf16.msra.mxu0 0
        %8856 = vmatprep.subr.bf16.mxu0 0
        %8857 = vmatpush1.bf16.msra.mxu0 0
        %8858 = vmatprep.subr.bf16.mxu0 0
        %8859 = vmatpush1.bf16.msra.mxu0 0
        %8860 = vmatprep.subr.bf16.mxu0 0
        %8861 = vmatpush1.bf16.msra.mxu0 0
        %8862 = vmatprep.subr.bf16.mxu0 0
        %8863 = vmatpush1.bf16.msra.mxu0 0
        %8864 = vmatprep.subr.bf16.mxu0 %v8845
        %8865 = vmatpush1.bf16.msra.mxu0 %v8842
        %8866 = vmatprep.subr.bf16.mxu0 0
        %8867 = vmatpush2.bf16.msra.mxu0 0
        %8868 = vmatprep.subr.bf16.mxu0 0
        %8869 = vmatpush2.bf16.msra.mxu0 0
        %8870 = vmatprep.subr.bf16.mxu0 0
        %8871 = vmatpush2.bf16.msra.mxu0 0
        %8872 = vmatprep.subr.bf16.mxu0 0
        %8873 = vmatpush2.bf16.msra.mxu0 0
        %8874 = vmatprep.subr.bf16.mxu0 0
        %8875 = vmatpush2.bf16.msra.mxu0 0
        %8876 = vmatprep.subr.bf16.mxu0 0
        %8877 = vmatpush2.bf16.msra.mxu0 0
        %8878 = vmatprep.subr.bf16.mxu0 0
        %8879 = vmatpush2.bf16.msra.mxu0 0
        %8880 = vmatprep.subr.bf16.mxu0 0
        %8881 = vmatpush2.bf16.msra.mxu0 0
        %8882 = vmatprep.mubr.bf16.mxu0 0
        %8883 = vmatmul.mubr.bf16.gmra.mxu0 %v8839
        %v8884 = vpop.f32.mrf.mxu0
        %v8885 = vadd.f32 0.0, %v8884
        %v8886 = vpop.f32.mrf.mxu0
        %v8887 = vadd.f32 0.0, %v8886
        %v8888 = vpop.f32.mrf.mxu0
        %v8889 = vpop.f32.mrf.mxu0
        %8890 = vdwg.mxu0
        %8891 = vmatprep.subr.bf16.mxu0 0
        %8892 = vmatpush1.bf16.msra.mxu0 0
        %8893 = vmatprep.subr.bf16.mxu0 0
        %8894 = vmatpush1.bf16.msra.mxu0 0
        %8895 = vmatprep.subr.bf16.mxu0 0
        %8896 = vmatpush1.bf16.msra.mxu0 0
        %8897 = vmatprep.subr.bf16.mxu0 0
        %8898 = vmatpush1.bf16.msra.mxu0 0
        %8899 = vmatprep.subr.bf16.mxu0 0
        %8900 = vmatpush1.bf16.msra.mxu0 0
        %8901 = vmatprep.subr.bf16.mxu0 0
        %8902 = vmatpush1.bf16.msra.mxu0 0
        %8903 = vmatprep.subr.bf16.mxu0 0
        %8904 = vmatpush1.bf16.msra.mxu0 0
        %8905 = vmatprep.subr.bf16.mxu0 0
        %8906 = vmatpush1.bf16.msra.mxu0 %v8848
        %8907 = vmatprep.subr.bf16.mxu0 0
        %8908 = vmatpush2.bf16.msra.mxu0 0
        %8909 = vmatprep.subr.bf16.mxu0 0
        %8910 = vmatpush2.bf16.msra.mxu0 0
        %8911 = vmatprep.subr.bf16.mxu0 0
        %8912 = vmatpush2.bf16.msra.mxu0 0
        %8913 = vmatprep.subr.bf16.mxu0 0
        %8914 = vmatpush2.bf16.msra.mxu0 0
        %8915 = vmatprep.subr.bf16.mxu0 0
        %8916 = vmatpush2.bf16.msra.mxu0 0
        %8917 = vmatprep.subr.bf16.mxu0 0
        %8918 = vmatpush2.bf16.msra.mxu0 0
        %8919 = vmatprep.subr.bf16.mxu0 0
        %8920 = vmatpush2.bf16.msra.mxu0 0
        %8921 = vmatprep.subr.bf16.mxu0 0
        %8922 = vmatpush2.bf16.msra.mxu0 0
        %8923 = vmatprep.mubr.bf16.mxu0 0
        %8924 = vmatmul.mubr.bf16.gmra.mxu0 %v8839
        %v8925 = vpop.f32.mrf.mxu0
        %v8926 = vadd.f32 0.0, %v8925
        %v8927 = vpop.f32.mrf.mxu0
        %v8928 = vpop.f32.mrf.mxu0
        %v8929 = vpop.f32.mrf.mxu0
        %8930 = vdwg.mxu0
        %v8931 = vadd.f32 %v8825, %v8885
        %v8932 = vadd.f32 %v8826, %v8887
        %v8933 = vadd.f32 %v8827, %v8926
        %s8934 = scalar_lea.vmem %s4, 48
        %v8935 = vld [vmem:[%s8934] sm:$0x3]
        %8936 = vrot.lane.b32.xlu0 %v8299, 92
        %v8937 = vpop.permute.xlu0 %8936
        %8938 = vrot.lane.b32.xlu0 %v8307, 92
        %v8939 = vpop.permute.xlu0 %8938
        %8940 = vrot.lane.b32.xlu0 %v8306, 92
        %v8941 = vpop.permute.xlu0 %8940
        %v8942 = vsel %vm7003, %v8937, %v8939
        %v8943 = vsel %vm7003, %v8939, %v8941
        %v8945 = vsel %vm6380, %v8935, 0
        %v8948 = vsel %vm440, %v8942, 0
        %v8951 = vsel %vm440, %v8943, 0
        %v8954 = vsel %vm440, %v8941, 0
        %8956 = vmatprep.subr.bf16.mxu0 0
        %8957 = vmatpush1.bf16.msra.mxu0 0
        %8958 = vmatprep.subr.bf16.mxu0 0
        %8959 = vmatpush1.bf16.msra.mxu0 0
        %8960 = vmatprep.subr.bf16.mxu0 0
        %8961 = vmatpush1.bf16.msra.mxu0 0
        %8962 = vmatprep.subr.bf16.mxu0 0
        %8963 = vmatpush1.bf16.msra.mxu0 0
        %8964 = vmatprep.subr.bf16.mxu0 0
        %8965 = vmatpush1.bf16.msra.mxu0 0
        %8966 = vmatprep.subr.bf16.mxu0 0
        %8967 = vmatpush1.bf16.msra.mxu0 0
        %8968 = vmatprep.subr.bf16.mxu0 0
        %8969 = vmatpush1.bf16.msra.mxu0 0
        %8970 = vmatprep.subr.bf16.mxu0 %v8951
        %8971 = vmatpush1.bf16.msra.mxu0 %v8948
        %8972 = vmatprep.subr.bf16.mxu0 0
        %8973 = vmatpush2.bf16.msra.mxu0 0
        %8974 = vmatprep.subr.bf16.mxu0 0
        %8975 = vmatpush2.bf16.msra.mxu0 0
        %8976 = vmatprep.subr.bf16.mxu0 0
        %8977 = vmatpush2.bf16.msra.mxu0 0
        %8978 = vmatprep.subr.bf16.mxu0 0
        %8979 = vmatpush2.bf16.msra.mxu0 0
        %8980 = vmatprep.subr.bf16.mxu0 0
        %8981 = vmatpush2.bf16.msra.mxu0 0
        %8982 = vmatprep.subr.bf16.mxu0 0
        %8983 = vmatpush2.bf16.msra.mxu0 0
        %8984 = vmatprep.subr.bf16.mxu0 0
        %8985 = vmatpush2.bf16.msra.mxu0 0
        %8986 = vmatprep.subr.bf16.mxu0 0
        %8987 = vmatpush2.bf16.msra.mxu0 0
        %8988 = vmatprep.mubr.bf16.mxu0 0
        %8989 = vmatmul.mubr.bf16.gmra.mxu0 %v8945
        %v8990 = vpop.f32.mrf.mxu0
        %v8991 = vadd.f32 0.0, %v8990
        %v8992 = vpop.f32.mrf.mxu0
        %v8993 = vadd.f32 0.0, %v8992
        %v8994 = vpop.f32.mrf.mxu0
        %v8995 = vpop.f32.mrf.mxu0
        %8996 = vdwg.mxu0
        %8997 = vmatprep.subr.bf16.mxu0 0
        %8998 = vmatpush1.bf16.msra.mxu0 0
        %8999 = vmatprep.subr.bf16.mxu0 0
        %9000 = vmatpush1.bf16.msra.mxu0 0
        %9001 = vmatprep.subr.bf16.mxu0 0
        %9002 = vmatpush1.bf16.msra.mxu0 0
        %9003 = vmatprep.subr.bf16.mxu0 0
        %9004 = vmatpush1.bf16.msra.mxu0 0
        %9005 = vmatprep.subr.bf16.mxu0 0
        %9006 = vmatpush1.bf16.msra.mxu0 0
        %9007 = vmatprep.subr.bf16.mxu0 0
        %9008 = vmatpush1.bf16.msra.mxu0 0
        %9009 = vmatprep.subr.bf16.mxu0 0
        %9010 = vmatpush1.bf16.msra.mxu0 0
        %9011 = vmatprep.subr.bf16.mxu0 0
        %9012 = vmatpush1.bf16.msra.mxu0 %v8954
        %9013 = vmatprep.subr.bf16.mxu0 0
        %9014 = vmatpush2.bf16.msra.mxu0 0
        %9015 = vmatprep.subr.bf16.mxu0 0
        %9016 = vmatpush2.bf16.msra.mxu0 0
        %9017 = vmatprep.subr.bf16.mxu0 0
        %9018 = vmatpush2.bf16.msra.mxu0 0
        %9019 = vmatprep.subr.bf16.mxu0 0
        %9020 = vmatpush2.bf16.msra.mxu0 0
        %9021 = vmatprep.subr.bf16.mxu0 0
        %9022 = vmatpush2.bf16.msra.mxu0 0
        %9023 = vmatprep.subr.bf16.mxu0 0
        %9024 = vmatpush2.bf16.msra.mxu0 0
        %9025 = vmatprep.subr.bf16.mxu0 0
        %9026 = vmatpush2.bf16.msra.mxu0 0
        %9027 = vmatprep.subr.bf16.mxu0 0
        %9028 = vmatpush2.bf16.msra.mxu0 0
        %9029 = vmatprep.mubr.bf16.mxu0 0
        %9030 = vmatmul.mubr.bf16.gmra.mxu0 %v8945
        %v9031 = vpop.f32.mrf.mxu0
        %v9032 = vadd.f32 0.0, %v9031
        %v9033 = vpop.f32.mrf.mxu0
        %v9034 = vpop.f32.mrf.mxu0
        %v9035 = vpop.f32.mrf.mxu0
        %9036 = vdwg.mxu0
        %v9037 = vadd.f32 %v8931, %v8991
        %v9038 = vadd.f32 %v8932, %v8993
        %v9039 = vadd.f32 %v8933, %v9032
        %s9040 = scalar_lea.vmem %s4, 50
        %v9041 = vld [vmem:[%s9040] sm:$0x3]
        %9042 = vrot.lane.b32.xlu0 %v8299, 91
        %v9043 = vpop.permute.xlu0 %9042
        %9044 = vrot.lane.b32.xlu0 %v8307, 91
        %v9045 = vpop.permute.xlu0 %9044
        %9046 = vrot.lane.b32.xlu0 %v8306, 91
        %v9047 = vpop.permute.xlu0 %9046
        %v9048 = vsel %vm7110, %v9043, %v9045
        %v9049 = vsel %vm7110, %v9045, %v9047
        %v9051 = vsel %vm6380, %v9041, 0
        %v9054 = vsel %vm440, %v9048, 0
        %v9057 = vsel %vm440, %v9049, 0
        %v9060 = vsel %vm440, %v9047, 0
        %9062 = vmatprep.subr.bf16.mxu0 0
        %9063 = vmatpush1.bf16.msra.mxu0 0
        %9064 = vmatprep.subr.bf16.mxu0 0
        %9065 = vmatpush1.bf16.msra.mxu0 0
        %9066 = vmatprep.subr.bf16.mxu0 0
        %9067 = vmatpush1.bf16.msra.mxu0 0
        %9068 = vmatprep.subr.bf16.mxu0 0
        %9069 = vmatpush1.bf16.msra.mxu0 0
        %9070 = vmatprep.subr.bf16.mxu0 0
        %9071 = vmatpush1.bf16.msra.mxu0 0
        %9072 = vmatprep.subr.bf16.mxu0 0
        %9073 = vmatpush1.bf16.msra.mxu0 0
        %9074 = vmatprep.subr.bf16.mxu0 0
        %9075 = vmatpush1.bf16.msra.mxu0 0
        %9076 = vmatprep.subr.bf16.mxu0 %v9057
        %9077 = vmatpush1.bf16.msra.mxu0 %v9054
        %9078 = vmatprep.subr.bf16.mxu0 0
        %9079 = vmatpush2.bf16.msra.mxu0 0
        %9080 = vmatprep.subr.bf16.mxu0 0
        %9081 = vmatpush2.bf16.msra.mxu0 0
        %9082 = vmatprep.subr.bf16.mxu0 0
        %9083 = vmatpush2.bf16.msra.mxu0 0
        %9084 = vmatprep.subr.bf16.mxu0 0
        %9085 = vmatpush2.bf16.msra.mxu0 0
        %9086 = vmatprep.subr.bf16.mxu0 0
        %9087 = vmatpush2.bf16.msra.mxu0 0
        %9088 = vmatprep.subr.bf16.mxu0 0
        %9089 = vmatpush2.bf16.msra.mxu0 0
        %9090 = vmatprep.subr.bf16.mxu0 0
        %9091 = vmatpush2.bf16.msra.mxu0 0
        %9092 = vmatprep.subr.bf16.mxu0 0
        %9093 = vmatpush2.bf16.msra.mxu0 0
        %9094 = vmatprep.mubr.bf16.mxu0 0
        %9095 = vmatmul.mubr.bf16.gmra.mxu0 %v9051
        %v9096 = vpop.f32.mrf.mxu0
        %v9097 = vadd.f32 0.0, %v9096
        %v9098 = vpop.f32.mrf.mxu0
        %v9099 = vadd.f32 0.0, %v9098
        %v9100 = vpop.f32.mrf.mxu0
        %v9101 = vpop.f32.mrf.mxu0
        %9102 = vdwg.mxu0
        %9103 = vmatprep.subr.bf16.mxu0 0
        %9104 = vmatpush1.bf16.msra.mxu0 0
        %9105 = vmatprep.subr.bf16.mxu0 0
        %9106 = vmatpush1.bf16.msra.mxu0 0
        %9107 = vmatprep.subr.bf16.mxu0 0
        %9108 = vmatpush1.bf16.msra.mxu0 0
        %9109 = vmatprep.subr.bf16.mxu0 0
        %9110 = vmatpush1.bf16.msra.mxu0 0
        %9111 = vmatprep.subr.bf16.mxu0 0
        %9112 = vmatpush1.bf16.msra.mxu0 0
        %9113 = vmatprep.subr.bf16.mxu0 0
        %9114 = vmatpush1.bf16.msra.mxu0 0
        %9115 = vmatprep.subr.bf16.mxu0 0
        %9116 = vmatpush1.bf16.msra.mxu0 0
        %9117 = vmatprep.subr.bf16.mxu0 0
        %9118 = vmatpush1.bf16.msra.mxu0 %v9060
        %9119 = vmatprep.subr.bf16.mxu0 0
        %9120 = vmatpush2.bf16.msra.mxu0 0
        %9121 = vmatprep.subr.bf16.mxu0 0
        %9122 = vmatpush2.bf16.msra.mxu0 0
        %9123 = vmatprep.subr.bf16.mxu0 0
        %9124 = vmatpush2.bf16.msra.mxu0 0
        %9125 = vmatprep.subr.bf16.mxu0 0
        %9126 = vmatpush2.bf16.msra.mxu0 0
        %9127 = vmatprep.subr.bf16.mxu0 0
        %9128 = vmatpush2.bf16.msra.mxu0 0
        %9129 = vmatprep.subr.bf16.mxu0 0
        %9130 = vmatpush2.bf16.msra.mxu0 0
        %9131 = vmatprep.subr.bf16.mxu0 0
        %9132 = vmatpush2.bf16.msra.mxu0 0
        %9133 = vmatprep.subr.bf16.mxu0 0
        %9134 = vmatpush2.bf16.msra.mxu0 0
        %9135 = vmatprep.mubr.bf16.mxu0 0
        %9136 = vmatmul.mubr.bf16.gmra.mxu0 %v9051
        %v9137 = vpop.f32.mrf.mxu0
        %v9138 = vadd.f32 0.0, %v9137
        %v9139 = vpop.f32.mrf.mxu0
        %v9140 = vpop.f32.mrf.mxu0
        %v9141 = vpop.f32.mrf.mxu0
        %9142 = vdwg.mxu0
        %v9143 = vadd.f32 %v9037, %v9097
        %v9144 = vadd.f32 %v9038, %v9099
        %v9145 = vadd.f32 %v9039, %v9138
        %s9146 = scalar_lea.vmem %s4, 52
        %v9147 = vld [vmem:[%s9146] sm:$0x3]
        %9148 = vrot.lane.b32.xlu0 %v8299, 90
        %v9149 = vpop.permute.xlu0 %9148
        %9150 = vrot.lane.b32.xlu0 %v8307, 90
        %v9151 = vpop.permute.xlu0 %9150
        %9152 = vrot.lane.b32.xlu0 %v8306, 90
        %v9153 = vpop.permute.xlu0 %9152
        %v9154 = vsel %vm7217, %v9149, %v9151
        %v9155 = vsel %vm7217, %v9151, %v9153
        %v9157 = vsel %vm6380, %v9147, 0
        %v9160 = vsel %vm440, %v9154, 0
        %v9163 = vsel %vm440, %v9155, 0
        %v9166 = vsel %vm440, %v9153, 0
        %9168 = vmatprep.subr.bf16.mxu0 0
        %9169 = vmatpush1.bf16.msra.mxu0 0
        %9170 = vmatprep.subr.bf16.mxu0 0
        %9171 = vmatpush1.bf16.msra.mxu0 0
        %9172 = vmatprep.subr.bf16.mxu0 0
        %9173 = vmatpush1.bf16.msra.mxu0 0
        %9174 = vmatprep.subr.bf16.mxu0 0
        %9175 = vmatpush1.bf16.msra.mxu0 0
        %9176 = vmatprep.subr.bf16.mxu0 0
        %9177 = vmatpush1.bf16.msra.mxu0 0
        %9178 = vmatprep.subr.bf16.mxu0 0
        %9179 = vmatpush1.bf16.msra.mxu0 0
        %9180 = vmatprep.subr.bf16.mxu0 0
        %9181 = vmatpush1.bf16.msra.mxu0 0
        %9182 = vmatprep.subr.bf16.mxu0 %v9163
        %9183 = vmatpush1.bf16.msra.mxu0 %v9160
        %9184 = vmatprep.subr.bf16.mxu0 0
        %9185 = vmatpush2.bf16.msra.mxu0 0
        %9186 = vmatprep.subr.bf16.mxu0 0
        %9187 = vmatpush2.bf16.msra.mxu0 0
        %9188 = vmatprep.subr.bf16.mxu0 0
        %9189 = vmatpush2.bf16.msra.mxu0 0
        %9190 = vmatprep.subr.bf16.mxu0 0
        %9191 = vmatpush2.bf16.msra.mxu0 0
        %9192 = vmatprep.subr.bf16.mxu0 0
        %9193 = vmatpush2.bf16.msra.mxu0 0
        %9194 = vmatprep.subr.bf16.mxu0 0
        %9195 = vmatpush2.bf16.msra.mxu0 0
        %9196 = vmatprep.subr.bf16.mxu0 0
        %9197 = vmatpush2.bf16.msra.mxu0 0
        %9198 = vmatprep.subr.bf16.mxu0 0
        %9199 = vmatpush2.bf16.msra.mxu0 0
        %9200 = vmatprep.mubr.bf16.mxu0 0
        %9201 = vmatmul.mubr.bf16.gmra.mxu0 %v9157
        %v9202 = vpop.f32.mrf.mxu0
        %v9203 = vadd.f32 0.0, %v9202
        %v9204 = vpop.f32.mrf.mxu0
        %v9205 = vadd.f32 0.0, %v9204
        %v9206 = vpop.f32.mrf.mxu0
        %v9207 = vpop.f32.mrf.mxu0
        %9208 = vdwg.mxu0
        %9209 = vmatprep.subr.bf16.mxu0 0
        %9210 = vmatpush1.bf16.msra.mxu0 0
        %9211 = vmatprep.subr.bf16.mxu0 0
        %9212 = vmatpush1.bf16.msra.mxu0 0
        %9213 = vmatprep.subr.bf16.mxu0 0
        %9214 = vmatpush1.bf16.msra.mxu0 0
        %9215 = vmatprep.subr.bf16.mxu0 0
        %9216 = vmatpush1.bf16.msra.mxu0 0
        %9217 = vmatprep.subr.bf16.mxu0 0
        %9218 = vmatpush1.bf16.msra.mxu0 0
        %9219 = vmatprep.subr.bf16.mxu0 0
        %9220 = vmatpush1.bf16.msra.mxu0 0
        %9221 = vmatprep.subr.bf16.mxu0 0
        %9222 = vmatpush1.bf16.msra.mxu0 0
        %9223 = vmatprep.subr.bf16.mxu0 0
        %9224 = vmatpush1.bf16.msra.mxu0 %v9166
        %9225 = vmatprep.subr.bf16.mxu0 0
        %9226 = vmatpush2.bf16.msra.mxu0 0
        %9227 = vmatprep.subr.bf16.mxu0 0
        %9228 = vmatpush2.bf16.msra.mxu0 0
        %9229 = vmatprep.subr.bf16.mxu0 0
        %9230 = vmatpush2.bf16.msra.mxu0 0
        %9231 = vmatprep.subr.bf16.mxu0 0
        %9232 = vmatpush2.bf16.msra.mxu0 0
        %9233 = vmatprep.subr.bf16.mxu0 0
        %9234 = vmatpush2.bf16.msra.mxu0 0
        %9235 = vmatprep.subr.bf16.mxu0 0
        %9236 = vmatpush2.bf16.msra.mxu0 0
        %9237 = vmatprep.subr.bf16.mxu0 0
        %9238 = vmatpush2.bf16.msra.mxu0 0
        %9239 = vmatprep.subr.bf16.mxu0 0
        %9240 = vmatpush2.bf16.msra.mxu0 0
        %9241 = vmatprep.mubr.bf16.mxu0 0
        %9242 = vmatmul.mubr.bf16.gmra.mxu0 %v9157
        %v9243 = vpop.f32.mrf.mxu0
        %v9244 = vadd.f32 0.0, %v9243
        %v9245 = vpop.f32.mrf.mxu0
        %v9246 = vpop.f32.mrf.mxu0
        %v9247 = vpop.f32.mrf.mxu0
        %9248 = vdwg.mxu0
        %v9249 = vadd.f32 %v9143, %v9203
        %v9250 = vadd.f32 %v9144, %v9205
        %v9251 = vadd.f32 %v9145, %v9244
        %9253 = vset.pattern.permute.xlu0 0
        %9254 = vperm.xlu0 %9253, %v437
        %v9255 = vpop.permute.xlu0 %9254
        %v9257 = vmul.f32 %v9249, %v9255
        %v9258 = vmul.f32 %v9250, %v9255
        %v9259 = vmul.f32 %v9251, %v9255
        %9261 = vset.pattern.permute.xlu0 0
        %9262 = vperm.xlu0 %9261, %v438
        %v9263 = vpop.permute.xlu0 %9262
        %v9265 = vadd.f32 %v9257, %v9263
        %v9266 = vadd.f32 %v9258, %v9263
        %v9267 = vadd.f32 %v9259, %v9263
        %v9268 = vmax.f32 %v9265, 0.0
        %v9269 = vmax.f32 %v9266, 0.0
        %v9270 = vmax.f32 %v9267, 0.0
        %v9273 = vcombine.low %v9268, %v9269
        %s9275 = smul.addr %s6347, 4
        %s9276 = scalar_lea.vmem %s431, %s9275
        %9277 = vst [vmem:[%s9276] sm:$0xff] %v9273
        %vm9278 = vcmask 551936
        %9279 = vst.msk [vmem:[%s9276 + $0x8] sm:$0xf] %vm9278, %v9270
      $region72: #{upsample_block_forward.1} parent=59 // loop_footer
        %s6346 = sadd.s32 1, %s6342
      $region73: #{upsample_block_forward.1} parent=59 // loop_footer_branch
        %6341 = sbr.rel target = $region69
      $region74: #{upsample_block_forward.1} parent=59 // loop_exit
        _
      %s9280 = smul.u32 8, %s26
      %p9281 = scmp.lt.s32.totalorder %s25, 1
      %s9282 = scalar_select %p9281, %s25, 1
      %p9283 = scmp.lt.s32.totalorder %s9280, 7
      %s9284 = scalar_select %p9283, %s9280, 7
      %s9285 = smul.addr %s9284, 3
      %s9286 = smul.addr %s9282, 24
      %s9287 = sadd.s32 %s9285, %s9286
      %s9288 = smul.addr %s9287, 4
      %s9289 = scalar_lea.vmem %s10, %s9288
      // Predicated region
      $region75: #{upsample_block_forward.1} parent=59 // pred_check
        %p9290 = pneg %p277
      $region76: #{upsample_block_forward.1} parent=59 // pred_check_branch
        %9292 = sbr.rel (%p9290) target = $region78
      $region77: #{upsample_block_forward.1} parent=59 // pred_region
        %s9293 = smul.u32 8, %s26
      $region78: #{upsample_block_forward.1} parent=59 // pred_fallthru
        _
    $region60: #{upsample_block_forward.1} parent=5 // pred_fallthru
      _
    %p9294 = scmp.le.s32.totalorder 2, %s16
    // Predicated region
    $region79: #{upsample_block_forward.1} parent=5 // pred_check
      %p9295 = pneg %p9294
    $region80: #{upsample_block_forward.1} parent=5 // pred_check_branch
      %9297 = sbr.rel (%p9295) target = $region82
    $region81: #{upsample_block_forward.1} parent=5 // pred_region
      %s9298 = ssub.s32 %s16, 2
      // Predicated region
      $region83: #{upsample_block_forward.1} parent=81 // pred_check
        %p9299 = pneg %p283
      $region84: #{upsample_block_forward.1} parent=81 // pred_check_branch
        %9301 = sbr.rel (%p9299) target = $region86
      $region85: #{upsample_block_forward.1} parent=81 // pred_region
        %s9302 = smul.u32 8, %s28
        %p9303 = scmp.lt.s32.totalorder %s27, 1
        %s9304 = scalar_select %p9303, %s27, 1
        %p9305 = scmp.lt.s32.totalorder %s9302, 7
        %s9306 = scalar_select %p9305, %s9302, 7
        %s9307 = smul.addr %s9306, 3
        %s9308 = smul.addr %s9304, 24
        %s9309 = sadd.s32 %s9307, %s9308
        %s9310 = smul.addr %s9309, 4
        %s9311 = scalar_lea.vmem %s10, %s9310
      $region86: #{upsample_block_forward.1} parent=81 // pred_fallthru
        _
    $region82: #{upsample_block_forward.1} parent=5 // pred_fallthru
      _
  $region6: #{upsample_block_forward.1} parent=0 // loop_footer
    %s20 = sadd.s32 1, %s16
  $region7: #{upsample_block_forward.1} parent=0 // loop_footer_branch
    %15 = sbr.rel target = $region3
  $region8: #{upsample_block_forward.1} parent=0 // loop_exit
    _

</llo_original>
